<compile_context>
chip_gen: v7x
topology: tpu7x:2x2x1
jax: 0.10.0
libtpu: 0.0.40
codegen_flags: <defaults>
</compile_context>

<pallas_src>
import functools

import jax
import jax.numpy as jnp
from jax import lax
from jax.experimental import pallas as pl
from jax.experimental.pallas import tpu as pltpu


# ----------------------------------------------------------------------------
# Pallas kernels
# ----------------------------------------------------------------------------
def conv_relu_pool_kernel(x_ref, w_ref, b_ref, out_ref, *, wq, m_out, cout):
    """Fused 5x5 conv + bias + ReLU + 2x2 max-pool for ONE image.

    Space-to-depth formulation: the stride-2 composite (conv5x5 -> pool) is a
    stride-1 3x3 conv over the pixel-unshuffled padded input (4*Cin channels)
    into 4*Cout channels (4 pool phases), then a max over the phase groups.
    The unshuffled image arrives with its (Hq, Wq) grid flattened into rows,
    so tap (qy, qx) is the row-window starting at qy*wq + qx.

    x_ref:   (1, R, 4*Cin)      bf16, R >= m_out + 2*wq + 2 (zero pad rows)
    w_ref:   (9, 4*Cin, 4*Cout) bf16
    b_ref:   (1, Cout)          f32
    out_ref: (1, m_out, Cout)   bf16, m_out = Ho*wq rows (cols >= Wo are halo
             garbage, cropped by the wrapper)
    """
    acc = None
    for qy in range(3):
        for qx in range(3):
            off = qy * wq + qx
            lhs = x_ref[0, off:off + m_out, :]                  # (m_out, 4Cin)
            d = jnp.dot(lhs, w_ref[qy * 3 + qx],
                        preferred_element_type=jnp.float32)     # (m_out, 4Cout)
            acc = d if acc is None else acc + d
    # 2x2 max-pool == max over the 4 phase channel-groups.
    y = jnp.maximum(jnp.maximum(acc[:, 0 * cout:1 * cout],
                                acc[:, 1 * cout:2 * cout]),
                    jnp.maximum(acc[:, 2 * cout:3 * cout],
                                acc[:, 3 * cout:4 * cout]))
    # Bias + ReLU once, after the pool (== per-phase bias+ReLU: bias is
    # phase-invariant and ReLU is monotone).
    y = jnp.maximum(y + b_ref[...], 0.0)
    out_ref[0] = y.astype(out_ref.dtype)


def mlp_kernel(x_ref, w1_ref, b1_ref, w2_ref, b2_ref, out_ref):
    """Linear(2048, 128-padded) -> ReLU -> Linear(128-padded, 128-padded)."""
    h = jnp.dot(x_ref[...], w1_ref[...], preferred_element_type=jnp.float32)
    h = jnp.maximum(h + b1_ref[...], 0.0)
    o = jnp.dot(h.astype(w2_ref.dtype), w2_ref[...],
                preferred_element_type=jnp.float32)
    out_ref[...] = (o + b2_ref[...]).astype(out_ref.dtype)


# ----------------------------------------------------------------------------
# JAX glue (layout plumbing only: pad, pixel-unshuffle, weight re-indexing)
# ----------------------------------------------------------------------------
def _space_to_depth_weights(w_torch):
    """(Cout, Cin, 5, 5) torch conv weight -> (9, 4*Cin, 4*Cout) s2d weight.

    W2[(qy,qx), (ay,ax,ci), (py,px,co)] = w[2qy+ay-py, 2qx+ax-px, ci, co]
    (zero when the 5x5 index falls outside [0, 4]).
    """
    w = jnp.transpose(w_torch, (2, 3, 1, 0))            # (dy, dx, Cin, Cout)
    wp = jnp.pad(w, ((1, 1), (1, 1), (0, 0), (0, 0)))   # dy, dx in [-1, 5]
    taps = []
    for qy in range(3):
        for qx in range(3):
            rows = []
            for ay in range(2):
                for ax in range(2):
                    cols = []
                    for py in range(2):
                        for px in range(2):
                            dy = 2 * qy + ay - py
                            dx = 2 * qx + ax - px
                            cols.append(wp[dy + 1, dx + 1])     # (Cin, Cout)
                    rows.append(jnp.concatenate(cols, axis=1))  # (Cin, 4Cout)
            taps.append(jnp.concatenate(rows, axis=0))          # (4Cin, 4Cout)
    return jnp.stack(taps)                                       # (9,4Cin,4Cout)


def conv_relu_pool(x_nhwc, w_torch, b):
    """One feature-extractor stage. w_torch: (Cout, Cin, 5, 5) (PyTorch)."""
    N, H, W, Cin = x_nhwc.shape
    Cout = w_torch.shape[0]
    assert H % 2 == 0 and W % 2 == 0
    Ho, Wo = H // 2, W // 2
    Hq, Wq = Ho + 2, Wo + 2

    # Zero-pad + pixel-unshuffle; flatten the (Hq, Wq) grid into rows and add
    # a few zero pad rows so every tap window stays in-bounds.  Same memory
    # footprint as the activation -- no 25x im2col expansion in HBM.
    xp = jnp.pad(x_nhwc, ((0, 0), (2, 2), (2, 2), (0, 0)))
    xq = xp.reshape(N, Hq, 2, Wq, 2, Cin)
    xq = jnp.transpose(xq, (0, 1, 3, 2, 4, 5)).reshape(N, Hq * Wq, 4 * Cin)
    pad_rows = 8                                        # needs >= 2
    xq = jnp.pad(xq, ((0, 0), (0, pad_rows), (0, 0))).astype(jnp.bfloat16)
    R = Hq * Wq + pad_rows
    m_out = Ho * Wq          # full-width rows; halo columns cropped below

    w2 = _space_to_depth_weights(w_torch).astype(jnp.bfloat16)
    b2d = b.reshape(1, Cout).astype(jnp.float32)

    kernel = functools.partial(conv_relu_pool_kernel,
                               wq=Wq, m_out=m_out, cout=Cout)
    out = pl.pallas_call(
        kernel,
        out_shape=jax.ShapeDtypeStruct((N, m_out, Cout), jnp.bfloat16),
        grid=(N,),
        in_specs=[
            pl.BlockSpec((1, R, 4 * Cin), lambda i: (i, 0, 0)),
            pl.BlockSpec((9, 4 * Cin, 4 * Cout), lambda i: (0, 0, 0)),
            pl.BlockSpec((1, Cout), lambda i: (0, 0)),
        ],
        out_specs=pl.BlockSpec((1, m_out, Cout), lambda i: (i, 0, 0)),
        compiler_params=pltpu.CompilerParams(
            dimension_semantics=("parallel",)),
    )(xq, w2, b2d)
    # Drop the 2 halo columns and restore NHWC.
    return out.reshape(N, Ho, Wq, Cout)[:, :, :Wo, :]


def classifier(feats, w1_torch, b1, w2_torch, b2, feat_chw=(128, 4, 4)):
    """feats: (N, 2048) in NHWC-flatten order (h, w, c).

    torch Linear weights are (out, in); fc1's `in` axis is in NCHW-flatten
    order (c, h, w), so it is permuted once here (no activation transpose).
    Hidden and class dims are zero-padded to 128 for lane-dense MXU work and
    unmasked stores; padding is sliced off on return.
    """
    N, F = feats.shape
    H1 = w1_torch.shape[0]
    NC = w2_torch.shape[0]
    C, Hs, Ws = feat_chw
    assert C * Hs * Ws == F == w1_torch.shape[1]

    H1p = max(128, ((H1 + 127) // 128) * 128)
    NCp = max(128, ((NC + 127) // 128) * 128)
    w1 = jnp.transpose(w1_torch.reshape(H1, C, Hs, Ws),
                       (2, 3, 1, 0)).reshape(F, H1)
    w1 = jnp.pad(w1, ((0, 0), (0, H1p - H1))).astype(jnp.bfloat16)
    b1p = jnp.pad(b1, (0, H1p - H1)).reshape(1, H1p).astype(jnp.float32)
    w2 = jnp.pad(w2_torch.T, ((0, H1p - H1), (0, NCp - NC))).astype(jnp.bfloat16)
    b2p = jnp.pad(b2, (0, NCp - NC)).reshape(1, NCp).astype(jnp.float32)
    feats = feats.astype(jnp.bfloat16)

    bn = N
    if N >= 16:
        for cand in (512, 256, 128, 64, 32, 16, 8):
            if cand <= N // 2 and N % cand == 0:
                bn = cand
                break

    out = pl.pallas_call(
        mlp_kernel,
        out_shape=jax.ShapeDtypeStruct((N, NCp), jnp.float32),
        grid=(N // bn,),
        in_specs=[
            pl.BlockSpec((bn, F), lambda i: (i, 0)),
            pl.BlockSpec((F, H1p), lambda i: (0, 0)),
            pl.BlockSpec((1, H1p), lambda i: (0, 0)),
            pl.BlockSpec((H1p, NCp), lambda i: (0, 0)),
            pl.BlockSpec((1, NCp), lambda i: (0, 0)),
        ],
        out_specs=pl.BlockSpec((bn, NCp), lambda i: (i, 0)),
        compiler_params=pltpu.CompilerParams(
            dimension_semantics=("parallel",)),
    )(feats, w1, b1p, w2, b2p)
    return out[:, :NC]


# ----------------------------------------------------------------------------
# Model (parameters kept in PyTorch layouts; converted at call sites)
# ----------------------------------------------------------------------------
def init_params(key, image_channels=3, num_classes=10):
    ks = jax.random.split(key, 10)

    def conv_w(k, cout, cin):
        fan_in = cin * 25
        return jax.random.normal(k, (cout, cin, 5, 5), jnp.float32) / jnp.sqrt(fan_in)

    def lin_w(k, cout, cin):
        return jax.random.normal(k, (cout, cin), jnp.float32) / jnp.sqrt(cin)

    return {
        "convs": [
            (conv_w(ks[0], 32, image_channels),
             0.01 * jax.random.normal(ks[1], (32,), jnp.float32)),
            (conv_w(ks[2], 64, 32),
             0.01 * jax.random.normal(ks[3], (64,), jnp.float32)),
            (conv_w(ks[4], 128, 64),
             0.01 * jax.random.normal(ks[5], (128,), jnp.float32)),
        ],
        "fc1_w": lin_w(ks[6], 64, 2048),
        "fc1_b": 0.01 * jax.random.normal(ks[7], (64,), jnp.float32),
        "fc2_w": lin_w(ks[8], num_classes, 64),
        "fc2_b": 0.01 * jax.random.normal(ks[9], (num_classes,), jnp.float32),
    }


def example_model_forward(x_nchw, params, num_classes=10):
    batch_size = x_nchw.shape[0]
    x = jnp.transpose(x_nchw, (0, 2, 3, 1)).astype(jnp.bfloat16)  # NCHW->NHWC
    for w, b in params["convs"]:
        x = conv_relu_pool(x, w, b)
    feats = x.reshape(batch_size, -1)           # NHWC flatten (h, w, c)
    assert feats.shape[1] == 2048, feats.shape
    C = params["convs"][-1][0].shape[0]
    Hs, Ws = x.shape[1], x.shape[2]
    out = classifier(feats, params["fc1_w"], params["fc1_b"],
                     params["fc2_w"], params["fc2_b"], feat_chw=(C, Hs, Ws))
    assert out.shape == (batch_size, num_classes)
    return out


# ----------------------------------------------------------------------------
# Pure-JAX reference (for correctness check)
# ----------------------------------------------------------------------------
def reference_forward(x_nchw, params):
    x = x_nchw
    for w, b in params["convs"]:
        x = lax.conv_general_dilated(
            x, w, window_strides=(1, 1), padding=((2, 2), (2, 2)),
            dimension_numbers=("NCHW", "OIHW", "NCHW"),
            precision=lax.Precision.HIGHEST)
        x = jnp.maximum(x + b[None, :, None, None], 0.0)
        N, C, H, W = x.shape
        x = x.reshape(N, C, H // 2, 2, W // 2, 2).max(axis=(3, 5))
    N = x.shape[0]
    feats = x.reshape(N, -1)
    h = jnp.maximum(
        jnp.dot(feats, params["fc1_w"].T, precision=lax.Precision.HIGHEST)
        + params["fc1_b"], 0.0)
    return jnp.dot(h, params["fc2_w"].T,
                   precision=lax.Precision.HIGHEST) + params["fc2_b"]


# ----------------------------------------------------------------------------
if __name__ == "__main__":
    image_channels, num_classes = 3, 10
    batch = 2

    key = jax.random.PRNGKey(0)
    kx, kp = jax.random.split(key)
    # The classifier's Linear(2048, 64) implies 32x32 inputs (128 * 4 * 4).
    x = jax.random.normal(kx, (batch, image_channels, 32, 32), jnp.float32)
    params = init_params(kp, image_channels, num_classes)

    fwd = jax.jit(functools.partial(example_model_forward,
                                    num_classes=num_classes))
    out = jax.block_until_ready(fwd(x, params))
    assert out.shape == (batch, num_classes), out.shape

    ref = jax.block_until_ready(reference_forward(x, params))
    # bf16 MXU operands (f32 accumulation) vs. an all-f32 HIGHEST reference.
    max_err = float(jnp.max(jnp.abs(out - ref)))
    assert jnp.allclose(out, ref, rtol=2e-2, atol=2e-2), max_err

    print("KERNEL_OK")
</pallas_src>

<mosaic_0001>
module attributes {stable_mosaic.version = 11 : i64} {
  func.func @conv_relu_pool_kernel(%arg0: i32, %arg1: memref<1x332x12xbf16, #tpu.memory_space<vmem>>, %arg2: memref<9x12x128xbf16, #tpu.memory_space<vmem>>, %arg3: memref<1x32xf32, #tpu.memory_space<vmem>>, %arg4: memref<1x288x32xbf16, #tpu.memory_space<vmem>>) attributes {dimension_semantics = [#tpu.dimension_semantics<parallel>], iteration_bounds = array<i64: 2>, scalar_prefetch = 0 : i64, scratch_operands = 0 : i64, tpu.core_type = #tpu.core_type<tc>, window_params = [{transform_indices = @transform_0, window_bounds = array<i64: 1, 332, 12>}, {pipeline_mode = #tpu.pipeline_mode<synchronous>, transform_indices = @transform_1, window_bounds = array<i64: 9, 12, 128>}, {pipeline_mode = #tpu.pipeline_mode<synchronous>, transform_indices = @transform_2, window_bounds = array<i64: 1, 32>}, {transform_indices = @transform_3, window_bounds = array<i64: 1, 288, 32>}]} {
    %c0 = arith.constant 0 : index
    %c0_0 = arith.constant 0 : index
    %c0_1 = arith.constant 0 : index
    %0 = vector.load %arg1[%c0, %c0_0, %c0_1] : memref<1x332x12xbf16, #tpu.memory_space<vmem>>, vector<1x288x12xbf16>
    %1 = vector.shape_cast %0 : vector<1x288x12xbf16> to vector<288x12xbf16>
    %c0_2 = arith.constant 0 : index
    %c0_3 = arith.constant 0 : index
    %c0_4 = arith.constant 0 : index
    %2 = vector.load %arg2[%c0_2, %c0_3, %c0_4] : memref<9x12x128xbf16, #tpu.memory_space<vmem>>, vector<1x12x128xbf16>
    %3 = vector.shape_cast %2 : vector<1x12x128xbf16> to vector<12x128xbf16>
    %cst = arith.constant dense<0.000000e+00> : vector<288x128xf32>
    %4 = tpu.matmul %1, %3, %cst {dimension_numbers = #tpu.dot_dimension_numbers<[1], [0], [0], [1], [0, 0, 1, 1], [], []>} : vector<288x12xbf16>, vector<12x128xbf16>, vector<288x128xf32> -> vector<288x128xf32>
    %c0_5 = arith.constant 0 : index
    %c1 = arith.constant 1 : index
    %c0_6 = arith.constant 0 : index
    %5 = vector.load %arg1[%c0_5, %c1, %c0_6] : memref<1x332x12xbf16, #tpu.memory_space<vmem>>, vector<1x288x12xbf16>
    %6 = vector.shape_cast %5 : vector<1x288x12xbf16> to vector<288x12xbf16>
    %c1_7 = arith.constant 1 : index
    %c0_8 = arith.constant 0 : index
    %c0_9 = arith.constant 0 : index
    %7 = vector.load %arg2[%c1_7, %c0_8, %c0_9] : memref<9x12x128xbf16, #tpu.memory_space<vmem>>, vector<1x12x128xbf16>
    %8 = vector.shape_cast %7 : vector<1x12x128xbf16> to vector<12x128xbf16>
    %cst_10 = arith.constant dense<0.000000e+00> : vector<288x128xf32>
    %9 = tpu.matmul %6, %8, %cst_10 {dimension_numbers = #tpu.dot_dimension_numbers<[1], [0], [0], [1], [0, 0, 1, 1], [], []>} : vector<288x12xbf16>, vector<12x128xbf16>, vector<288x128xf32> -> vector<288x128xf32>
    %10 = arith.addf %4, %9 : vector<288x128xf32>
    %c0_11 = arith.constant 0 : index
    %c2 = arith.constant 2 : index
    %c0_12 = arith.constant 0 : index
    %11 = vector.load %arg1[%c0_11, %c2, %c0_12] : memref<1x332x12xbf16, #tpu.memory_space<vmem>>, vector<1x288x12xbf16>
    %12 = vector.shape_cast %11 : vector<1x288x12xbf16> to vector<288x12xbf16>
    %c2_13 = arith.constant 2 : index
    %c0_14 = arith.constant 0 : index
    %c0_15 = arith.constant 0 : index
    %13 = vector.load %arg2[%c2_13, %c0_14, %c0_15] : memref<9x12x128xbf16, #tpu.memory_space<vmem>>, vector<1x12x128xbf16>
    %14 = vector.shape_cast %13 : vector<1x12x128xbf16> to vector<12x128xbf16>
    %cst_16 = arith.constant dense<0.000000e+00> : vector<288x128xf32>
    %15 = tpu.matmul %12, %14, %cst_16 {dimension_numbers = #tpu.dot_dimension_numbers<[1], [0], [0], [1], [0, 0, 1, 1], [], []>} : vector<288x12xbf16>, vector<12x128xbf16>, vector<288x128xf32> -> vector<288x128xf32>
    %16 = arith.addf %10, %15 : vector<288x128xf32>
    %c0_17 = arith.constant 0 : index
    %c18 = arith.constant 18 : index
    %c0_18 = arith.constant 0 : index
    %17 = vector.load %arg1[%c0_17, %c18, %c0_18] : memref<1x332x12xbf16, #tpu.memory_space<vmem>>, vector<1x288x12xbf16>
    %18 = vector.shape_cast %17 : vector<1x288x12xbf16> to vector<288x12xbf16>
    %c3 = arith.constant 3 : index
    %c0_19 = arith.constant 0 : index
    %c0_20 = arith.constant 0 : index
    %19 = vector.load %arg2[%c3, %c0_19, %c0_20] : memref<9x12x128xbf16, #tpu.memory_space<vmem>>, vector<1x12x128xbf16>
    %20 = vector.shape_cast %19 : vector<1x12x128xbf16> to vector<12x128xbf16>
    %cst_21 = arith.constant dense<0.000000e+00> : vector<288x128xf32>
    %21 = tpu.matmul %18, %20, %cst_21 {dimension_numbers = #tpu.dot_dimension_numbers<[1], [0], [0], [1], [0, 0, 1, 1], [], []>} : vector<288x12xbf16>, vector<12x128xbf16>, vector<288x128xf32> -> vector<288x128xf32>
    %22 = arith.addf %16, %21 : vector<288x128xf32>
    %c0_22 = arith.constant 0 : index
    %c19 = arith.constant 19 : index
    %c0_23 = arith.constant 0 : index
    %23 = vector.load %arg1[%c0_22, %c19, %c0_23] : memref<1x332x12xbf16, #tpu.memory_space<vmem>>, vector<1x288x12xbf16>
    %24 = vector.shape_cast %23 : vector<1x288x12xbf16> to vector<288x12xbf16>
    %c4 = arith.constant 4 : index
    %c0_24 = arith.constant 0 : index
    %c0_25 = arith.constant 0 : index
    %25 = vector.load %arg2[%c4, %c0_24, %c0_25] : memref<9x12x128xbf16, #tpu.memory_space<vmem>>, vector<1x12x128xbf16>
    %26 = vector.shape_cast %25 : vector<1x12x128xbf16> to vector<12x128xbf16>
    %cst_26 = arith.constant dense<0.000000e+00> : vector<288x128xf32>
    %27 = tpu.matmul %24, %26, %cst_26 {dimension_numbers = #tpu.dot_dimension_numbers<[1], [0], [0], [1], [0, 0, 1, 1], [], []>} : vector<288x12xbf16>, vector<12x128xbf16>, vector<288x128xf32> -> vector<288x128xf32>
    %28 = arith.addf %22, %27 : vector<288x128xf32>
    %c0_27 = arith.constant 0 : index
    %c20 = arith.constant 20 : index
    %c0_28 = arith.constant 0 : index
    %29 = vector.load %arg1[%c0_27, %c20, %c0_28] : memref<1x332x12xbf16, #tpu.memory_space<vmem>>, vector<1x288x12xbf16>
    %30 = vector.shape_cast %29 : vector<1x288x12xbf16> to vector<288x12xbf16>
    %c5 = arith.constant 5 : index
    %c0_29 = arith.constant 0 : index
    %c0_30 = arith.constant 0 : index
    %31 = vector.load %arg2[%c5, %c0_29, %c0_30] : memref<9x12x128xbf16, #tpu.memory_space<vmem>>, vector<1x12x128xbf16>
    %32 = vector.shape_cast %31 : vector<1x12x128xbf16> to vector<12x128xbf16>
    %cst_31 = arith.constant dense<0.000000e+00> : vector<288x128xf32>
    %33 = tpu.matmul %30, %32, %cst_31 {dimension_numbers = #tpu.dot_dimension_numbers<[1], [0], [0], [1], [0, 0, 1, 1], [], []>} : vector<288x12xbf16>, vector<12x128xbf16>, vector<288x128xf32> -> vector<288x128xf32>
    %34 = arith.addf %28, %33 : vector<288x128xf32>
    %c0_32 = arith.constant 0 : index
    %c36 = arith.constant 36 : index
    %c0_33 = arith.constant 0 : index
    %35 = vector.load %arg1[%c0_32, %c36, %c0_33] : memref<1x332x12xbf16, #tpu.memory_space<vmem>>, vector<1x288x12xbf16>
    %36 = vector.shape_cast %35 : vector<1x288x12xbf16> to vector<288x12xbf16>
    %c6 = arith.constant 6 : index
    %c0_34 = arith.constant 0 : index
    %c0_35 = arith.constant 0 : index
    %37 = vector.load %arg2[%c6, %c0_34, %c0_35] : memref<9x12x128xbf16, #tpu.memory_space<vmem>>, vector<1x12x128xbf16>
    %38 = vector.shape_cast %37 : vector<1x12x128xbf16> to vector<12x128xbf16>
    %cst_36 = arith.constant dense<0.000000e+00> : vector<288x128xf32>
    %39 = tpu.matmul %36, %38, %cst_36 {dimension_numbers = #tpu.dot_dimension_numbers<[1], [0], [0], [1], [0, 0, 1, 1], [], []>} : vector<288x12xbf16>, vector<12x128xbf16>, vector<288x128xf32> -> vector<288x128xf32>
    %40 = arith.addf %34, %39 : vector<288x128xf32>
    %c0_37 = arith.constant 0 : index
    %c37 = arith.constant 37 : index
    %c0_38 = arith.constant 0 : index
    %41 = vector.load %arg1[%c0_37, %c37, %c0_38] : memref<1x332x12xbf16, #tpu.memory_space<vmem>>, vector<1x288x12xbf16>
    %42 = vector.shape_cast %41 : vector<1x288x12xbf16> to vector<288x12xbf16>
    %c7 = arith.constant 7 : index
    %c0_39 = arith.constant 0 : index
    %c0_40 = arith.constant 0 : index
    %43 = vector.load %arg2[%c7, %c0_39, %c0_40] : memref<9x12x128xbf16, #tpu.memory_space<vmem>>, vector<1x12x128xbf16>
    %44 = vector.shape_cast %43 : vector<1x12x128xbf16> to vector<12x128xbf16>
    %cst_41 = arith.constant dense<0.000000e+00> : vector<288x128xf32>
    %45 = tpu.matmul %42, %44, %cst_41 {dimension_numbers = #tpu.dot_dimension_numbers<[1], [0], [0], [1], [0, 0, 1, 1], [], []>} : vector<288x12xbf16>, vector<12x128xbf16>, vector<288x128xf32> -> vector<288x128xf32>
    %46 = arith.addf %40, %45 : vector<288x128xf32>
    %c0_42 = arith.constant 0 : index
    %c38 = arith.constant 38 : index
    %c0_43 = arith.constant 0 : index
    %47 = vector.load %arg1[%c0_42, %c38, %c0_43] : memref<1x332x12xbf16, #tpu.memory_space<vmem>>, vector<1x288x12xbf16>
    %48 = vector.shape_cast %47 : vector<1x288x12xbf16> to vector<288x12xbf16>
    %c8 = arith.constant 8 : index
    %c0_44 = arith.constant 0 : index
    %c0_45 = arith.constant 0 : index
    %49 = vector.load %arg2[%c8, %c0_44, %c0_45] : memref<9x12x128xbf16, #tpu.memory_space<vmem>>, vector<1x12x128xbf16>
    %50 = vector.shape_cast %49 : vector<1x12x128xbf16> to vector<12x128xbf16>
    %cst_46 = arith.constant dense<0.000000e+00> : vector<288x128xf32>
    %51 = tpu.matmul %48, %50, %cst_46 {dimension_numbers = #tpu.dot_dimension_numbers<[1], [0], [0], [1], [0, 0, 1, 1], [], []>} : vector<288x12xbf16>, vector<12x128xbf16>, vector<288x128xf32> -> vector<288x128xf32>
    %52 = arith.addf %46, %51 : vector<288x128xf32>
    %53 = vector.extract_strided_slice %52 {offsets = [0, 0], sizes = [288, 32], strides = [1, 1]} : vector<288x128xf32> to vector<288x32xf32>
    %54 = vector.extract_strided_slice %52 {offsets = [0, 32], sizes = [288, 32], strides = [1, 1]} : vector<288x128xf32> to vector<288x32xf32>
    %55 = arith.maximumf %53, %54 : vector<288x32xf32>
    %56 = vector.extract_strided_slice %52 {offsets = [0, 64], sizes = [288, 32], strides = [1, 1]} : vector<288x128xf32> to vector<288x32xf32>
    %57 = vector.extract_strided_slice %52 {offsets = [0, 96], sizes = [288, 32], strides = [1, 1]} : vector<288x128xf32> to vector<288x32xf32>
    %58 = arith.maximumf %56, %57 : vector<288x32xf32>
    %59 = arith.maximumf %55, %58 : vector<288x32xf32>
    %c0_47 = arith.constant 0 : index
    %c0_48 = arith.constant 0 : index
    %60 = vector.load %arg3[%c0_47, %c0_48] : memref<1x32xf32, #tpu.memory_space<vmem>>, vector<1x32xf32>
    %61 = vector.broadcast %60 : vector<1x32xf32> to vector<288x32xf32>
    %62 = arith.addf %59, %61 : vector<288x32xf32>
    %cst_49 = arith.constant 0.000000e+00 : f32
    %63 = vector.broadcast %cst_49 : f32 to vector<288x32xf32>
    %64 = arith.maximumf %62, %63 : vector<288x32xf32>
    %65 = arith.truncf %64 : vector<288x32xf32> to vector<288x32xbf16>
    %c0_50 = arith.constant 0 : index
    %c0_51 = arith.constant 0 : index
    %c0_52 = arith.constant 0 : index
    %66 = vector.load %arg4[%c0_50, %c0_51, %c0_52] : memref<1x288x32xbf16, #tpu.memory_space<vmem>>, vector<1x288x32xbf16>
    %67 = vector.shape_cast %66 : vector<1x288x32xbf16> to vector<288x32xbf16>
    %68 = vector.shape_cast %65 : vector<288x32xbf16> to vector<1x288x32xbf16>
    tpu.vector_store %arg4[%c0_50, %c0_51, %c0_52], %68 {strides = array<i32>} : memref<1x288x32xbf16, #tpu.memory_space<vmem>>, vector<1x288x32xbf16>,
    return
  }
  func.func @transform_0(%arg0: i32) -> (i32, i32, i32) {
    %c0_i32 = arith.constant 0 : i32
    %c0_i32_0 = arith.constant 0 : i32
    %c0_i32_1 = arith.constant 0 : i32
    return %arg0, %c0_i32, %c0_i32_0 : i32, i32, i32
  }
  func.func @transform_1(%arg0: i32) -> (i32, i32, i32) {
    %c0_i32 = arith.constant 0 : i32
    %c0_i32_0 = arith.constant 0 : i32
    %c0_i32_1 = arith.constant 0 : i32
    %c0_i32_2 = arith.constant 0 : i32
    return %c0_i32, %c0_i32_0, %c0_i32_1 : i32, i32, i32
  }
  func.func @transform_2(%arg0: i32) -> (i32, i32) {
    %c0_i32 = arith.constant 0 : i32
    %c0_i32_0 = arith.constant 0 : i32
    %c0_i32_1 = arith.constant 0 : i32
    return %c0_i32, %c0_i32_0 : i32, i32
  }
  func.func @transform_3(%arg0: i32) -> (i32, i32, i32) {
    %c0_i32 = arith.constant 0 : i32
    %c0_i32_0 = arith.constant 0 : i32
    %c0_i32_1 = arith.constant 0 : i32
    return %arg0, %c0_i32, %c0_i32_0 : i32, i32, i32
  }
}

module attributes {stable_mosaic.version = 11 : i64} {
  func.func @conv_relu_pool_kernel(%arg0: i32, %arg1: memref<1x108x128xbf16, #tpu.memory_space<vmem>>, %arg2: memref<9x128x256xbf16, #tpu.memory_space<vmem>>, %arg3: memref<1x64xf32, #tpu.memory_space<vmem>>, %arg4: memref<1x80x64xbf16, #tpu.memory_space<vmem>>) attributes {dimension_semantics = [#tpu.dimension_semantics<parallel>], iteration_bounds = array<i64: 2>, scalar_prefetch = 0 : i64, scratch_operands = 0 : i64, tpu.core_type = #tpu.core_type<tc>, window_params = [{transform_indices = @transform_0, window_bounds = array<i64: 1, 108, 128>}, {pipeline_mode = #tpu.pipeline_mode<synchronous>, transform_indices = @transform_1, window_bounds = array<i64: 9, 128, 256>}, {pipeline_mode = #tpu.pipeline_mode<synchronous>, transform_indices = @transform_2, window_bounds = array<i64: 1, 64>}, {transform_indices = @transform_3, window_bounds = array<i64: 1, 80, 64>}]} {
    %c0 = arith.constant 0 : index
    %c0_0 = arith.constant 0 : index
    %c0_1 = arith.constant 0 : index
    %0 = vector.load %arg1[%c0, %c0_0, %c0_1] : memref<1x108x128xbf16, #tpu.memory_space<vmem>>, vector<1x80x128xbf16>
    %1 = vector.shape_cast %0 : vector<1x80x128xbf16> to vector<80x128xbf16>
    %c0_2 = arith.constant 0 : index
    %c0_3 = arith.constant 0 : index
    %c0_4 = arith.constant 0 : index
    %2 = vector.load %arg2[%c0_2, %c0_3, %c0_4] : memref<9x128x256xbf16, #tpu.memory_space<vmem>>, vector<1x128x256xbf16>
    %3 = vector.shape_cast %2 : vector<1x128x256xbf16> to vector<128x256xbf16>
    %cst = arith.constant dense<0.000000e+00> : vector<80x256xf32>
    %4 = tpu.matmul %1, %3, %cst {dimension_numbers = #tpu.dot_dimension_numbers<[1], [0], [0], [1], [0, 0, 1, 1], [], []>} : vector<80x128xbf16>, vector<128x256xbf16>, vector<80x256xf32> -> vector<80x256xf32>
    %c0_5 = arith.constant 0 : index
    %c1 = arith.constant 1 : index
    %c0_6 = arith.constant 0 : index
    %5 = vector.load %arg1[%c0_5, %c1, %c0_6] : memref<1x108x128xbf16, #tpu.memory_space<vmem>>, vector<1x80x128xbf16>
    %6 = vector.shape_cast %5 : vector<1x80x128xbf16> to vector<80x128xbf16>
    %c1_7 = arith.constant 1 : index
    %c0_8 = arith.constant 0 : index
    %c0_9 = arith.constant 0 : index
    %7 = vector.load %arg2[%c1_7, %c0_8, %c0_9] : memref<9x128x256xbf16, #tpu.memory_space<vmem>>, vector<1x128x256xbf16>
    %8 = vector.shape_cast %7 : vector<1x128x256xbf16> to vector<128x256xbf16>
    %cst_10 = arith.constant dense<0.000000e+00> : vector<80x256xf32>
    %9 = tpu.matmul %6, %8, %cst_10 {dimension_numbers = #tpu.dot_dimension_numbers<[1], [0], [0], [1], [0, 0, 1, 1], [], []>} : vector<80x128xbf16>, vector<128x256xbf16>, vector<80x256xf32> -> vector<80x256xf32>
    %10 = arith.addf %4, %9 : vector<80x256xf32>
    %c0_11 = arith.constant 0 : index
    %c2 = arith.constant 2 : index
    %c0_12 = arith.constant 0 : index
    %11 = vector.load %arg1[%c0_11, %c2, %c0_12] : memref<1x108x128xbf16, #tpu.memory_space<vmem>>, vector<1x80x128xbf16>
    %12 = vector.shape_cast %11 : vector<1x80x128xbf16> to vector<80x128xbf16>
    %c2_13 = arith.constant 2 : index
    %c0_14 = arith.constant 0 : index
    %c0_15 = arith.constant 0 : index
    %13 = vector.load %arg2[%c2_13, %c0_14, %c0_15] : memref<9x128x256xbf16, #tpu.memory_space<vmem>>, vector<1x128x256xbf16>
    %14 = vector.shape_cast %13 : vector<1x128x256xbf16> to vector<128x256xbf16>
    %cst_16 = arith.constant dense<0.000000e+00> : vector<80x256xf32>
    %15 = tpu.matmul %12, %14, %cst_16 {dimension_numbers = #tpu.dot_dimension_numbers<[1], [0], [0], [1], [0, 0, 1, 1], [], []>} : vector<80x128xbf16>, vector<128x256xbf16>, vector<80x256xf32> -> vector<80x256xf32>
    %16 = arith.addf %10, %15 : vector<80x256xf32>
    %c0_17 = arith.constant 0 : index
    %c10 = arith.constant 10 : index
    %c0_18 = arith.constant 0 : index
    %17 = vector.load %arg1[%c0_17, %c10, %c0_18] : memref<1x108x128xbf16, #tpu.memory_space<vmem>>, vector<1x80x128xbf16>
    %18 = vector.shape_cast %17 : vector<1x80x128xbf16> to vector<80x128xbf16>
    %c3 = arith.constant 3 : index
    %c0_19 = arith.constant 0 : index
    %c0_20 = arith.constant 0 : index
    %19 = vector.load %arg2[%c3, %c0_19, %c0_20] : memref<9x128x256xbf16, #tpu.memory_space<vmem>>, vector<1x128x256xbf16>
    %20 = vector.shape_cast %19 : vector<1x128x256xbf16> to vector<128x256xbf16>
    %cst_21 = arith.constant dense<0.000000e+00> : vector<80x256xf32>
    %21 = tpu.matmul %18, %20, %cst_21 {dimension_numbers = #tpu.dot_dimension_numbers<[1], [0], [0], [1], [0, 0, 1, 1], [], []>} : vector<80x128xbf16>, vector<128x256xbf16>, vector<80x256xf32> -> vector<80x256xf32>
    %22 = arith.addf %16, %21 : vector<80x256xf32>
    %c0_22 = arith.constant 0 : index
    %c11 = arith.constant 11 : index
    %c0_23 = arith.constant 0 : index
    %23 = vector.load %arg1[%c0_22, %c11, %c0_23] : memref<1x108x128xbf16, #tpu.memory_space<vmem>>, vector<1x80x128xbf16>
    %24 = vector.shape_cast %23 : vector<1x80x128xbf16> to vector<80x128xbf16>
    %c4 = arith.constant 4 : index
    %c0_24 = arith.constant 0 : index
    %c0_25 = arith.constant 0 : index
    %25 = vector.load %arg2[%c4, %c0_24, %c0_25] : memref<9x128x256xbf16, #tpu.memory_space<vmem>>, vector<1x128x256xbf16>
    %26 = vector.shape_cast %25 : vector<1x128x256xbf16> to vector<128x256xbf16>
    %cst_26 = arith.constant dense<0.000000e+00> : vector<80x256xf32>
    %27 = tpu.matmul %24, %26, %cst_26 {dimension_numbers = #tpu.dot_dimension_numbers<[1], [0], [0], [1], [0, 0, 1, 1], [], []>} : vector<80x128xbf16>, vector<128x256xbf16>, vector<80x256xf32> -> vector<80x256xf32>
    %28 = arith.addf %22, %27 : vector<80x256xf32>
    %c0_27 = arith.constant 0 : index
    %c12 = arith.constant 12 : index
    %c0_28 = arith.constant 0 : index
    %29 = vector.load %arg1[%c0_27, %c12, %c0_28] : memref<1x108x128xbf16, #tpu.memory_space<vmem>>, vector<1x80x128xbf16>
    %30 = vector.shape_cast %29 : vector<1x80x128xbf16> to vector<80x128xbf16>
    %c5 = arith.constant 5 : index
    %c0_29 = arith.constant 0 : index
    %c0_30 = arith.constant 0 : index
    %31 = vector.load %arg2[%c5, %c0_29, %c0_30] : memref<9x128x256xbf16, #tpu.memory_space<vmem>>, vector<1x128x256xbf16>
    %32 = vector.shape_cast %31 : vector<1x128x256xbf16> to vector<128x256xbf16>
    %cst_31 = arith.constant dense<0.000000e+00> : vector<80x256xf32>
    %33 = tpu.matmul %30, %32, %cst_31 {dimension_numbers = #tpu.dot_dimension_numbers<[1], [0], [0], [1], [0, 0, 1, 1], [], []>} : vector<80x128xbf16>, vector<128x256xbf16>, vector<80x256xf32> -> vector<80x256xf32>
    %34 = arith.addf %28, %33 : vector<80x256xf32>
    %c0_32 = arith.constant 0 : index
    %c20 = arith.constant 20 : index
    %c0_33 = arith.constant 0 : index
    %35 = vector.load %arg1[%c0_32, %c20, %c0_33] : memref<1x108x128xbf16, #tpu.memory_space<vmem>>, vector<1x80x128xbf16>
    %36 = vector.shape_cast %35 : vector<1x80x128xbf16> to vector<80x128xbf16>
    %c6 = arith.constant 6 : index
    %c0_34 = arith.constant 0 : index
    %c0_35 = arith.constant 0 : index
    %37 = vector.load %arg2[%c6, %c0_34, %c0_35] : memref<9x128x256xbf16, #tpu.memory_space<vmem>>, vector<1x128x256xbf16>
    %38 = vector.shape_cast %37 : vector<1x128x256xbf16> to vector<128x256xbf16>
    %cst_36 = arith.constant dense<0.000000e+00> : vector<80x256xf32>
    %39 = tpu.matmul %36, %38, %cst_36 {dimension_numbers = #tpu.dot_dimension_numbers<[1], [0], [0], [1], [0, 0, 1, 1], [], []>} : vector<80x128xbf16>, vector<128x256xbf16>, vector<80x256xf32> -> vector<80x256xf32>
    %40 = arith.addf %34, %39 : vector<80x256xf32>
    %c0_37 = arith.constant 0 : index
    %c21 = arith.constant 21 : index
    %c0_38 = arith.constant 0 : index
    %41 = vector.load %arg1[%c0_37, %c21, %c0_38] : memref<1x108x128xbf16, #tpu.memory_space<vmem>>, vector<1x80x128xbf16>
    %42 = vector.shape_cast %41 : vector<1x80x128xbf16> to vector<80x128xbf16>
    %c7 = arith.constant 7 : index
    %c0_39 = arith.constant 0 : index
    %c0_40 = arith.constant 0 : index
    %43 = vector.load %arg2[%c7, %c0_39, %c0_40] : memref<9x128x256xbf16, #tpu.memory_space<vmem>>, vector<1x128x256xbf16>
    %44 = vector.shape_cast %43 : vector<1x128x256xbf16> to vector<128x256xbf16>
    %cst_41 = arith.constant dense<0.000000e+00> : vector<80x256xf32>
    %45 = tpu.matmul %42, %44, %cst_41 {dimension_numbers = #tpu.dot_dimension_numbers<[1], [0], [0], [1], [0, 0, 1, 1], [], []>} : vector<80x128xbf16>, vector<128x256xbf16>, vector<80x256xf32> -> vector<80x256xf32>
    %46 = arith.addf %40, %45 : vector<80x256xf32>
    %c0_42 = arith.constant 0 : index
    %c22 = arith.constant 22 : index
    %c0_43 = arith.constant 0 : index
    %47 = vector.load %arg1[%c0_42, %c22, %c0_43] : memref<1x108x128xbf16, #tpu.memory_space<vmem>>, vector<1x80x128xbf16>
    %48 = vector.shape_cast %47 : vector<1x80x128xbf16> to vector<80x128xbf16>
    %c8 = arith.constant 8 : index
    %c0_44 = arith.constant 0 : index
    %c0_45 = arith.constant 0 : index
    %49 = vector.load %arg2[%c8, %c0_44, %c0_45] : memref<9x128x256xbf16, #tpu.memory_space<vmem>>, vector<1x128x256xbf16>
    %50 = vector.shape_cast %49 : vector<1x128x256xbf16> to vector<128x256xbf16>
    %cst_46 = arith.constant dense<0.000000e+00> : vector<80x256xf32>
    %51 = tpu.matmul %48, %50, %cst_46 {dimension_numbers = #tpu.dot_dimension_numbers<[1], [0], [0], [1], [0, 0, 1, 1], [], []>} : vector<80x128xbf16>, vector<128x256xbf16>, vector<80x256xf32> -> vector<80x256xf32>
    %52 = arith.addf %46, %51 : vector<80x256xf32>
    %53 = vector.extract_strided_slice %52 {offsets = [0, 0], sizes = [80, 64], strides = [1, 1]} : vector<80x256xf32> to vector<80x64xf32>
    %54 = vector.extract_strided_slice %52 {offsets = [0, 64], sizes = [80, 64], strides = [1, 1]} : vector<80x256xf32> to vector<80x64xf32>
    %55 = arith.maximumf %53, %54 : vector<80x64xf32>
    %56 = vector.extract_strided_slice %52 {offsets = [0, 128], sizes = [80, 64], strides = [1, 1]} : vector<80x256xf32> to vector<80x64xf32>
    %57 = vector.extract_strided_slice %52 {offsets = [0, 192], sizes = [80, 64], strides = [1, 1]} : vector<80x256xf32> to vector<80x64xf32>
    %58 = arith.maximumf %56, %57 : vector<80x64xf32>
    %59 = arith.maximumf %55, %58 : vector<80x64xf32>
    %c0_47 = arith.constant 0 : index
    %c0_48 = arith.constant 0 : index
    %60 = vector.load %arg3[%c0_47, %c0_48] : memref<1x64xf32, #tpu.memory_space<vmem>>, vector<1x64xf32>
    %61 = vector.broadcast %60 : vector<1x64xf32> to vector<80x64xf32>
    %62 = arith.addf %59, %61 : vector<80x64xf32>
    %cst_49 = arith.constant 0.000000e+00 : f32
    %63 = vector.broadcast %cst_49 : f32 to vector<80x64xf32>
    %64 = arith.maximumf %62, %63 : vector<80x64xf32>
    %65 = arith.truncf %64 : vector<80x64xf32> to vector<80x64xbf16>
    %c0_50 = arith.constant 0 : index
    %c0_51 = arith.constant 0 : index
    %c0_52 = arith.constant 0 : index
    %66 = vector.load %arg4[%c0_50, %c0_51, %c0_52] : memref<1x80x64xbf16, #tpu.memory_space<vmem>>, vector<1x80x64xbf16>
    %67 = vector.shape_cast %66 : vector<1x80x64xbf16> to vector<80x64xbf16>
    %68 = vector.shape_cast %65 : vector<80x64xbf16> to vector<1x80x64xbf16>
    tpu.vector_store %arg4[%c0_50, %c0_51, %c0_52], %68 {strides = array<i32>} : memref<1x80x64xbf16, #tpu.memory_space<vmem>>, vector<1x80x64xbf16>,
    return
  }
  func.func @transform_0(%arg0: i32) -> (i32, i32, i32) {
    %c0_i32 = arith.constant 0 : i32
    %c0_i32_0 = arith.constant 0 : i32
    %c0_i32_1 = arith.constant 0 : i32
    return %arg0, %c0_i32, %c0_i32_0 : i32, i32, i32
  }
  func.func @transform_1(%arg0: i32) -> (i32, i32, i32) {
    %c0_i32 = arith.constant 0 : i32
    %c0_i32_0 = arith.constant 0 : i32
    %c0_i32_1 = arith.constant 0 : i32
    %c0_i32_2 = arith.constant 0 : i32
    return %c0_i32, %c0_i32_0, %c0_i32_1 : i32, i32, i32
  }
  func.func @transform_2(%arg0: i32) -> (i32, i32) {
    %c0_i32 = arith.constant 0 : i32
    %c0_i32_0 = arith.constant 0 : i32
    %c0_i32_1 = arith.constant 0 : i32
    return %c0_i32, %c0_i32_0 : i32, i32
  }
  func.func @transform_3(%arg0: i32) -> (i32, i32, i32) {
    %c0_i32 = arith.constant 0 : i32
    %c0_i32_0 = arith.constant 0 : i32
    %c0_i32_1 = arith.constant 0 : i32
    return %arg0, %c0_i32, %c0_i32_0 : i32, i32, i32
  }
}

module attributes {stable_mosaic.version = 11 : i64} {
  func.func @conv_relu_pool_kernel(%arg0: i32, %arg1: memref<1x44x256xbf16, #tpu.memory_space<vmem>>, %arg2: memref<9x256x512xbf16, #tpu.memory_space<vmem>>, %arg3: memref<1x128xf32, #tpu.memory_space<vmem>>, %arg4: memref<1x24x128xbf16, #tpu.memory_space<vmem>>) attributes {dimension_semantics = [#tpu.dimension_semantics<parallel>], iteration_bounds = array<i64: 2>, scalar_prefetch = 0 : i64, scratch_operands = 0 : i64, tpu.core_type = #tpu.core_type<tc>, window_params = [{transform_indices = @transform_0, window_bounds = array<i64: 1, 44, 256>}, {pipeline_mode = #tpu.pipeline_mode<synchronous>, transform_indices = @transform_1, window_bounds = array<i64: 9, 256, 512>}, {pipeline_mode = #tpu.pipeline_mode<synchronous>, transform_indices = @transform_2, window_bounds = array<i64: 1, 128>}, {transform_indices = @transform_3, window_bounds = array<i64: 1, 24, 128>}]} {
    %c0 = arith.constant 0 : index
    %c0_0 = arith.constant 0 : index
    %c0_1 = arith.constant 0 : index
    %0 = vector.load %arg1[%c0, %c0_0, %c0_1] : memref<1x44x256xbf16, #tpu.memory_space<vmem>>, vector<1x24x256xbf16>
    %1 = vector.shape_cast %0 : vector<1x24x256xbf16> to vector<24x256xbf16>
    %c0_2 = arith.constant 0 : index
    %c0_3 = arith.constant 0 : index
    %c0_4 = arith.constant 0 : index
    %2 = vector.load %arg2[%c0_2, %c0_3, %c0_4] : memref<9x256x512xbf16, #tpu.memory_space<vmem>>, vector<1x256x512xbf16>
    %3 = vector.shape_cast %2 : vector<1x256x512xbf16> to vector<256x512xbf16>
    %cst = arith.constant dense<0.000000e+00> : vector<24x512xf32>
    %4 = tpu.matmul %1, %3, %cst {dimension_numbers = #tpu.dot_dimension_numbers<[1], [0], [0], [1], [0, 0, 1, 1], [], []>} : vector<24x256xbf16>, vector<256x512xbf16>, vector<24x512xf32> -> vector<24x512xf32>
    %c0_5 = arith.constant 0 : index
    %c1 = arith.constant 1 : index
    %c0_6 = arith.constant 0 : index
    %5 = vector.load %arg1[%c0_5, %c1, %c0_6] : memref<1x44x256xbf16, #tpu.memory_space<vmem>>, vector<1x24x256xbf16>
    %6 = vector.shape_cast %5 : vector<1x24x256xbf16> to vector<24x256xbf16>
    %c1_7 = arith.constant 1 : index
    %c0_8 = arith.constant 0 : index
    %c0_9 = arith.constant 0 : index
    %7 = vector.load %arg2[%c1_7, %c0_8, %c0_9] : memref<9x256x512xbf16, #tpu.memory_space<vmem>>, vector<1x256x512xbf16>
    %8 = vector.shape_cast %7 : vector<1x256x512xbf16> to vector<256x512xbf16>
    %cst_10 = arith.constant dense<0.000000e+00> : vector<24x512xf32>
    %9 = tpu.matmul %6, %8, %cst_10 {dimension_numbers = #tpu.dot_dimension_numbers<[1], [0], [0], [1], [0, 0, 1, 1], [], []>} : vector<24x256xbf16>, vector<256x512xbf16>, vector<24x512xf32> -> vector<24x512xf32>
    %10 = arith.addf %4, %9 : vector<24x512xf32>
    %c0_11 = arith.constant 0 : index
    %c2 = arith.constant 2 : index
    %c0_12 = arith.constant 0 : index
    %11 = vector.load %arg1[%c0_11, %c2, %c0_12] : memref<1x44x256xbf16, #tpu.memory_space<vmem>>, vector<1x24x256xbf16>
    %12 = vector.shape_cast %11 : vector<1x24x256xbf16> to vector<24x256xbf16>
    %c2_13 = arith.constant 2 : index
    %c0_14 = arith.constant 0 : index
    %c0_15 = arith.constant 0 : index
    %13 = vector.load %arg2[%c2_13, %c0_14, %c0_15] : memref<9x256x512xbf16, #tpu.memory_space<vmem>>, vector<1x256x512xbf16>
    %14 = vector.shape_cast %13 : vector<1x256x512xbf16> to vector<256x512xbf16>
    %cst_16 = arith.constant dense<0.000000e+00> : vector<24x512xf32>
    %15 = tpu.matmul %12, %14, %cst_16 {dimension_numbers = #tpu.dot_dimension_numbers<[1], [0], [0], [1], [0, 0, 1, 1], [], []>} : vector<24x256xbf16>, vector<256x512xbf16>, vector<24x512xf32> -> vector<24x512xf32>
    %16 = arith.addf %10, %15 : vector<24x512xf32>
    %c0_17 = arith.constant 0 : index
    %c6 = arith.constant 6 : index
    %c0_18 = arith.constant 0 : index
    %17 = vector.load %arg1[%c0_17, %c6, %c0_18] : memref<1x44x256xbf16, #tpu.memory_space<vmem>>, vector<1x24x256xbf16>
    %18 = vector.shape_cast %17 : vector<1x24x256xbf16> to vector<24x256xbf16>
    %c3 = arith.constant 3 : index
    %c0_19 = arith.constant 0 : index
    %c0_20 = arith.constant 0 : index
    %19 = vector.load %arg2[%c3, %c0_19, %c0_20] : memref<9x256x512xbf16, #tpu.memory_space<vmem>>, vector<1x256x512xbf16>
    %20 = vector.shape_cast %19 : vector<1x256x512xbf16> to vector<256x512xbf16>
    %cst_21 = arith.constant dense<0.000000e+00> : vector<24x512xf32>
    %21 = tpu.matmul %18, %20, %cst_21 {dimension_numbers = #tpu.dot_dimension_numbers<[1], [0], [0], [1], [0, 0, 1, 1], [], []>} : vector<24x256xbf16>, vector<256x512xbf16>, vector<24x512xf32> -> vector<24x512xf32>
    %22 = arith.addf %16, %21 : vector<24x512xf32>
    %c0_22 = arith.constant 0 : index
    %c7 = arith.constant 7 : index
    %c0_23 = arith.constant 0 : index
    %23 = vector.load %arg1[%c0_22, %c7, %c0_23] : memref<1x44x256xbf16, #tpu.memory_space<vmem>>, vector<1x24x256xbf16>
    %24 = vector.shape_cast %23 : vector<1x24x256xbf16> to vector<24x256xbf16>
    %c4 = arith.constant 4 : index
    %c0_24 = arith.constant 0 : index
    %c0_25 = arith.constant 0 : index
    %25 = vector.load %arg2[%c4, %c0_24, %c0_25] : memref<9x256x512xbf16, #tpu.memory_space<vmem>>, vector<1x256x512xbf16>
    %26 = vector.shape_cast %25 : vector<1x256x512xbf16> to vector<256x512xbf16>
    %cst_26 = arith.constant dense<0.000000e+00> : vector<24x512xf32>
    %27 = tpu.matmul %24, %26, %cst_26 {dimension_numbers = #tpu.dot_dimension_numbers<[1], [0], [0], [1], [0, 0, 1, 1], [], []>} : vector<24x256xbf16>, vector<256x512xbf16>, vector<24x512xf32> -> vector<24x512xf32>
    %28 = arith.addf %22, %27 : vector<24x512xf32>
    %c0_27 = arith.constant 0 : index
    %c8 = arith.constant 8 : index
    %c0_28 = arith.constant 0 : index
    %29 = vector.load %arg1[%c0_27, %c8, %c0_28] : memref<1x44x256xbf16, #tpu.memory_space<vmem>>, vector<1x24x256xbf16>
    %30 = vector.shape_cast %29 : vector<1x24x256xbf16> to vector<24x256xbf16>
    %c5 = arith.constant 5 : index
    %c0_29 = arith.constant 0 : index
    %c0_30 = arith.constant 0 : index
    %31 = vector.load %arg2[%c5, %c0_29, %c0_30] : memref<9x256x512xbf16, #tpu.memory_space<vmem>>, vector<1x256x512xbf16>
    %32 = vector.shape_cast %31 : vector<1x256x512xbf16> to vector<256x512xbf16>
    %cst_31 = arith.constant dense<0.000000e+00> : vector<24x512xf32>
    %33 = tpu.matmul %30, %32, %cst_31 {dimension_numbers = #tpu.dot_dimension_numbers<[1], [0], [0], [1], [0, 0, 1, 1], [], []>} : vector<24x256xbf16>, vector<256x512xbf16>, vector<24x512xf32> -> vector<24x512xf32>
    %34 = arith.addf %28, %33 : vector<24x512xf32>
    %c0_32 = arith.constant 0 : index
    %c12 = arith.constant 12 : index
    %c0_33 = arith.constant 0 : index
    %35 = vector.load %arg1[%c0_32, %c12, %c0_33] : memref<1x44x256xbf16, #tpu.memory_space<vmem>>, vector<1x24x256xbf16>
    %36 = vector.shape_cast %35 : vector<1x24x256xbf16> to vector<24x256xbf16>
    %c6_34 = arith.constant 6 : index
    %c0_35 = arith.constant 0 : index
    %c0_36 = arith.constant 0 : index
    %37 = vector.load %arg2[%c6_34, %c0_35, %c0_36] : memref<9x256x512xbf16, #tpu.memory_space<vmem>>, vector<1x256x512xbf16>
    %38 = vector.shape_cast %37 : vector<1x256x512xbf16> to vector<256x512xbf16>
    %cst_37 = arith.constant dense<0.000000e+00> : vector<24x512xf32>
    %39 = tpu.matmul %36, %38, %cst_37 {dimension_numbers = #tpu.dot_dimension_numbers<[1], [0], [0], [1], [0, 0, 1, 1], [], []>} : vector<24x256xbf16>, vector<256x512xbf16>, vector<24x512xf32> -> vector<24x512xf32>
    %40 = arith.addf %34, %39 : vector<24x512xf32>
    %c0_38 = arith.constant 0 : index
    %c13 = arith.constant 13 : index
    %c0_39 = arith.constant 0 : index
    %41 = vector.load %arg1[%c0_38, %c13, %c0_39] : memref<1x44x256xbf16, #tpu.memory_space<vmem>>, vector<1x24x256xbf16>
    %42 = vector.shape_cast %41 : vector<1x24x256xbf16> to vector<24x256xbf16>
    %c7_40 = arith.constant 7 : index
    %c0_41 = arith.constant 0 : index
    %c0_42 = arith.constant 0 : index
    %43 = vector.load %arg2[%c7_40, %c0_41, %c0_42] : memref<9x256x512xbf16, #tpu.memory_space<vmem>>, vector<1x256x512xbf16>
    %44 = vector.shape_cast %43 : vector<1x256x512xbf16> to vector<256x512xbf16>
    %cst_43 = arith.constant dense<0.000000e+00> : vector<24x512xf32>
    %45 = tpu.matmul %42, %44, %cst_43 {dimension_numbers = #tpu.dot_dimension_numbers<[1], [0], [0], [1], [0, 0, 1, 1], [], []>} : vector<24x256xbf16>, vector<256x512xbf16>, vector<24x512xf32> -> vector<24x512xf32>
    %46 = arith.addf %40, %45 : vector<24x512xf32>
    %c0_44 = arith.constant 0 : index
    %c14 = arith.constant 14 : index
    %c0_45 = arith.constant 0 : index
    %47 = vector.load %arg1[%c0_44, %c14, %c0_45] : memref<1x44x256xbf16, #tpu.memory_space<vmem>>, vector<1x24x256xbf16>
    %48 = vector.shape_cast %47 : vector<1x24x256xbf16> to vector<24x256xbf16>
    %c8_46 = arith.constant 8 : index
    %c0_47 = arith.constant 0 : index
    %c0_48 = arith.constant 0 : index
    %49 = vector.load %arg2[%c8_46, %c0_47, %c0_48] : memref<9x256x512xbf16, #tpu.memory_space<vmem>>, vector<1x256x512xbf16>
    %50 = vector.shape_cast %49 : vector<1x256x512xbf16> to vector<256x512xbf16>
    %cst_49 = arith.constant dense<0.000000e+00> : vector<24x512xf32>
    %51 = tpu.matmul %48, %50, %cst_49 {dimension_numbers = #tpu.dot_dimension_numbers<[1], [0], [0], [1], [0, 0, 1, 1], [], []>} : vector<24x256xbf16>, vector<256x512xbf16>, vector<24x512xf32> -> vector<24x512xf32>
    %52 = arith.addf %46, %51 : vector<24x512xf32>
    %53 = vector.extract_strided_slice %52 {offsets = [0, 0], sizes = [24, 128], strides = [1, 1]} : vector<24x512xf32> to vector<24x128xf32>
    %54 = vector.extract_strided_slice %52 {offsets = [0, 128], sizes = [24, 128], strides = [1, 1]} : vector<24x512xf32> to vector<24x128xf32>
    %55 = arith.maximumf %53, %54 : vector<24x128xf32>
    %56 = vector.extract_strided_slice %52 {offsets = [0, 256], sizes = [24, 128], strides = [1, 1]} : vector<24x512xf32> to vector<24x128xf32>
    %57 = vector.extract_strided_slice %52 {offsets = [0, 384], sizes = [24, 128], strides = [1, 1]} : vector<24x512xf32> to vector<24x128xf32>
    %58 = arith.maximumf %56, %57 : vector<24x128xf32>
    %59 = arith.maximumf %55, %58 : vector<24x128xf32>
    %c0_50 = arith.constant 0 : index
    %c0_51 = arith.constant 0 : index
    %60 = vector.load %arg3[%c0_50, %c0_51] : memref<1x128xf32, #tpu.memory_space<vmem>>, vector<1x128xf32>
    %61 = vector.broadcast %60 : vector<1x128xf32> to vector<24x128xf32>
    %62 = arith.addf %59, %61 : vector<24x128xf32>
    %cst_52 = arith.constant 0.000000e+00 : f32
    %63 = vector.broadcast %cst_52 : f32 to vector<24x128xf32>
    %64 = arith.maximumf %62, %63 : vector<24x128xf32>
    %65 = arith.truncf %64 : vector<24x128xf32> to vector<24x128xbf16>
    %c0_53 = arith.constant 0 : index
    %c0_54 = arith.constant 0 : index
    %c0_55 = arith.constant 0 : index
    %66 = vector.load %arg4[%c0_53, %c0_54, %c0_55] : memref<1x24x128xbf16, #tpu.memory_space<vmem>>, vector<1x24x128xbf16>
    %67 = vector.shape_cast %66 : vector<1x24x128xbf16> to vector<24x128xbf16>
    %68 = vector.shape_cast %65 : vector<24x128xbf16> to vector<1x24x128xbf16>
    tpu.vector_store %arg4[%c0_53, %c0_54, %c0_55], %68 {strides = array<i32>} : memref<1x24x128xbf16, #tpu.memory_space<vmem>>, vector<1x24x128xbf16>,
    return
  }
  func.func @transform_0(%arg0: i32) -> (i32, i32, i32) {
    %c0_i32 = arith.constant 0 : i32
    %c0_i32_0 = arith.constant 0 : i32
    %c0_i32_1 = arith.constant 0 : i32
    return %arg0, %c0_i32, %c0_i32_0 : i32, i32, i32
  }
  func.func @transform_1(%arg0: i32) -> (i32, i32, i32) {
    %c0_i32 = arith.constant 0 : i32
    %c0_i32_0 = arith.constant 0 : i32
    %c0_i32_1 = arith.constant 0 : i32
    %c0_i32_2 = arith.constant 0 : i32
    return %c0_i32, %c0_i32_0, %c0_i32_1 : i32, i32, i32
  }
  func.func @transform_2(%arg0: i32) -> (i32, i32) {
    %c0_i32 = arith.constant 0 : i32
    %c0_i32_0 = arith.constant 0 : i32
    %c0_i32_1 = arith.constant 0 : i32
    return %c0_i32, %c0_i32_0 : i32, i32
  }
  func.func @transform_3(%arg0: i32) -> (i32, i32, i32) {
    %c0_i32 = arith.constant 0 : i32
    %c0_i32_0 = arith.constant 0 : i32
    %c0_i32_1 = arith.constant 0 : i32
    return %arg0, %c0_i32, %c0_i32_0 : i32, i32, i32
  }
}

module attributes {stable_mosaic.version = 11 : i64} {
  func.func @mlp_kernel(%arg0: i32, %arg1: memref<2x2048xbf16, #tpu.memory_space<vmem>>, %arg2: memref<2048x128xbf16, #tpu.memory_space<vmem>>, %arg3: memref<1x128xf32, #tpu.memory_space<vmem>>, %arg4: memref<128x128xbf16, #tpu.memory_space<vmem>>, %arg5: memref<1x128xf32, #tpu.memory_space<vmem>>, %arg6: memref<2x128xf32, #tpu.memory_space<vmem>>) attributes {dimension_semantics = [#tpu.dimension_semantics<parallel>], iteration_bounds = array<i64: 1>, scalar_prefetch = 0 : i64, scratch_operands = 0 : i64, tpu.core_type = #tpu.core_type<tc>, window_params = [{transform_indices = @transform_0, window_bounds = array<i64: 2, 2048>}, {pipeline_mode = #tpu.pipeline_mode<synchronous>, transform_indices = @transform_1, window_bounds = array<i64: 2048, 128>}, {pipeline_mode = #tpu.pipeline_mode<synchronous>, transform_indices = @transform_2, window_bounds = array<i64: 1, 128>}, {pipeline_mode = #tpu.pipeline_mode<synchronous>, transform_indices = @transform_3, window_bounds = array<i64: 128, 128>}, {pipeline_mode = #tpu.pipeline_mode<synchronous>, transform_indices = @transform_4, window_bounds = array<i64: 1, 128>}, {transform_indices = @transform_5, window_bounds = array<i64: 2, 128>}]} {
    %c0 = arith.constant 0 : index
    %c0_0 = arith.constant 0 : index
    %0 = vector.load %arg1[%c0, %c0_0] : memref<2x2048xbf16, #tpu.memory_space<vmem>>, vector<2x2048xbf16>
    %c0_1 = arith.constant 0 : index
    %c0_2 = arith.constant 0 : index
    %1 = vector.load %arg2[%c0_1, %c0_2] : memref<2048x128xbf16, #tpu.memory_space<vmem>>, vector<2048x128xbf16>
    %cst = arith.constant dense<0.000000e+00> : vector<2x128xf32>
    %2 = tpu.matmul %0, %1, %cst {dimension_numbers = #tpu.dot_dimension_numbers<[1], [0], [0], [1], [0, 0, 1, 1], [], []>} : vector<2x2048xbf16>, vector<2048x128xbf16>, vector<2x128xf32> -> vector<2x128xf32>
    %c0_3 = arith.constant 0 : index
    %c0_4 = arith.constant 0 : index
    %3 = vector.load %arg3[%c0_3, %c0_4] : memref<1x128xf32, #tpu.memory_space<vmem>>, vector<1x128xf32>
    %4 = vector.broadcast %3 : vector<1x128xf32> to vector<2x128xf32>
    %5 = arith.addf %2, %4 : vector<2x128xf32>
    %cst_5 = arith.constant 0.000000e+00 : f32
    %6 = vector.broadcast %cst_5 : f32 to vector<2x128xf32>
    %7 = arith.maximumf %5, %6 : vector<2x128xf32>
    %8 = arith.truncf %7 : vector<2x128xf32> to vector<2x128xbf16>
    %c0_6 = arith.constant 0 : index
    %c0_7 = arith.constant 0 : index
    %9 = vector.load %arg4[%c0_6, %c0_7] : memref<128x128xbf16, #tpu.memory_space<vmem>>, vector<128x128xbf16>
    %cst_8 = arith.constant dense<0.000000e+00> : vector<2x128xf32>
    %10 = tpu.matmul %8, %9, %cst_8 {dimension_numbers = #tpu.dot_dimension_numbers<[1], [0], [0], [1], [0, 0, 1, 1], [], []>} : vector<2x128xbf16>, vector<128x128xbf16>, vector<2x128xf32> -> vector<2x128xf32>
    %c0_9 = arith.constant 0 : index
    %c0_10 = arith.constant 0 : index
    %11 = vector.load %arg5[%c0_9, %c0_10] : memref<1x128xf32, #tpu.memory_space<vmem>>, vector<1x128xf32>
    %12 = vector.broadcast %11 : vector<1x128xf32> to vector<2x128xf32>
    %13 = arith.addf %10, %12 : vector<2x128xf32>
    %c0_11 = arith.constant 0 : index
    %c0_12 = arith.constant 0 : index
    %14 = vector.load %arg6[%c0_11, %c0_12] : memref<2x128xf32, #tpu.memory_space<vmem>>, vector<2x128xf32>
    tpu.vector_store %arg6[%c0_11, %c0_12], %13 {strides = array<i32>} : memref<2x128xf32, #tpu.memory_space<vmem>>, vector<2x128xf32>,
    return
  }
  func.func @transform_0(%arg0: i32) -> (i32, i32) {
    %c0_i32 = arith.constant 0 : i32
    %c0_i32_0 = arith.constant 0 : i32
    return %arg0, %c0_i32 : i32, i32
  }
  func.func @transform_1(%arg0: i32) -> (i32, i32) {
    %c0_i32 = arith.constant 0 : i32
    %c0_i32_0 = arith.constant 0 : i32
    %c0_i32_1 = arith.constant 0 : i32
    return %c0_i32, %c0_i32_0 : i32, i32
  }
  func.func @transform_2(%arg0: i32) -> (i32, i32) {
    %c0_i32 = arith.constant 0 : i32
    %c0_i32_0 = arith.constant 0 : i32
    %c0_i32_1 = arith.constant 0 : i32
    return %c0_i32, %c0_i32_0 : i32, i32
  }
  func.func @transform_3(%arg0: i32) -> (i32, i32) {
    %c0_i32 = arith.constant 0 : i32
    %c0_i32_0 = arith.constant 0 : i32
    %c0_i32_1 = arith.constant 0 : i32
    return %c0_i32, %c0_i32_0 : i32, i32
  }
  func.func @transform_4(%arg0: i32) -> (i32, i32) {
    %c0_i32 = arith.constant 0 : i32
    %c0_i32_0 = arith.constant 0 : i32
    %c0_i32_1 = arith.constant 0 : i32
    return %c0_i32, %c0_i32_0 : i32, i32
  }
  func.func @transform_5(%arg0: i32) -> (i32, i32) {
    %c0_i32 = arith.constant 0 : i32
    %c0_i32_0 = arith.constant 0 : i32
    return %arg0, %c0_i32 : i32, i32
  }
}

</mosaic_0001>

<llo_original>
// kernel: example_model_forward.4
$region0: #{example_model_forward.4}
  #allocation0 [shape = 'u32[]', space=smem, size = 0x4, offset = 0x4, fixed_abs, tag = 'smem constant byte address 0x4 - core index']
  #allocation1 [shape = 'u32[144,128]{1,0:T(1,128)}', space=vmem, size = 0x12000, scoped, tag = 'internal scratch']
  %s0 = inlined_call_operand.vmem [shape: bf16[2,332,12], index: 0, kind: input, shape index: {}]
  %s1 = inlined_call_operand.vmem [shape: bf16[9,12,128], index: 1, kind: input, shape index: {}]
  %s2 = inlined_call_operand.vmem [shape: f32[1,32], index: 2, kind: input, shape index: {}]
  %s3 = inlined_call_operand.vmem [shape: bf16[2,288,32], index: 3, kind: output, shape index: {}]
  %s4 = sld [smem:[#allocation0]]
  $region45: #{example_model_forward.4} parent=0
    _
  %s6 = ssub.s32 1, %s4
  %s7 = scalar_select 0, %s6, %s4
  loop: start=0, step=1, limit=4
  $region2: #{example_model_forward.4} parent=0 // loop_pre_header
    _
  $region3: #{example_model_forward.4} parent=0 // loop_header
    %s9 = sphi 0, %s13
    %p10 = scmp.ge.s32.totalorder %s9, 4
    %s19 = sphi 0, %s21
    %s22 = sphi 0, %s19
    %s23 = sphi 0, %s22
    %s39 = sphi 0, %s23
    %s43 = sphi 0, %s43
    %s45 = sphi 0, %s43
    %s46 = sphi 0, %s45
    %s60 = sphi 0, %s46
    %s64 = sphi 0, %s64
    %s66 = sphi 0, %s64
    %s67 = sphi 0, %s66
    %s81 = sphi 0, %s67
    %s87 = sphi 0, %s89
    %s90 = sphi 0, %s87
    %s91 = sphi 0, %s90
    %s107 = sphi 0, %s91
  $region4: #{example_model_forward.4} parent=0 // loop_header_branch
    %12 = sbr.rel (%p10) target = $region8
  $region5: #{example_model_forward.4} parent=0 // loop_body
    %s14 = ssub.s32 %s9, 1
    %s15 = ssub.s32 %s9, 2
    %s16 = sadd.s32 %s9, 1
    %s17 = ssub.s32 %s9, %s16
    %p18 = scmp.eq.s32.totalorder %s17, 0
    %s20 = sadd.s32 %s19, 1
    %s21 = scalar_select %p18, %s19, %s20
    %p24 = pneg %p18
    %p25 = scmp.eq.s32.totalorder %s9, 1
    %p26 = por %p24, %p25
    %p27 = scmp.ne.s32.totalorder %s19, %s22
    %p28 = scmp.eq.s32.totalorder %s9, 0
    %p29 = por %p27, %p28
    %p30 = scmp.ne.s32.totalorder %s19, %s22
    %p31 = scmp.eq.s32.totalorder %s14, 1
    %p32 = por %p30, %p31
    %p33 = scmp.ne.s32.totalorder %s22, %s23
    %p34 = scmp.eq.s32.totalorder %s14, 0
    %p35 = por %p33, %p34
    %p36 = scmp.ne.s32.totalorder %s22, %s23
    %p37 = scmp.eq.s32.totalorder %s15, 1
    %p38 = por %p36, %p37
    %p40 = scmp.ne.s32.totalorder %s23, %s39
    %p41 = scmp.eq.s32.totalorder %s15, 0
    %p42 = por %p40, %p41
    %s44 = sadd.s32 %s43, 1
    %p47 = scmp.eq.s32.totalorder %s9, 1
    %p48 = scmp.ne.s32.totalorder %s43, %s45
    %p49 = scmp.eq.s32.totalorder %s9, 0
    %p50 = por %p48, %p49
    %p51 = scmp.ne.s32.totalorder %s43, %s45
    %p52 = scmp.eq.s32.totalorder %s14, 1
    %p53 = por %p51, %p52
    %p54 = scmp.ne.s32.totalorder %s45, %s46
    %p55 = scmp.eq.s32.totalorder %s14, 0
    %p56 = por %p54, %p55
    %p57 = scmp.ne.s32.totalorder %s45, %s46
    %p58 = scmp.eq.s32.totalorder %s15, 1
    %p59 = por %p57, %p58
    %p61 = scmp.ne.s32.totalorder %s46, %s60
    %p62 = scmp.eq.s32.totalorder %s15, 0
    %p63 = por %p61, %p62
    %s65 = sadd.s32 %s64, 1
    %p68 = scmp.eq.s32.totalorder %s9, 1
    %p69 = scmp.ne.s32.totalorder %s64, %s66
    %p70 = scmp.eq.s32.totalorder %s9, 0
    %p71 = por %p69, %p70
    %p72 = scmp.ne.s32.totalorder %s64, %s66
    %p73 = scmp.eq.s32.totalorder %s14, 1
    %p74 = por %p72, %p73
    %p75 = scmp.ne.s32.totalorder %s66, %s67
    %p76 = scmp.eq.s32.totalorder %s14, 0
    %p77 = por %p75, %p76
    %p78 = scmp.ne.s32.totalorder %s66, %s67
    %p79 = scmp.eq.s32.totalorder %s15, 1
    %p80 = por %p78, %p79
    %p82 = scmp.ne.s32.totalorder %s67, %s81
    %p83 = scmp.eq.s32.totalorder %s15, 0
    %p84 = por %p82, %p83
    %s85 = ssub.s32 %s9, %s16
    %p86 = scmp.eq.s32.totalorder %s85, 0
    %s88 = sadd.s32 %s87, 1
    %s89 = scalar_select %p86, %s87, %s88
    %p92 = pneg %p86
    %p93 = scmp.eq.s32.totalorder %s9, 1
    %p94 = por %p92, %p93
    %p95 = scmp.ne.s32.totalorder %s87, %s90
    %p96 = scmp.eq.s32.totalorder %s9, 0
    %p97 = por %p95, %p96
    %p98 = scmp.ne.s32.totalorder %s87, %s90
    %p99 = scmp.eq.s32.totalorder %s14, 1
    %p100 = por %p98, %p99
    %p101 = scmp.ne.s32.totalorder %s90, %s91
    %p102 = scmp.eq.s32.totalorder %s14, 0
    %p103 = por %p101, %p102
    %p104 = scmp.ne.s32.totalorder %s90, %s91
    %p105 = scmp.eq.s32.totalorder %s15, 1
    %p106 = por %p104, %p105
    %p108 = scmp.ne.s32.totalorder %s91, %s107
    %p109 = scmp.eq.s32.totalorder %s15, 0
    %p110 = por %p108, %p109
    %p111 = scmp.le.s32.totalorder 1, %s9
    %p112 = scmp.lt.s32.totalorder %s9, 3
    %p113 = pnand %p111, %p112
    %p114 = pneg %p113
    // Predicated region
    $region9: #{example_model_forward.4} parent=5 // pred_check
      _
    $region10: #{example_model_forward.4} parent=5 // pred_check_branch
      %116 = sbr.rel (%p113) target = $region12
    $region11: #{example_model_forward.4} parent=5 // pred_region
      %s117 = ssub.s32 %s9, 1
      // Predicated region
      $region13: #{example_model_forward.4} parent=11 // pred_check
        %p118 = pneg %p56
      $region14: #{example_model_forward.4} parent=11 // pred_check_branch
        %120 = sbr.rel (%p118) target = $region16
      $region15: #{example_model_forward.4} parent=11 // pred_region
        _
      $region16: #{example_model_forward.4} parent=11 // pred_fallthru
        _
      // Predicated region
      $region17: #{example_model_forward.4} parent=11 // pred_check
        %p121 = pneg %p77
      $region18: #{example_model_forward.4} parent=11 // pred_check_branch
        %123 = sbr.rel (%p121) target = $region20
      $region19: #{example_model_forward.4} parent=11 // pred_region
        _
      $region20: #{example_model_forward.4} parent=11 // pred_fallthru
        _
    $region12: #{example_model_forward.4} parent=5 // pred_fallthru
      _
    %p124 = scmp.lt.s32.totalorder %s9, 2
    // Predicated region
    $region21: #{example_model_forward.4} parent=5 // pred_check
      %p125 = pneg %p124
    $region22: #{example_model_forward.4} parent=5 // pred_check_branch
      %127 = sbr.rel (%p125) target = $region24
    $region23: #{example_model_forward.4} parent=5 // pred_region
      // Predicated region
      $region25: #{example_model_forward.4} parent=23 // pred_check
        %p128 = pneg %p29
      $region26: #{example_model_forward.4} parent=23 // pred_check_branch
        %130 = sbr.rel (%p128) target = $region28
      $region27: #{example_model_forward.4} parent=23 // pred_region
        %p131 = scmp.lt.s32.totalorder %s9, 1
        %s132 = scalar_select %p131, %s9, 1
        %s133 = smul.addr %s132, 42
        %s134 = smul.addr %s133, 4
        %s135 = scalar_lea.vmem %s0, %s134
      $region28: #{example_model_forward.4} parent=23 // pred_fallthru
        _
    $region24: #{example_model_forward.4} parent=5 // pred_fallthru
      _
    %p136 = scmp.le.s32.totalorder 1, %s9
    %p137 = scmp.lt.s32.totalorder %s9, 3
    %p138 = pnand %p136, %p137
    %p139 = pneg %p138
    // Predicated region
    $region29: #{example_model_forward.4} parent=5 // pred_check
      _
    $region30: #{example_model_forward.4} parent=5 // pred_check_branch
      %141 = sbr.rel (%p138) target = $region32
    $region31: #{example_model_forward.4} parent=5 // pred_region
      %s142 = ssub.s32 %s9, 1
      %p143 = scmp.lt.s32.totalorder %s14, 1
      %s144 = scalar_select %p143, %s14, 1
      %s145 = smul.addr %s144, 42
      %s146 = smul.addr %s145, 4
      %s147 = scalar_lea.vmem %s0, %s146
      %p148 = pneg %p35
      %p149 = pneg %p32
      %p150 = pneg %p56
      %p151 = pneg %p53
      %p152 = pneg %p77
      %p153 = pneg %p74
      %p154 = pneg %p103
      %p155 = pneg %p100
      %p156 = scmp.lt.s32.totalorder %s14, 1
      %s157 = scalar_select %p156, %s14, 1
      %s158 = smul.addr %s157, 36
      %s159 = smul.addr %s158, 4
      %s160 = scalar_lea.vmem %s3, %s159
      %p161 = scmp.lt.s32.totalorder %s14, 1
      %s162 = scalar_select %p161, %s14, 1
      %s163 = smul.addr %s162, 42
      %s164 = smul.addr %s163, 4
      %s165 = scalar_lea.vmem %s0, %s164
      %p166 = scmp.lt.s32.totalorder %s14, 1
      %s167 = scalar_select %p166, %s14, 1
      %s168 = smul.addr %s167, 36
      %s169 = smul.addr %s168, 4
      %s170 = scalar_lea.vmem %s3, %s169
      %v172 = vld [vmem:[%s165] sm:$0xf]
      %v173 = vld [vmem:[%s165 + $0x4] sm:$0xf]
      %v174 = vld [vmem:[%s165 + $0x8] sm:$0xf]
      %v175 = vld [vmem:[%s165 + $0xc] sm:$0xf]
      %v176 = vld [vmem:[%s165 + $0x10] sm:$0xf]
      %v177 = vld [vmem:[%s165 + $0x14] sm:$0xf]
      %v178 = vld [vmem:[%s165 + $0x18] sm:$0xf]
      %v179 = vld [vmem:[%s165 + $0x1c] sm:$0xf]
      %v180 = vld [vmem:[%s165 + $0x20] sm:$0xf]
      %v181 = vld [vmem:[%s165 + $0x24] sm:$0xf]
      %v182 = vld [vmem:[%s165 + $0x28] sm:$0xf]
      %v183 = vld [vmem:[%s165 + $0x2c] sm:$0xf]
      %v184 = vld [vmem:[%s165 + $0x30] sm:$0xf]
      %v185 = vld [vmem:[%s165 + $0x34] sm:$0xf]
      %v186 = vld [vmem:[%s165 + $0x38] sm:$0xf]
      %v187 = vld [vmem:[%s165 + $0x3c] sm:$0xf]
      %v188 = vld [vmem:[%s165 + $0x40] sm:$0xf]
      %v189 = vld [vmem:[%s165 + $0x44] sm:$0xf]
      %v190 = vld [vmem:[%s165 + $0x48] sm:$0xf]
      %v191 = vld [vmem:[%s165 + $0x4c] sm:$0xf]
      %v192 = vld [vmem:[%s165 + $0x50] sm:$0xf]
      %v193 = vld [vmem:[%s165 + $0x54] sm:$0xf]
      %v194 = vld [vmem:[%s165 + $0x58] sm:$0xf]
      %v195 = vld [vmem:[%s165 + $0x5c] sm:$0xf]
      %v196 = vld [vmem:[%s165 + $0x60] sm:$0xf]
      %v197 = vld [vmem:[%s165 + $0x64] sm:$0xf]
      %v198 = vld [vmem:[%s165 + $0x68] sm:$0xf]
      %v199 = vld [vmem:[%s165 + $0x6c] sm:$0xf]
      %v200 = vld [vmem:[%s165 + $0x70] sm:$0xf]
      %v201 = vld [vmem:[%s165 + $0x74] sm:$0xf]
      %v202 = vld [vmem:[%s165 + $0x78] sm:$0xf]
      %v203 = vld [vmem:[%s165 + $0x7c] sm:$0xf]
      %v204 = vld [vmem:[%s165 + $0x80] sm:$0xf]
      %v205 = vld [vmem:[%s165 + $0x84] sm:$0xf]
      %v206 = vld [vmem:[%s165 + $0x88] sm:$0xf]
      %v207 = vld [vmem:[%s165 + $0x8c] sm:$0xf]
      %v208 = vld [vmem:[%s1] sm:$0xf]
      %v209 = vld [vmem:[%s1 + $0x4] sm:$0x3]
      %v210 = vld [vmem:[%s165 + $0x90] sm:$0x1]
      %s211 = scalar_lea.vmem %s1, 8
      %v212 = vld [vmem:[%s211] sm:$0xf]
      %v213 = vld [vmem:[%s211 + $0x4] sm:$0x3]
      %v251 = vunpack.c.l.b16 %v172
      %v252 = vunpack.c.l.b16 %v173
      %v253 = vunpack.c.l.b16 %v174
      %v254 = vunpack.c.l.b16 %v175
      %v255 = vunpack.c.l.b16 %v176
      %v256 = vunpack.c.l.b16 %v177
      %v257 = vunpack.c.l.b16 %v178
      %v258 = vunpack.c.l.b16 %v179
      %v259 = vunpack.c.l.b16 %v180
      %v260 = vunpack.c.l.b16 %v181
      %v261 = vunpack.c.l.b16 %v182
      %v262 = vunpack.c.l.b16 %v183
      %v263 = vunpack.c.l.b16 %v184
      %v264 = vunpack.c.l.b16 %v185
      %v265 = vunpack.c.l.b16 %v186
      %v266 = vunpack.c.l.b16 %v187
      %v267 = vunpack.c.l.b16 %v188
      %v268 = vunpack.c.l.b16 %v189
      %v269 = vunpack.c.l.b16 %v190
      %v270 = vunpack.c.l.b16 %v191
      %v271 = vunpack.c.l.b16 %v192
      %v272 = vunpack.c.l.b16 %v193
      %v273 = vunpack.c.l.b16 %v194
      %v274 = vunpack.c.l.b16 %v195
      %v275 = vunpack.c.l.b16 %v196
      %v276 = vunpack.c.l.b16 %v197
      %v277 = vunpack.c.l.b16 %v198
      %v278 = vunpack.c.l.b16 %v199
      %v279 = vunpack.c.l.b16 %v200
      %v280 = vunpack.c.l.b16 %v201
      %v281 = vunpack.c.l.b16 %v202
      %v282 = vunpack.c.l.b16 %v203
      %v283 = vunpack.c.l.b16 %v204
      %v284 = vunpack.c.l.b16 %v205
      %v285 = vunpack.c.l.b16 %v206
      %v286 = vunpack.c.l.b16 %v207
      %v287 = vunpack.c.l.b16 %v210
      %v288 = vpack.c.b16 %v252, %v251
      %v289 = vpack.c.b16 %v254, %v253
      %v290 = vpack.c.b16 %v256, %v255
      %v291 = vpack.c.b16 %v258, %v257
      %v292 = vpack.c.b16 %v260, %v259
      %v293 = vpack.c.b16 %v262, %v261
      %v294 = vpack.c.b16 %v264, %v263
      %v295 = vpack.c.b16 %v266, %v265
      %v296 = vpack.c.b16 %v268, %v267
      %v297 = vpack.c.b16 %v270, %v269
      %v298 = vpack.c.b16 %v272, %v271
      %v299 = vpack.c.b16 %v274, %v273
      %v300 = vpack.c.b16 %v276, %v275
      %v301 = vpack.c.b16 %v278, %v277
      %v302 = vpack.c.b16 %v280, %v279
      %v303 = vpack.c.b16 %v282, %v281
      %v304 = vpack.c.b16 %v284, %v283
      %v305 = vpack.c.b16 %v286, %v285
      %v306 = vpack.c.b16 %v287, %v287
      %vm307 = vsmask.f32 7424
      %v309 = vshrl.u32 %v288, 16
      %v311 = vshll.u32 %v288, 16
      %v313 = vrot.slane %v311, 1
      %v314 = vor.u32 %v309, %v313
      %v316 = vshll.u32 %v289, 16
      %v318 = vrot.slane %v316, 1
      %v319 = vsel %vm307, %v314, %v318
      %v320 = vshrl.u32 %v289, 16
      %v322 = vor.u32 %v320, %v318
      %v324 = vshll.u32 %v290, 16
      %v326 = vrot.slane %v324, 1
      %v327 = vsel %vm307, %v322, %v326
      %v328 = vshrl.u32 %v290, 16
      %v330 = vor.u32 %v328, %v326
      %v332 = vshll.u32 %v291, 16
      %v334 = vrot.slane %v332, 1
      %v335 = vsel %vm307, %v330, %v334
      %v336 = vshrl.u32 %v291, 16
      %v338 = vor.u32 %v336, %v334
      %v340 = vshll.u32 %v292, 16
      %v342 = vrot.slane %v340, 1
      %v343 = vsel %vm307, %v338, %v342
      %v344 = vshrl.u32 %v292, 16
      %v346 = vor.u32 %v344, %v342
      %v348 = vshll.u32 %v293, 16
      %v350 = vrot.slane %v348, 1
      %v351 = vsel %vm307, %v346, %v350
      %v352 = vshrl.u32 %v293, 16
      %v354 = vor.u32 %v352, %v350
      %v356 = vshll.u32 %v294, 16
      %v358 = vrot.slane %v356, 1
      %v359 = vsel %vm307, %v354, %v358
      %v360 = vshrl.u32 %v294, 16
      %v362 = vor.u32 %v360, %v358
      %v364 = vshll.u32 %v295, 16
      %v366 = vrot.slane %v364, 1
      %v367 = vsel %vm307, %v362, %v366
      %v368 = vshrl.u32 %v295, 16
      %v370 = vor.u32 %v368, %v366
      %v372 = vshll.u32 %v296, 16
      %v374 = vrot.slane %v372, 1
      %v375 = vsel %vm307, %v370, %v374
      %v376 = vshrl.u32 %v296, 16
      %v378 = vor.u32 %v376, %v374
      %v380 = vshll.u32 %v297, 16
      %v382 = vrot.slane %v380, 1
      %v383 = vsel %vm307, %v378, %v382
      %v384 = vshrl.u32 %v297, 16
      %v386 = vor.u32 %v384, %v382
      %v388 = vshll.u32 %v298, 16
      %v390 = vrot.slane %v388, 1
      %v391 = vsel %vm307, %v386, %v390
      %v392 = vshrl.u32 %v298, 16
      %v394 = vor.u32 %v392, %v390
      %v396 = vshll.u32 %v299, 16
      %v398 = vrot.slane %v396, 1
      %v399 = vsel %vm307, %v394, %v398
      %v400 = vshrl.u32 %v299, 16
      %v402 = vor.u32 %v400, %v398
      %v404 = vshll.u32 %v300, 16
      %v406 = vrot.slane %v404, 1
      %v407 = vsel %vm307, %v402, %v406
      %v408 = vshrl.u32 %v300, 16
      %v410 = vor.u32 %v408, %v406
      %v412 = vshll.u32 %v301, 16
      %v414 = vrot.slane %v412, 1
      %v415 = vsel %vm307, %v410, %v414
      %v416 = vshrl.u32 %v301, 16
      %v418 = vor.u32 %v416, %v414
      %v420 = vshll.u32 %v302, 16
      %v422 = vrot.slane %v420, 1
      %v423 = vsel %vm307, %v418, %v422
      %v424 = vshrl.u32 %v302, 16
      %v426 = vor.u32 %v424, %v422
      %v428 = vshll.u32 %v303, 16
      %v430 = vrot.slane %v428, 1
      %v431 = vsel %vm307, %v426, %v430
      %v432 = vshrl.u32 %v303, 16
      %v434 = vor.u32 %v432, %v430
      %v436 = vshll.u32 %v304, 16
      %v438 = vrot.slane %v436, 1
      %v439 = vsel %vm307, %v434, %v438
      %v440 = vshrl.u32 %v304, 16
      %v442 = vor.u32 %v440, %v438
      %v444 = vshll.u32 %v305, 16
      %v446 = vrot.slane %v444, 1
      %v447 = vsel %vm307, %v442, %v446
      %v448 = vshrl.u32 %v305, 16
      %v450 = vor.u32 %v448, %v446
      %v452 = vshll.u32 %v306, 16
      %v454 = vrot.slane %v452, 1
      %v455 = vsel %vm307, %v450, %v454
      %v458 = vunpack.c.l.b16 %v212
      %v459 = vunpack.c.l.b16 %v213
      %v460 = vpack.c.b16 %v459, %v458
      %vm461 = vcmask 97280
      %v463 = vsel %vm461, %v319, 0
      %v466 = vsel %vm461, %v327, 0
      %v469 = vsel %vm461, %v335, 0
      %v472 = vsel %vm461, %v343, 0
      %v475 = vsel %vm461, %v351, 0
      %v478 = vsel %vm461, %v359, 0
      %v481 = vsel %vm461, %v367, 0
      %v484 = vsel %vm461, %v375, 0
      %v487 = vsel %vm461, %v383, 0
      %v490 = vsel %vm461, %v391, 0
      %v493 = vsel %vm461, %v399, 0
      %v496 = vsel %vm461, %v407, 0
      %v499 = vsel %vm461, %v415, 0
      %v502 = vsel %vm461, %v423, 0
      %v505 = vsel %vm461, %v431, 0
      %v508 = vsel %vm461, %v439, 0
      %v511 = vsel %vm461, %v447, 0
      %v514 = vsel %vm461, %v455, 0
      %vm516 = vcmask 1045504
      %v518 = vsel %vm516, %v460, 0
      %520 = vmatprep.subr.bf16.mxu0 0
      %521 = vmatpush1.bf16.msra.mxu0 %v518
      %522 = vmatprep.subr.bf16.mxu0 0
      %523 = vmatpush1.bf16.msra.mxu0 0
      %524 = vmatprep.subr.bf16.mxu0 0
      %525 = vmatpush1.bf16.msra.mxu0 0
      %526 = vmatprep.subr.bf16.mxu0 0
      %527 = vmatpush1.bf16.msra.mxu0 0
      %528 = vmatprep.subr.bf16.mxu0 0
      %529 = vmatpush1.bf16.msra.mxu0 0
      %530 = vmatprep.subr.bf16.mxu0 0
      %531 = vmatpush1.bf16.msra.mxu0 0
      %532 = vmatprep.subr.bf16.mxu0 0
      %533 = vmatpush1.bf16.msra.mxu0 0
      %534 = vmatprep.subr.bf16.mxu0 0
      %535 = vmatpush1.bf16.msra.mxu0 0
      %536 = vmatprep.subr.bf16.mxu0 0
      %537 = vmatpush1.bf16.msra.mxu0 0
      %538 = vmatprep.subr.bf16.mxu0 0
      %539 = vmatpush1.bf16.msra.mxu0 0
      %540 = vmatprep.subr.bf16.mxu0 0
      %541 = vmatpush1.bf16.msra.mxu0 0
      %542 = vmatprep.subr.bf16.mxu0 0
      %543 = vmatpush1.bf16.msra.mxu0 0
      %544 = vmatprep.subr.bf16.mxu0 0
      %545 = vmatpush1.bf16.msra.mxu0 0
      %546 = vmatprep.subr.bf16.mxu0 0
      %547 = vmatpush1.bf16.msra.mxu0 0
      %548 = vmatprep.subr.bf16.mxu0 0
      %549 = vmatpush1.bf16.msra.mxu0 0
      %550 = vmatprep.subr.bf16.mxu0 0
      %551 = vmatpush1.bf16.msra.mxu0 0
      %552 = vmatprep.mubr.bf16.mxu0 0
      %553 = vmatmul.mubr.bf16.gmra.mrb[0].mxu0 %v463
      %v554 = vpop.f32.mrb[0].mxu0
      %v555 = vadd.f32 0.0, %v554
      %v556 = vpop.f32.mrb[0].mxu0
      %v557 = vpop.f32.mrb[0].mxu0
      %v558 = vadd.f32 0.0, %v557
      %v559 = vpop.f32.mrb[0].mxu0
      %560 = vmatprep.mubr.bf16.mxu0 0
      %561 = vmatmul.mubr.bf16.gmra.mrb[0].mxu0 %v466
      %v562 = vpop.f32.mrb[0].mxu0
      %v563 = vadd.f32 0.0, %v562
      %v564 = vpop.f32.mrb[0].mxu0
      %v565 = vpop.f32.mrb[0].mxu0
      %v566 = vadd.f32 0.0, %v565
      %v567 = vpop.f32.mrb[0].mxu0
      %568 = vmatprep.mubr.bf16.mxu0 0
      %569 = vmatmul.mubr.bf16.gmra.mrb[0].mxu0 %v469
      %v570 = vpop.f32.mrb[0].mxu0
      %v571 = vadd.f32 0.0, %v570
      %v572 = vpop.f32.mrb[0].mxu0
      %v573 = vpop.f32.mrb[0].mxu0
      %v574 = vadd.f32 0.0, %v573
      %v575 = vpop.f32.mrb[0].mxu0
      %576 = vmatprep.mubr.bf16.mxu0 0
      %577 = vmatmul.mubr.bf16.gmra.mrb[0].mxu0 %v472
      %v578 = vpop.f32.mrb[0].mxu0
      %v579 = vadd.f32 0.0, %v578
      %v580 = vpop.f32.mrb[0].mxu0
      %v581 = vpop.f32.mrb[0].mxu0
      %v582 = vadd.f32 0.0, %v581
      %v583 = vpop.f32.mrb[0].mxu0
      %584 = vmatprep.mubr.bf16.mxu0 0
      %585 = vmatmul.mubr.bf16.gmra.mrb[0].mxu0 %v475
      %v586 = vpop.f32.mrb[0].mxu0
      %v587 = vadd.f32 0.0, %v586
      %v588 = vpop.f32.mrb[0].mxu0
      %v589 = vpop.f32.mrb[0].mxu0
      %v590 = vadd.f32 0.0, %v589
      %v591 = vpop.f32.mrb[0].mxu0
      %592 = vmatprep.mubr.bf16.mxu0 0
      %593 = vmatmul.mubr.bf16.gmra.mrb[0].mxu0 %v478
      %v594 = vpop.f32.mrb[0].mxu0
      %v595 = vadd.f32 0.0, %v594
      %v596 = vpop.f32.mrb[0].mxu0
      %v597 = vpop.f32.mrb[0].mxu0
      %v598 = vadd.f32 0.0, %v597
      %v599 = vpop.f32.mrb[0].mxu0
      %600 = vmatprep.mubr.bf16.mxu0 0
      %601 = vmatmul.mubr.bf16.gmra.mrb[0].mxu0 %v481
      %v602 = vpop.f32.mrb[0].mxu0
      %v603 = vadd.f32 0.0, %v602
      %v604 = vpop.f32.mrb[0].mxu0
      %v605 = vpop.f32.mrb[0].mxu0
      %v606 = vadd.f32 0.0, %v605
      %v607 = vpop.f32.mrb[0].mxu0
      %608 = vmatprep.mubr.bf16.mxu0 0
      %609 = vmatmul.mubr.bf16.gmra.mrb[0].mxu0 %v484
      %v610 = vpop.f32.mrb[0].mxu0
      %v611 = vadd.f32 0.0, %v610
      %v612 = vpop.f32.mrb[0].mxu0
      %v613 = vpop.f32.mrb[0].mxu0
      %v614 = vadd.f32 0.0, %v613
      %v615 = vpop.f32.mrb[0].mxu0
      %616 = vmatprep.mubr.bf16.mxu0 0
      %617 = vmatmul.mubr.bf16.gmra.mrb[0].mxu0 %v487
      %v618 = vpop.f32.mrb[0].mxu0
      %v619 = vadd.f32 0.0, %v618
      %v620 = vpop.f32.mrb[0].mxu0
      %v621 = vpop.f32.mrb[0].mxu0
      %v622 = vadd.f32 0.0, %v621
      %v623 = vpop.f32.mrb[0].mxu0
      %624 = vmatprep.mubr.bf16.mxu0 0
      %625 = vmatmul.mubr.bf16.gmra.mrb[0].mxu0 %v490
      %v626 = vpop.f32.mrb[0].mxu0
      %v627 = vadd.f32 0.0, %v626
      %v628 = vpop.f32.mrb[0].mxu0
      %v629 = vpop.f32.mrb[0].mxu0
      %v630 = vadd.f32 0.0, %v629
      %v631 = vpop.f32.mrb[0].mxu0
      %632 = vmatprep.mubr.bf16.mxu0 0
      %633 = vmatmul.mubr.bf16.gmra.mrb[0].mxu0 %v493
      %v634 = vpop.f32.mrb[0].mxu0
      %v635 = vadd.f32 0.0, %v634
      %v636 = vpop.f32.mrb[0].mxu0
      %v637 = vpop.f32.mrb[0].mxu0
      %v638 = vadd.f32 0.0, %v637
      %v639 = vpop.f32.mrb[0].mxu0
      %640 = vmatprep.mubr.bf16.mxu0 0
      %641 = vmatmul.mubr.bf16.gmra.mrb[0].mxu0 %v496
      %v642 = vpop.f32.mrb[0].mxu0
      %v643 = vadd.f32 0.0, %v642
      %v644 = vpop.f32.mrb[0].mxu0
      %v645 = vpop.f32.mrb[0].mxu0
      %v646 = vadd.f32 0.0, %v645
      %v647 = vpop.f32.mrb[0].mxu0
      %648 = vmatprep.mubr.bf16.mxu0 0
      %649 = vmatmul.mubr.bf16.gmra.mrb[0].mxu0 %v499
      %v650 = vpop.f32.mrb[0].mxu0
      %v651 = vadd.f32 0.0, %v650
      %v652 = vpop.f32.mrb[0].mxu0
      %v653 = vpop.f32.mrb[0].mxu0
      %v654 = vadd.f32 0.0, %v653
      %v655 = vpop.f32.mrb[0].mxu0
      %656 = vmatprep.mubr.bf16.mxu0 0
      %657 = vmatmul.mubr.bf16.gmra.mrb[0].mxu0 %v502
      %v658 = vpop.f32.mrb[0].mxu0
      %v659 = vadd.f32 0.0, %v658
      %v660 = vpop.f32.mrb[0].mxu0
      %v661 = vpop.f32.mrb[0].mxu0
      %v662 = vadd.f32 0.0, %v661
      %v663 = vpop.f32.mrb[0].mxu0
      %664 = vmatprep.mubr.bf16.mxu0 0
      %665 = vmatmul.mubr.bf16.gmra.mrb[0].mxu0 %v505
      %v666 = vpop.f32.mrb[0].mxu0
      %v667 = vadd.f32 0.0, %v666
      %v668 = vpop.f32.mrb[0].mxu0
      %v669 = vpop.f32.mrb[0].mxu0
      %v670 = vadd.f32 0.0, %v669
      %v671 = vpop.f32.mrb[0].mxu0
      %672 = vmatprep.mubr.bf16.mxu0 0
      %673 = vmatmul.mubr.bf16.gmra.mrb[0].mxu0 %v508
      %v674 = vpop.f32.mrb[0].mxu0
      %v675 = vadd.f32 0.0, %v674
      %v676 = vpop.f32.mrb[0].mxu0
      %v677 = vpop.f32.mrb[0].mxu0
      %v678 = vadd.f32 0.0, %v677
      %v679 = vpop.f32.mrb[0].mxu0
      %680 = vmatprep.mubr.bf16.mxu0 0
      %681 = vmatmul.mubr.bf16.gmra.mrb[0].mxu0 %v511
      %v682 = vpop.f32.mrb[0].mxu0
      %v683 = vadd.f32 0.0, %v682
      %v684 = vpop.f32.mrb[0].mxu0
      %v685 = vpop.f32.mrb[0].mxu0
      %v686 = vadd.f32 0.0, %v685
      %v687 = vpop.f32.mrb[0].mxu0
      %688 = vmatprep.mubr.bf16.mxu0 0
      %689 = vmatmul.mubr.bf16.gmra.mrb[0].mxu0 %v514
      %v690 = vpop.f32.mrb[0].mxu0
      %v691 = vadd.f32 0.0, %v690
      %v692 = vpop.f32.mrb[0].mxu0
      %v693 = vpop.f32.mrb[0].mxu0
      %v694 = vadd.f32 0.0, %v693
      %v695 = vpop.f32.mrb[0].mxu0
      %696 = vdwg.mxu0
      %v699 = vunpack.c.l.b16 %v208
      %v700 = vunpack.c.l.b16 %v209
      %v701 = vpack.c.b16 %v700, %v699
      %v702 = vsel %vm461, %v288, 0
      %v704 = vsel %vm461, %v289, 0
      %v706 = vsel %vm461, %v290, 0
      %v708 = vsel %vm461, %v291, 0
      %v710 = vsel %vm461, %v292, 0
      %v712 = vsel %vm461, %v293, 0
      %v714 = vsel %vm461, %v294, 0
      %v716 = vsel %vm461, %v295, 0
      %v718 = vsel %vm461, %v296, 0
      %v720 = vsel %vm461, %v297, 0
      %v722 = vsel %vm461, %v298, 0
      %v724 = vsel %vm461, %v299, 0
      %v726 = vsel %vm461, %v300, 0
      %v728 = vsel %vm461, %v301, 0
      %v730 = vsel %vm461, %v302, 0
      %v732 = vsel %vm461, %v303, 0
      %v734 = vsel %vm461, %v304, 0
      %v736 = vsel %vm461, %v305, 0
      %v739 = vsel %vm516, %v701, 0
      %741 = vmatprep.subr.bf16.mxu0 0
      %742 = vmatpush1.bf16.msra.mxu0 %v739
      %743 = vmatprep.subr.bf16.mxu0 0
      %744 = vmatpush1.bf16.msra.mxu0 0
      %745 = vmatprep.subr.bf16.mxu0 0
      %746 = vmatpush1.bf16.msra.mxu0 0
      %747 = vmatprep.subr.bf16.mxu0 0
      %748 = vmatpush1.bf16.msra.mxu0 0
      %749 = vmatprep.subr.bf16.mxu0 0
      %750 = vmatpush1.bf16.msra.mxu0 0
      %751 = vmatprep.subr.bf16.mxu0 0
      %752 = vmatpush1.bf16.msra.mxu0 0
      %753 = vmatprep.subr.bf16.mxu0 0
      %754 = vmatpush1.bf16.msra.mxu0 0
      %755 = vmatprep.subr.bf16.mxu0 0
      %756 = vmatpush1.bf16.msra.mxu0 0
      %757 = vmatprep.subr.bf16.mxu0 0
      %758 = vmatpush1.bf16.msra.mxu0 0
      %759 = vmatprep.subr.bf16.mxu0 0
      %760 = vmatpush1.bf16.msra.mxu0 0
      %761 = vmatprep.subr.bf16.mxu0 0
      %762 = vmatpush1.bf16.msra.mxu0 0
      %763 = vmatprep.subr.bf16.mxu0 0
      %764 = vmatpush1.bf16.msra.mxu0 0
      %765 = vmatprep.subr.bf16.mxu0 0
      %766 = vmatpush1.bf16.msra.mxu0 0
      %767 = vmatprep.subr.bf16.mxu0 0
      %768 = vmatpush1.bf16.msra.mxu0 0
      %769 = vmatprep.subr.bf16.mxu0 0
      %770 = vmatpush1.bf16.msra.mxu0 0
      %771 = vmatprep.subr.bf16.mxu0 0
      %772 = vmatpush1.bf16.msra.mxu0 0
      %773 = vmatprep.mubr.bf16.mxu0 0
      %774 = vmatmul.mubr.bf16.gmra.mrb[0].mxu0 %v702
      %v775 = vpop.f32.mrb[0].mxu0
      %v776 = vadd.f32 %v555, %v775
      %v777 = vpop.f32.mrb[0].mxu0
      %v778 = vpop.f32.mrb[0].mxu0
      %v779 = vadd.f32 %v558, %v778
      %v780 = vpop.f32.mrb[0].mxu0
      %781 = vmatprep.mubr.bf16.mxu0 0
      %782 = vmatmul.mubr.bf16.gmra.mrb[0].mxu0 %v704
      %v783 = vpop.f32.mrb[0].mxu0
      %v784 = vadd.f32 %v563, %v783
      %v785 = vpop.f32.mrb[0].mxu0
      %v786 = vpop.f32.mrb[0].mxu0
      %v787 = vadd.f32 %v566, %v786
      %v788 = vpop.f32.mrb[0].mxu0
      %789 = vmatprep.mubr.bf16.mxu0 0
      %790 = vmatmul.mubr.bf16.gmra.mrb[0].mxu0 %v706
      %v791 = vpop.f32.mrb[0].mxu0
      %v792 = vadd.f32 %v571, %v791
      %v793 = vpop.f32.mrb[0].mxu0
      %v794 = vpop.f32.mrb[0].mxu0
      %v795 = vadd.f32 %v574, %v794
      %v796 = vpop.f32.mrb[0].mxu0
      %797 = vmatprep.mubr.bf16.mxu0 0
      %798 = vmatmul.mubr.bf16.gmra.mrb[0].mxu0 %v708
      %v799 = vpop.f32.mrb[0].mxu0
      %v800 = vadd.f32 %v579, %v799
      %v801 = vpop.f32.mrb[0].mxu0
      %v802 = vpop.f32.mrb[0].mxu0
      %v803 = vadd.f32 %v582, %v802
      %v804 = vpop.f32.mrb[0].mxu0
      %805 = vmatprep.mubr.bf16.mxu0 0
      %806 = vmatmul.mubr.bf16.gmra.mrb[0].mxu0 %v710
      %v807 = vpop.f32.mrb[0].mxu0
      %v808 = vadd.f32 %v587, %v807
      %v809 = vpop.f32.mrb[0].mxu0
      %v810 = vpop.f32.mrb[0].mxu0
      %v811 = vadd.f32 %v590, %v810
      %v812 = vpop.f32.mrb[0].mxu0
      %813 = vmatprep.mubr.bf16.mxu0 0
      %814 = vmatmul.mubr.bf16.gmra.mrb[0].mxu0 %v712
      %v815 = vpop.f32.mrb[0].mxu0
      %v816 = vadd.f32 %v595, %v815
      %v817 = vpop.f32.mrb[0].mxu0
      %v818 = vpop.f32.mrb[0].mxu0
      %v819 = vadd.f32 %v598, %v818
      %v820 = vpop.f32.mrb[0].mxu0
      %821 = vmatprep.mubr.bf16.mxu0 0
      %822 = vmatmul.mubr.bf16.gmra.mrb[0].mxu0 %v714
      %v823 = vpop.f32.mrb[0].mxu0
      %v824 = vadd.f32 %v603, %v823
      %v825 = vpop.f32.mrb[0].mxu0
      %v826 = vpop.f32.mrb[0].mxu0
      %v827 = vadd.f32 %v606, %v826
      %v828 = vpop.f32.mrb[0].mxu0
      %829 = vmatprep.mubr.bf16.mxu0 0
      %830 = vmatmul.mubr.bf16.gmra.mrb[0].mxu0 %v716
      %v831 = vpop.f32.mrb[0].mxu0
      %v832 = vadd.f32 %v611, %v831
      %v833 = vpop.f32.mrb[0].mxu0
      %v834 = vpop.f32.mrb[0].mxu0
      %v835 = vadd.f32 %v614, %v834
      %v836 = vpop.f32.mrb[0].mxu0
      %837 = vmatprep.mubr.bf16.mxu0 0
      %838 = vmatmul.mubr.bf16.gmra.mrb[0].mxu0 %v718
      %v839 = vpop.f32.mrb[0].mxu0
      %v840 = vadd.f32 %v619, %v839
      %v841 = vpop.f32.mrb[0].mxu0
      %v842 = vpop.f32.mrb[0].mxu0
      %v843 = vadd.f32 %v622, %v842
      %v844 = vpop.f32.mrb[0].mxu0
      %845 = vmatprep.mubr.bf16.mxu0 0
      %846 = vmatmul.mubr.bf16.gmra.mrb[0].mxu0 %v720
      %v847 = vpop.f32.mrb[0].mxu0
      %v848 = vadd.f32 %v627, %v847
      %v849 = vpop.f32.mrb[0].mxu0
      %v850 = vpop.f32.mrb[0].mxu0
      %v851 = vadd.f32 %v630, %v850
      %v852 = vpop.f32.mrb[0].mxu0
      %853 = vmatprep.mubr.bf16.mxu0 0
      %854 = vmatmul.mubr.bf16.gmra.mrb[0].mxu0 %v722
      %v855 = vpop.f32.mrb[0].mxu0
      %v856 = vadd.f32 %v635, %v855
      %v857 = vpop.f32.mrb[0].mxu0
      %v858 = vpop.f32.mrb[0].mxu0
      %v859 = vadd.f32 %v638, %v858
      %v860 = vpop.f32.mrb[0].mxu0
      %861 = vmatprep.mubr.bf16.mxu0 0
      %862 = vmatmul.mubr.bf16.gmra.mrb[0].mxu0 %v724
      %v863 = vpop.f32.mrb[0].mxu0
      %v864 = vadd.f32 %v643, %v863
      %v865 = vpop.f32.mrb[0].mxu0
      %v866 = vpop.f32.mrb[0].mxu0
      %v867 = vadd.f32 %v646, %v866
      %v868 = vpop.f32.mrb[0].mxu0
      %869 = vmatprep.mubr.bf16.mxu0 0
      %870 = vmatmul.mubr.bf16.gmra.mrb[0].mxu0 %v726
      %v871 = vpop.f32.mrb[0].mxu0
      %v872 = vadd.f32 %v651, %v871
      %v873 = vpop.f32.mrb[0].mxu0
      %v874 = vpop.f32.mrb[0].mxu0
      %v875 = vadd.f32 %v654, %v874
      %v876 = vpop.f32.mrb[0].mxu0
      %877 = vmatprep.mubr.bf16.mxu0 0
      %878 = vmatmul.mubr.bf16.gmra.mrb[0].mxu0 %v728
      %v879 = vpop.f32.mrb[0].mxu0
      %v880 = vadd.f32 %v659, %v879
      %v881 = vpop.f32.mrb[0].mxu0
      %v882 = vpop.f32.mrb[0].mxu0
      %v883 = vadd.f32 %v662, %v882
      %v884 = vpop.f32.mrb[0].mxu0
      %885 = vmatprep.mubr.bf16.mxu0 0
      %886 = vmatmul.mubr.bf16.gmra.mrb[0].mxu0 %v730
      %v887 = vpop.f32.mrb[0].mxu0
      %v888 = vadd.f32 %v667, %v887
      %v889 = vpop.f32.mrb[0].mxu0
      %v890 = vpop.f32.mrb[0].mxu0
      %v891 = vadd.f32 %v670, %v890
      %v892 = vpop.f32.mrb[0].mxu0
      %893 = vmatprep.mubr.bf16.mxu0 0
      %894 = vmatmul.mubr.bf16.gmra.mrb[0].mxu0 %v732
      %v895 = vpop.f32.mrb[0].mxu0
      %v896 = vadd.f32 %v675, %v895
      %v897 = vpop.f32.mrb[0].mxu0
      %v898 = vpop.f32.mrb[0].mxu0
      %v899 = vadd.f32 %v678, %v898
      %v900 = vpop.f32.mrb[0].mxu0
      %901 = vmatprep.mubr.bf16.mxu0 0
      %902 = vmatmul.mubr.bf16.gmra.mrb[0].mxu0 %v734
      %v903 = vpop.f32.mrb[0].mxu0
      %v904 = vadd.f32 %v683, %v903
      %v905 = vpop.f32.mrb[0].mxu0
      %v906 = vpop.f32.mrb[0].mxu0
      %v907 = vadd.f32 %v686, %v906
      %v908 = vpop.f32.mrb[0].mxu0
      %909 = vmatprep.mubr.bf16.mxu0 0
      %910 = vmatmul.mubr.bf16.gmra.mrb[0].mxu0 %v736
      %v911 = vpop.f32.mrb[0].mxu0
      %v912 = vadd.f32 %v691, %v911
      %v913 = vpop.f32.mrb[0].mxu0
      %v914 = vpop.f32.mrb[0].mxu0
      %v915 = vadd.f32 %v694, %v914
      %v916 = vpop.f32.mrb[0].mxu0
      %917 = vdwg.mxu0
      %v918 = vld [vmem:[%s165] sm:$0xe]
      %s919 = scalar_lea.vmem %s1, 16
      %v920 = vld [vmem:[%s919] sm:$0xf]
      %v921 = vld [vmem:[%s919 + $0x4] sm:$0x3]
      %v923 = vunpack.c.l.b16 %v918
      %v924 = vpack.c.b16 %v252, %v923
      %vm925 = vcmask 1046528
      %v926 = vrot.slane %v924, 1
      %v927 = vrot.slane %v289, 1
      %v928 = vsel %vm925, %v926, %v927
      %v929 = vrot.slane %v290, 1
      %v930 = vsel %vm925, %v927, %v929
      %v931 = vrot.slane %v291, 1
      %v932 = vsel %vm925, %v929, %v931
      %v933 = vrot.slane %v292, 1
      %v934 = vsel %vm925, %v931, %v933
      %v935 = vrot.slane %v293, 1
      %v936 = vsel %vm925, %v933, %v935
      %v937 = vrot.slane %v294, 1
      %v938 = vsel %vm925, %v935, %v937
      %v939 = vrot.slane %v295, 1
      %v940 = vsel %vm925, %v937, %v939
      %v941 = vrot.slane %v296, 1
      %v942 = vsel %vm925, %v939, %v941
      %v943 = vrot.slane %v297, 1
      %v944 = vsel %vm925, %v941, %v943
      %v945 = vrot.slane %v298, 1
      %v946 = vsel %vm925, %v943, %v945
      %v947 = vrot.slane %v299, 1
      %v948 = vsel %vm925, %v945, %v947
      %v949 = vrot.slane %v300, 1
      %v950 = vsel %vm925, %v947, %v949
      %v951 = vrot.slane %v301, 1
      %v952 = vsel %vm925, %v949, %v951
      %v953 = vrot.slane %v302, 1
      %v954 = vsel %vm925, %v951, %v953
      %v955 = vrot.slane %v303, 1
      %v956 = vsel %vm925, %v953, %v955
      %v957 = vrot.slane %v304, 1
      %v958 = vsel %vm925, %v955, %v957
      %v959 = vrot.slane %v305, 1
      %v960 = vsel %vm925, %v957, %v959
      %v961 = vrot.slane %v306, 1
      %v962 = vsel %vm925, %v959, %v961
      %v965 = vunpack.c.l.b16 %v920
      %v966 = vunpack.c.l.b16 %v921
      %v967 = vpack.c.b16 %v966, %v965
      %v969 = vsel %vm461, %v928, 0
      %v972 = vsel %vm461, %v930, 0
      %v975 = vsel %vm461, %v932, 0
      %v978 = vsel %vm461, %v934, 0
      %v981 = vsel %vm461, %v936, 0
      %v984 = vsel %vm461, %v938, 0
      %v987 = vsel %vm461, %v940, 0
      %v990 = vsel %vm461, %v942, 0
      %v993 = vsel %vm461, %v944, 0
      %v996 = vsel %vm461, %v946, 0
      %v999 = vsel %vm461, %v948, 0
      %v1002 = vsel %vm461, %v950, 0
      %v1005 = vsel %vm461, %v952, 0
      %v1008 = vsel %vm461, %v954, 0
      %v1011 = vsel %vm461, %v956, 0
      %v1014 = vsel %vm461, %v958, 0
      %v1017 = vsel %vm461, %v960, 0
      %v1020 = vsel %vm461, %v962, 0
      %v1023 = vsel %vm516, %v967, 0
      %1025 = vmatprep.subr.bf16.mxu0 0
      %1026 = vmatpush1.bf16.msra.mxu0 %v1023
      %1027 = vmatprep.subr.bf16.mxu0 0
      %1028 = vmatpush1.bf16.msra.mxu0 0
      %1029 = vmatprep.subr.bf16.mxu0 0
      %1030 = vmatpush1.bf16.msra.mxu0 0
      %1031 = vmatprep.subr.bf16.mxu0 0
      %1032 = vmatpush1.bf16.msra.mxu0 0
      %1033 = vmatprep.subr.bf16.mxu0 0
      %1034 = vmatpush1.bf16.msra.mxu0 0
      %1035 = vmatprep.subr.bf16.mxu0 0
      %1036 = vmatpush1.bf16.msra.mxu0 0
      %1037 = vmatprep.subr.bf16.mxu0 0
      %1038 = vmatpush1.bf16.msra.mxu0 0
      %1039 = vmatprep.subr.bf16.mxu0 0
      %1040 = vmatpush1.bf16.msra.mxu0 0
      %1041 = vmatprep.subr.bf16.mxu0 0
      %1042 = vmatpush1.bf16.msra.mxu0 0
      %1043 = vmatprep.subr.bf16.mxu0 0
      %1044 = vmatpush1.bf16.msra.mxu0 0
      %1045 = vmatprep.subr.bf16.mxu0 0
      %1046 = vmatpush1.bf16.msra.mxu0 0
      %1047 = vmatprep.subr.bf16.mxu0 0
      %1048 = vmatpush1.bf16.msra.mxu0 0
      %1049 = vmatprep.subr.bf16.mxu0 0
      %1050 = vmatpush1.bf16.msra.mxu0 0
      %1051 = vmatprep.subr.bf16.mxu0 0
      %1052 = vmatpush1.bf16.msra.mxu0 0
      %1053 = vmatprep.subr.bf16.mxu0 0
      %1054 = vmatpush1.bf16.msra.mxu0 0
      %1055 = vmatprep.subr.bf16.mxu0 0
      %1056 = vmatpush1.bf16.msra.mxu0 0
      %1057 = vmatprep.mubr.bf16.mxu0 0
      %1058 = vmatmul.mubr.bf16.gmra.mrb[0].mxu0 %v969
      %v1059 = vpop.f32.mrb[0].mxu0
      %v1060 = vadd.f32 0.0, %v1059
      %v1061 = vpop.f32.mrb[0].mxu0
      %v1062 = vpop.f32.mrb[0].mxu0
      %v1063 = vadd.f32 0.0, %v1062
      %v1064 = vpop.f32.mrb[0].mxu0
      %1065 = vmatprep.mubr.bf16.mxu0 0
      %1066 = vmatmul.mubr.bf16.gmra.mrb[0].mxu0 %v972
      %v1067 = vpop.f32.mrb[0].mxu0
      %v1068 = vadd.f32 0.0, %v1067
      %v1069 = vpop.f32.mrb[0].mxu0
      %v1070 = vpop.f32.mrb[0].mxu0
      %v1071 = vadd.f32 0.0, %v1070
      %v1072 = vpop.f32.mrb[0].mxu0
      %1073 = vmatprep.mubr.bf16.mxu0 0
      %1074 = vmatmul.mubr.bf16.gmra.mrb[0].mxu0 %v975
      %v1075 = vpop.f32.mrb[0].mxu0
      %v1076 = vadd.f32 0.0, %v1075
      %v1077 = vpop.f32.mrb[0].mxu0
      %v1078 = vpop.f32.mrb[0].mxu0
      %v1079 = vadd.f32 0.0, %v1078
      %v1080 = vpop.f32.mrb[0].mxu0
      %1081 = vmatprep.mubr.bf16.mxu0 0
      %1082 = vmatmul.mubr.bf16.gmra.mrb[0].mxu0 %v978
      %v1083 = vpop.f32.mrb[0].mxu0
      %v1084 = vadd.f32 0.0, %v1083
      %v1085 = vpop.f32.mrb[0].mxu0
      %v1086 = vpop.f32.mrb[0].mxu0
      %v1087 = vadd.f32 0.0, %v1086
      %v1088 = vpop.f32.mrb[0].mxu0
      %1089 = vmatprep.mubr.bf16.mxu0 0
      %1090 = vmatmul.mubr.bf16.gmra.mrb[0].mxu0 %v981
      %v1091 = vpop.f32.mrb[0].mxu0
      %v1092 = vadd.f32 0.0, %v1091
      %v1093 = vpop.f32.mrb[0].mxu0
      %v1094 = vpop.f32.mrb[0].mxu0
      %v1095 = vadd.f32 0.0, %v1094
      %v1096 = vpop.f32.mrb[0].mxu0
      %1097 = vmatprep.mubr.bf16.mxu0 0
      %1098 = vmatmul.mubr.bf16.gmra.mrb[0].mxu0 %v984
      %v1099 = vpop.f32.mrb[0].mxu0
      %v1100 = vadd.f32 0.0, %v1099
      %v1101 = vpop.f32.mrb[0].mxu0
      %v1102 = vpop.f32.mrb[0].mxu0
      %v1103 = vadd.f32 0.0, %v1102
      %v1104 = vpop.f32.mrb[0].mxu0
      %1105 = vmatprep.mubr.bf16.mxu0 0
      %1106 = vmatmul.mubr.bf16.gmra.mrb[0].mxu0 %v987
      %v1107 = vpop.f32.mrb[0].mxu0
      %v1108 = vadd.f32 0.0, %v1107
      %v1109 = vpop.f32.mrb[0].mxu0
      %v1110 = vpop.f32.mrb[0].mxu0
      %v1111 = vadd.f32 0.0, %v1110
      %v1112 = vpop.f32.mrb[0].mxu0
      %1113 = vmatprep.mubr.bf16.mxu0 0
      %1114 = vmatmul.mubr.bf16.gmra.mrb[0].mxu0 %v990
      %v1115 = vpop.f32.mrb[0].mxu0
      %v1116 = vadd.f32 0.0, %v1115
      %v1117 = vpop.f32.mrb[0].mxu0
      %v1118 = vpop.f32.mrb[0].mxu0
      %v1119 = vadd.f32 0.0, %v1118
      %v1120 = vpop.f32.mrb[0].mxu0
      %1121 = vmatprep.mubr.bf16.mxu0 0
      %1122 = vmatmul.mubr.bf16.gmra.mrb[0].mxu0 %v993
      %v1123 = vpop.f32.mrb[0].mxu0
      %v1124 = vadd.f32 0.0, %v1123
      %v1125 = vpop.f32.mrb[0].mxu0
      %v1126 = vpop.f32.mrb[0].mxu0
      %v1127 = vadd.f32 0.0, %v1126
      %v1128 = vpop.f32.mrb[0].mxu0
      %1129 = vmatprep.mubr.bf16.mxu0 0
      %1130 = vmatmul.mubr.bf16.gmra.mrb[0].mxu0 %v996
      %v1131 = vpop.f32.mrb[0].mxu0
      %v1132 = vadd.f32 0.0, %v1131
      %v1133 = vpop.f32.mrb[0].mxu0
      %v1134 = vpop.f32.mrb[0].mxu0
      %v1135 = vadd.f32 0.0, %v1134
      %v1136 = vpop.f32.mrb[0].mxu0
      %1137 = vmatprep.mubr.bf16.mxu0 0
      %1138 = vmatmul.mubr.bf16.gmra.mrb[0].mxu0 %v999
      %v1139 = vpop.f32.mrb[0].mxu0
      %v1140 = vadd.f32 0.0, %v1139
      %v1141 = vpop.f32.mrb[0].mxu0
      %v1142 = vpop.f32.mrb[0].mxu0
      %v1143 = vadd.f32 0.0, %v1142
      %v1144 = vpop.f32.mrb[0].mxu0
      %1145 = vmatprep.mubr.bf16.mxu0 0
      %1146 = vmatmul.mubr.bf16.gmra.mrb[0].mxu0 %v1002
      %v1147 = vpop.f32.mrb[0].mxu0
      %v1148 = vadd.f32 0.0, %v1147
      %v1149 = vpop.f32.mrb[0].mxu0
      %v1150 = vpop.f32.mrb[0].mxu0
      %v1151 = vadd.f32 0.0, %v1150
      %v1152 = vpop.f32.mrb[0].mxu0
      %1153 = vmatprep.mubr.bf16.mxu0 0
      %1154 = vmatmul.mubr.bf16.gmra.mrb[0].mxu0 %v1005
      %v1155 = vpop.f32.mrb[0].mxu0
      %v1156 = vadd.f32 0.0, %v1155
      %v1157 = vpop.f32.mrb[0].mxu0
      %v1158 = vpop.f32.mrb[0].mxu0
      %v1159 = vadd.f32 0.0, %v1158
      %v1160 = vpop.f32.mrb[0].mxu0
      %1161 = vmatprep.mubr.bf16.mxu0 0
      %1162 = vmatmul.mubr.bf16.gmra.mrb[0].mxu0 %v1008
      %v1163 = vpop.f32.mrb[0].mxu0
      %v1164 = vadd.f32 0.0, %v1163
      %v1165 = vpop.f32.mrb[0].mxu0
      %v1166 = vpop.f32.mrb[0].mxu0
      %v1167 = vadd.f32 0.0, %v1166
      %v1168 = vpop.f32.mrb[0].mxu0
      %1169 = vmatprep.mubr.bf16.mxu0 0
      %1170 = vmatmul.mubr.bf16.gmra.mrb[0].mxu0 %v1011
      %v1171 = vpop.f32.mrb[0].mxu0
      %v1172 = vadd.f32 0.0, %v1171
      %v1173 = vpop.f32.mrb[0].mxu0
      %v1174 = vpop.f32.mrb[0].mxu0
      %v1175 = vadd.f32 0.0, %v1174
      %v1176 = vpop.f32.mrb[0].mxu0
      %1177 = vmatprep.mubr.bf16.mxu0 0
      %1178 = vmatmul.mubr.bf16.gmra.mrb[0].mxu0 %v1014
      %v1179 = vpop.f32.mrb[0].mxu0
      %v1180 = vadd.f32 0.0, %v1179
      %v1181 = vpop.f32.mrb[0].mxu0
      %v1182 = vpop.f32.mrb[0].mxu0
      %v1183 = vadd.f32 0.0, %v1182
      %v1184 = vpop.f32.mrb[0].mxu0
      %1185 = vmatprep.mubr.bf16.mxu0 0
      %1186 = vmatmul.mubr.bf16.gmra.mrb[0].mxu0 %v1017
      %v1187 = vpop.f32.mrb[0].mxu0
      %v1188 = vadd.f32 0.0, %v1187
      %v1189 = vpop.f32.mrb[0].mxu0
      %v1190 = vpop.f32.mrb[0].mxu0
      %v1191 = vadd.f32 0.0, %v1190
      %v1192 = vpop.f32.mrb[0].mxu0
      %1193 = vmatprep.mubr.bf16.mxu0 0
      %1194 = vmatmul.mubr.bf16.gmra.mrb[0].mxu0 %v1020
      %v1195 = vpop.f32.mrb[0].mxu0
      %v1196 = vadd.f32 0.0, %v1195
      %v1197 = vpop.f32.mrb[0].mxu0
      %v1198 = vpop.f32.mrb[0].mxu0
      %v1199 = vadd.f32 0.0, %v1198
      %v1200 = vpop.f32.mrb[0].mxu0
      %1201 = vdwg.mxu0
      %v1202 = vadd.f32 %v776, %v1060
      %v1203 = vadd.f32 %v779, %v1063
      %v1204 = vadd.f32 %v784, %v1068
      %v1205 = vadd.f32 %v787, %v1071
      %v1206 = vadd.f32 %v792, %v1076
      %v1207 = vadd.f32 %v795, %v1079
      %v1208 = vadd.f32 %v800, %v1084
      %v1209 = vadd.f32 %v803, %v1087
      %v1210 = vadd.f32 %v808, %v1092
      %v1211 = vadd.f32 %v811, %v1095
      %v1212 = vadd.f32 %v816, %v1100
      %v1213 = vadd.f32 %v819, %v1103
      %v1214 = vadd.f32 %v824, %v1108
      %v1215 = vadd.f32 %v827, %v1111
      %v1216 = vadd.f32 %v832, %v1116
      %v1217 = vadd.f32 %v835, %v1119
      %v1218 = vadd.f32 %v840, %v1124
      %v1219 = vadd.f32 %v843, %v1127
      %v1220 = vadd.f32 %v848, %v1132
      %v1221 = vadd.f32 %v851, %v1135
      %v1222 = vadd.f32 %v856, %v1140
      %v1223 = vadd.f32 %v859, %v1143
      %v1224 = vadd.f32 %v864, %v1148
      %v1225 = vadd.f32 %v867, %v1151
      %v1226 = vadd.f32 %v872, %v1156
      %v1227 = vadd.f32 %v875, %v1159
      %v1228 = vadd.f32 %v880, %v1164
      %v1229 = vadd.f32 %v883, %v1167
      %v1230 = vadd.f32 %v888, %v1172
      %v1231 = vadd.f32 %v891, %v1175
      %v1232 = vadd.f32 %v896, %v1180
      %v1233 = vadd.f32 %v899, %v1183
      %v1234 = vadd.f32 %v904, %v1188
      %v1235 = vadd.f32 %v907, %v1191
      %v1236 = vadd.f32 %v912, %v1196
      %v1237 = vadd.f32 %v915, %v1199
      %v1238 = vld [vmem:[%s165 + $0x8] sm:$0xe]
      %v1239 = vld [vmem:[%s165 + $0xc] sm:$0xf]
      %v1240 = vld [vmem:[%s165 + $0x10] sm:$0xf]
      %v1241 = vld [vmem:[%s165 + $0x14] sm:$0xf]
      %v1242 = vld [vmem:[%s165 + $0x18] sm:$0xf]
      %v1243 = vld [vmem:[%s165 + $0x1c] sm:$0xf]
      %v1244 = vld [vmem:[%s165 + $0x20] sm:$0xf]
      %v1245 = vld [vmem:[%s165 + $0x24] sm:$0xf]
      %v1246 = vld [vmem:[%s165 + $0x28] sm:$0xf]
      %v1247 = vld [vmem:[%s165 + $0x2c] sm:$0xf]
      %v1248 = vld [vmem:[%s165 + $0x30] sm:$0xf]
      %v1249 = vld [vmem:[%s165 + $0x34] sm:$0xf]
      %v1250 = vld [vmem:[%s165 + $0x38] sm:$0xf]
      %v1251 = vld [vmem:[%s165 + $0x3c] sm:$0xf]
      %v1252 = vld [vmem:[%s165 + $0x40] sm:$0xf]
      %v1253 = vld [vmem:[%s165 + $0x44] sm:$0xf]
      %v1254 = vld [vmem:[%s165 + $0x48] sm:$0xf]
      %v1255 = vld [vmem:[%s165 + $0x4c] sm:$0xf]
      %v1256 = vld [vmem:[%s165 + $0x50] sm:$0xf]
      %v1257 = vld [vmem:[%s165 + $0x54] sm:$0xf]
      %v1258 = vld [vmem:[%s165 + $0x58] sm:$0xf]
      %v1259 = vld [vmem:[%s165 + $0x5c] sm:$0xf]
      %v1260 = vld [vmem:[%s165 + $0x60] sm:$0xf]
      %v1261 = vld [vmem:[%s165 + $0x64] sm:$0xf]
      %v1262 = vld [vmem:[%s165 + $0x68] sm:$0xf]
      %v1263 = vld [vmem:[%s165 + $0x6c] sm:$0xf]
      %v1264 = vld [vmem:[%s165 + $0x70] sm:$0xf]
      %v1265 = vld [vmem:[%s165 + $0x74] sm:$0xf]
      %v1266 = vld [vmem:[%s165 + $0x78] sm:$0xf]
      %v1267 = vld [vmem:[%s165 + $0x7c] sm:$0xf]
      %v1268 = vld [vmem:[%s165 + $0x80] sm:$0xf]
      %v1269 = vld [vmem:[%s165 + $0x84] sm:$0xf]
      %v1270 = vld [vmem:[%s165 + $0x88] sm:$0xf]
      %v1271 = vld [vmem:[%s165 + $0x8c] sm:$0xf]
      %v1272 = vld [vmem:[%s165 + $0x90] sm:$0xf]
      %v1273 = vld [vmem:[%s165 + $0x94] sm:$0xf]
      %v1274 = vld [vmem:[%s165 + $0x98] sm:$0x1]
      %s1275 = scalar_lea.vmem %s1, 24
      %v1276 = vld [vmem:[%s1275] sm:$0xf]
      %v1277 = vld [vmem:[%s1275 + $0x4] sm:$0x3]
      %v1315 = vunpack.c.l.b16 %v1238
      %v1316 = vunpack.c.l.b16 %v1239
      %v1317 = vunpack.c.l.b16 %v1240
      %v1318 = vunpack.c.l.b16 %v1241
      %v1319 = vunpack.c.l.b16 %v1242
      %v1320 = vunpack.c.l.b16 %v1243
      %v1321 = vunpack.c.l.b16 %v1244
      %v1322 = vunpack.c.l.b16 %v1245
      %v1323 = vunpack.c.l.b16 %v1246
      %v1324 = vunpack.c.l.b16 %v1247
      %v1325 = vunpack.c.l.b16 %v1248
      %v1326 = vunpack.c.l.b16 %v1249
      %v1327 = vunpack.c.l.b16 %v1250
      %v1328 = vunpack.c.l.b16 %v1251
      %v1329 = vunpack.c.l.b16 %v1252
      %v1330 = vunpack.c.l.b16 %v1253
      %v1331 = vunpack.c.l.b16 %v1254
      %v1332 = vunpack.c.l.b16 %v1255
      %v1333 = vunpack.c.l.b16 %v1256
      %v1334 = vunpack.c.l.b16 %v1257
      %v1335 = vunpack.c.l.b16 %v1258
      %v1336 = vunpack.c.l.b16 %v1259
      %v1337 = vunpack.c.l.b16 %v1260
      %v1338 = vunpack.c.l.b16 %v1261
      %v1339 = vunpack.c.l.b16 %v1262
      %v1340 = vunpack.c.l.b16 %v1263
      %v1341 = vunpack.c.l.b16 %v1264
      %v1342 = vunpack.c.l.b16 %v1265
      %v1343 = vunpack.c.l.b16 %v1266
      %v1344 = vunpack.c.l.b16 %v1267
      %v1345 = vunpack.c.l.b16 %v1268
      %v1346 = vunpack.c.l.b16 %v1269
      %v1347 = vunpack.c.l.b16 %v1270
      %v1348 = vunpack.c.l.b16 %v1271
      %v1349 = vunpack.c.l.b16 %v1272
      %v1350 = vunpack.c.l.b16 %v1273
      %v1351 = vunpack.c.l.b16 %v1274
      %v1352 = vpack.c.b16 %v1316, %v1315
      %v1353 = vpack.c.b16 %v1318, %v1317
      %v1354 = vpack.c.b16 %v1320, %v1319
      %v1355 = vpack.c.b16 %v1322, %v1321
      %v1356 = vpack.c.b16 %v1324, %v1323
      %v1357 = vpack.c.b16 %v1326, %v1325
      %v1358 = vpack.c.b16 %v1328, %v1327
      %v1359 = vpack.c.b16 %v1330, %v1329
      %v1360 = vpack.c.b16 %v1332, %v1331
      %v1361 = vpack.c.b16 %v1334, %v1333
      %v1362 = vpack.c.b16 %v1336, %v1335
      %v1363 = vpack.c.b16 %v1338, %v1337
      %v1364 = vpack.c.b16 %v1340, %v1339
      %v1365 = vpack.c.b16 %v1342, %v1341
      %v1366 = vpack.c.b16 %v1344, %v1343
      %v1367 = vpack.c.b16 %v1346, %v1345
      %v1368 = vpack.c.b16 %v1348, %v1347
      %v1369 = vpack.c.b16 %v1350, %v1349
      %v1370 = vpack.c.b16 %v1351, %v1351
      %v1371 = vrot.slane %v1352, 1
      %v1372 = vrot.slane %v1353, 1
      %v1373 = vsel %vm925, %v1371, %v1372
      %v1374 = vrot.slane %v1354, 1
      %v1375 = vsel %vm925, %v1372, %v1374
      %v1376 = vrot.slane %v1355, 1
      %v1377 = vsel %vm925, %v1374, %v1376
      %v1378 = vrot.slane %v1356, 1
      %v1379 = vsel %vm925, %v1376, %v1378
      %v1380 = vrot.slane %v1357, 1
      %v1381 = vsel %vm925, %v1378, %v1380
      %v1382 = vrot.slane %v1358, 1
      %v1383 = vsel %vm925, %v1380, %v1382
      %v1384 = vrot.slane %v1359, 1
      %v1385 = vsel %vm925, %v1382, %v1384
      %v1386 = vrot.slane %v1360, 1
      %v1387 = vsel %vm925, %v1384, %v1386
      %v1388 = vrot.slane %v1361, 1
      %v1389 = vsel %vm925, %v1386, %v1388
      %v1390 = vrot.slane %v1362, 1
      %v1391 = vsel %vm925, %v1388, %v1390
      %v1392 = vrot.slane %v1363, 1
      %v1393 = vsel %vm925, %v1390, %v1392
      %v1394 = vrot.slane %v1364, 1
      %v1395 = vsel %vm925, %v1392, %v1394
      %v1396 = vrot.slane %v1365, 1
      %v1397 = vsel %vm925, %v1394, %v1396
      %v1398 = vrot.slane %v1366, 1
      %v1399 = vsel %vm925, %v1396, %v1398
      %v1400 = vrot.slane %v1367, 1
      %v1401 = vsel %vm925, %v1398, %v1400
      %v1402 = vrot.slane %v1368, 1
      %v1403 = vsel %vm925, %v1400, %v1402
      %v1404 = vrot.slane %v1369, 1
      %v1405 = vsel %vm925, %v1402, %v1404
      %v1406 = vrot.slane %v1370, 1
      %v1407 = vsel %vm925, %v1404, %v1406
      %v1410 = vunpack.c.l.b16 %v1276
      %v1411 = vunpack.c.l.b16 %v1277
      %v1412 = vpack.c.b16 %v1411, %v1410
      %v1414 = vsel %vm461, %v1373, 0
      %v1417 = vsel %vm461, %v1375, 0
      %v1420 = vsel %vm461, %v1377, 0
      %v1423 = vsel %vm461, %v1379, 0
      %v1426 = vsel %vm461, %v1381, 0
      %v1429 = vsel %vm461, %v1383, 0
      %v1432 = vsel %vm461, %v1385, 0
      %v1435 = vsel %vm461, %v1387, 0
      %v1438 = vsel %vm461, %v1389, 0
      %v1441 = vsel %vm461, %v1391, 0
      %v1444 = vsel %vm461, %v1393, 0
      %v1447 = vsel %vm461, %v1395, 0
      %v1450 = vsel %vm461, %v1397, 0
      %v1453 = vsel %vm461, %v1399, 0
      %v1456 = vsel %vm461, %v1401, 0
      %v1459 = vsel %vm461, %v1403, 0
      %v1462 = vsel %vm461, %v1405, 0
      %v1465 = vsel %vm461, %v1407, 0
      %v1468 = vsel %vm516, %v1412, 0
      %1470 = vmatprep.subr.bf16.mxu0 0
      %1471 = vmatpush1.bf16.msra.mxu0 %v1468
      %1472 = vmatprep.subr.bf16.mxu0 0
      %1473 = vmatpush1.bf16.msra.mxu0 0
      %1474 = vmatprep.subr.bf16.mxu0 0
      %1475 = vmatpush1.bf16.msra.mxu0 0
      %1476 = vmatprep.subr.bf16.mxu0 0
      %1477 = vmatpush1.bf16.msra.mxu0 0
      %1478 = vmatprep.subr.bf16.mxu0 0
      %1479 = vmatpush1.bf16.msra.mxu0 0
      %1480 = vmatprep.subr.bf16.mxu0 0
      %1481 = vmatpush1.bf16.msra.mxu0 0
      %1482 = vmatprep.subr.bf16.mxu0 0
      %1483 = vmatpush1.bf16.msra.mxu0 0
      %1484 = vmatprep.subr.bf16.mxu0 0
      %1485 = vmatpush1.bf16.msra.mxu0 0
      %1486 = vmatprep.subr.bf16.mxu0 0
      %1487 = vmatpush1.bf16.msra.mxu0 0
      %1488 = vmatprep.subr.bf16.mxu0 0
      %1489 = vmatpush1.bf16.msra.mxu0 0
      %1490 = vmatprep.subr.bf16.mxu0 0
      %1491 = vmatpush1.bf16.msra.mxu0 0
      %1492 = vmatprep.subr.bf16.mxu0 0
      %1493 = vmatpush1.bf16.msra.mxu0 0
      %1494 = vmatprep.subr.bf16.mxu0 0
      %1495 = vmatpush1.bf16.msra.mxu0 0
      %1496 = vmatprep.subr.bf16.mxu0 0
      %1497 = vmatpush1.bf16.msra.mxu0 0
      %1498 = vmatprep.subr.bf16.mxu0 0
      %1499 = vmatpush1.bf16.msra.mxu0 0
      %1500 = vmatprep.subr.bf16.mxu0 0
      %1501 = vmatpush1.bf16.msra.mxu0 0
      %1502 = vmatprep.mubr.bf16.mxu0 0
      %1503 = vmatmul.mubr.bf16.gmra.mrb[0].mxu0 %v1414
      %v1504 = vpop.f32.mrb[0].mxu0
      %v1505 = vadd.f32 0.0, %v1504
      %v1506 = vpop.f32.mrb[0].mxu0
      %v1507 = vpop.f32.mrb[0].mxu0
      %v1508 = vadd.f32 0.0, %v1507
      %v1509 = vpop.f32.mrb[0].mxu0
      %1510 = vmatprep.mubr.bf16.mxu0 0
      %1511 = vmatmul.mubr.bf16.gmra.mrb[0].mxu0 %v1417
      %v1512 = vpop.f32.mrb[0].mxu0
      %v1513 = vadd.f32 0.0, %v1512
      %v1514 = vpop.f32.mrb[0].mxu0
      %v1515 = vpop.f32.mrb[0].mxu0
      %v1516 = vadd.f32 0.0, %v1515
      %v1517 = vpop.f32.mrb[0].mxu0
      %1518 = vmatprep.mubr.bf16.mxu0 0
      %1519 = vmatmul.mubr.bf16.gmra.mrb[0].mxu0 %v1420
      %v1520 = vpop.f32.mrb[0].mxu0
      %v1521 = vadd.f32 0.0, %v1520
      %v1522 = vpop.f32.mrb[0].mxu0
      %v1523 = vpop.f32.mrb[0].mxu0
      %v1524 = vadd.f32 0.0, %v1523
      %v1525 = vpop.f32.mrb[0].mxu0
      %1526 = vmatprep.mubr.bf16.mxu0 0
      %1527 = vmatmul.mubr.bf16.gmra.mrb[0].mxu0 %v1423
      %v1528 = vpop.f32.mrb[0].mxu0
      %v1529 = vadd.f32 0.0, %v1528
      %v1530 = vpop.f32.mrb[0].mxu0
      %v1531 = vpop.f32.mrb[0].mxu0
      %v1532 = vadd.f32 0.0, %v1531
      %v1533 = vpop.f32.mrb[0].mxu0
      %1534 = vmatprep.mubr.bf16.mxu0 0
      %1535 = vmatmul.mubr.bf16.gmra.mrb[0].mxu0 %v1426
      %v1536 = vpop.f32.mrb[0].mxu0
      %v1537 = vadd.f32 0.0, %v1536
      %v1538 = vpop.f32.mrb[0].mxu0
      %v1539 = vpop.f32.mrb[0].mxu0
      %v1540 = vadd.f32 0.0, %v1539
      %v1541 = vpop.f32.mrb[0].mxu0
      %1542 = vmatprep.mubr.bf16.mxu0 0
      %1543 = vmatmul.mubr.bf16.gmra.mrb[0].mxu0 %v1429
      %v1544 = vpop.f32.mrb[0].mxu0
      %v1545 = vadd.f32 0.0, %v1544
      %v1546 = vpop.f32.mrb[0].mxu0
      %v1547 = vpop.f32.mrb[0].mxu0
      %v1548 = vadd.f32 0.0, %v1547
      %v1549 = vpop.f32.mrb[0].mxu0
      %1550 = vmatprep.mubr.bf16.mxu0 0
      %1551 = vmatmul.mubr.bf16.gmra.mrb[0].mxu0 %v1432
      %v1552 = vpop.f32.mrb[0].mxu0
      %v1553 = vadd.f32 0.0, %v1552
      %v1554 = vpop.f32.mrb[0].mxu0
      %v1555 = vpop.f32.mrb[0].mxu0
      %v1556 = vadd.f32 0.0, %v1555
      %v1557 = vpop.f32.mrb[0].mxu0
      %1558 = vmatprep.mubr.bf16.mxu0 0
      %1559 = vmatmul.mubr.bf16.gmra.mrb[0].mxu0 %v1435
      %v1560 = vpop.f32.mrb[0].mxu0
      %v1561 = vadd.f32 0.0, %v1560
      %v1562 = vpop.f32.mrb[0].mxu0
      %v1563 = vpop.f32.mrb[0].mxu0
      %v1564 = vadd.f32 0.0, %v1563
      %v1565 = vpop.f32.mrb[0].mxu0
      %1566 = vmatprep.mubr.bf16.mxu0 0
      %1567 = vmatmul.mubr.bf16.gmra.mrb[0].mxu0 %v1438
      %v1568 = vpop.f32.mrb[0].mxu0
      %v1569 = vadd.f32 0.0, %v1568
      %v1570 = vpop.f32.mrb[0].mxu0
      %v1571 = vpop.f32.mrb[0].mxu0
      %v1572 = vadd.f32 0.0, %v1571
      %v1573 = vpop.f32.mrb[0].mxu0
      %1574 = vmatprep.mubr.bf16.mxu0 0
      %1575 = vmatmul.mubr.bf16.gmra.mrb[0].mxu0 %v1441
      %v1576 = vpop.f32.mrb[0].mxu0
      %v1577 = vadd.f32 0.0, %v1576
      %v1578 = vpop.f32.mrb[0].mxu0
      %v1579 = vpop.f32.mrb[0].mxu0
      %v1580 = vadd.f32 0.0, %v1579
      %v1581 = vpop.f32.mrb[0].mxu0
      %1582 = vmatprep.mubr.bf16.mxu0 0
      %1583 = vmatmul.mubr.bf16.gmra.mrb[0].mxu0 %v1444
      %v1584 = vpop.f32.mrb[0].mxu0
      %v1585 = vadd.f32 0.0, %v1584
      %v1586 = vpop.f32.mrb[0].mxu0
      %v1587 = vpop.f32.mrb[0].mxu0
      %v1588 = vadd.f32 0.0, %v1587
      %v1589 = vpop.f32.mrb[0].mxu0
      %1590 = vmatprep.mubr.bf16.mxu0 0
      %1591 = vmatmul.mubr.bf16.gmra.mrb[0].mxu0 %v1447
      %v1592 = vpop.f32.mrb[0].mxu0
      %v1593 = vadd.f32 0.0, %v1592
      %v1594 = vpop.f32.mrb[0].mxu0
      %v1595 = vpop.f32.mrb[0].mxu0
      %v1596 = vadd.f32 0.0, %v1595
      %v1597 = vpop.f32.mrb[0].mxu0
      %1598 = vmatprep.mubr.bf16.mxu0 0
      %1599 = vmatmul.mubr.bf16.gmra.mrb[0].mxu0 %v1450
      %v1600 = vpop.f32.mrb[0].mxu0
      %v1601 = vadd.f32 0.0, %v1600
      %v1602 = vpop.f32.mrb[0].mxu0
      %v1603 = vpop.f32.mrb[0].mxu0
      %v1604 = vadd.f32 0.0, %v1603
      %v1605 = vpop.f32.mrb[0].mxu0
      %1606 = vmatprep.mubr.bf16.mxu0 0
      %1607 = vmatmul.mubr.bf16.gmra.mrb[0].mxu0 %v1453
      %v1608 = vpop.f32.mrb[0].mxu0
      %v1609 = vadd.f32 0.0, %v1608
      %v1610 = vpop.f32.mrb[0].mxu0
      %v1611 = vpop.f32.mrb[0].mxu0
      %v1612 = vadd.f32 0.0, %v1611
      %v1613 = vpop.f32.mrb[0].mxu0
      %1614 = vmatprep.mubr.bf16.mxu0 0
      %1615 = vmatmul.mubr.bf16.gmra.mrb[0].mxu0 %v1456
      %v1616 = vpop.f32.mrb[0].mxu0
      %v1617 = vadd.f32 0.0, %v1616
      %v1618 = vpop.f32.mrb[0].mxu0
      %v1619 = vpop.f32.mrb[0].mxu0
      %v1620 = vadd.f32 0.0, %v1619
      %v1621 = vpop.f32.mrb[0].mxu0
      %1622 = vmatprep.mubr.bf16.mxu0 0
      %1623 = vmatmul.mubr.bf16.gmra.mrb[0].mxu0 %v1459
      %v1624 = vpop.f32.mrb[0].mxu0
      %v1625 = vadd.f32 0.0, %v1624
      %v1626 = vpop.f32.mrb[0].mxu0
      %v1627 = vpop.f32.mrb[0].mxu0
      %v1628 = vadd.f32 0.0, %v1627
      %v1629 = vpop.f32.mrb[0].mxu0
      %1630 = vmatprep.mubr.bf16.mxu0 0
      %1631 = vmatmul.mubr.bf16.gmra.mrb[0].mxu0 %v1462
      %v1632 = vpop.f32.mrb[0].mxu0
      %v1633 = vadd.f32 0.0, %v1632
      %v1634 = vpop.f32.mrb[0].mxu0
      %v1635 = vpop.f32.mrb[0].mxu0
      %v1636 = vadd.f32 0.0, %v1635
      %v1637 = vpop.f32.mrb[0].mxu0
      %1638 = vmatprep.mubr.bf16.mxu0 0
      %1639 = vmatmul.mubr.bf16.gmra.mrb[0].mxu0 %v1465
      %v1640 = vpop.f32.mrb[0].mxu0
      %v1641 = vadd.f32 0.0, %v1640
      %v1642 = vpop.f32.mrb[0].mxu0
      %v1643 = vpop.f32.mrb[0].mxu0
      %v1644 = vadd.f32 0.0, %v1643
      %v1645 = vpop.f32.mrb[0].mxu0
      %1646 = vdwg.mxu0
      %v1647 = vadd.f32 %v1202, %v1505
      %v1648 = vadd.f32 %v1203, %v1508
      %v1649 = vadd.f32 %v1204, %v1513
      %v1650 = vadd.f32 %v1205, %v1516
      %v1651 = vadd.f32 %v1206, %v1521
      %v1652 = vadd.f32 %v1207, %v1524
      %v1653 = vadd.f32 %v1208, %v1529
      %v1654 = vadd.f32 %v1209, %v1532
      %v1655 = vadd.f32 %v1210, %v1537
      %v1656 = vadd.f32 %v1211, %v1540
      %v1657 = vadd.f32 %v1212, %v1545
      %v1658 = vadd.f32 %v1213, %v1548
      %v1659 = vadd.f32 %v1214, %v1553
      %v1660 = vadd.f32 %v1215, %v1556
      %v1661 = vadd.f32 %v1216, %v1561
      %v1662 = vadd.f32 %v1217, %v1564
      %v1663 = vadd.f32 %v1218, %v1569
      %v1664 = vadd.f32 %v1219, %v1572
      %v1665 = vadd.f32 %v1220, %v1577
      %v1666 = vadd.f32 %v1221, %v1580
      %v1667 = vadd.f32 %v1222, %v1585
      %v1668 = vadd.f32 %v1223, %v1588
      %v1669 = vadd.f32 %v1224, %v1593
      %v1670 = vadd.f32 %v1225, %v1596
      %v1671 = vadd.f32 %v1226, %v1601
      %v1672 = vadd.f32 %v1227, %v1604
      %v1673 = vadd.f32 %v1228, %v1609
      %v1674 = vadd.f32 %v1229, %v1612
      %v1675 = vadd.f32 %v1230, %v1617
      %v1676 = vadd.f32 %v1231, %v1620
      %v1677 = vadd.f32 %v1232, %v1625
      %v1678 = vadd.f32 %v1233, %v1628
      %v1679 = vadd.f32 %v1234, %v1633
      %v1680 = vadd.f32 %v1235, %v1636
      %v1681 = vadd.f32 %v1236, %v1641
      %v1682 = vadd.f32 %v1237, %v1644
      %v1683 = vld [vmem:[%s165 + $0x98] sm:$0x3]
      %s1684 = scalar_lea.vmem %s1, 32
      %v1685 = vld [vmem:[%s1684] sm:$0xf]
      %v1686 = vld [vmem:[%s1684 + $0x4] sm:$0x3]
      %v1688 = vunpack.c.l.b16 %v1683
      %v1689 = vpack.c.b16 %v1688, %v1688
      %vm1690 = vsmask.f32 6400
      %v1692 = vshrl.u32 %v1352, 16
      %v1694 = vrot.slane %v1692, 1
      %v1695 = vshll.u32 %v1352, 16
      %v1697 = vrot.slane %v1695, 2
      %v1698 = vor.u32 %v1694, %v1697
      %v1700 = vshrl.u32 %v1353, 16
      %v1702 = vrot.slane %v1700, 1
      %v1703 = vshll.u32 %v1353, 16
      %v1705 = vrot.slane %v1703, 2
      %v1706 = vor.u32 %v1702, %v1705
      %v1707 = vsel %vm1690, %v1698, %v1706
      %v1709 = vshrl.u32 %v1354, 16
      %v1711 = vrot.slane %v1709, 1
      %v1712 = vshll.u32 %v1354, 16
      %v1714 = vrot.slane %v1712, 2
      %v1715 = vor.u32 %v1711, %v1714
      %v1716 = vsel %vm1690, %v1706, %v1715
      %v1718 = vshrl.u32 %v1355, 16
      %v1720 = vrot.slane %v1718, 1
      %v1721 = vshll.u32 %v1355, 16
      %v1723 = vrot.slane %v1721, 2
      %v1724 = vor.u32 %v1720, %v1723
      %v1725 = vsel %vm1690, %v1715, %v1724
      %v1727 = vshrl.u32 %v1356, 16
      %v1729 = vrot.slane %v1727, 1
      %v1730 = vshll.u32 %v1356, 16
      %v1732 = vrot.slane %v1730, 2
      %v1733 = vor.u32 %v1729, %v1732
      %v1734 = vsel %vm1690, %v1724, %v1733
      %v1736 = vshrl.u32 %v1357, 16
      %v1738 = vrot.slane %v1736, 1
      %v1739 = vshll.u32 %v1357, 16
      %v1741 = vrot.slane %v1739, 2
      %v1742 = vor.u32 %v1738, %v1741
      %v1743 = vsel %vm1690, %v1733, %v1742
      %v1745 = vshrl.u32 %v1358, 16
      %v1747 = vrot.slane %v1745, 1
      %v1748 = vshll.u32 %v1358, 16
      %v1750 = vrot.slane %v1748, 2
      %v1751 = vor.u32 %v1747, %v1750
      %v1752 = vsel %vm1690, %v1742, %v1751
      %v1754 = vshrl.u32 %v1359, 16
      %v1756 = vrot.slane %v1754, 1
      %v1757 = vshll.u32 %v1359, 16
      %v1759 = vrot.slane %v1757, 2
      %v1760 = vor.u32 %v1756, %v1759
      %v1761 = vsel %vm1690, %v1751, %v1760
      %v1763 = vshrl.u32 %v1360, 16
      %v1765 = vrot.slane %v1763, 1
      %v1766 = vshll.u32 %v1360, 16
      %v1768 = vrot.slane %v1766, 2
      %v1769 = vor.u32 %v1765, %v1768
      %v1770 = vsel %vm1690, %v1760, %v1769
      %v1772 = vshrl.u32 %v1361, 16
      %v1774 = vrot.slane %v1772, 1
      %v1775 = vshll.u32 %v1361, 16
      %v1777 = vrot.slane %v1775, 2
      %v1778 = vor.u32 %v1774, %v1777
      %v1779 = vsel %vm1690, %v1769, %v1778
      %v1781 = vshrl.u32 %v1362, 16
      %v1783 = vrot.slane %v1781, 1
      %v1784 = vshll.u32 %v1362, 16
      %v1786 = vrot.slane %v1784, 2
      %v1787 = vor.u32 %v1783, %v1786
      %v1788 = vsel %vm1690, %v1778, %v1787
      %v1790 = vshrl.u32 %v1363, 16
      %v1792 = vrot.slane %v1790, 1
      %v1793 = vshll.u32 %v1363, 16
      %v1795 = vrot.slane %v1793, 2
      %v1796 = vor.u32 %v1792, %v1795
      %v1797 = vsel %vm1690, %v1787, %v1796
      %v1799 = vshrl.u32 %v1364, 16
      %v1801 = vrot.slane %v1799, 1
      %v1802 = vshll.u32 %v1364, 16
      %v1804 = vrot.slane %v1802, 2
      %v1805 = vor.u32 %v1801, %v1804
      %v1806 = vsel %vm1690, %v1796, %v1805
      %v1808 = vshrl.u32 %v1365, 16
      %v1810 = vrot.slane %v1808, 1
      %v1811 = vshll.u32 %v1365, 16
      %v1813 = vrot.slane %v1811, 2
      %v1814 = vor.u32 %v1810, %v1813
      %v1815 = vsel %vm1690, %v1805, %v1814
      %v1817 = vshrl.u32 %v1366, 16
      %v1819 = vrot.slane %v1817, 1
      %v1820 = vshll.u32 %v1366, 16
      %v1822 = vrot.slane %v1820, 2
      %v1823 = vor.u32 %v1819, %v1822
      %v1824 = vsel %vm1690, %v1814, %v1823
      %v1826 = vshrl.u32 %v1367, 16
      %v1828 = vrot.slane %v1826, 1
      %v1829 = vshll.u32 %v1367, 16
      %v1831 = vrot.slane %v1829, 2
      %v1832 = vor.u32 %v1828, %v1831
      %v1833 = vsel %vm1690, %v1823, %v1832
      %v1835 = vshrl.u32 %v1368, 16
      %v1837 = vrot.slane %v1835, 1
      %v1838 = vshll.u32 %v1368, 16
      %v1840 = vrot.slane %v1838, 2
      %v1841 = vor.u32 %v1837, %v1840
      %v1842 = vsel %vm1690, %v1832, %v1841
      %v1844 = vshrl.u32 %v1369, 16
      %v1846 = vrot.slane %v1844, 1
      %v1847 = vshll.u32 %v1369, 16
      %v1849 = vrot.slane %v1847, 2
      %v1850 = vor.u32 %v1846, %v1849
      %v1851 = vsel %vm1690, %v1841, %v1850
      %v1853 = vshrl.u32 %v1689, 16
      %v1855 = vrot.slane %v1853, 1
      %v1856 = vshll.u32 %v1689, 16
      %v1858 = vrot.slane %v1856, 2
      %v1859 = vor.u32 %v1855, %v1858
      %v1860 = vsel %vm1690, %v1850, %v1859
      %v1863 = vunpack.c.l.b16 %v1685
      %v1864 = vunpack.c.l.b16 %v1686
      %v1865 = vpack.c.b16 %v1864, %v1863
      %v1867 = vsel %vm461, %v1707, 0
      %v1870 = vsel %vm461, %v1716, 0
      %v1873 = vsel %vm461, %v1725, 0
      %v1876 = vsel %vm461, %v1734, 0
      %v1879 = vsel %vm461, %v1743, 0
      %v1882 = vsel %vm461, %v1752, 0
      %v1885 = vsel %vm461, %v1761, 0
      %v1888 = vsel %vm461, %v1770, 0
      %v1891 = vsel %vm461, %v1779, 0
      %v1894 = vsel %vm461, %v1788, 0
      %v1897 = vsel %vm461, %v1797, 0
      %v1900 = vsel %vm461, %v1806, 0
      %v1903 = vsel %vm461, %v1815, 0
      %v1906 = vsel %vm461, %v1824, 0
      %v1909 = vsel %vm461, %v1833, 0
      %v1912 = vsel %vm461, %v1842, 0
      %v1915 = vsel %vm461, %v1851, 0
      %v1918 = vsel %vm461, %v1860, 0
      %v1921 = vsel %vm516, %v1865, 0
      %1923 = vmatprep.subr.bf16.mxu0 0
      %1924 = vmatpush1.bf16.msra.mxu0 %v1921
      %1925 = vmatprep.subr.bf16.mxu0 0
      %1926 = vmatpush1.bf16.msra.mxu0 0
      %1927 = vmatprep.subr.bf16.mxu0 0
      %1928 = vmatpush1.bf16.msra.mxu0 0
      %1929 = vmatprep.subr.bf16.mxu0 0
      %1930 = vmatpush1.bf16.msra.mxu0 0
      %1931 = vmatprep.subr.bf16.mxu0 0
      %1932 = vmatpush1.bf16.msra.mxu0 0
      %1933 = vmatprep.subr.bf16.mxu0 0
      %1934 = vmatpush1.bf16.msra.mxu0 0
      %1935 = vmatprep.subr.bf16.mxu0 0
      %1936 = vmatpush1.bf16.msra.mxu0 0
      %1937 = vmatprep.subr.bf16.mxu0 0
      %1938 = vmatpush1.bf16.msra.mxu0 0
      %1939 = vmatprep.subr.bf16.mxu0 0
      %1940 = vmatpush1.bf16.msra.mxu0 0
      %1941 = vmatprep.subr.bf16.mxu0 0
      %1942 = vmatpush1.bf16.msra.mxu0 0
      %1943 = vmatprep.subr.bf16.mxu0 0
      %1944 = vmatpush1.bf16.msra.mxu0 0
      %1945 = vmatprep.subr.bf16.mxu0 0
      %1946 = vmatpush1.bf16.msra.mxu0 0
      %1947 = vmatprep.subr.bf16.mxu0 0
      %1948 = vmatpush1.bf16.msra.mxu0 0
      %1949 = vmatprep.subr.bf16.mxu0 0
      %1950 = vmatpush1.bf16.msra.mxu0 0
      %1951 = vmatprep.subr.bf16.mxu0 0
      %1952 = vmatpush1.bf16.msra.mxu0 0
      %1953 = vmatprep.subr.bf16.mxu0 0
      %1954 = vmatpush1.bf16.msra.mxu0 0
      %1955 = vmatprep.mubr.bf16.mxu0 0
      %1956 = vmatmul.mubr.bf16.gmra.mrb[0].mxu0 %v1867
      %v1957 = vpop.f32.mrb[0].mxu0
      %v1958 = vadd.f32 0.0, %v1957
      %v1959 = vpop.f32.mrb[0].mxu0
      %v1960 = vpop.f32.mrb[0].mxu0
      %v1961 = vadd.f32 0.0, %v1960
      %v1962 = vpop.f32.mrb[0].mxu0
      %1963 = vmatprep.mubr.bf16.mxu0 0
      %1964 = vmatmul.mubr.bf16.gmra.mrb[0].mxu0 %v1870
      %v1965 = vpop.f32.mrb[0].mxu0
      %v1966 = vadd.f32 0.0, %v1965
      %v1967 = vpop.f32.mrb[0].mxu0
      %v1968 = vpop.f32.mrb[0].mxu0
      %v1969 = vadd.f32 0.0, %v1968
      %v1970 = vpop.f32.mrb[0].mxu0
      %1971 = vmatprep.mubr.bf16.mxu0 0
      %1972 = vmatmul.mubr.bf16.gmra.mrb[0].mxu0 %v1873
      %v1973 = vpop.f32.mrb[0].mxu0
      %v1974 = vadd.f32 0.0, %v1973
      %v1975 = vpop.f32.mrb[0].mxu0
      %v1976 = vpop.f32.mrb[0].mxu0
      %v1977 = vadd.f32 0.0, %v1976
      %v1978 = vpop.f32.mrb[0].mxu0
      %1979 = vmatprep.mubr.bf16.mxu0 0
      %1980 = vmatmul.mubr.bf16.gmra.mrb[0].mxu0 %v1876
      %v1981 = vpop.f32.mrb[0].mxu0
      %v1982 = vadd.f32 0.0, %v1981
      %v1983 = vpop.f32.mrb[0].mxu0
      %v1984 = vpop.f32.mrb[0].mxu0
      %v1985 = vadd.f32 0.0, %v1984
      %v1986 = vpop.f32.mrb[0].mxu0
      %1987 = vmatprep.mubr.bf16.mxu0 0
      %1988 = vmatmul.mubr.bf16.gmra.mrb[0].mxu0 %v1879
      %v1989 = vpop.f32.mrb[0].mxu0
      %v1990 = vadd.f32 0.0, %v1989
      %v1991 = vpop.f32.mrb[0].mxu0
      %v1992 = vpop.f32.mrb[0].mxu0
      %v1993 = vadd.f32 0.0, %v1992
      %v1994 = vpop.f32.mrb[0].mxu0
      %1995 = vmatprep.mubr.bf16.mxu0 0
      %1996 = vmatmul.mubr.bf16.gmra.mrb[0].mxu0 %v1882
      %v1997 = vpop.f32.mrb[0].mxu0
      %v1998 = vadd.f32 0.0, %v1997
      %v1999 = vpop.f32.mrb[0].mxu0
      %v2000 = vpop.f32.mrb[0].mxu0
      %v2001 = vadd.f32 0.0, %v2000
      %v2002 = vpop.f32.mrb[0].mxu0
      %2003 = vmatprep.mubr.bf16.mxu0 0
      %2004 = vmatmul.mubr.bf16.gmra.mrb[0].mxu0 %v1885
      %v2005 = vpop.f32.mrb[0].mxu0
      %v2006 = vadd.f32 0.0, %v2005
      %v2007 = vpop.f32.mrb[0].mxu0
      %v2008 = vpop.f32.mrb[0].mxu0
      %v2009 = vadd.f32 0.0, %v2008
      %v2010 = vpop.f32.mrb[0].mxu0
      %2011 = vmatprep.mubr.bf16.mxu0 0
      %2012 = vmatmul.mubr.bf16.gmra.mrb[0].mxu0 %v1888
      %v2013 = vpop.f32.mrb[0].mxu0
      %v2014 = vadd.f32 0.0, %v2013
      %v2015 = vpop.f32.mrb[0].mxu0
      %v2016 = vpop.f32.mrb[0].mxu0
      %v2017 = vadd.f32 0.0, %v2016
      %v2018 = vpop.f32.mrb[0].mxu0
      %2019 = vmatprep.mubr.bf16.mxu0 0
      %2020 = vmatmul.mubr.bf16.gmra.mrb[0].mxu0 %v1891
      %v2021 = vpop.f32.mrb[0].mxu0
      %v2022 = vadd.f32 0.0, %v2021
      %v2023 = vpop.f32.mrb[0].mxu0
      %v2024 = vpop.f32.mrb[0].mxu0
      %v2025 = vadd.f32 0.0, %v2024
      %v2026 = vpop.f32.mrb[0].mxu0
      %2027 = vmatprep.mubr.bf16.mxu0 0
      %2028 = vmatmul.mubr.bf16.gmra.mrb[0].mxu0 %v1894
      %v2029 = vpop.f32.mrb[0].mxu0
      %v2030 = vadd.f32 0.0, %v2029
      %v2031 = vpop.f32.mrb[0].mxu0
      %v2032 = vpop.f32.mrb[0].mxu0
      %v2033 = vadd.f32 0.0, %v2032
      %v2034 = vpop.f32.mrb[0].mxu0
      %2035 = vmatprep.mubr.bf16.mxu0 0
      %2036 = vmatmul.mubr.bf16.gmra.mrb[0].mxu0 %v1897
      %v2037 = vpop.f32.mrb[0].mxu0
      %v2038 = vadd.f32 0.0, %v2037
      %v2039 = vpop.f32.mrb[0].mxu0
      %v2040 = vpop.f32.mrb[0].mxu0
      %v2041 = vadd.f32 0.0, %v2040
      %v2042 = vpop.f32.mrb[0].mxu0
      %2043 = vmatprep.mubr.bf16.mxu0 0
      %2044 = vmatmul.mubr.bf16.gmra.mrb[0].mxu0 %v1900
      %v2045 = vpop.f32.mrb[0].mxu0
      %v2046 = vadd.f32 0.0, %v2045
      %v2047 = vpop.f32.mrb[0].mxu0
      %v2048 = vpop.f32.mrb[0].mxu0
      %v2049 = vadd.f32 0.0, %v2048
      %v2050 = vpop.f32.mrb[0].mxu0
      %2051 = vmatprep.mubr.bf16.mxu0 0
      %2052 = vmatmul.mubr.bf16.gmra.mrb[0].mxu0 %v1903
      %v2053 = vpop.f32.mrb[0].mxu0
      %v2054 = vadd.f32 0.0, %v2053
      %v2055 = vpop.f32.mrb[0].mxu0
      %v2056 = vpop.f32.mrb[0].mxu0
      %v2057 = vadd.f32 0.0, %v2056
      %v2058 = vpop.f32.mrb[0].mxu0
      %2059 = vmatprep.mubr.bf16.mxu0 0
      %2060 = vmatmul.mubr.bf16.gmra.mrb[0].mxu0 %v1906
      %v2061 = vpop.f32.mrb[0].mxu0
      %v2062 = vadd.f32 0.0, %v2061
      %v2063 = vpop.f32.mrb[0].mxu0
      %v2064 = vpop.f32.mrb[0].mxu0
      %v2065 = vadd.f32 0.0, %v2064
      %v2066 = vpop.f32.mrb[0].mxu0
      %2067 = vmatprep.mubr.bf16.mxu0 0
      %2068 = vmatmul.mubr.bf16.gmra.mrb[0].mxu0 %v1909
      %v2069 = vpop.f32.mrb[0].mxu0
      %v2070 = vadd.f32 0.0, %v2069
      %v2071 = vpop.f32.mrb[0].mxu0
      %v2072 = vpop.f32.mrb[0].mxu0
      %v2073 = vadd.f32 0.0, %v2072
      %v2074 = vpop.f32.mrb[0].mxu0
      %2075 = vmatprep.mubr.bf16.mxu0 0
      %2076 = vmatmul.mubr.bf16.gmra.mrb[0].mxu0 %v1912
      %v2077 = vpop.f32.mrb[0].mxu0
      %v2078 = vadd.f32 0.0, %v2077
      %v2079 = vpop.f32.mrb[0].mxu0
      %v2080 = vpop.f32.mrb[0].mxu0
      %v2081 = vadd.f32 0.0, %v2080
      %v2082 = vpop.f32.mrb[0].mxu0
      %2083 = vmatprep.mubr.bf16.mxu0 0
      %2084 = vmatmul.mubr.bf16.gmra.mrb[0].mxu0 %v1915
      %v2085 = vpop.f32.mrb[0].mxu0
      %v2086 = vadd.f32 0.0, %v2085
      %v2087 = vpop.f32.mrb[0].mxu0
      %v2088 = vpop.f32.mrb[0].mxu0
      %v2089 = vadd.f32 0.0, %v2088
      %v2090 = vpop.f32.mrb[0].mxu0
      %2091 = vmatprep.mubr.bf16.mxu0 0
      %2092 = vmatmul.mubr.bf16.gmra.mrb[0].mxu0 %v1918
      %v2093 = vpop.f32.mrb[0].mxu0
      %v2094 = vadd.f32 0.0, %v2093
      %v2095 = vpop.f32.mrb[0].mxu0
      %v2096 = vpop.f32.mrb[0].mxu0
      %v2097 = vadd.f32 0.0, %v2096
      %v2098 = vpop.f32.mrb[0].mxu0
      %2099 = vdwg.mxu0
      %v2100 = vadd.f32 %v1647, %v1958
      %v2101 = vadd.f32 %v1648, %v1961
      %v2102 = vadd.f32 %v1649, %v1966
      %v2103 = vadd.f32 %v1650, %v1969
      %v2104 = vadd.f32 %v1651, %v1974
      %v2105 = vadd.f32 %v1652, %v1977
      %v2106 = vadd.f32 %v1653, %v1982
      %v2107 = vadd.f32 %v1654, %v1985
      %v2108 = vadd.f32 %v1655, %v1990
      %v2109 = vadd.f32 %v1656, %v1993
      %v2110 = vadd.f32 %v1657, %v1998
      %v2111 = vadd.f32 %v1658, %v2001
      %v2112 = vadd.f32 %v1659, %v2006
      %v2113 = vadd.f32 %v1660, %v2009
      %v2114 = vadd.f32 %v1661, %v2014
      %v2115 = vadd.f32 %v1662, %v2017
      %v2116 = vadd.f32 %v1663, %v2022
      %v2117 = vadd.f32 %v1664, %v2025
      %v2118 = vadd.f32 %v1665, %v2030
      %v2119 = vadd.f32 %v1666, %v2033
      %v2120 = vadd.f32 %v1667, %v2038
      %v2121 = vadd.f32 %v1668, %v2041
      %v2122 = vadd.f32 %v1669, %v2046
      %v2123 = vadd.f32 %v1670, %v2049
      %v2124 = vadd.f32 %v1671, %v2054
      %v2125 = vadd.f32 %v1672, %v2057
      %v2126 = vadd.f32 %v1673, %v2062
      %v2127 = vadd.f32 %v1674, %v2065
      %v2128 = vadd.f32 %v1675, %v2070
      %v2129 = vadd.f32 %v1676, %v2073
      %v2130 = vadd.f32 %v1677, %v2078
      %v2131 = vadd.f32 %v1678, %v2081
      %v2132 = vadd.f32 %v1679, %v2086
      %v2133 = vadd.f32 %v1680, %v2089
      %v2134 = vadd.f32 %v1681, %v2094
      %v2135 = vadd.f32 %v1682, %v2097
      %v2136 = vld [vmem:[%s165 + $0x8] sm:$0xc]
      %s2137 = scalar_lea.vmem %s1, 40
      %v2138 = vld [vmem:[%s2137] sm:$0xf]
      %v2139 = vld [vmem:[%s2137 + $0x4] sm:$0x3]
      %v2141 = vunpack.c.l.b16 %v2136
      %v2142 = vpack.c.b16 %v1316, %v2141
      %vm2143 = vcmask 1045504
      %v2144 = vrot.slane %v2142, 2
      %v2145 = vrot.slane %v1353, 2
      %v2146 = vsel %vm2143, %v2144, %v2145
      %v2147 = vrot.slane %v1354, 2
      %v2148 = vsel %vm2143, %v2145, %v2147
      %v2149 = vrot.slane %v1355, 2
      %v2150 = vsel %vm2143, %v2147, %v2149
      %v2151 = vrot.slane %v1356, 2
      %v2152 = vsel %vm2143, %v2149, %v2151
      %v2153 = vrot.slane %v1357, 2
      %v2154 = vsel %vm2143, %v2151, %v2153
      %v2155 = vrot.slane %v1358, 2
      %v2156 = vsel %vm2143, %v2153, %v2155
      %v2157 = vrot.slane %v1359, 2
      %v2158 = vsel %vm2143, %v2155, %v2157
      %v2159 = vrot.slane %v1360, 2
      %v2160 = vsel %vm2143, %v2157, %v2159
      %v2161 = vrot.slane %v1361, 2
      %v2162 = vsel %vm2143, %v2159, %v2161
      %v2163 = vrot.slane %v1362, 2
      %v2164 = vsel %vm2143, %v2161, %v2163
      %v2165 = vrot.slane %v1363, 2
      %v2166 = vsel %vm2143, %v2163, %v2165
      %v2167 = vrot.slane %v1364, 2
      %v2168 = vsel %vm2143, %v2165, %v2167
      %v2169 = vrot.slane %v1365, 2
      %v2170 = vsel %vm2143, %v2167, %v2169
      %v2171 = vrot.slane %v1366, 2
      %v2172 = vsel %vm2143, %v2169, %v2171
      %v2173 = vrot.slane %v1367, 2
      %v2174 = vsel %vm2143, %v2171, %v2173
      %v2175 = vrot.slane %v1368, 2
      %v2176 = vsel %vm2143, %v2173, %v2175
      %v2177 = vrot.slane %v1369, 2
      %v2178 = vsel %vm2143, %v2175, %v2177
      %v2179 = vrot.slane %v1689, 2
      %v2180 = vsel %vm2143, %v2177, %v2179
      %v2183 = vunpack.c.l.b16 %v2138
      %v2184 = vunpack.c.l.b16 %v2139
      %v2185 = vpack.c.b16 %v2184, %v2183
      %v2187 = vsel %vm461, %v2146, 0
      %v2190 = vsel %vm461, %v2148, 0
      %v2193 = vsel %vm461, %v2150, 0
      %v2196 = vsel %vm461, %v2152, 0
      %v2199 = vsel %vm461, %v2154, 0
      %v2202 = vsel %vm461, %v2156, 0
      %v2205 = vsel %vm461, %v2158, 0
      %v2208 = vsel %vm461, %v2160, 0
      %v2211 = vsel %vm461, %v2162, 0
      %v2214 = vsel %vm461, %v2164, 0
      %v2217 = vsel %vm461, %v2166, 0
      %v2220 = vsel %vm461, %v2168, 0
      %v2223 = vsel %vm461, %v2170, 0
      %v2226 = vsel %vm461, %v2172, 0
      %v2229 = vsel %vm461, %v2174, 0
      %v2232 = vsel %vm461, %v2176, 0
      %v2235 = vsel %vm461, %v2178, 0
      %v2238 = vsel %vm461, %v2180, 0
      %v2241 = vsel %vm516, %v2185, 0
      %2243 = vmatprep.subr.bf16.mxu0 0
      %2244 = vmatpush1.bf16.msra.mxu0 %v2241
      %2245 = vmatprep.subr.bf16.mxu0 0
      %2246 = vmatpush1.bf16.msra.mxu0 0
      %2247 = vmatprep.subr.bf16.mxu0 0
      %2248 = vmatpush1.bf16.msra.mxu0 0
      %2249 = vmatprep.subr.bf16.mxu0 0
      %2250 = vmatpush1.bf16.msra.mxu0 0
      %2251 = vmatprep.subr.bf16.mxu0 0
      %2252 = vmatpush1.bf16.msra.mxu0 0
      %2253 = vmatprep.subr.bf16.mxu0 0
      %2254 = vmatpush1.bf16.msra.mxu0 0
      %2255 = vmatprep.subr.bf16.mxu0 0
      %2256 = vmatpush1.bf16.msra.mxu0 0
      %2257 = vmatprep.subr.bf16.mxu0 0
      %2258 = vmatpush1.bf16.msra.mxu0 0
      %2259 = vmatprep.subr.bf16.mxu0 0
      %2260 = vmatpush1.bf16.msra.mxu0 0
      %2261 = vmatprep.subr.bf16.mxu0 0
      %2262 = vmatpush1.bf16.msra.mxu0 0
      %2263 = vmatprep.subr.bf16.mxu0 0
      %2264 = vmatpush1.bf16.msra.mxu0 0
      %2265 = vmatprep.subr.bf16.mxu0 0
      %2266 = vmatpush1.bf16.msra.mxu0 0
      %2267 = vmatprep.subr.bf16.mxu0 0
      %2268 = vmatpush1.bf16.msra.mxu0 0
      %2269 = vmatprep.subr.bf16.mxu0 0
      %2270 = vmatpush1.bf16.msra.mxu0 0
      %2271 = vmatprep.subr.bf16.mxu0 0
      %2272 = vmatpush1.bf16.msra.mxu0 0
      %2273 = vmatprep.subr.bf16.mxu0 0
      %2274 = vmatpush1.bf16.msra.mxu0 0
      %2275 = vmatprep.mubr.bf16.mxu0 0
      %2276 = vmatmul.mubr.bf16.gmra.mrb[0].mxu0 %v2187
      %v2277 = vpop.f32.mrb[0].mxu0
      %v2278 = vadd.f32 0.0, %v2277
      %v2279 = vpop.f32.mrb[0].mxu0
      %v2280 = vpop.f32.mrb[0].mxu0
      %v2281 = vadd.f32 0.0, %v2280
      %v2282 = vpop.f32.mrb[0].mxu0
      %2283 = vmatprep.mubr.bf16.mxu0 0
      %2284 = vmatmul.mubr.bf16.gmra.mrb[0].mxu0 %v2190
      %v2285 = vpop.f32.mrb[0].mxu0
      %v2286 = vadd.f32 0.0, %v2285
      %v2287 = vpop.f32.mrb[0].mxu0
      %v2288 = vpop.f32.mrb[0].mxu0
      %v2289 = vadd.f32 0.0, %v2288
      %v2290 = vpop.f32.mrb[0].mxu0
      %2291 = vmatprep.mubr.bf16.mxu0 0
      %2292 = vmatmul.mubr.bf16.gmra.mrb[0].mxu0 %v2193
      %v2293 = vpop.f32.mrb[0].mxu0
      %v2294 = vadd.f32 0.0, %v2293
      %v2295 = vpop.f32.mrb[0].mxu0
      %v2296 = vpop.f32.mrb[0].mxu0
      %v2297 = vadd.f32 0.0, %v2296
      %v2298 = vpop.f32.mrb[0].mxu0
      %2299 = vmatprep.mubr.bf16.mxu0 0
      %2300 = vmatmul.mubr.bf16.gmra.mrb[0].mxu0 %v2196
      %v2301 = vpop.f32.mrb[0].mxu0
      %v2302 = vadd.f32 0.0, %v2301
      %v2303 = vpop.f32.mrb[0].mxu0
      %v2304 = vpop.f32.mrb[0].mxu0
      %v2305 = vadd.f32 0.0, %v2304
      %v2306 = vpop.f32.mrb[0].mxu0
      %2307 = vmatprep.mubr.bf16.mxu0 0
      %2308 = vmatmul.mubr.bf16.gmra.mrb[0].mxu0 %v2199
      %v2309 = vpop.f32.mrb[0].mxu0
      %v2310 = vadd.f32 0.0, %v2309
      %v2311 = vpop.f32.mrb[0].mxu0
      %v2312 = vpop.f32.mrb[0].mxu0
      %v2313 = vadd.f32 0.0, %v2312
      %v2314 = vpop.f32.mrb[0].mxu0
      %2315 = vmatprep.mubr.bf16.mxu0 0
      %2316 = vmatmul.mubr.bf16.gmra.mrb[0].mxu0 %v2202
      %v2317 = vpop.f32.mrb[0].mxu0
      %v2318 = vadd.f32 0.0, %v2317
      %v2319 = vpop.f32.mrb[0].mxu0
      %v2320 = vpop.f32.mrb[0].mxu0
      %v2321 = vadd.f32 0.0, %v2320
      %v2322 = vpop.f32.mrb[0].mxu0
      %2323 = vmatprep.mubr.bf16.mxu0 0
      %2324 = vmatmul.mubr.bf16.gmra.mrb[0].mxu0 %v2205
      %v2325 = vpop.f32.mrb[0].mxu0
      %v2326 = vadd.f32 0.0, %v2325
      %v2327 = vpop.f32.mrb[0].mxu0
      %v2328 = vpop.f32.mrb[0].mxu0
      %v2329 = vadd.f32 0.0, %v2328
      %v2330 = vpop.f32.mrb[0].mxu0
      %2331 = vmatprep.mubr.bf16.mxu0 0
      %2332 = vmatmul.mubr.bf16.gmra.mrb[0].mxu0 %v2208
      %v2333 = vpop.f32.mrb[0].mxu0
      %v2334 = vadd.f32 0.0, %v2333
      %v2335 = vpop.f32.mrb[0].mxu0
      %v2336 = vpop.f32.mrb[0].mxu0
      %v2337 = vadd.f32 0.0, %v2336
      %v2338 = vpop.f32.mrb[0].mxu0
      %2339 = vmatprep.mubr.bf16.mxu0 0
      %2340 = vmatmul.mubr.bf16.gmra.mrb[0].mxu0 %v2211
      %v2341 = vpop.f32.mrb[0].mxu0
      %v2342 = vadd.f32 0.0, %v2341
      %v2343 = vpop.f32.mrb[0].mxu0
      %v2344 = vpop.f32.mrb[0].mxu0
      %v2345 = vadd.f32 0.0, %v2344
      %v2346 = vpop.f32.mrb[0].mxu0
      %2347 = vmatprep.mubr.bf16.mxu0 0
      %2348 = vmatmul.mubr.bf16.gmra.mrb[0].mxu0 %v2214
      %v2349 = vpop.f32.mrb[0].mxu0
      %v2350 = vadd.f32 0.0, %v2349
      %v2351 = vpop.f32.mrb[0].mxu0
      %v2352 = vpop.f32.mrb[0].mxu0
      %v2353 = vadd.f32 0.0, %v2352
      %v2354 = vpop.f32.mrb[0].mxu0
      %2355 = vmatprep.mubr.bf16.mxu0 0
      %2356 = vmatmul.mubr.bf16.gmra.mrb[0].mxu0 %v2217
      %v2357 = vpop.f32.mrb[0].mxu0
      %v2358 = vadd.f32 0.0, %v2357
      %v2359 = vpop.f32.mrb[0].mxu0
      %v2360 = vpop.f32.mrb[0].mxu0
      %v2361 = vadd.f32 0.0, %v2360
      %v2362 = vpop.f32.mrb[0].mxu0
      %2363 = vmatprep.mubr.bf16.mxu0 0
      %2364 = vmatmul.mubr.bf16.gmra.mrb[0].mxu0 %v2220
      %v2365 = vpop.f32.mrb[0].mxu0
      %v2366 = vadd.f32 0.0, %v2365
      %v2367 = vpop.f32.mrb[0].mxu0
      %v2368 = vpop.f32.mrb[0].mxu0
      %v2369 = vadd.f32 0.0, %v2368
      %v2370 = vpop.f32.mrb[0].mxu0
      %2371 = vmatprep.mubr.bf16.mxu0 0
      %2372 = vmatmul.mubr.bf16.gmra.mrb[0].mxu0 %v2223
      %v2373 = vpop.f32.mrb[0].mxu0
      %v2374 = vadd.f32 0.0, %v2373
      %v2375 = vpop.f32.mrb[0].mxu0
      %v2376 = vpop.f32.mrb[0].mxu0
      %v2377 = vadd.f32 0.0, %v2376
      %v2378 = vpop.f32.mrb[0].mxu0
      %2379 = vmatprep.mubr.bf16.mxu0 0
      %2380 = vmatmul.mubr.bf16.gmra.mrb[0].mxu0 %v2226
      %v2381 = vpop.f32.mrb[0].mxu0
      %v2382 = vadd.f32 0.0, %v2381
      %v2383 = vpop.f32.mrb[0].mxu0
      %v2384 = vpop.f32.mrb[0].mxu0
      %v2385 = vadd.f32 0.0, %v2384
      %v2386 = vpop.f32.mrb[0].mxu0
      %2387 = vmatprep.mubr.bf16.mxu0 0
      %2388 = vmatmul.mubr.bf16.gmra.mrb[0].mxu0 %v2229
      %v2389 = vpop.f32.mrb[0].mxu0
      %v2390 = vadd.f32 0.0, %v2389
      %v2391 = vpop.f32.mrb[0].mxu0
      %v2392 = vpop.f32.mrb[0].mxu0
      %v2393 = vadd.f32 0.0, %v2392
      %v2394 = vpop.f32.mrb[0].mxu0
      %2395 = vmatprep.mubr.bf16.mxu0 0
      %2396 = vmatmul.mubr.bf16.gmra.mrb[0].mxu0 %v2232
      %v2397 = vpop.f32.mrb[0].mxu0
      %v2398 = vadd.f32 0.0, %v2397
      %v2399 = vpop.f32.mrb[0].mxu0
      %v2400 = vpop.f32.mrb[0].mxu0
      %v2401 = vadd.f32 0.0, %v2400
      %v2402 = vpop.f32.mrb[0].mxu0
      %2403 = vmatprep.mubr.bf16.mxu0 0
      %2404 = vmatmul.mubr.bf16.gmra.mrb[0].mxu0 %v2235
      %v2405 = vpop.f32.mrb[0].mxu0
      %v2406 = vadd.f32 0.0, %v2405
      %v2407 = vpop.f32.mrb[0].mxu0
      %v2408 = vpop.f32.mrb[0].mxu0
      %v2409 = vadd.f32 0.0, %v2408
      %v2410 = vpop.f32.mrb[0].mxu0
      %2411 = vmatprep.mubr.bf16.mxu0 0
      %2412 = vmatmul.mubr.bf16.gmra.mrb[0].mxu0 %v2238
      %v2413 = vpop.f32.mrb[0].mxu0
      %v2414 = vadd.f32 0.0, %v2413
      %v2415 = vpop.f32.mrb[0].mxu0
      %v2416 = vpop.f32.mrb[0].mxu0
      %v2417 = vadd.f32 0.0, %v2416
      %v2418 = vpop.f32.mrb[0].mxu0
      %2419 = vdwg.mxu0
      %v2420 = vadd.f32 %v2100, %v2278
      %v2421 = vadd.f32 %v2101, %v2281
      %v2422 = vadd.f32 %v2102, %v2286
      %v2423 = vadd.f32 %v2103, %v2289
      %v2424 = vadd.f32 %v2104, %v2294
      %v2425 = vadd.f32 %v2105, %v2297
      %v2426 = vadd.f32 %v2106, %v2302
      %v2427 = vadd.f32 %v2107, %v2305
      %v2428 = vadd.f32 %v2108, %v2310
      %v2429 = vadd.f32 %v2109, %v2313
      %v2430 = vadd.f32 %v2110, %v2318
      %v2431 = vadd.f32 %v2111, %v2321
      %v2432 = vadd.f32 %v2112, %v2326
      %v2433 = vadd.f32 %v2113, %v2329
      %v2434 = vadd.f32 %v2114, %v2334
      %v2435 = vadd.f32 %v2115, %v2337
      %v2436 = vadd.f32 %v2116, %v2342
      %v2437 = vadd.f32 %v2117, %v2345
      %v2438 = vadd.f32 %v2118, %v2350
      %v2439 = vadd.f32 %v2119, %v2353
      %v2440 = vadd.f32 %v2120, %v2358
      %v2441 = vadd.f32 %v2121, %v2361
      %v2442 = vadd.f32 %v2122, %v2366
      %v2443 = vadd.f32 %v2123, %v2369
      %v2444 = vadd.f32 %v2124, %v2374
      %v2445 = vadd.f32 %v2125, %v2377
      %v2446 = vadd.f32 %v2126, %v2382
      %v2447 = vadd.f32 %v2127, %v2385
      %v2448 = vadd.f32 %v2128, %v2390
      %v2449 = vadd.f32 %v2129, %v2393
      %v2450 = vadd.f32 %v2130, %v2398
      %v2451 = vadd.f32 %v2131, %v2401
      %v2452 = vadd.f32 %v2132, %v2406
      %v2453 = vadd.f32 %v2133, %v2409
      %v2454 = vadd.f32 %v2134, %v2414
      %v2455 = vadd.f32 %v2135, %v2417
      %v2456 = vld [vmem:[%s165 + $0x10] sm:$0xc]
      %v2457 = vld [vmem:[%s165 + $0x14] sm:$0xf]
      %v2458 = vld [vmem:[%s165 + $0x18] sm:$0xf]
      %v2459 = vld [vmem:[%s165 + $0x1c] sm:$0xf]
      %v2460 = vld [vmem:[%s165 + $0x20] sm:$0xf]
      %v2461 = vld [vmem:[%s165 + $0x24] sm:$0xf]
      %v2462 = vld [vmem:[%s165 + $0x28] sm:$0xf]
      %v2463 = vld [vmem:[%s165 + $0x2c] sm:$0xf]
      %v2464 = vld [vmem:[%s165 + $0x30] sm:$0xf]
      %v2465 = vld [vmem:[%s165 + $0x34] sm:$0xf]
      %v2466 = vld [vmem:[%s165 + $0x38] sm:$0xf]
      %v2467 = vld [vmem:[%s165 + $0x3c] sm:$0xf]
      %v2468 = vld [vmem:[%s165 + $0x40] sm:$0xf]
      %v2469 = vld [vmem:[%s165 + $0x44] sm:$0xf]
      %v2470 = vld [vmem:[%s165 + $0x48] sm:$0xf]
      %v2471 = vld [vmem:[%s165 + $0x4c] sm:$0xf]
      %v2472 = vld [vmem:[%s165 + $0x50] sm:$0xf]
      %v2473 = vld [vmem:[%s165 + $0x54] sm:$0xf]
      %v2474 = vld [vmem:[%s165 + $0x58] sm:$0xf]
      %v2475 = vld [vmem:[%s165 + $0x5c] sm:$0xf]
      %v2476 = vld [vmem:[%s165 + $0x60] sm:$0xf]
      %v2477 = vld [vmem:[%s165 + $0x64] sm:$0xf]
      %v2478 = vld [vmem:[%s165 + $0x68] sm:$0xf]
      %v2479 = vld [vmem:[%s165 + $0x6c] sm:$0xf]
      %v2480 = vld [vmem:[%s165 + $0x70] sm:$0xf]
      %v2481 = vld [vmem:[%s165 + $0x74] sm:$0xf]
      %v2482 = vld [vmem:[%s165 + $0x78] sm:$0xf]
      %v2483 = vld [vmem:[%s165 + $0x7c] sm:$0xf]
      %v2484 = vld [vmem:[%s165 + $0x80] sm:$0xf]
      %v2485 = vld [vmem:[%s165 + $0x84] sm:$0xf]
      %v2486 = vld [vmem:[%s165 + $0x88] sm:$0xf]
      %v2487 = vld [vmem:[%s165 + $0x8c] sm:$0xf]
      %v2488 = vld [vmem:[%s165 + $0x90] sm:$0xf]
      %v2489 = vld [vmem:[%s165 + $0x94] sm:$0xf]
      %v2490 = vld [vmem:[%s165 + $0x98] sm:$0xf]
      %v2491 = vld [vmem:[%s165 + $0x9c] sm:$0xf]
      %v2492 = vld [vmem:[%s165 + $0xa0] sm:$0x3]
      %s2493 = scalar_lea.vmem %s1, 48
      %v2494 = vld [vmem:[%s2493] sm:$0xf]
      %v2495 = vld [vmem:[%s2493 + $0x4] sm:$0x3]
      %v2533 = vunpack.c.l.b16 %v2456
      %v2534 = vunpack.c.l.b16 %v2457
      %v2535 = vunpack.c.l.b16 %v2458
      %v2536 = vunpack.c.l.b16 %v2459
      %v2537 = vunpack.c.l.b16 %v2460
      %v2538 = vunpack.c.l.b16 %v2461
      %v2539 = vunpack.c.l.b16 %v2462
      %v2540 = vunpack.c.l.b16 %v2463
      %v2541 = vunpack.c.l.b16 %v2464
      %v2542 = vunpack.c.l.b16 %v2465
      %v2543 = vunpack.c.l.b16 %v2466
      %v2544 = vunpack.c.l.b16 %v2467
      %v2545 = vunpack.c.l.b16 %v2468
      %v2546 = vunpack.c.l.b16 %v2469
      %v2547 = vunpack.c.l.b16 %v2470
      %v2548 = vunpack.c.l.b16 %v2471
      %v2549 = vunpack.c.l.b16 %v2472
      %v2550 = vunpack.c.l.b16 %v2473
      %v2551 = vunpack.c.l.b16 %v2474
      %v2552 = vunpack.c.l.b16 %v2475
      %v2553 = vunpack.c.l.b16 %v2476
      %v2554 = vunpack.c.l.b16 %v2477
      %v2555 = vunpack.c.l.b16 %v2478
      %v2556 = vunpack.c.l.b16 %v2479
      %v2557 = vunpack.c.l.b16 %v2480
      %v2558 = vunpack.c.l.b16 %v2481
      %v2559 = vunpack.c.l.b16 %v2482
      %v2560 = vunpack.c.l.b16 %v2483
      %v2561 = vunpack.c.l.b16 %v2484
      %v2562 = vunpack.c.l.b16 %v2485
      %v2563 = vunpack.c.l.b16 %v2486
      %v2564 = vunpack.c.l.b16 %v2487
      %v2565 = vunpack.c.l.b16 %v2488
      %v2566 = vunpack.c.l.b16 %v2489
      %v2567 = vunpack.c.l.b16 %v2490
      %v2568 = vunpack.c.l.b16 %v2491
      %v2569 = vunpack.c.l.b16 %v2492
      %v2570 = vpack.c.b16 %v2534, %v2533
      %v2571 = vpack.c.b16 %v2536, %v2535
      %v2572 = vpack.c.b16 %v2538, %v2537
      %v2573 = vpack.c.b16 %v2540, %v2539
      %v2574 = vpack.c.b16 %v2542, %v2541
      %v2575 = vpack.c.b16 %v2544, %v2543
      %v2576 = vpack.c.b16 %v2546, %v2545
      %v2577 = vpack.c.b16 %v2548, %v2547
      %v2578 = vpack.c.b16 %v2550, %v2549
      %v2579 = vpack.c.b16 %v2552, %v2551
      %v2580 = vpack.c.b16 %v2554, %v2553
      %v2581 = vpack.c.b16 %v2556, %v2555
      %v2582 = vpack.c.b16 %v2558, %v2557
      %v2583 = vpack.c.b16 %v2560, %v2559
      %v2584 = vpack.c.b16 %v2562, %v2561
      %v2585 = vpack.c.b16 %v2564, %v2563
      %v2586 = vpack.c.b16 %v2566, %v2565
      %v2587 = vpack.c.b16 %v2568, %v2567
      %v2588 = vpack.c.b16 %v2569, %v2569
      %v2589 = vrot.slane %v2570, 2
      %v2590 = vrot.slane %v2571, 2
      %v2591 = vsel %vm2143, %v2589, %v2590
      %v2592 = vrot.slane %v2572, 2
      %v2593 = vsel %vm2143, %v2590, %v2592
      %v2594 = vrot.slane %v2573, 2
      %v2595 = vsel %vm2143, %v2592, %v2594
      %v2596 = vrot.slane %v2574, 2
      %v2597 = vsel %vm2143, %v2594, %v2596
      %v2598 = vrot.slane %v2575, 2
      %v2599 = vsel %vm2143, %v2596, %v2598
      %v2600 = vrot.slane %v2576, 2
      %v2601 = vsel %vm2143, %v2598, %v2600
      %v2602 = vrot.slane %v2577, 2
      %v2603 = vsel %vm2143, %v2600, %v2602
      %v2604 = vrot.slane %v2578, 2
      %v2605 = vsel %vm2143, %v2602, %v2604
      %v2606 = vrot.slane %v2579, 2
      %v2607 = vsel %vm2143, %v2604, %v2606
      %v2608 = vrot.slane %v2580, 2
      %v2609 = vsel %vm2143, %v2606, %v2608
      %v2610 = vrot.slane %v2581, 2
      %v2611 = vsel %vm2143, %v2608, %v2610
      %v2612 = vrot.slane %v2582, 2
      %v2613 = vsel %vm2143, %v2610, %v2612
      %v2614 = vrot.slane %v2583, 2
      %v2615 = vsel %vm2143, %v2612, %v2614
      %v2616 = vrot.slane %v2584, 2
      %v2617 = vsel %vm2143, %v2614, %v2616
      %v2618 = vrot.slane %v2585, 2
      %v2619 = vsel %vm2143, %v2616, %v2618
      %v2620 = vrot.slane %v2586, 2
      %v2621 = vsel %vm2143, %v2618, %v2620
      %v2622 = vrot.slane %v2587, 2
      %v2623 = vsel %vm2143, %v2620, %v2622
      %v2624 = vrot.slane %v2588, 2
      %v2625 = vsel %vm2143, %v2622, %v2624
      %v2628 = vunpack.c.l.b16 %v2494
      %v2629 = vunpack.c.l.b16 %v2495
      %v2630 = vpack.c.b16 %v2629, %v2628
      %v2632 = vsel %vm461, %v2591, 0
      %v2635 = vsel %vm461, %v2593, 0
      %v2638 = vsel %vm461, %v2595, 0
      %v2641 = vsel %vm461, %v2597, 0
      %v2644 = vsel %vm461, %v2599, 0
      %v2647 = vsel %vm461, %v2601, 0
      %v2650 = vsel %vm461, %v2603, 0
      %v2653 = vsel %vm461, %v2605, 0
      %v2656 = vsel %vm461, %v2607, 0
      %v2659 = vsel %vm461, %v2609, 0
      %v2662 = vsel %vm461, %v2611, 0
      %v2665 = vsel %vm461, %v2613, 0
      %v2668 = vsel %vm461, %v2615, 0
      %v2671 = vsel %vm461, %v2617, 0
      %v2674 = vsel %vm461, %v2619, 0
      %v2677 = vsel %vm461, %v2621, 0
      %v2680 = vsel %vm461, %v2623, 0
      %v2683 = vsel %vm461, %v2625, 0
      %v2686 = vsel %vm516, %v2630, 0
      %2688 = vmatprep.subr.bf16.mxu0 0
      %2689 = vmatpush1.bf16.msra.mxu0 %v2686
      %2690 = vmatprep.subr.bf16.mxu0 0
      %2691 = vmatpush1.bf16.msra.mxu0 0
      %2692 = vmatprep.subr.bf16.mxu0 0
      %2693 = vmatpush1.bf16.msra.mxu0 0
      %2694 = vmatprep.subr.bf16.mxu0 0
      %2695 = vmatpush1.bf16.msra.mxu0 0
      %2696 = vmatprep.subr.bf16.mxu0 0
      %2697 = vmatpush1.bf16.msra.mxu0 0
      %2698 = vmatprep.subr.bf16.mxu0 0
      %2699 = vmatpush1.bf16.msra.mxu0 0
      %2700 = vmatprep.subr.bf16.mxu0 0
      %2701 = vmatpush1.bf16.msra.mxu0 0
      %2702 = vmatprep.subr.bf16.mxu0 0
      %2703 = vmatpush1.bf16.msra.mxu0 0
      %2704 = vmatprep.subr.bf16.mxu0 0
      %2705 = vmatpush1.bf16.msra.mxu0 0
      %2706 = vmatprep.subr.bf16.mxu0 0
      %2707 = vmatpush1.bf16.msra.mxu0 0
      %2708 = vmatprep.subr.bf16.mxu0 0
      %2709 = vmatpush1.bf16.msra.mxu0 0
      %2710 = vmatprep.subr.bf16.mxu0 0
      %2711 = vmatpush1.bf16.msra.mxu0 0
      %2712 = vmatprep.subr.bf16.mxu0 0
      %2713 = vmatpush1.bf16.msra.mxu0 0
      %2714 = vmatprep.subr.bf16.mxu0 0
      %2715 = vmatpush1.bf16.msra.mxu0 0
      %2716 = vmatprep.subr.bf16.mxu0 0
      %2717 = vmatpush1.bf16.msra.mxu0 0
      %2718 = vmatprep.subr.bf16.mxu0 0
      %2719 = vmatpush1.bf16.msra.mxu0 0
      %2720 = vmatprep.mubr.bf16.mxu0 0
      %2721 = vmatmul.mubr.bf16.gmra.mrb[0].mxu0 %v2632
      %v2722 = vpop.f32.mrb[0].mxu0
      %v2723 = vadd.f32 0.0, %v2722
      %v2724 = vpop.f32.mrb[0].mxu0
      %v2725 = vpop.f32.mrb[0].mxu0
      %v2726 = vadd.f32 0.0, %v2725
      %v2727 = vpop.f32.mrb[0].mxu0
      %2728 = vmatprep.mubr.bf16.mxu0 0
      %2729 = vmatmul.mubr.bf16.gmra.mrb[0].mxu0 %v2635
      %v2730 = vpop.f32.mrb[0].mxu0
      %v2731 = vadd.f32 0.0, %v2730
      %v2732 = vpop.f32.mrb[0].mxu0
      %v2733 = vpop.f32.mrb[0].mxu0
      %v2734 = vadd.f32 0.0, %v2733
      %v2735 = vpop.f32.mrb[0].mxu0
      %2736 = vmatprep.mubr.bf16.mxu0 0
      %2737 = vmatmul.mubr.bf16.gmra.mrb[0].mxu0 %v2638
      %v2738 = vpop.f32.mrb[0].mxu0
      %v2739 = vadd.f32 0.0, %v2738
      %v2740 = vpop.f32.mrb[0].mxu0
      %v2741 = vpop.f32.mrb[0].mxu0
      %v2742 = vadd.f32 0.0, %v2741
      %v2743 = vpop.f32.mrb[0].mxu0
      %2744 = vmatprep.mubr.bf16.mxu0 0
      %2745 = vmatmul.mubr.bf16.gmra.mrb[0].mxu0 %v2641
      %v2746 = vpop.f32.mrb[0].mxu0
      %v2747 = vadd.f32 0.0, %v2746
      %v2748 = vpop.f32.mrb[0].mxu0
      %v2749 = vpop.f32.mrb[0].mxu0
      %v2750 = vadd.f32 0.0, %v2749
      %v2751 = vpop.f32.mrb[0].mxu0
      %2752 = vmatprep.mubr.bf16.mxu0 0
      %2753 = vmatmul.mubr.bf16.gmra.mrb[0].mxu0 %v2644
      %v2754 = vpop.f32.mrb[0].mxu0
      %v2755 = vadd.f32 0.0, %v2754
      %v2756 = vpop.f32.mrb[0].mxu0
      %v2757 = vpop.f32.mrb[0].mxu0
      %v2758 = vadd.f32 0.0, %v2757
      %v2759 = vpop.f32.mrb[0].mxu0
      %2760 = vmatprep.mubr.bf16.mxu0 0
      %2761 = vmatmul.mubr.bf16.gmra.mrb[0].mxu0 %v2647
      %v2762 = vpop.f32.mrb[0].mxu0
      %v2763 = vadd.f32 0.0, %v2762
      %v2764 = vpop.f32.mrb[0].mxu0
      %v2765 = vpop.f32.mrb[0].mxu0
      %v2766 = vadd.f32 0.0, %v2765
      %v2767 = vpop.f32.mrb[0].mxu0
      %2768 = vmatprep.mubr.bf16.mxu0 0
      %2769 = vmatmul.mubr.bf16.gmra.mrb[0].mxu0 %v2650
      %v2770 = vpop.f32.mrb[0].mxu0
      %v2771 = vadd.f32 0.0, %v2770
      %v2772 = vpop.f32.mrb[0].mxu0
      %v2773 = vpop.f32.mrb[0].mxu0
      %v2774 = vadd.f32 0.0, %v2773
      %v2775 = vpop.f32.mrb[0].mxu0
      %2776 = vmatprep.mubr.bf16.mxu0 0
      %2777 = vmatmul.mubr.bf16.gmra.mrb[0].mxu0 %v2653
      %v2778 = vpop.f32.mrb[0].mxu0
      %v2779 = vadd.f32 0.0, %v2778
      %v2780 = vpop.f32.mrb[0].mxu0
      %v2781 = vpop.f32.mrb[0].mxu0
      %v2782 = vadd.f32 0.0, %v2781
      %v2783 = vpop.f32.mrb[0].mxu0
      %2784 = vmatprep.mubr.bf16.mxu0 0
      %2785 = vmatmul.mubr.bf16.gmra.mrb[0].mxu0 %v2656
      %v2786 = vpop.f32.mrb[0].mxu0
      %v2787 = vadd.f32 0.0, %v2786
      %v2788 = vpop.f32.mrb[0].mxu0
      %v2789 = vpop.f32.mrb[0].mxu0
      %v2790 = vadd.f32 0.0, %v2789
      %v2791 = vpop.f32.mrb[0].mxu0
      %2792 = vmatprep.mubr.bf16.mxu0 0
      %2793 = vmatmul.mubr.bf16.gmra.mrb[0].mxu0 %v2659
      %v2794 = vpop.f32.mrb[0].mxu0
      %v2795 = vadd.f32 0.0, %v2794
      %v2796 = vpop.f32.mrb[0].mxu0
      %v2797 = vpop.f32.mrb[0].mxu0
      %v2798 = vadd.f32 0.0, %v2797
      %v2799 = vpop.f32.mrb[0].mxu0
      %2800 = vmatprep.mubr.bf16.mxu0 0
      %2801 = vmatmul.mubr.bf16.gmra.mrb[0].mxu0 %v2662
      %v2802 = vpop.f32.mrb[0].mxu0
      %v2803 = vadd.f32 0.0, %v2802
      %v2804 = vpop.f32.mrb[0].mxu0
      %v2805 = vpop.f32.mrb[0].mxu0
      %v2806 = vadd.f32 0.0, %v2805
      %v2807 = vpop.f32.mrb[0].mxu0
      %2808 = vmatprep.mubr.bf16.mxu0 0
      %2809 = vmatmul.mubr.bf16.gmra.mrb[0].mxu0 %v2665
      %v2810 = vpop.f32.mrb[0].mxu0
      %v2811 = vadd.f32 0.0, %v2810
      %v2812 = vpop.f32.mrb[0].mxu0
      %v2813 = vpop.f32.mrb[0].mxu0
      %v2814 = vadd.f32 0.0, %v2813
      %v2815 = vpop.f32.mrb[0].mxu0
      %2816 = vmatprep.mubr.bf16.mxu0 0
      %2817 = vmatmul.mubr.bf16.gmra.mrb[0].mxu0 %v2668
      %v2818 = vpop.f32.mrb[0].mxu0
      %v2819 = vadd.f32 0.0, %v2818
      %v2820 = vpop.f32.mrb[0].mxu0
      %v2821 = vpop.f32.mrb[0].mxu0
      %v2822 = vadd.f32 0.0, %v2821
      %v2823 = vpop.f32.mrb[0].mxu0
      %2824 = vmatprep.mubr.bf16.mxu0 0
      %2825 = vmatmul.mubr.bf16.gmra.mrb[0].mxu0 %v2671
      %v2826 = vpop.f32.mrb[0].mxu0
      %v2827 = vadd.f32 0.0, %v2826
      %v2828 = vpop.f32.mrb[0].mxu0
      %v2829 = vpop.f32.mrb[0].mxu0
      %v2830 = vadd.f32 0.0, %v2829
      %v2831 = vpop.f32.mrb[0].mxu0
      %2832 = vmatprep.mubr.bf16.mxu0 0
      %2833 = vmatmul.mubr.bf16.gmra.mrb[0].mxu0 %v2674
      %v2834 = vpop.f32.mrb[0].mxu0
      %v2835 = vadd.f32 0.0, %v2834
      %v2836 = vpop.f32.mrb[0].mxu0
      %v2837 = vpop.f32.mrb[0].mxu0
      %v2838 = vadd.f32 0.0, %v2837
      %v2839 = vpop.f32.mrb[0].mxu0
      %2840 = vmatprep.mubr.bf16.mxu0 0
      %2841 = vmatmul.mubr.bf16.gmra.mrb[0].mxu0 %v2677
      %v2842 = vpop.f32.mrb[0].mxu0
      %v2843 = vadd.f32 0.0, %v2842
      %v2844 = vpop.f32.mrb[0].mxu0
      %v2845 = vpop.f32.mrb[0].mxu0
      %v2846 = vadd.f32 0.0, %v2845
      %v2847 = vpop.f32.mrb[0].mxu0
      %2848 = vmatprep.mubr.bf16.mxu0 0
      %2849 = vmatmul.mubr.bf16.gmra.mrb[0].mxu0 %v2680
      %v2850 = vpop.f32.mrb[0].mxu0
      %v2851 = vadd.f32 0.0, %v2850
      %v2852 = vpop.f32.mrb[0].mxu0
      %v2853 = vpop.f32.mrb[0].mxu0
      %v2854 = vadd.f32 0.0, %v2853
      %v2855 = vpop.f32.mrb[0].mxu0
      %2856 = vmatprep.mubr.bf16.mxu0 0
      %2857 = vmatmul.mubr.bf16.gmra.mrb[0].mxu0 %v2683
      %v2858 = vpop.f32.mrb[0].mxu0
      %v2859 = vadd.f32 0.0, %v2858
      %v2860 = vpop.f32.mrb[0].mxu0
      %v2861 = vpop.f32.mrb[0].mxu0
      %v2862 = vadd.f32 0.0, %v2861
      %v2863 = vpop.f32.mrb[0].mxu0
      %2864 = vdwg.mxu0
      %v2865 = vadd.f32 %v2420, %v2723
      %v2866 = vadd.f32 %v2421, %v2726
      %v2867 = vadd.f32 %v2422, %v2731
      %v2868 = vadd.f32 %v2423, %v2734
      %v2869 = vadd.f32 %v2424, %v2739
      %v2870 = vadd.f32 %v2425, %v2742
      %v2871 = vadd.f32 %v2426, %v2747
      %v2872 = vadd.f32 %v2427, %v2750
      %v2873 = vadd.f32 %v2428, %v2755
      %v2874 = vadd.f32 %v2429, %v2758
      %v2875 = vadd.f32 %v2430, %v2763
      %v2876 = vadd.f32 %v2431, %v2766
      %v2877 = vadd.f32 %v2432, %v2771
      %v2878 = vadd.f32 %v2433, %v2774
      %v2879 = vadd.f32 %v2434, %v2779
      %v2880 = vadd.f32 %v2435, %v2782
      %v2881 = vadd.f32 %v2436, %v2787
      %v2882 = vadd.f32 %v2437, %v2790
      %v2883 = vadd.f32 %v2438, %v2795
      %v2884 = vadd.f32 %v2439, %v2798
      %v2885 = vadd.f32 %v2440, %v2803
      %v2886 = vadd.f32 %v2441, %v2806
      %v2887 = vadd.f32 %v2442, %v2811
      %v2888 = vadd.f32 %v2443, %v2814
      %v2889 = vadd.f32 %v2444, %v2819
      %v2890 = vadd.f32 %v2445, %v2822
      %v2891 = vadd.f32 %v2446, %v2827
      %v2892 = vadd.f32 %v2447, %v2830
      %v2893 = vadd.f32 %v2448, %v2835
      %v2894 = vadd.f32 %v2449, %v2838
      %v2895 = vadd.f32 %v2450, %v2843
      %v2896 = vadd.f32 %v2451, %v2846
      %v2897 = vadd.f32 %v2452, %v2851
      %v2898 = vadd.f32 %v2453, %v2854
      %v2899 = vadd.f32 %v2454, %v2859
      %v2900 = vadd.f32 %v2455, %v2862
      %v2901 = vld [vmem:[%s165 + $0xa0] sm:$0x7]
      %s2902 = scalar_lea.vmem %s1, 56
      %v2903 = vld [vmem:[%s2902] sm:$0xf]
      %v2904 = vld [vmem:[%s2902 + $0x4] sm:$0x3]
      %v2906 = vunpack.c.l.b16 %v2901
      %v2907 = vpack.c.b16 %v2906, %v2906
      %vm2908 = vsmask.f32 5376
      %v2910 = vshrl.u32 %v2570, 16
      %v2912 = vrot.slane %v2910, 2
      %v2913 = vshll.u32 %v2570, 16
      %v2915 = vrot.slane %v2913, 3
      %v2916 = vor.u32 %v2912, %v2915
      %v2918 = vshrl.u32 %v2571, 16
      %v2920 = vrot.slane %v2918, 2
      %v2921 = vshll.u32 %v2571, 16
      %v2923 = vrot.slane %v2921, 3
      %v2924 = vor.u32 %v2920, %v2923
      %v2925 = vsel %vm2908, %v2916, %v2924
      %v2927 = vshrl.u32 %v2572, 16
      %v2929 = vrot.slane %v2927, 2
      %v2930 = vshll.u32 %v2572, 16
      %v2932 = vrot.slane %v2930, 3
      %v2933 = vor.u32 %v2929, %v2932
      %v2934 = vsel %vm2908, %v2924, %v2933
      %v2936 = vshrl.u32 %v2573, 16
      %v2938 = vrot.slane %v2936, 2
      %v2939 = vshll.u32 %v2573, 16
      %v2941 = vrot.slane %v2939, 3
      %v2942 = vor.u32 %v2938, %v2941
      %v2943 = vsel %vm2908, %v2933, %v2942
      %v2945 = vshrl.u32 %v2574, 16
      %v2947 = vrot.slane %v2945, 2
      %v2948 = vshll.u32 %v2574, 16
      %v2950 = vrot.slane %v2948, 3
      %v2951 = vor.u32 %v2947, %v2950
      %v2952 = vsel %vm2908, %v2942, %v2951
      %v2954 = vshrl.u32 %v2575, 16
      %v2956 = vrot.slane %v2954, 2
      %v2957 = vshll.u32 %v2575, 16
      %v2959 = vrot.slane %v2957, 3
      %v2960 = vor.u32 %v2956, %v2959
      %v2961 = vsel %vm2908, %v2951, %v2960
      %v2963 = vshrl.u32 %v2576, 16
      %v2965 = vrot.slane %v2963, 2
      %v2966 = vshll.u32 %v2576, 16
      %v2968 = vrot.slane %v2966, 3
      %v2969 = vor.u32 %v2965, %v2968
      %v2970 = vsel %vm2908, %v2960, %v2969
      %v2972 = vshrl.u32 %v2577, 16
      %v2974 = vrot.slane %v2972, 2
      %v2975 = vshll.u32 %v2577, 16
      %v2977 = vrot.slane %v2975, 3
      %v2978 = vor.u32 %v2974, %v2977
      %v2979 = vsel %vm2908, %v2969, %v2978
      %v2981 = vshrl.u32 %v2578, 16
      %v2983 = vrot.slane %v2981, 2
      %v2984 = vshll.u32 %v2578, 16
      %v2986 = vrot.slane %v2984, 3
      %v2987 = vor.u32 %v2983, %v2986
      %v2988 = vsel %vm2908, %v2978, %v2987
      %v2990 = vshrl.u32 %v2579, 16
      %v2992 = vrot.slane %v2990, 2
      %v2993 = vshll.u32 %v2579, 16
      %v2995 = vrot.slane %v2993, 3
      %v2996 = vor.u32 %v2992, %v2995
      %v2997 = vsel %vm2908, %v2987, %v2996
      %v2999 = vshrl.u32 %v2580, 16
      %v3001 = vrot.slane %v2999, 2
      %v3002 = vshll.u32 %v2580, 16
      %v3004 = vrot.slane %v3002, 3
      %v3005 = vor.u32 %v3001, %v3004
      %v3006 = vsel %vm2908, %v2996, %v3005
      %v3008 = vshrl.u32 %v2581, 16
      %v3010 = vrot.slane %v3008, 2
      %v3011 = vshll.u32 %v2581, 16
      %v3013 = vrot.slane %v3011, 3
      %v3014 = vor.u32 %v3010, %v3013
      %v3015 = vsel %vm2908, %v3005, %v3014
      %v3017 = vshrl.u32 %v2582, 16
      %v3019 = vrot.slane %v3017, 2
      %v3020 = vshll.u32 %v2582, 16
      %v3022 = vrot.slane %v3020, 3
      %v3023 = vor.u32 %v3019, %v3022
      %v3024 = vsel %vm2908, %v3014, %v3023
      %v3026 = vshrl.u32 %v2583, 16
      %v3028 = vrot.slane %v3026, 2
      %v3029 = vshll.u32 %v2583, 16
      %v3031 = vrot.slane %v3029, 3
      %v3032 = vor.u32 %v3028, %v3031
      %v3033 = vsel %vm2908, %v3023, %v3032
      %v3035 = vshrl.u32 %v2584, 16
      %v3037 = vrot.slane %v3035, 2
      %v3038 = vshll.u32 %v2584, 16
      %v3040 = vrot.slane %v3038, 3
      %v3041 = vor.u32 %v3037, %v3040
      %v3042 = vsel %vm2908, %v3032, %v3041
      %v3044 = vshrl.u32 %v2585, 16
      %v3046 = vrot.slane %v3044, 2
      %v3047 = vshll.u32 %v2585, 16
      %v3049 = vrot.slane %v3047, 3
      %v3050 = vor.u32 %v3046, %v3049
      %v3051 = vsel %vm2908, %v3041, %v3050
      %v3053 = vshrl.u32 %v2586, 16
      %v3055 = vrot.slane %v3053, 2
      %v3056 = vshll.u32 %v2586, 16
      %v3058 = vrot.slane %v3056, 3
      %v3059 = vor.u32 %v3055, %v3058
      %v3060 = vsel %vm2908, %v3050, %v3059
      %v3062 = vshrl.u32 %v2587, 16
      %v3064 = vrot.slane %v3062, 2
      %v3065 = vshll.u32 %v2587, 16
      %v3067 = vrot.slane %v3065, 3
      %v3068 = vor.u32 %v3064, %v3067
      %v3069 = vsel %vm2908, %v3059, %v3068
      %v3071 = vshrl.u32 %v2907, 16
      %v3073 = vrot.slane %v3071, 2
      %v3074 = vshll.u32 %v2907, 16
      %v3076 = vrot.slane %v3074, 3
      %v3077 = vor.u32 %v3073, %v3076
      %v3078 = vsel %vm2908, %v3068, %v3077
      %v3081 = vunpack.c.l.b16 %v2903
      %v3082 = vunpack.c.l.b16 %v2904
      %v3083 = vpack.c.b16 %v3082, %v3081
      %v3085 = vsel %vm461, %v2925, 0
      %v3088 = vsel %vm461, %v2934, 0
      %v3091 = vsel %vm461, %v2943, 0
      %v3094 = vsel %vm461, %v2952, 0
      %v3097 = vsel %vm461, %v2961, 0
      %v3100 = vsel %vm461, %v2970, 0
      %v3103 = vsel %vm461, %v2979, 0
      %v3106 = vsel %vm461, %v2988, 0
      %v3109 = vsel %vm461, %v2997, 0
      %v3112 = vsel %vm461, %v3006, 0
      %v3115 = vsel %vm461, %v3015, 0
      %v3118 = vsel %vm461, %v3024, 0
      %v3121 = vsel %vm461, %v3033, 0
      %v3124 = vsel %vm461, %v3042, 0
      %v3127 = vsel %vm461, %v3051, 0
      %v3130 = vsel %vm461, %v3060, 0
      %v3133 = vsel %vm461, %v3069, 0
      %v3136 = vsel %vm461, %v3078, 0
      %v3139 = vsel %vm516, %v3083, 0
      %3141 = vmatprep.subr.bf16.mxu0 0
      %3142 = vmatpush1.bf16.msra.mxu0 %v3139
      %3143 = vmatprep.subr.bf16.mxu0 0
      %3144 = vmatpush1.bf16.msra.mxu0 0
      %3145 = vmatprep.subr.bf16.mxu0 0
      %3146 = vmatpush1.bf16.msra.mxu0 0
      %3147 = vmatprep.subr.bf16.mxu0 0
      %3148 = vmatpush1.bf16.msra.mxu0 0
      %3149 = vmatprep.subr.bf16.mxu0 0
      %3150 = vmatpush1.bf16.msra.mxu0 0
      %3151 = vmatprep.subr.bf16.mxu0 0
      %3152 = vmatpush1.bf16.msra.mxu0 0
      %3153 = vmatprep.subr.bf16.mxu0 0
      %3154 = vmatpush1.bf16.msra.mxu0 0
      %3155 = vmatprep.subr.bf16.mxu0 0
      %3156 = vmatpush1.bf16.msra.mxu0 0
      %3157 = vmatprep.subr.bf16.mxu0 0
      %3158 = vmatpush1.bf16.msra.mxu0 0
      %3159 = vmatprep.subr.bf16.mxu0 0
      %3160 = vmatpush1.bf16.msra.mxu0 0
      %3161 = vmatprep.subr.bf16.mxu0 0
      %3162 = vmatpush1.bf16.msra.mxu0 0
      %3163 = vmatprep.subr.bf16.mxu0 0
      %3164 = vmatpush1.bf16.msra.mxu0 0
      %3165 = vmatprep.subr.bf16.mxu0 0
      %3166 = vmatpush1.bf16.msra.mxu0 0
      %3167 = vmatprep.subr.bf16.mxu0 0
      %3168 = vmatpush1.bf16.msra.mxu0 0
      %3169 = vmatprep.subr.bf16.mxu0 0
      %3170 = vmatpush1.bf16.msra.mxu0 0
      %3171 = vmatprep.subr.bf16.mxu0 0
      %3172 = vmatpush1.bf16.msra.mxu0 0
      %3173 = vmatprep.mubr.bf16.mxu0 0
      %3174 = vmatmul.mubr.bf16.gmra.mrb[0].mxu0 %v3085
      %v3175 = vpop.f32.mrb[0].mxu0
      %v3176 = vadd.f32 0.0, %v3175
      %v3177 = vpop.f32.mrb[0].mxu0
      %v3178 = vpop.f32.mrb[0].mxu0
      %v3179 = vadd.f32 0.0, %v3178
      %v3180 = vpop.f32.mrb[0].mxu0
      %3181 = vmatprep.mubr.bf16.mxu0 0
      %3182 = vmatmul.mubr.bf16.gmra.mrb[0].mxu0 %v3088
      %v3183 = vpop.f32.mrb[0].mxu0
      %v3184 = vadd.f32 0.0, %v3183
      %v3185 = vpop.f32.mrb[0].mxu0
      %v3186 = vpop.f32.mrb[0].mxu0
      %v3187 = vadd.f32 0.0, %v3186
      %v3188 = vpop.f32.mrb[0].mxu0
      %3189 = vmatprep.mubr.bf16.mxu0 0
      %3190 = vmatmul.mubr.bf16.gmra.mrb[0].mxu0 %v3091
      %v3191 = vpop.f32.mrb[0].mxu0
      %v3192 = vadd.f32 0.0, %v3191
      %v3193 = vpop.f32.mrb[0].mxu0
      %v3194 = vpop.f32.mrb[0].mxu0
      %v3195 = vadd.f32 0.0, %v3194
      %v3196 = vpop.f32.mrb[0].mxu0
      %3197 = vmatprep.mubr.bf16.mxu0 0
      %3198 = vmatmul.mubr.bf16.gmra.mrb[0].mxu0 %v3094
      %v3199 = vpop.f32.mrb[0].mxu0
      %v3200 = vadd.f32 0.0, %v3199
      %v3201 = vpop.f32.mrb[0].mxu0
      %v3202 = vpop.f32.mrb[0].mxu0
      %v3203 = vadd.f32 0.0, %v3202
      %v3204 = vpop.f32.mrb[0].mxu0
      %3205 = vmatprep.mubr.bf16.mxu0 0
      %3206 = vmatmul.mubr.bf16.gmra.mrb[0].mxu0 %v3097
      %v3207 = vpop.f32.mrb[0].mxu0
      %v3208 = vadd.f32 0.0, %v3207
      %v3209 = vpop.f32.mrb[0].mxu0
      %v3210 = vpop.f32.mrb[0].mxu0
      %v3211 = vadd.f32 0.0, %v3210
      %v3212 = vpop.f32.mrb[0].mxu0
      %3213 = vmatprep.mubr.bf16.mxu0 0
      %3214 = vmatmul.mubr.bf16.gmra.mrb[0].mxu0 %v3100
      %v3215 = vpop.f32.mrb[0].mxu0
      %v3216 = vadd.f32 0.0, %v3215
      %v3217 = vpop.f32.mrb[0].mxu0
      %v3218 = vpop.f32.mrb[0].mxu0
      %v3219 = vadd.f32 0.0, %v3218
      %v3220 = vpop.f32.mrb[0].mxu0
      %3221 = vmatprep.mubr.bf16.mxu0 0
      %3222 = vmatmul.mubr.bf16.gmra.mrb[0].mxu0 %v3103
      %v3223 = vpop.f32.mrb[0].mxu0
      %v3224 = vadd.f32 0.0, %v3223
      %v3225 = vpop.f32.mrb[0].mxu0
      %v3226 = vpop.f32.mrb[0].mxu0
      %v3227 = vadd.f32 0.0, %v3226
      %v3228 = vpop.f32.mrb[0].mxu0
      %3229 = vmatprep.mubr.bf16.mxu0 0
      %3230 = vmatmul.mubr.bf16.gmra.mrb[0].mxu0 %v3106
      %v3231 = vpop.f32.mrb[0].mxu0
      %v3232 = vadd.f32 0.0, %v3231
      %v3233 = vpop.f32.mrb[0].mxu0
      %v3234 = vpop.f32.mrb[0].mxu0
      %v3235 = vadd.f32 0.0, %v3234
      %v3236 = vpop.f32.mrb[0].mxu0
      %3237 = vmatprep.mubr.bf16.mxu0 0
      %3238 = vmatmul.mubr.bf16.gmra.mrb[0].mxu0 %v3109
      %v3239 = vpop.f32.mrb[0].mxu0
      %v3240 = vadd.f32 0.0, %v3239
      %v3241 = vpop.f32.mrb[0].mxu0
      %v3242 = vpop.f32.mrb[0].mxu0
      %v3243 = vadd.f32 0.0, %v3242
      %v3244 = vpop.f32.mrb[0].mxu0
      %3245 = vmatprep.mubr.bf16.mxu0 0
      %3246 = vmatmul.mubr.bf16.gmra.mrb[0].mxu0 %v3112
      %v3247 = vpop.f32.mrb[0].mxu0
      %v3248 = vadd.f32 0.0, %v3247
      %v3249 = vpop.f32.mrb[0].mxu0
      %v3250 = vpop.f32.mrb[0].mxu0
      %v3251 = vadd.f32 0.0, %v3250
      %v3252 = vpop.f32.mrb[0].mxu0
      %3253 = vmatprep.mubr.bf16.mxu0 0
      %3254 = vmatmul.mubr.bf16.gmra.mrb[0].mxu0 %v3115
      %v3255 = vpop.f32.mrb[0].mxu0
      %v3256 = vadd.f32 0.0, %v3255
      %v3257 = vpop.f32.mrb[0].mxu0
      %v3258 = vpop.f32.mrb[0].mxu0
      %v3259 = vadd.f32 0.0, %v3258
      %v3260 = vpop.f32.mrb[0].mxu0
      %3261 = vmatprep.mubr.bf16.mxu0 0
      %3262 = vmatmul.mubr.bf16.gmra.mrb[0].mxu0 %v3118
      %v3263 = vpop.f32.mrb[0].mxu0
      %v3264 = vadd.f32 0.0, %v3263
      %v3265 = vpop.f32.mrb[0].mxu0
      %v3266 = vpop.f32.mrb[0].mxu0
      %v3267 = vadd.f32 0.0, %v3266
      %v3268 = vpop.f32.mrb[0].mxu0
      %3269 = vmatprep.mubr.bf16.mxu0 0
      %3270 = vmatmul.mubr.bf16.gmra.mrb[0].mxu0 %v3121
      %v3271 = vpop.f32.mrb[0].mxu0
      %v3272 = vadd.f32 0.0, %v3271
      %v3273 = vpop.f32.mrb[0].mxu0
      %v3274 = vpop.f32.mrb[0].mxu0
      %v3275 = vadd.f32 0.0, %v3274
      %v3276 = vpop.f32.mrb[0].mxu0
      %3277 = vmatprep.mubr.bf16.mxu0 0
      %3278 = vmatmul.mubr.bf16.gmra.mrb[0].mxu0 %v3124
      %v3279 = vpop.f32.mrb[0].mxu0
      %v3280 = vadd.f32 0.0, %v3279
      %v3281 = vpop.f32.mrb[0].mxu0
      %v3282 = vpop.f32.mrb[0].mxu0
      %v3283 = vadd.f32 0.0, %v3282
      %v3284 = vpop.f32.mrb[0].mxu0
      %3285 = vmatprep.mubr.bf16.mxu0 0
      %3286 = vmatmul.mubr.bf16.gmra.mrb[0].mxu0 %v3127
      %v3287 = vpop.f32.mrb[0].mxu0
      %v3288 = vadd.f32 0.0, %v3287
      %v3289 = vpop.f32.mrb[0].mxu0
      %v3290 = vpop.f32.mrb[0].mxu0
      %v3291 = vadd.f32 0.0, %v3290
      %v3292 = vpop.f32.mrb[0].mxu0
      %3293 = vmatprep.mubr.bf16.mxu0 0
      %3294 = vmatmul.mubr.bf16.gmra.mrb[0].mxu0 %v3130
      %v3295 = vpop.f32.mrb[0].mxu0
      %v3296 = vadd.f32 0.0, %v3295
      %v3297 = vpop.f32.mrb[0].mxu0
      %v3298 = vpop.f32.mrb[0].mxu0
      %v3299 = vadd.f32 0.0, %v3298
      %v3300 = vpop.f32.mrb[0].mxu0
      %3301 = vmatprep.mubr.bf16.mxu0 0
      %3302 = vmatmul.mubr.bf16.gmra.mrb[0].mxu0 %v3133
      %v3303 = vpop.f32.mrb[0].mxu0
      %v3304 = vadd.f32 0.0, %v3303
      %v3305 = vpop.f32.mrb[0].mxu0
      %v3306 = vpop.f32.mrb[0].mxu0
      %v3307 = vadd.f32 0.0, %v3306
      %v3308 = vpop.f32.mrb[0].mxu0
      %3309 = vmatprep.mubr.bf16.mxu0 0
      %3310 = vmatmul.mubr.bf16.gmra.mrb[0].mxu0 %v3136
      %v3311 = vpop.f32.mrb[0].mxu0
      %v3312 = vadd.f32 0.0, %v3311
      %v3313 = vpop.f32.mrb[0].mxu0
      %v3314 = vpop.f32.mrb[0].mxu0
      %v3315 = vadd.f32 0.0, %v3314
      %v3316 = vpop.f32.mrb[0].mxu0
      %3317 = vdwg.mxu0
      %v3318 = vadd.f32 %v2865, %v3176
      %v3319 = vadd.f32 %v2866, %v3179
      %v3320 = vadd.f32 %v2867, %v3184
      %v3321 = vadd.f32 %v2868, %v3187
      %v3322 = vadd.f32 %v2869, %v3192
      %v3323 = vadd.f32 %v2870, %v3195
      %v3324 = vadd.f32 %v2871, %v3200
      %v3325 = vadd.f32 %v2872, %v3203
      %v3326 = vadd.f32 %v2873, %v3208
      %v3327 = vadd.f32 %v2874, %v3211
      %v3328 = vadd.f32 %v2875, %v3216
      %v3329 = vadd.f32 %v2876, %v3219
      %v3330 = vadd.f32 %v2877, %v3224
      %v3331 = vadd.f32 %v2878, %v3227
      %v3332 = vadd.f32 %v2879, %v3232
      %v3333 = vadd.f32 %v2880, %v3235
      %v3334 = vadd.f32 %v2881, %v3240
      %v3335 = vadd.f32 %v2882, %v3243
      %v3336 = vadd.f32 %v2883, %v3248
      %v3337 = vadd.f32 %v2884, %v3251
      %v3338 = vadd.f32 %v2885, %v3256
      %v3339 = vadd.f32 %v2886, %v3259
      %v3340 = vadd.f32 %v2887, %v3264
      %v3341 = vadd.f32 %v2888, %v3267
      %v3342 = vadd.f32 %v2889, %v3272
      %v3343 = vadd.f32 %v2890, %v3275
      %v3344 = vadd.f32 %v2891, %v3280
      %v3345 = vadd.f32 %v2892, %v3283
      %v3346 = vadd.f32 %v2893, %v3288
      %v3347 = vadd.f32 %v2894, %v3291
      %v3348 = vadd.f32 %v2895, %v3296
      %v3349 = vadd.f32 %v2896, %v3299
      %v3350 = vadd.f32 %v2897, %v3304
      %v3351 = vadd.f32 %v2898, %v3307
      %v3352 = vadd.f32 %v2899, %v3312
      %v3353 = vadd.f32 %v2900, %v3315
      %v3354 = vld [vmem:[%s165 + $0x10] sm:$0x8]
      %s3355 = scalar_lea.vmem %s1, 64
      %v3356 = vld [vmem:[%s3355] sm:$0xf]
      %v3357 = vld [vmem:[%s3355 + $0x4] sm:$0x3]
      %v3359 = vunpack.c.l.b16 %v3354
      %v3360 = vpack.c.b16 %v2534, %v3359
      %vm3361 = vcmask 1044480
      %v3362 = vrot.slane %v3360, 3
      %v3363 = vrot.slane %v2571, 3
      %v3364 = vsel %vm3361, %v3362, %v3363
      %v3365 = vrot.slane %v2572, 3
      %v3366 = vsel %vm3361, %v3363, %v3365
      %v3367 = vrot.slane %v2573, 3
      %v3368 = vsel %vm3361, %v3365, %v3367
      %v3369 = vrot.slane %v2574, 3
      %v3370 = vsel %vm3361, %v3367, %v3369
      %v3371 = vrot.slane %v2575, 3
      %v3372 = vsel %vm3361, %v3369, %v3371
      %v3373 = vrot.slane %v2576, 3
      %v3374 = vsel %vm3361, %v3371, %v3373
      %v3375 = vrot.slane %v2577, 3
      %v3376 = vsel %vm3361, %v3373, %v3375
      %v3377 = vrot.slane %v2578, 3
      %v3378 = vsel %vm3361, %v3375, %v3377
      %v3379 = vrot.slane %v2579, 3
      %v3380 = vsel %vm3361, %v3377, %v3379
      %v3381 = vrot.slane %v2580, 3
      %v3382 = vsel %vm3361, %v3379, %v3381
      %v3383 = vrot.slane %v2581, 3
      %v3384 = vsel %vm3361, %v3381, %v3383
      %v3385 = vrot.slane %v2582, 3
      %v3386 = vsel %vm3361, %v3383, %v3385
      %v3387 = vrot.slane %v2583, 3
      %v3388 = vsel %vm3361, %v3385, %v3387
      %v3389 = vrot.slane %v2584, 3
      %v3390 = vsel %vm3361, %v3387, %v3389
      %v3391 = vrot.slane %v2585, 3
      %v3392 = vsel %vm3361, %v3389, %v3391
      %v3393 = vrot.slane %v2586, 3
      %v3394 = vsel %vm3361, %v3391, %v3393
      %v3395 = vrot.slane %v2587, 3
      %v3396 = vsel %vm3361, %v3393, %v3395
      %v3397 = vrot.slane %v2907, 3
      %v3398 = vsel %vm3361, %v3395, %v3397
      %v3401 = vunpack.c.l.b16 %v3356
      %v3402 = vunpack.c.l.b16 %v3357
      %v3403 = vpack.c.b16 %v3402, %v3401
      %v3405 = vsel %vm461, %v3364, 0
      %v3408 = vsel %vm461, %v3366, 0
      %v3411 = vsel %vm461, %v3368, 0
      %v3414 = vsel %vm461, %v3370, 0
      %v3417 = vsel %vm461, %v3372, 0
      %v3420 = vsel %vm461, %v3374, 0
      %v3423 = vsel %vm461, %v3376, 0
      %v3426 = vsel %vm461, %v3378, 0
      %v3429 = vsel %vm461, %v3380, 0
      %v3432 = vsel %vm461, %v3382, 0
      %v3435 = vsel %vm461, %v3384, 0
      %v3438 = vsel %vm461, %v3386, 0
      %v3441 = vsel %vm461, %v3388, 0
      %v3444 = vsel %vm461, %v3390, 0
      %v3447 = vsel %vm461, %v3392, 0
      %v3450 = vsel %vm461, %v3394, 0
      %v3453 = vsel %vm461, %v3396, 0
      %v3456 = vsel %vm461, %v3398, 0
      %v3459 = vsel %vm516, %v3403, 0
      %3461 = vmatprep.subr.bf16.mxu0 0
      %3462 = vmatpush1.bf16.msra.mxu0 %v3459
      %3463 = vmatprep.subr.bf16.mxu0 0
      %3464 = vmatpush1.bf16.msra.mxu0 0
      %3465 = vmatprep.subr.bf16.mxu0 0
      %3466 = vmatpush1.bf16.msra.mxu0 0
      %3467 = vmatprep.subr.bf16.mxu0 0
      %3468 = vmatpush1.bf16.msra.mxu0 0
      %3469 = vmatprep.subr.bf16.mxu0 0
      %3470 = vmatpush1.bf16.msra.mxu0 0
      %3471 = vmatprep.subr.bf16.mxu0 0
      %3472 = vmatpush1.bf16.msra.mxu0 0
      %3473 = vmatprep.subr.bf16.mxu0 0
      %3474 = vmatpush1.bf16.msra.mxu0 0
      %3475 = vmatprep.subr.bf16.mxu0 0
      %3476 = vmatpush1.bf16.msra.mxu0 0
      %3477 = vmatprep.subr.bf16.mxu0 0
      %3478 = vmatpush1.bf16.msra.mxu0 0
      %3479 = vmatprep.subr.bf16.mxu0 0
      %3480 = vmatpush1.bf16.msra.mxu0 0
      %3481 = vmatprep.subr.bf16.mxu0 0
      %3482 = vmatpush1.bf16.msra.mxu0 0
      %3483 = vmatprep.subr.bf16.mxu0 0
      %3484 = vmatpush1.bf16.msra.mxu0 0
      %3485 = vmatprep.subr.bf16.mxu0 0
      %3486 = vmatpush1.bf16.msra.mxu0 0
      %3487 = vmatprep.subr.bf16.mxu0 0
      %3488 = vmatpush1.bf16.msra.mxu0 0
      %3489 = vmatprep.subr.bf16.mxu0 0
      %3490 = vmatpush1.bf16.msra.mxu0 0
      %3491 = vmatprep.subr.bf16.mxu0 0
      %3492 = vmatpush1.bf16.msra.mxu0 0
      %3493 = vmatprep.mubr.bf16.mxu0 0
      %3494 = vmatmul.mubr.bf16.gmra.mrb[0].mxu0 %v3405
      %v3495 = vpop.f32.mrb[0].mxu0
      %v3496 = vadd.f32 0.0, %v3495
      %v3497 = vpop.f32.mrb[0].mxu0
      %v3498 = vpop.f32.mrb[0].mxu0
      %v3499 = vadd.f32 0.0, %v3498
      %v3500 = vpop.f32.mrb[0].mxu0
      %3501 = vmatprep.mubr.bf16.mxu0 0
      %3502 = vmatmul.mubr.bf16.gmra.mrb[0].mxu0 %v3408
      %v3503 = vpop.f32.mrb[0].mxu0
      %v3504 = vadd.f32 0.0, %v3503
      %v3505 = vpop.f32.mrb[0].mxu0
      %v3506 = vpop.f32.mrb[0].mxu0
      %v3507 = vadd.f32 0.0, %v3506
      %v3508 = vpop.f32.mrb[0].mxu0
      %3509 = vmatprep.mubr.bf16.mxu0 0
      %3510 = vmatmul.mubr.bf16.gmra.mrb[0].mxu0 %v3411
      %v3511 = vpop.f32.mrb[0].mxu0
      %v3512 = vadd.f32 0.0, %v3511
      %v3513 = vpop.f32.mrb[0].mxu0
      %v3514 = vpop.f32.mrb[0].mxu0
      %v3515 = vadd.f32 0.0, %v3514
      %v3516 = vpop.f32.mrb[0].mxu0
      %3517 = vmatprep.mubr.bf16.mxu0 0
      %3518 = vmatmul.mubr.bf16.gmra.mrb[0].mxu0 %v3414
      %v3519 = vpop.f32.mrb[0].mxu0
      %v3520 = vadd.f32 0.0, %v3519
      %v3521 = vpop.f32.mrb[0].mxu0
      %v3522 = vpop.f32.mrb[0].mxu0
      %v3523 = vadd.f32 0.0, %v3522
      %v3524 = vpop.f32.mrb[0].mxu0
      %3525 = vmatprep.mubr.bf16.mxu0 0
      %3526 = vmatmul.mubr.bf16.gmra.mrb[0].mxu0 %v3417
      %v3527 = vpop.f32.mrb[0].mxu0
      %v3528 = vadd.f32 0.0, %v3527
      %v3529 = vpop.f32.mrb[0].mxu0
      %v3530 = vpop.f32.mrb[0].mxu0
      %v3531 = vadd.f32 0.0, %v3530
      %v3532 = vpop.f32.mrb[0].mxu0
      %3533 = vmatprep.mubr.bf16.mxu0 0
      %3534 = vmatmul.mubr.bf16.gmra.mrb[0].mxu0 %v3420
      %v3535 = vpop.f32.mrb[0].mxu0
      %v3536 = vadd.f32 0.0, %v3535
      %v3537 = vpop.f32.mrb[0].mxu0
      %v3538 = vpop.f32.mrb[0].mxu0
      %v3539 = vadd.f32 0.0, %v3538
      %v3540 = vpop.f32.mrb[0].mxu0
      %3541 = vmatprep.mubr.bf16.mxu0 0
      %3542 = vmatmul.mubr.bf16.gmra.mrb[0].mxu0 %v3423
      %v3543 = vpop.f32.mrb[0].mxu0
      %v3544 = vadd.f32 0.0, %v3543
      %v3545 = vpop.f32.mrb[0].mxu0
      %v3546 = vpop.f32.mrb[0].mxu0
      %v3547 = vadd.f32 0.0, %v3546
      %v3548 = vpop.f32.mrb[0].mxu0
      %3549 = vmatprep.mubr.bf16.mxu0 0
      %3550 = vmatmul.mubr.bf16.gmra.mrb[0].mxu0 %v3426
      %v3551 = vpop.f32.mrb[0].mxu0
      %v3552 = vadd.f32 0.0, %v3551
      %v3553 = vpop.f32.mrb[0].mxu0
      %v3554 = vpop.f32.mrb[0].mxu0
      %v3555 = vadd.f32 0.0, %v3554
      %v3556 = vpop.f32.mrb[0].mxu0
      %3557 = vmatprep.mubr.bf16.mxu0 0
      %3558 = vmatmul.mubr.bf16.gmra.mrb[0].mxu0 %v3429
      %v3559 = vpop.f32.mrb[0].mxu0
      %v3560 = vadd.f32 0.0, %v3559
      %v3561 = vpop.f32.mrb[0].mxu0
      %v3562 = vpop.f32.mrb[0].mxu0
      %v3563 = vadd.f32 0.0, %v3562
      %v3564 = vpop.f32.mrb[0].mxu0
      %3565 = vmatprep.mubr.bf16.mxu0 0
      %3566 = vmatmul.mubr.bf16.gmra.mrb[0].mxu0 %v3432
      %v3567 = vpop.f32.mrb[0].mxu0
      %v3568 = vadd.f32 0.0, %v3567
      %v3569 = vpop.f32.mrb[0].mxu0
      %v3570 = vpop.f32.mrb[0].mxu0
      %v3571 = vadd.f32 0.0, %v3570
      %v3572 = vpop.f32.mrb[0].mxu0
      %3573 = vmatprep.mubr.bf16.mxu0 0
      %3574 = vmatmul.mubr.bf16.gmra.mrb[0].mxu0 %v3435
      %v3575 = vpop.f32.mrb[0].mxu0
      %v3576 = vadd.f32 0.0, %v3575
      %v3577 = vpop.f32.mrb[0].mxu0
      %v3578 = vpop.f32.mrb[0].mxu0
      %v3579 = vadd.f32 0.0, %v3578
      %v3580 = vpop.f32.mrb[0].mxu0
      %3581 = vmatprep.mubr.bf16.mxu0 0
      %3582 = vmatmul.mubr.bf16.gmra.mrb[0].mxu0 %v3438
      %v3583 = vpop.f32.mrb[0].mxu0
      %v3584 = vadd.f32 0.0, %v3583
      %v3585 = vpop.f32.mrb[0].mxu0
      %v3586 = vpop.f32.mrb[0].mxu0
      %v3587 = vadd.f32 0.0, %v3586
      %v3588 = vpop.f32.mrb[0].mxu0
      %3589 = vmatprep.mubr.bf16.mxu0 0
      %3590 = vmatmul.mubr.bf16.gmra.mrb[0].mxu0 %v3441
      %v3591 = vpop.f32.mrb[0].mxu0
      %v3592 = vadd.f32 0.0, %v3591
      %v3593 = vpop.f32.mrb[0].mxu0
      %v3594 = vpop.f32.mrb[0].mxu0
      %v3595 = vadd.f32 0.0, %v3594
      %v3596 = vpop.f32.mrb[0].mxu0
      %3597 = vmatprep.mubr.bf16.mxu0 0
      %3598 = vmatmul.mubr.bf16.gmra.mrb[0].mxu0 %v3444
      %v3599 = vpop.f32.mrb[0].mxu0
      %v3600 = vadd.f32 0.0, %v3599
      %v3601 = vpop.f32.mrb[0].mxu0
      %v3602 = vpop.f32.mrb[0].mxu0
      %v3603 = vadd.f32 0.0, %v3602
      %v3604 = vpop.f32.mrb[0].mxu0
      %3605 = vmatprep.mubr.bf16.mxu0 0
      %3606 = vmatmul.mubr.bf16.gmra.mrb[0].mxu0 %v3447
      %v3607 = vpop.f32.mrb[0].mxu0
      %v3608 = vadd.f32 0.0, %v3607
      %v3609 = vpop.f32.mrb[0].mxu0
      %v3610 = vpop.f32.mrb[0].mxu0
      %v3611 = vadd.f32 0.0, %v3610
      %v3612 = vpop.f32.mrb[0].mxu0
      %3613 = vmatprep.mubr.bf16.mxu0 0
      %3614 = vmatmul.mubr.bf16.gmra.mrb[0].mxu0 %v3450
      %v3615 = vpop.f32.mrb[0].mxu0
      %v3616 = vadd.f32 0.0, %v3615
      %v3617 = vpop.f32.mrb[0].mxu0
      %v3618 = vpop.f32.mrb[0].mxu0
      %v3619 = vadd.f32 0.0, %v3618
      %v3620 = vpop.f32.mrb[0].mxu0
      %3621 = vmatprep.mubr.bf16.mxu0 0
      %3622 = vmatmul.mubr.bf16.gmra.mrb[0].mxu0 %v3453
      %v3623 = vpop.f32.mrb[0].mxu0
      %v3624 = vadd.f32 0.0, %v3623
      %v3625 = vpop.f32.mrb[0].mxu0
      %v3626 = vpop.f32.mrb[0].mxu0
      %v3627 = vadd.f32 0.0, %v3626
      %v3628 = vpop.f32.mrb[0].mxu0
      %3629 = vmatprep.mubr.bf16.mxu0 0
      %3630 = vmatmul.mubr.bf16.gmra.mrb[0].mxu0 %v3456
      %v3631 = vpop.f32.mrb[0].mxu0
      %v3632 = vadd.f32 0.0, %v3631
      %v3633 = vpop.f32.mrb[0].mxu0
      %v3634 = vpop.f32.mrb[0].mxu0
      %v3635 = vadd.f32 0.0, %v3634
      %v3636 = vpop.f32.mrb[0].mxu0
      %3637 = vdwg.mxu0
      %v3638 = vadd.f32 %v3318, %v3496
      %v3639 = vadd.f32 %v3319, %v3499
      %v3640 = vadd.f32 %v3320, %v3504
      %v3641 = vadd.f32 %v3321, %v3507
      %v3642 = vadd.f32 %v3322, %v3512
      %v3643 = vadd.f32 %v3323, %v3515
      %v3644 = vadd.f32 %v3324, %v3520
      %v3645 = vadd.f32 %v3325, %v3523
      %v3646 = vadd.f32 %v3326, %v3528
      %v3647 = vadd.f32 %v3327, %v3531
      %v3648 = vadd.f32 %v3328, %v3536
      %v3649 = vadd.f32 %v3329, %v3539
      %v3650 = vadd.f32 %v3330, %v3544
      %v3651 = vadd.f32 %v3331, %v3547
      %v3652 = vadd.f32 %v3332, %v3552
      %v3653 = vadd.f32 %v3333, %v3555
      %v3654 = vadd.f32 %v3334, %v3560
      %v3655 = vadd.f32 %v3335, %v3563
      %v3656 = vadd.f32 %v3336, %v3568
      %v3657 = vadd.f32 %v3337, %v3571
      %v3658 = vadd.f32 %v3338, %v3576
      %v3659 = vadd.f32 %v3339, %v3579
      %v3660 = vadd.f32 %v3340, %v3584
      %v3661 = vadd.f32 %v3341, %v3587
      %v3662 = vadd.f32 %v3342, %v3592
      %v3663 = vadd.f32 %v3343, %v3595
      %v3664 = vadd.f32 %v3344, %v3600
      %v3665 = vadd.f32 %v3345, %v3603
      %v3666 = vadd.f32 %v3346, %v3608
      %v3667 = vadd.f32 %v3347, %v3611
      %v3668 = vadd.f32 %v3348, %v3616
      %v3669 = vadd.f32 %v3349, %v3619
      %v3670 = vadd.f32 %v3350, %v3624
      %v3671 = vadd.f32 %v3351, %v3627
      %v3672 = vadd.f32 %v3352, %v3632
      %v3673 = vadd.f32 %v3353, %v3635
      %3710 = vrot.lane.b32.xlu0 %v3638, 96
      %v3711 = vpop.permute.xlu0 %3710
      %3712 = vrot.lane.b32.xlu0 %v3639, 96
      %v3713 = vpop.permute.xlu0 %3712
      %3714 = vrot.lane.b32.xlu0 %v3640, 96
      %v3715 = vpop.permute.xlu0 %3714
      %3716 = vrot.lane.b32.xlu0 %v3641, 96
      %v3717 = vpop.permute.xlu0 %3716
      %3718 = vrot.lane.b32.xlu0 %v3642, 96
      %v3719 = vpop.permute.xlu0 %3718
      %3720 = vrot.lane.b32.xlu0 %v3643, 96
      %v3721 = vpop.permute.xlu0 %3720
      %3722 = vrot.lane.b32.xlu0 %v3644, 96
      %v3723 = vpop.permute.xlu0 %3722
      %3724 = vrot.lane.b32.xlu0 %v3645, 96
      %v3725 = vpop.permute.xlu0 %3724
      %3726 = vrot.lane.b32.xlu0 %v3646, 96
      %v3727 = vpop.permute.xlu0 %3726
      %3728 = vrot.lane.b32.xlu0 %v3647, 96
      %v3729 = vpop.permute.xlu0 %3728
      %3730 = vrot.lane.b32.xlu0 %v3648, 96
      %v3731 = vpop.permute.xlu0 %3730
      %3732 = vrot.lane.b32.xlu0 %v3649, 96
      %v3733 = vpop.permute.xlu0 %3732
      %3734 = vrot.lane.b32.xlu0 %v3650, 96
      %v3735 = vpop.permute.xlu0 %3734
      %3736 = vrot.lane.b32.xlu0 %v3651, 96
      %v3737 = vpop.permute.xlu0 %3736
      %3738 = vrot.lane.b32.xlu0 %v3652, 96
      %v3739 = vpop.permute.xlu0 %3738
      %3740 = vrot.lane.b32.xlu0 %v3653, 96
      %v3741 = vpop.permute.xlu0 %3740
      %3742 = vrot.lane.b32.xlu0 %v3654, 96
      %v3743 = vpop.permute.xlu0 %3742
      %3744 = vrot.lane.b32.xlu0 %v3655, 96
      %v3745 = vpop.permute.xlu0 %3744
      %3746 = vrot.lane.b32.xlu0 %v3656, 96
      %v3747 = vpop.permute.xlu0 %3746
      %3748 = vrot.lane.b32.xlu0 %v3657, 96
      %v3749 = vpop.permute.xlu0 %3748
      %3750 = vrot.lane.b32.xlu0 %v3658, 96
      %v3751 = vpop.permute.xlu0 %3750
      %3752 = vrot.lane.b32.xlu0 %v3659, 96
      %v3753 = vpop.permute.xlu0 %3752
      %3754 = vrot.lane.b32.xlu0 %v3660, 96
      %v3755 = vpop.permute.xlu0 %3754
      %3756 = vrot.lane.b32.xlu0 %v3661, 96
      %v3757 = vpop.permute.xlu0 %3756
      %3758 = vrot.lane.b32.xlu0 %v3662, 96
      %v3759 = vpop.permute.xlu0 %3758
      %3760 = vrot.lane.b32.xlu0 %v3663, 96
      %v3761 = vpop.permute.xlu0 %3760
      %3762 = vrot.lane.b32.xlu0 %v3664, 96
      %v3763 = vpop.permute.xlu0 %3762
      %3764 = vrot.lane.b32.xlu0 %v3665, 96
      %v3765 = vpop.permute.xlu0 %3764
      %3766 = vrot.lane.b32.xlu0 %v3666, 96
      %v3767 = vpop.permute.xlu0 %3766
      %3768 = vrot.lane.b32.xlu0 %v3667, 96
      %v3769 = vpop.permute.xlu0 %3768
      %3770 = vrot.lane.b32.xlu0 %v3668, 96
      %v3771 = vpop.permute.xlu0 %3770
      %3772 = vrot.lane.b32.xlu0 %v3669, 96
      %v3773 = vpop.permute.xlu0 %3772
      %3774 = vrot.lane.b32.xlu0 %v3670, 96
      %v3775 = vpop.permute.xlu0 %3774
      %3776 = vrot.lane.b32.xlu0 %v3671, 96
      %v3777 = vpop.permute.xlu0 %3776
      %3778 = vrot.lane.b32.xlu0 %v3672, 96
      %v3779 = vpop.permute.xlu0 %3778
      %3780 = vrot.lane.b32.xlu0 %v3673, 96
      %v3781 = vpop.permute.xlu0 %3780
      %v3818 = vmax.f32 %v3638, %v3711
      %v3819 = vmax.f32 %v3639, %v3713
      %v3820 = vmax.f32 %v3640, %v3715
      %v3821 = vmax.f32 %v3641, %v3717
      %v3822 = vmax.f32 %v3642, %v3719
      %v3823 = vmax.f32 %v3643, %v3721
      %v3824 = vmax.f32 %v3644, %v3723
      %v3825 = vmax.f32 %v3645, %v3725
      %v3826 = vmax.f32 %v3646, %v3727
      %v3827 = vmax.f32 %v3647, %v3729
      %v3828 = vmax.f32 %v3648, %v3731
      %v3829 = vmax.f32 %v3649, %v3733
      %v3830 = vmax.f32 %v3650, %v3735
      %v3831 = vmax.f32 %v3651, %v3737
      %v3832 = vmax.f32 %v3652, %v3739
      %v3833 = vmax.f32 %v3653, %v3741
      %v3834 = vmax.f32 %v3654, %v3743
      %v3835 = vmax.f32 %v3655, %v3745
      %v3836 = vmax.f32 %v3656, %v3747
      %v3837 = vmax.f32 %v3657, %v3749
      %v3838 = vmax.f32 %v3658, %v3751
      %v3839 = vmax.f32 %v3659, %v3753
      %v3840 = vmax.f32 %v3660, %v3755
      %v3841 = vmax.f32 %v3661, %v3757
      %v3842 = vmax.f32 %v3662, %v3759
      %v3843 = vmax.f32 %v3663, %v3761
      %v3844 = vmax.f32 %v3664, %v3763
      %v3845 = vmax.f32 %v3665, %v3765
      %v3846 = vmax.f32 %v3666, %v3767
      %v3847 = vmax.f32 %v3667, %v3769
      %v3848 = vmax.f32 %v3668, %v3771
      %v3849 = vmax.f32 %v3669, %v3773
      %v3850 = vmax.f32 %v3670, %v3775
      %v3851 = vmax.f32 %v3671, %v3777
      %v3852 = vmax.f32 %v3672, %v3779
      %v3853 = vmax.f32 %v3673, %v3781
      %3890 = vrot.lane.b32.xlu0 %v3818, 64
      %v3891 = vpop.permute.xlu0 %3890
      %3892 = vrot.lane.b32.xlu0 %v3819, 64
      %v3893 = vpop.permute.xlu0 %3892
      %3894 = vrot.lane.b32.xlu0 %v3820, 64
      %v3895 = vpop.permute.xlu0 %3894
      %3896 = vrot.lane.b32.xlu0 %v3821, 64
      %v3897 = vpop.permute.xlu0 %3896
      %3898 = vrot.lane.b32.xlu0 %v3822, 64
      %v3899 = vpop.permute.xlu0 %3898
      %3900 = vrot.lane.b32.xlu0 %v3823, 64
      %v3901 = vpop.permute.xlu0 %3900
      %3902 = vrot.lane.b32.xlu0 %v3824, 64
      %v3903 = vpop.permute.xlu0 %3902
      %3904 = vrot.lane.b32.xlu0 %v3825, 64
      %v3905 = vpop.permute.xlu0 %3904
      %3906 = vrot.lane.b32.xlu0 %v3826, 64
      %v3907 = vpop.permute.xlu0 %3906
      %3908 = vrot.lane.b32.xlu0 %v3827, 64
      %v3909 = vpop.permute.xlu0 %3908
      %3910 = vrot.lane.b32.xlu0 %v3828, 64
      %v3911 = vpop.permute.xlu0 %3910
      %3912 = vrot.lane.b32.xlu0 %v3829, 64
      %v3913 = vpop.permute.xlu0 %3912
      %3914 = vrot.lane.b32.xlu0 %v3830, 64
      %v3915 = vpop.permute.xlu0 %3914
      %3916 = vrot.lane.b32.xlu0 %v3831, 64
      %v3917 = vpop.permute.xlu0 %3916
      %3918 = vrot.lane.b32.xlu0 %v3832, 64
      %v3919 = vpop.permute.xlu0 %3918
      %3920 = vrot.lane.b32.xlu0 %v3833, 64
      %v3921 = vpop.permute.xlu0 %3920
      %3922 = vrot.lane.b32.xlu0 %v3834, 64
      %v3923 = vpop.permute.xlu0 %3922
      %3924 = vrot.lane.b32.xlu0 %v3835, 64
      %v3925 = vpop.permute.xlu0 %3924
      %3926 = vrot.lane.b32.xlu0 %v3836, 64
      %v3927 = vpop.permute.xlu0 %3926
      %3928 = vrot.lane.b32.xlu0 %v3837, 64
      %v3929 = vpop.permute.xlu0 %3928
      %3930 = vrot.lane.b32.xlu0 %v3838, 64
      %v3931 = vpop.permute.xlu0 %3930
      %3932 = vrot.lane.b32.xlu0 %v3839, 64
      %v3933 = vpop.permute.xlu0 %3932
      %3934 = vrot.lane.b32.xlu0 %v3840, 64
      %v3935 = vpop.permute.xlu0 %3934
      %3936 = vrot.lane.b32.xlu0 %v3841, 64
      %v3937 = vpop.permute.xlu0 %3936
      %3938 = vrot.lane.b32.xlu0 %v3842, 64
      %v3939 = vpop.permute.xlu0 %3938
      %3940 = vrot.lane.b32.xlu0 %v3843, 64
      %v3941 = vpop.permute.xlu0 %3940
      %3942 = vrot.lane.b32.xlu0 %v3844, 64
      %v3943 = vpop.permute.xlu0 %3942
      %3944 = vrot.lane.b32.xlu0 %v3845, 64
      %v3945 = vpop.permute.xlu0 %3944
      %3946 = vrot.lane.b32.xlu0 %v3846, 64
      %v3947 = vpop.permute.xlu0 %3946
      %3948 = vrot.lane.b32.xlu0 %v3847, 64
      %v3949 = vpop.permute.xlu0 %3948
      %3950 = vrot.lane.b32.xlu0 %v3848, 64
      %v3951 = vpop.permute.xlu0 %3950
      %3952 = vrot.lane.b32.xlu0 %v3849, 64
      %v3953 = vpop.permute.xlu0 %3952
      %3954 = vrot.lane.b32.xlu0 %v3850, 64
      %v3955 = vpop.permute.xlu0 %3954
      %3956 = vrot.lane.b32.xlu0 %v3851, 64
      %v3957 = vpop.permute.xlu0 %3956
      %3958 = vrot.lane.b32.xlu0 %v3852, 64
      %v3959 = vpop.permute.xlu0 %3958
      %3960 = vrot.lane.b32.xlu0 %v3853, 64
      %v3961 = vpop.permute.xlu0 %3960
      %v3998 = vmax.f32 %v3818, %v3891
      %v3999 = vmax.f32 %v3819, %v3893
      %v4000 = vmax.f32 %v3820, %v3895
      %v4001 = vmax.f32 %v3821, %v3897
      %v4002 = vmax.f32 %v3822, %v3899
      %v4003 = vmax.f32 %v3823, %v3901
      %v4004 = vmax.f32 %v3824, %v3903
      %v4005 = vmax.f32 %v3825, %v3905
      %v4006 = vmax.f32 %v3826, %v3907
      %v4007 = vmax.f32 %v3827, %v3909
      %v4008 = vmax.f32 %v3828, %v3911
      %v4009 = vmax.f32 %v3829, %v3913
      %v4010 = vmax.f32 %v3830, %v3915
      %v4011 = vmax.f32 %v3831, %v3917
      %v4012 = vmax.f32 %v3832, %v3919
      %v4013 = vmax.f32 %v3833, %v3921
      %v4014 = vmax.f32 %v3834, %v3923
      %v4015 = vmax.f32 %v3835, %v3925
      %v4016 = vmax.f32 %v3836, %v3927
      %v4017 = vmax.f32 %v3837, %v3929
      %v4018 = vmax.f32 %v3838, %v3931
      %v4019 = vmax.f32 %v3839, %v3933
      %v4020 = vmax.f32 %v3840, %v3935
      %v4021 = vmax.f32 %v3841, %v3937
      %v4022 = vmax.f32 %v3842, %v3939
      %v4023 = vmax.f32 %v3843, %v3941
      %v4024 = vmax.f32 %v3844, %v3943
      %v4025 = vmax.f32 %v3845, %v3945
      %v4026 = vmax.f32 %v3846, %v3947
      %v4027 = vmax.f32 %v3847, %v3949
      %v4028 = vmax.f32 %v3848, %v3951
      %v4029 = vmax.f32 %v3849, %v3953
      %v4030 = vmax.f32 %v3850, %v3955
      %v4031 = vmax.f32 %v3851, %v3957
      %v4032 = vmax.f32 %v3852, %v3959
      %v4033 = vmax.f32 %v3853, %v3961
      %v4034 = vld [vmem:[%s2] sm:$0x1]
      %v4036 = vlaneseq
      %v4037 = vshrl.u32 %v4036, 7
      %v4038 = vsub.s32 0, %v4037
      %v4039 = vrot.slane %v4034, %v4038
      %v4041 = vadd.f32 %v3998, %v4039
      %v4042 = vadd.f32 %v3999, %v4039
      %v4043 = vadd.f32 %v4000, %v4039
      %v4044 = vadd.f32 %v4001, %v4039
      %v4045 = vadd.f32 %v4002, %v4039
      %v4046 = vadd.f32 %v4003, %v4039
      %v4047 = vadd.f32 %v4004, %v4039
      %v4048 = vadd.f32 %v4005, %v4039
      %v4049 = vadd.f32 %v4006, %v4039
      %v4050 = vadd.f32 %v4007, %v4039
      %v4051 = vadd.f32 %v4008, %v4039
      %v4052 = vadd.f32 %v4009, %v4039
      %v4053 = vadd.f32 %v4010, %v4039
      %v4054 = vadd.f32 %v4011, %v4039
      %v4055 = vadd.f32 %v4012, %v4039
      %v4056 = vadd.f32 %v4013, %v4039
      %v4057 = vadd.f32 %v4014, %v4039
      %v4058 = vadd.f32 %v4015, %v4039
      %v4059 = vadd.f32 %v4016, %v4039
      %v4060 = vadd.f32 %v4017, %v4039
      %v4061 = vadd.f32 %v4018, %v4039
      %v4062 = vadd.f32 %v4019, %v4039
      %v4063 = vadd.f32 %v4020, %v4039
      %v4064 = vadd.f32 %v4021, %v4039
      %v4065 = vadd.f32 %v4022, %v4039
      %v4066 = vadd.f32 %v4023, %v4039
      %v4067 = vadd.f32 %v4024, %v4039
      %v4068 = vadd.f32 %v4025, %v4039
      %v4069 = vadd.f32 %v4026, %v4039
      %v4070 = vadd.f32 %v4027, %v4039
      %v4071 = vadd.f32 %v4028, %v4039
      %v4072 = vadd.f32 %v4029, %v4039
      %v4073 = vadd.f32 %v4030, %v4039
      %v4074 = vadd.f32 %v4031, %v4039
      %v4075 = vadd.f32 %v4032, %v4039
      %v4076 = vadd.f32 %v4033, %v4039
      %v4077 = vmax.f32 %v4041, 0.0
      %v4078 = vmax.f32 %v4042, 0.0
      %v4079 = vmax.f32 %v4043, 0.0
      %v4080 = vmax.f32 %v4044, 0.0
      %v4081 = vmax.f32 %v4045, 0.0
      %v4082 = vmax.f32 %v4046, 0.0
      %v4083 = vmax.f32 %v4047, 0.0
      %v4084 = vmax.f32 %v4048, 0.0
      %v4085 = vmax.f32 %v4049, 0.0
      %v4086 = vmax.f32 %v4050, 0.0
      %v4087 = vmax.f32 %v4051, 0.0
      %v4088 = vmax.f32 %v4052, 0.0
      %v4089 = vmax.f32 %v4053, 0.0
      %v4090 = vmax.f32 %v4054, 0.0
      %v4091 = vmax.f32 %v4055, 0.0
      %v4092 = vmax.f32 %v4056, 0.0
      %v4093 = vmax.f32 %v4057, 0.0
      %v4094 = vmax.f32 %v4058, 0.0
      %v4095 = vmax.f32 %v4059, 0.0
      %v4096 = vmax.f32 %v4060, 0.0
      %v4097 = vmax.f32 %v4061, 0.0
      %v4098 = vmax.f32 %v4062, 0.0
      %v4099 = vmax.f32 %v4063, 0.0
      %v4100 = vmax.f32 %v4064, 0.0
      %v4101 = vmax.f32 %v4065, 0.0
      %v4102 = vmax.f32 %v4066, 0.0
      %v4103 = vmax.f32 %v4067, 0.0
      %v4104 = vmax.f32 %v4068, 0.0
      %v4105 = vmax.f32 %v4069, 0.0
      %v4106 = vmax.f32 %v4070, 0.0
      %v4107 = vmax.f32 %v4071, 0.0
      %v4108 = vmax.f32 %v4072, 0.0
      %v4109 = vmax.f32 %v4073, 0.0
      %v4110 = vmax.f32 %v4074, 0.0
      %v4111 = vmax.f32 %v4075, 0.0
      %v4112 = vmax.f32 %v4076, 0.0
      %v4113 = vpack.c.bf16 %v4078, %v4077
      %v4114 = vpack.c.bf16 %v4080, %v4079
      %v4115 = vpack.c.bf16 %v4082, %v4081
      %v4116 = vpack.c.bf16 %v4084, %v4083
      %v4117 = vpack.c.bf16 %v4086, %v4085
      %v4118 = vpack.c.bf16 %v4088, %v4087
      %v4119 = vpack.c.bf16 %v4090, %v4089
      %v4120 = vpack.c.bf16 %v4092, %v4091
      %v4121 = vpack.c.bf16 %v4094, %v4093
      %v4122 = vpack.c.bf16 %v4096, %v4095
      %v4123 = vpack.c.bf16 %v4098, %v4097
      %v4124 = vpack.c.bf16 %v4100, %v4099
      %v4125 = vpack.c.bf16 %v4102, %v4101
      %v4126 = vpack.c.bf16 %v4104, %v4103
      %v4127 = vpack.c.bf16 %v4106, %v4105
      %v4128 = vpack.c.bf16 %v4108, %v4107
      %v4129 = vpack.c.bf16 %v4110, %v4109
      %v4130 = vpack.c.bf16 %v4112, %v4111
      %v4149 = vunpack.c.l.b16 %v4113
      %v4150 = vunpack.c.h.b16 %v4113
      %v4151 = vunpack.c.l.b16 %v4114
      %v4152 = vunpack.c.h.b16 %v4114
      %v4153 = vunpack.c.l.b16 %v4115
      %v4154 = vunpack.c.h.b16 %v4115
      %v4155 = vunpack.c.l.b16 %v4116
      %v4156 = vunpack.c.h.b16 %v4116
      %v4157 = vunpack.c.l.b16 %v4117
      %v4158 = vunpack.c.h.b16 %v4117
      %v4159 = vunpack.c.l.b16 %v4118
      %v4160 = vunpack.c.h.b16 %v4118
      %v4161 = vunpack.c.l.b16 %v4119
      %v4162 = vunpack.c.h.b16 %v4119
      %v4163 = vunpack.c.l.b16 %v4120
      %v4164 = vunpack.c.h.b16 %v4120
      %v4165 = vunpack.c.l.b16 %v4121
      %v4166 = vunpack.c.h.b16 %v4121
      %v4167 = vunpack.c.l.b16 %v4122
      %v4168 = vunpack.c.h.b16 %v4122
      %v4169 = vunpack.c.l.b16 %v4123
      %v4170 = vunpack.c.h.b16 %v4123
      %v4171 = vunpack.c.l.b16 %v4124
      %v4172 = vunpack.c.h.b16 %v4124
      %v4173 = vunpack.c.l.b16 %v4125
      %v4174 = vunpack.c.h.b16 %v4125
      %v4175 = vunpack.c.l.b16 %v4126
      %v4176 = vunpack.c.h.b16 %v4126
      %v4177 = vunpack.c.l.b16 %v4127
      %v4178 = vunpack.c.h.b16 %v4127
      %v4179 = vunpack.c.l.b16 %v4128
      %v4180 = vunpack.c.h.b16 %v4128
      %v4181 = vunpack.c.l.b16 %v4129
      %v4182 = vunpack.c.h.b16 %v4129
      %v4183 = vunpack.c.l.b16 %v4130
      %v4184 = vunpack.c.h.b16 %v4130
      %v4185 = vpack.c.b16 %v4149, %v4149
      %v4186 = vpack.c.b16 %v4150, %v4150
      %v4187 = vpack.c.b16 %v4151, %v4151
      %v4188 = vpack.c.b16 %v4152, %v4152
      %v4189 = vpack.c.b16 %v4153, %v4153
      %v4190 = vpack.c.b16 %v4154, %v4154
      %v4191 = vpack.c.b16 %v4155, %v4155
      %v4192 = vpack.c.b16 %v4156, %v4156
      %v4193 = vpack.c.b16 %v4157, %v4157
      %v4194 = vpack.c.b16 %v4158, %v4158
      %v4195 = vpack.c.b16 %v4159, %v4159
      %v4196 = vpack.c.b16 %v4160, %v4160
      %v4197 = vpack.c.b16 %v4161, %v4161
      %v4198 = vpack.c.b16 %v4162, %v4162
      %v4199 = vpack.c.b16 %v4163, %v4163
      %v4200 = vpack.c.b16 %v4164, %v4164
      %v4201 = vpack.c.b16 %v4165, %v4165
      %v4202 = vpack.c.b16 %v4166, %v4166
      %v4203 = vpack.c.b16 %v4167, %v4167
      %v4204 = vpack.c.b16 %v4168, %v4168
      %v4205 = vpack.c.b16 %v4169, %v4169
      %v4206 = vpack.c.b16 %v4170, %v4170
      %v4207 = vpack.c.b16 %v4171, %v4171
      %v4208 = vpack.c.b16 %v4172, %v4172
      %v4209 = vpack.c.b16 %v4173, %v4173
      %v4210 = vpack.c.b16 %v4174, %v4174
      %v4211 = vpack.c.b16 %v4175, %v4175
      %v4212 = vpack.c.b16 %v4176, %v4176
      %v4213 = vpack.c.b16 %v4177, %v4177
      %v4214 = vpack.c.b16 %v4178, %v4178
      %v4215 = vpack.c.b16 %v4179, %v4179
      %v4216 = vpack.c.b16 %v4180, %v4180
      %v4217 = vpack.c.b16 %v4181, %v4181
      %v4218 = vpack.c.b16 %v4182, %v4182
      %v4219 = vpack.c.b16 %v4183, %v4183
      %v4220 = vpack.c.b16 %v4184, %v4184
      %vm4257 = vcmask 257024
      %4258 = vst.msk [vmem:[%s170] sm:$0xf] %vm4257, %v4185
      %4259 = vst.msk [vmem:[%s170 + $0x4] sm:$0xf] %vm4257, %v4186
      %4260 = vst.msk [vmem:[%s170 + $0x8] sm:$0xf] %vm4257, %v4187
      %4261 = vst.msk [vmem:[%s170 + $0xc] sm:$0xf] %vm4257, %v4188
      %4262 = vst.msk [vmem:[%s170 + $0x10] sm:$0xf] %vm4257, %v4189
      %4263 = vst.msk [vmem:[%s170 + $0x14] sm:$0xf] %vm4257, %v4190
      %4264 = vst.msk [vmem:[%s170 + $0x18] sm:$0xf] %vm4257, %v4191
      %4265 = vst.msk [vmem:[%s170 + $0x1c] sm:$0xf] %vm4257, %v4192
      %4266 = vst.msk [vmem:[%s170 + $0x20] sm:$0xf] %vm4257, %v4193
      %4267 = vst.msk [vmem:[%s170 + $0x24] sm:$0xf] %vm4257, %v4194
      %4268 = vst.msk [vmem:[%s170 + $0x28] sm:$0xf] %vm4257, %v4195
      %4269 = vst.msk [vmem:[%s170 + $0x2c] sm:$0xf] %vm4257, %v4196
      %4270 = vst.msk [vmem:[%s170 + $0x30] sm:$0xf] %vm4257, %v4197
      %4271 = vst.msk [vmem:[%s170 + $0x34] sm:$0xf] %vm4257, %v4198
      %4272 = vst.msk [vmem:[%s170 + $0x38] sm:$0xf] %vm4257, %v4199
      %4273 = vst.msk [vmem:[%s170 + $0x3c] sm:$0xf] %vm4257, %v4200
      %4274 = vst.msk [vmem:[%s170 + $0x40] sm:$0xf] %vm4257, %v4201
      %4275 = vst.msk [vmem:[%s170 + $0x44] sm:$0xf] %vm4257, %v4202
      %4276 = vst.msk [vmem:[%s170 + $0x48] sm:$0xf] %vm4257, %v4203
      %4277 = vst.msk [vmem:[%s170 + $0x4c] sm:$0xf] %vm4257, %v4204
      %4278 = vst.msk [vmem:[%s170 + $0x50] sm:$0xf] %vm4257, %v4205
      %4279 = vst.msk [vmem:[%s170 + $0x54] sm:$0xf] %vm4257, %v4206
      %4280 = vst.msk [vmem:[%s170 + $0x58] sm:$0xf] %vm4257, %v4207
      %4281 = vst.msk [vmem:[%s170 + $0x5c] sm:$0xf] %vm4257, %v4208
      %4282 = vst.msk [vmem:[%s170 + $0x60] sm:$0xf] %vm4257, %v4209
      %4283 = vst.msk [vmem:[%s170 + $0x64] sm:$0xf] %vm4257, %v4210
      %4284 = vst.msk [vmem:[%s170 + $0x68] sm:$0xf] %vm4257, %v4211
      %4285 = vst.msk [vmem:[%s170 + $0x6c] sm:$0xf] %vm4257, %v4212
      %4286 = vst.msk [vmem:[%s170 + $0x70] sm:$0xf] %vm4257, %v4213
      %4287 = vst.msk [vmem:[%s170 + $0x74] sm:$0xf] %vm4257, %v4214
      %4288 = vst.msk [vmem:[%s170 + $0x78] sm:$0xf] %vm4257, %v4215
      %4289 = vst.msk [vmem:[%s170 + $0x7c] sm:$0xf] %vm4257, %v4216
      %4290 = vst.msk [vmem:[%s170 + $0x80] sm:$0xf] %vm4257, %v4217
      %4291 = vst.msk [vmem:[%s170 + $0x84] sm:$0xf] %vm4257, %v4218
      %4292 = vst.msk [vmem:[%s170 + $0x88] sm:$0xf] %vm4257, %v4219
      %4293 = vst.msk [vmem:[%s170 + $0x8c] sm:$0xf] %vm4257, %v4220
      %p4294 = scmp.lt.s32.totalorder %s14, 1
      %s4295 = scalar_select %p4294, %s14, 1
      %s4296 = smul.addr %s4295, 36
      %s4297 = smul.addr %s4296, 4
      %s4298 = scalar_lea.vmem %s3, %s4297
      // Predicated region
      $region33: #{example_model_forward.4} parent=31 // pred_check
        %p4299 = pneg %p100
      $region34: #{example_model_forward.4} parent=31 // pred_check_branch
        %4301 = sbr.rel (%p4299) target = $region36
      $region35: #{example_model_forward.4} parent=31 // pred_region
        _
      $region36: #{example_model_forward.4} parent=31 // pred_fallthru
        _
    $region32: #{example_model_forward.4} parent=5 // pred_fallthru
      _
    %p4302 = scmp.le.s32.totalorder 2, %s9
    // Predicated region
    $region37: #{example_model_forward.4} parent=5 // pred_check
      %p4303 = pneg %p4302
    $region38: #{example_model_forward.4} parent=5 // pred_check_branch
      %4305 = sbr.rel (%p4303) target = $region40
    $region39: #{example_model_forward.4} parent=5 // pred_region
      %s4306 = ssub.s32 %s9, 2
      // Predicated region
      $region41: #{example_model_forward.4} parent=39 // pred_check
        %p4307 = pneg %p106
      $region42: #{example_model_forward.4} parent=39 // pred_check_branch
        %4309 = sbr.rel (%p4307) target = $region44
      $region43: #{example_model_forward.4} parent=39 // pred_region
        %p4310 = scmp.lt.s32.totalorder %s15, 1
        %s4311 = scalar_select %p4310, %s15, 1
        %s4312 = smul.addr %s4311, 36
        %s4313 = smul.addr %s4312, 4
        %s4314 = scalar_lea.vmem %s3, %s4313
      $region44: #{example_model_forward.4} parent=39 // pred_fallthru
        _
    $region40: #{example_model_forward.4} parent=5 // pred_fallthru
      _
  $region6: #{example_model_forward.4} parent=0 // loop_footer
    %s13 = sadd.s32 1, %s9
  $region7: #{example_model_forward.4} parent=0 // loop_footer_branch
    %8 = sbr.rel target = $region3
  $region8: #{example_model_forward.4} parent=0 // loop_exit
    _

// kernel: example_model_forward.5
$region0: #{example_model_forward.5}
  #allocation0 [shape = 'u32[]', space=smem, size = 0x4, offset = 0x4, fixed_abs, tag = 'smem constant byte address 0x4 - core index']
  #allocation1 [shape = 'u32[144,128]{1,0:T(1,128)}', space=vmem, size = 0x12000, scoped, tag = 'internal scratch']
  %s0 = inlined_call_operand.vmem [shape: bf16[2,108,128], index: 0, kind: input, shape index: {}]
  %s1 = inlined_call_operand.vmem [shape: bf16[9,128,256], index: 1, kind: input, shape index: {}]
  %s2 = inlined_call_operand.vmem [shape: f32[1,64], index: 2, kind: input, shape index: {}]
  %s3 = inlined_call_operand.vmem [shape: bf16[2,80,64], index: 3, kind: output, shape index: {}]
  %s4 = sld [smem:[#allocation0]]
  $region45: #{example_model_forward.5} parent=0
    _
  %s6 = ssub.s32 1, %s4
  %s7 = scalar_select 0, %s6, %s4
  loop: start=0, step=1, limit=4
  $region2: #{example_model_forward.5} parent=0 // loop_pre_header
    _
  $region3: #{example_model_forward.5} parent=0 // loop_header
    %s9 = sphi 0, %s13
    %p10 = scmp.ge.s32.totalorder %s9, 4
    %s19 = sphi 0, %s21
    %s22 = sphi 0, %s19
    %s23 = sphi 0, %s22
    %s39 = sphi 0, %s23
    %s43 = sphi 0, %s43
    %s45 = sphi 0, %s43
    %s46 = sphi 0, %s45
    %s60 = sphi 0, %s46
    %s64 = sphi 0, %s64
    %s66 = sphi 0, %s64
    %s67 = sphi 0, %s66
    %s81 = sphi 0, %s67
    %s87 = sphi 0, %s89
    %s90 = sphi 0, %s87
    %s91 = sphi 0, %s90
    %s107 = sphi 0, %s91
  $region4: #{example_model_forward.5} parent=0 // loop_header_branch
    %12 = sbr.rel (%p10) target = $region8
  $region5: #{example_model_forward.5} parent=0 // loop_body
    %s14 = ssub.s32 %s9, 1
    %s15 = ssub.s32 %s9, 2
    %s16 = sadd.s32 %s9, 1
    %s17 = ssub.s32 %s9, %s16
    %p18 = scmp.eq.s32.totalorder %s17, 0
    %s20 = sadd.s32 %s19, 1
    %s21 = scalar_select %p18, %s19, %s20
    %p24 = pneg %p18
    %p25 = scmp.eq.s32.totalorder %s9, 1
    %p26 = por %p24, %p25
    %p27 = scmp.ne.s32.totalorder %s19, %s22
    %p28 = scmp.eq.s32.totalorder %s9, 0
    %p29 = por %p27, %p28
    %p30 = scmp.ne.s32.totalorder %s19, %s22
    %p31 = scmp.eq.s32.totalorder %s14, 1
    %p32 = por %p30, %p31
    %p33 = scmp.ne.s32.totalorder %s22, %s23
    %p34 = scmp.eq.s32.totalorder %s14, 0
    %p35 = por %p33, %p34
    %p36 = scmp.ne.s32.totalorder %s22, %s23
    %p37 = scmp.eq.s32.totalorder %s15, 1
    %p38 = por %p36, %p37
    %p40 = scmp.ne.s32.totalorder %s23, %s39
    %p41 = scmp.eq.s32.totalorder %s15, 0
    %p42 = por %p40, %p41
    %s44 = sadd.s32 %s43, 1
    %p47 = scmp.eq.s32.totalorder %s9, 1
    %p48 = scmp.ne.s32.totalorder %s43, %s45
    %p49 = scmp.eq.s32.totalorder %s9, 0
    %p50 = por %p48, %p49
    %p51 = scmp.ne.s32.totalorder %s43, %s45
    %p52 = scmp.eq.s32.totalorder %s14, 1
    %p53 = por %p51, %p52
    %p54 = scmp.ne.s32.totalorder %s45, %s46
    %p55 = scmp.eq.s32.totalorder %s14, 0
    %p56 = por %p54, %p55
    %p57 = scmp.ne.s32.totalorder %s45, %s46
    %p58 = scmp.eq.s32.totalorder %s15, 1
    %p59 = por %p57, %p58
    %p61 = scmp.ne.s32.totalorder %s46, %s60
    %p62 = scmp.eq.s32.totalorder %s15, 0
    %p63 = por %p61, %p62
    %s65 = sadd.s32 %s64, 1
    %p68 = scmp.eq.s32.totalorder %s9, 1
    %p69 = scmp.ne.s32.totalorder %s64, %s66
    %p70 = scmp.eq.s32.totalorder %s9, 0
    %p71 = por %p69, %p70
    %p72 = scmp.ne.s32.totalorder %s64, %s66
    %p73 = scmp.eq.s32.totalorder %s14, 1
    %p74 = por %p72, %p73
    %p75 = scmp.ne.s32.totalorder %s66, %s67
    %p76 = scmp.eq.s32.totalorder %s14, 0
    %p77 = por %p75, %p76
    %p78 = scmp.ne.s32.totalorder %s66, %s67
    %p79 = scmp.eq.s32.totalorder %s15, 1
    %p80 = por %p78, %p79
    %p82 = scmp.ne.s32.totalorder %s67, %s81
    %p83 = scmp.eq.s32.totalorder %s15, 0
    %p84 = por %p82, %p83
    %s85 = ssub.s32 %s9, %s16
    %p86 = scmp.eq.s32.totalorder %s85, 0
    %s88 = sadd.s32 %s87, 1
    %s89 = scalar_select %p86, %s87, %s88
    %p92 = pneg %p86
    %p93 = scmp.eq.s32.totalorder %s9, 1
    %p94 = por %p92, %p93
    %p95 = scmp.ne.s32.totalorder %s87, %s90
    %p96 = scmp.eq.s32.totalorder %s9, 0
    %p97 = por %p95, %p96
    %p98 = scmp.ne.s32.totalorder %s87, %s90
    %p99 = scmp.eq.s32.totalorder %s14, 1
    %p100 = por %p98, %p99
    %p101 = scmp.ne.s32.totalorder %s90, %s91
    %p102 = scmp.eq.s32.totalorder %s14, 0
    %p103 = por %p101, %p102
    %p104 = scmp.ne.s32.totalorder %s90, %s91
    %p105 = scmp.eq.s32.totalorder %s15, 1
    %p106 = por %p104, %p105
    %p108 = scmp.ne.s32.totalorder %s91, %s107
    %p109 = scmp.eq.s32.totalorder %s15, 0
    %p110 = por %p108, %p109
    %p111 = scmp.le.s32.totalorder 1, %s9
    %p112 = scmp.lt.s32.totalorder %s9, 3
    %p113 = pnand %p111, %p112
    %p114 = pneg %p113
    // Predicated region
    $region9: #{example_model_forward.5} parent=5 // pred_check
      _
    $region10: #{example_model_forward.5} parent=5 // pred_check_branch
      %116 = sbr.rel (%p113) target = $region12
    $region11: #{example_model_forward.5} parent=5 // pred_region
      %s117 = ssub.s32 %s9, 1
      // Predicated region
      $region13: #{example_model_forward.5} parent=11 // pred_check
        %p118 = pneg %p56
      $region14: #{example_model_forward.5} parent=11 // pred_check_branch
        %120 = sbr.rel (%p118) target = $region16
      $region15: #{example_model_forward.5} parent=11 // pred_region
        _
      $region16: #{example_model_forward.5} parent=11 // pred_fallthru
        _
      // Predicated region
      $region17: #{example_model_forward.5} parent=11 // pred_check
        %p121 = pneg %p77
      $region18: #{example_model_forward.5} parent=11 // pred_check_branch
        %123 = sbr.rel (%p121) target = $region20
      $region19: #{example_model_forward.5} parent=11 // pred_region
        _
      $region20: #{example_model_forward.5} parent=11 // pred_fallthru
        _
    $region12: #{example_model_forward.5} parent=5 // pred_fallthru
      _
    %p124 = scmp.lt.s32.totalorder %s9, 2
    // Predicated region
    $region21: #{example_model_forward.5} parent=5 // pred_check
      %p125 = pneg %p124
    $region22: #{example_model_forward.5} parent=5 // pred_check_branch
      %127 = sbr.rel (%p125) target = $region24
    $region23: #{example_model_forward.5} parent=5 // pred_region
      // Predicated region
      $region25: #{example_model_forward.5} parent=23 // pred_check
        %p128 = pneg %p29
      $region26: #{example_model_forward.5} parent=23 // pred_check_branch
        %130 = sbr.rel (%p128) target = $region28
      $region27: #{example_model_forward.5} parent=23 // pred_region
        %p131 = scmp.lt.s32.totalorder %s9, 1
        %s132 = scalar_select %p131, %s9, 1
        %s133 = smul.addr %s132, 14
        %s134 = smul.addr %s133, 4
        %s135 = scalar_lea.vmem %s0, %s134
      $region28: #{example_model_forward.5} parent=23 // pred_fallthru
        _
    $region24: #{example_model_forward.5} parent=5 // pred_fallthru
      _
    %p136 = scmp.le.s32.totalorder 1, %s9
    %p137 = scmp.lt.s32.totalorder %s9, 3
    %p138 = pnand %p136, %p137
    %p139 = pneg %p138
    // Predicated region
    $region29: #{example_model_forward.5} parent=5 // pred_check
      _
    $region30: #{example_model_forward.5} parent=5 // pred_check_branch
      %141 = sbr.rel (%p138) target = $region32
    $region31: #{example_model_forward.5} parent=5 // pred_region
      %s142 = ssub.s32 %s9, 1
      %p143 = scmp.lt.s32.totalorder %s14, 1
      %s144 = scalar_select %p143, %s14, 1
      %s145 = smul.addr %s144, 14
      %s146 = smul.addr %s145, 4
      %s147 = scalar_lea.vmem %s0, %s146
      %p148 = pneg %p35
      %p149 = pneg %p32
      %p150 = pneg %p56
      %p151 = pneg %p53
      %p152 = pneg %p77
      %p153 = pneg %p74
      %p154 = pneg %p103
      %p155 = pneg %p100
      %p156 = scmp.lt.s32.totalorder %s14, 1
      %s157 = scalar_select %p156, %s14, 1
      %s158 = smul.addr %s157, 10
      %s159 = smul.addr %s158, 4
      %s160 = scalar_lea.vmem %s3, %s159
      %p161 = scmp.lt.s32.totalorder %s14, 1
      %s162 = scalar_select %p161, %s14, 1
      %s163 = smul.addr %s162, 14
      %s164 = smul.addr %s163, 4
      %s165 = scalar_lea.vmem %s0, %s164
      %p166 = scmp.lt.s32.totalorder %s14, 1
      %s167 = scalar_select %p166, %s14, 1
      %s168 = smul.addr %s167, 10
      %s169 = smul.addr %s168, 4
      %s170 = scalar_lea.vmem %s3, %s169
      %v172 = vld [vmem:[%s165] sm:$0xf]
      %v173 = vld [vmem:[%s165 + $0x4] sm:$0xf]
      %v174 = vld [vmem:[%s165 + $0x8] sm:$0xf]
      %v175 = vld [vmem:[%s165 + $0xc] sm:$0xf]
      %v176 = vld [vmem:[%s165 + $0x10] sm:$0xf]
      %v177 = vld [vmem:[%s165 + $0x14] sm:$0xf]
      %v178 = vld [vmem:[%s165 + $0x18] sm:$0xf]
      %v179 = vld [vmem:[%s165 + $0x1c] sm:$0xf]
      %v180 = vld [vmem:[%s165 + $0x20] sm:$0xf]
      %v181 = vld [vmem:[%s165 + $0x24] sm:$0xf]
      %v182 = vld [vmem:[%s1] sm:$0xff]
      %v183 = vld [vmem:[%s1 + $0x8] sm:$0xff]
      %v184 = vld [vmem:[%s1 + $0x10] sm:$0xff]
      %v185 = vld [vmem:[%s1 + $0x18] sm:$0xff]
      %v186 = vld [vmem:[%s1 + $0x20] sm:$0xff]
      %v187 = vld [vmem:[%s1 + $0x28] sm:$0xff]
      %v188 = vld [vmem:[%s1 + $0x30] sm:$0xff]
      %v189 = vld [vmem:[%s1 + $0x38] sm:$0xff]
      %v190 = vld [vmem:[%s1 + $0x40] sm:$0xff]
      %v191 = vld [vmem:[%s1 + $0x48] sm:$0xff]
      %v192 = vld [vmem:[%s1 + $0x50] sm:$0xff]
      %v193 = vld [vmem:[%s1 + $0x58] sm:$0xff]
      %v194 = vld [vmem:[%s1 + $0x60] sm:$0xff]
      %v195 = vld [vmem:[%s1 + $0x68] sm:$0xff]
      %v196 = vld [vmem:[%s1 + $0x70] sm:$0xff]
      %v197 = vld [vmem:[%s1 + $0x78] sm:$0xff]
      %v198 = vld [vmem:[%s165 + $0x28] sm:$0x1]
      %s199 = scalar_lea.vmem %s1, 128
      %v200 = vld [vmem:[%s199] sm:$0xff]
      %v201 = vld [vmem:[%s199 + $0x8] sm:$0xff]
      %v202 = vld [vmem:[%s199 + $0x10] sm:$0xff]
      %v203 = vld [vmem:[%s199 + $0x18] sm:$0xff]
      %v204 = vld [vmem:[%s199 + $0x20] sm:$0xff]
      %v205 = vld [vmem:[%s199 + $0x28] sm:$0xff]
      %v206 = vld [vmem:[%s199 + $0x30] sm:$0xff]
      %v207 = vld [vmem:[%s199 + $0x38] sm:$0xff]
      %v208 = vld [vmem:[%s199 + $0x40] sm:$0xff]
      %v209 = vld [vmem:[%s199 + $0x48] sm:$0xff]
      %v210 = vld [vmem:[%s199 + $0x50] sm:$0xff]
      %v211 = vld [vmem:[%s199 + $0x58] sm:$0xff]
      %v212 = vld [vmem:[%s199 + $0x60] sm:$0xff]
      %v213 = vld [vmem:[%s199 + $0x68] sm:$0xff]
      %v214 = vld [vmem:[%s199 + $0x70] sm:$0xff]
      %v215 = vld [vmem:[%s199 + $0x78] sm:$0xff]
      %v227 = vunpack.c.l.b16 %v172
      %v228 = vunpack.c.l.b16 %v173
      %v229 = vunpack.c.l.b16 %v174
      %v230 = vunpack.c.l.b16 %v175
      %v231 = vunpack.c.l.b16 %v176
      %v232 = vunpack.c.l.b16 %v177
      %v233 = vunpack.c.l.b16 %v178
      %v234 = vunpack.c.l.b16 %v179
      %v235 = vunpack.c.l.b16 %v180
      %v236 = vunpack.c.l.b16 %v181
      %v237 = vunpack.c.l.b16 %v198
      %v238 = vpack.c.b16 %v228, %v227
      %v239 = vpack.c.b16 %v230, %v229
      %v240 = vpack.c.b16 %v232, %v231
      %v241 = vpack.c.b16 %v234, %v233
      %v242 = vpack.c.b16 %v236, %v235
      %v243 = vpack.c.b16 %v237, %v237
      %vm244 = vsmask.f32 7424
      %v246 = vshrl.u32 %v238, 16
      %v248 = vshll.u32 %v238, 16
      %v250 = vrot.slane %v248, 1
      %v251 = vor.u32 %v246, %v250
      %v253 = vshll.u32 %v239, 16
      %v255 = vrot.slane %v253, 1
      %v256 = vsel %vm244, %v251, %v255
      %v257 = vshrl.u32 %v239, 16
      %v259 = vor.u32 %v257, %v255
      %v261 = vshll.u32 %v240, 16
      %v263 = vrot.slane %v261, 1
      %v264 = vsel %vm244, %v259, %v263
      %v265 = vshrl.u32 %v240, 16
      %v267 = vor.u32 %v265, %v263
      %v269 = vshll.u32 %v241, 16
      %v271 = vrot.slane %v269, 1
      %v272 = vsel %vm244, %v267, %v271
      %v273 = vshrl.u32 %v241, 16
      %v275 = vor.u32 %v273, %v271
      %v277 = vshll.u32 %v242, 16
      %v279 = vrot.slane %v277, 1
      %v280 = vsel %vm244, %v275, %v279
      %v281 = vshrl.u32 %v242, 16
      %v283 = vor.u32 %v281, %v279
      %v285 = vshll.u32 %v243, 16
      %v287 = vrot.slane %v285, 1
      %v288 = vsel %vm244, %v283, %v287
      %v310 = vunpack.c.l.b16 %v200
      %v311 = vunpack.c.h.b16 %v200
      %v312 = vunpack.c.l.b16 %v201
      %v313 = vunpack.c.h.b16 %v201
      %v314 = vunpack.c.l.b16 %v202
      %v315 = vunpack.c.h.b16 %v202
      %v316 = vunpack.c.l.b16 %v203
      %v317 = vunpack.c.h.b16 %v203
      %v318 = vunpack.c.l.b16 %v204
      %v319 = vunpack.c.h.b16 %v204
      %v320 = vunpack.c.l.b16 %v205
      %v321 = vunpack.c.h.b16 %v205
      %v322 = vunpack.c.l.b16 %v206
      %v323 = vunpack.c.h.b16 %v206
      %v324 = vunpack.c.l.b16 %v207
      %v325 = vunpack.c.h.b16 %v207
      %v326 = vunpack.c.l.b16 %v208
      %v327 = vunpack.c.h.b16 %v208
      %v328 = vunpack.c.l.b16 %v209
      %v329 = vunpack.c.h.b16 %v209
      %v330 = vunpack.c.l.b16 %v210
      %v331 = vunpack.c.h.b16 %v210
      %v332 = vunpack.c.l.b16 %v211
      %v333 = vunpack.c.h.b16 %v211
      %v334 = vunpack.c.l.b16 %v212
      %v335 = vunpack.c.h.b16 %v212
      %v336 = vunpack.c.l.b16 %v213
      %v337 = vunpack.c.h.b16 %v213
      %v338 = vunpack.c.l.b16 %v214
      %v339 = vunpack.c.h.b16 %v214
      %v340 = vunpack.c.l.b16 %v215
      %v341 = vunpack.c.h.b16 %v215
      %v342 = vpack.c.b16 %v312, %v310
      %v343 = vpack.c.b16 %v313, %v311
      %v344 = vpack.c.b16 %v316, %v314
      %v345 = vpack.c.b16 %v317, %v315
      %v346 = vpack.c.b16 %v320, %v318
      %v347 = vpack.c.b16 %v321, %v319
      %v348 = vpack.c.b16 %v324, %v322
      %v349 = vpack.c.b16 %v325, %v323
      %v350 = vpack.c.b16 %v328, %v326
      %v351 = vpack.c.b16 %v329, %v327
      %v352 = vpack.c.b16 %v332, %v330
      %v353 = vpack.c.b16 %v333, %v331
      %v354 = vpack.c.b16 %v336, %v334
      %v355 = vpack.c.b16 %v337, %v335
      %v356 = vpack.c.b16 %v340, %v338
      %v357 = vpack.c.b16 %v341, %v339
      %374 = vmatprep.subr.bf16.mxu0 %v343
      %375 = vmatpush1.bf16.msra.mxu0 %v342
      %376 = vmatprep.subr.bf16.mxu0 %v345
      %377 = vmatpush1.bf16.msra.mxu0 %v344
      %378 = vmatprep.subr.bf16.mxu0 %v347
      %379 = vmatpush1.bf16.msra.mxu0 %v346
      %380 = vmatprep.subr.bf16.mxu0 %v349
      %381 = vmatpush1.bf16.msra.mxu0 %v348
      %382 = vmatprep.subr.bf16.mxu0 %v351
      %383 = vmatpush1.bf16.msra.mxu0 %v350
      %384 = vmatprep.subr.bf16.mxu0 %v353
      %385 = vmatpush1.bf16.msra.mxu0 %v352
      %386 = vmatprep.subr.bf16.mxu0 %v355
      %387 = vmatpush1.bf16.msra.mxu0 %v354
      %388 = vmatprep.subr.bf16.mxu0 %v357
      %389 = vmatpush1.bf16.msra.mxu0 %v356
      %390 = vmatprep.subr.bf16.mxu0 0
      %391 = vmatpush1.bf16.msra.mxu0 0
      %392 = vmatprep.subr.bf16.mxu0 0
      %393 = vmatpush1.bf16.msra.mxu0 0
      %394 = vmatprep.subr.bf16.mxu0 0
      %395 = vmatpush1.bf16.msra.mxu0 0
      %396 = vmatprep.subr.bf16.mxu0 0
      %397 = vmatpush1.bf16.msra.mxu0 0
      %398 = vmatprep.subr.bf16.mxu0 0
      %399 = vmatpush1.bf16.msra.mxu0 0
      %400 = vmatprep.subr.bf16.mxu0 0
      %401 = vmatpush1.bf16.msra.mxu0 0
      %402 = vmatprep.subr.bf16.mxu0 0
      %403 = vmatpush1.bf16.msra.mxu0 0
      %404 = vmatprep.subr.bf16.mxu0 0
      %405 = vmatpush1.bf16.msra.mxu0 0
      %406 = vmatprep.mubr.bf16.mxu0 0
      %407 = vmatmul.mubr.bf16.gmra.mrb[0].mxu0 %v256
      %v408 = vpop.f32.mrb[0].mxu0
      %v409 = vadd.f32 0.0, %v408
      %v410 = vpop.f32.mrb[0].mxu0
      %v411 = vadd.f32 0.0, %v410
      %v412 = vpop.f32.mrb[0].mxu0
      %v413 = vadd.f32 0.0, %v412
      %v414 = vpop.f32.mrb[0].mxu0
      %v415 = vadd.f32 0.0, %v414
      %416 = vmatprep.mubr.bf16.mxu0 0
      %417 = vmatmul.mubr.bf16.gmra.mrb[0].mxu0 %v264
      %v418 = vpop.f32.mrb[0].mxu0
      %v419 = vadd.f32 0.0, %v418
      %v420 = vpop.f32.mrb[0].mxu0
      %v421 = vadd.f32 0.0, %v420
      %v422 = vpop.f32.mrb[0].mxu0
      %v423 = vadd.f32 0.0, %v422
      %v424 = vpop.f32.mrb[0].mxu0
      %v425 = vadd.f32 0.0, %v424
      %426 = vmatprep.mubr.bf16.mxu0 0
      %427 = vmatmul.mubr.bf16.gmra.mrb[0].mxu0 %v272
      %v428 = vpop.f32.mrb[0].mxu0
      %v429 = vadd.f32 0.0, %v428
      %v430 = vpop.f32.mrb[0].mxu0
      %v431 = vadd.f32 0.0, %v430
      %v432 = vpop.f32.mrb[0].mxu0
      %v433 = vadd.f32 0.0, %v432
      %v434 = vpop.f32.mrb[0].mxu0
      %v435 = vadd.f32 0.0, %v434
      %436 = vmatprep.mubr.bf16.mxu0 0
      %437 = vmatmul.mubr.bf16.gmra.mrb[0].mxu0 %v280
      %v438 = vpop.f32.mrb[0].mxu0
      %v439 = vadd.f32 0.0, %v438
      %v440 = vpop.f32.mrb[0].mxu0
      %v441 = vadd.f32 0.0, %v440
      %v442 = vpop.f32.mrb[0].mxu0
      %v443 = vadd.f32 0.0, %v442
      %v444 = vpop.f32.mrb[0].mxu0
      %v445 = vadd.f32 0.0, %v444
      %446 = vmatprep.mubr.bf16.mxu0 0
      %447 = vmatmul.mubr.bf16.gmra.mrb[0].mxu0 %v288
      %v448 = vpop.f32.mrb[0].mxu0
      %v449 = vadd.f32 0.0, %v448
      %v450 = vpop.f32.mrb[0].mxu0
      %v451 = vadd.f32 0.0, %v450
      %v452 = vpop.f32.mrb[0].mxu0
      %v453 = vadd.f32 0.0, %v452
      %v454 = vpop.f32.mrb[0].mxu0
      %v455 = vadd.f32 0.0, %v454
      %456 = vdwg.mxu0
      %v478 = vunpack.c.l.b16 %v182
      %v479 = vunpack.c.h.b16 %v182
      %v480 = vunpack.c.l.b16 %v183
      %v481 = vunpack.c.h.b16 %v183
      %v482 = vunpack.c.l.b16 %v184
      %v483 = vunpack.c.h.b16 %v184
      %v484 = vunpack.c.l.b16 %v185
      %v485 = vunpack.c.h.b16 %v185
      %v486 = vunpack.c.l.b16 %v186
      %v487 = vunpack.c.h.b16 %v186
      %v488 = vunpack.c.l.b16 %v187
      %v489 = vunpack.c.h.b16 %v187
      %v490 = vunpack.c.l.b16 %v188
      %v491 = vunpack.c.h.b16 %v188
      %v492 = vunpack.c.l.b16 %v189
      %v493 = vunpack.c.h.b16 %v189
      %v494 = vunpack.c.l.b16 %v190
      %v495 = vunpack.c.h.b16 %v190
      %v496 = vunpack.c.l.b16 %v191
      %v497 = vunpack.c.h.b16 %v191
      %v498 = vunpack.c.l.b16 %v192
      %v499 = vunpack.c.h.b16 %v192
      %v500 = vunpack.c.l.b16 %v193
      %v501 = vunpack.c.h.b16 %v193
      %v502 = vunpack.c.l.b16 %v194
      %v503 = vunpack.c.h.b16 %v194
      %v504 = vunpack.c.l.b16 %v195
      %v505 = vunpack.c.h.b16 %v195
      %v506 = vunpack.c.l.b16 %v196
      %v507 = vunpack.c.h.b16 %v196
      %v508 = vunpack.c.l.b16 %v197
      %v509 = vunpack.c.h.b16 %v197
      %v510 = vpack.c.b16 %v480, %v478
      %v511 = vpack.c.b16 %v481, %v479
      %v512 = vpack.c.b16 %v484, %v482
      %v513 = vpack.c.b16 %v485, %v483
      %v514 = vpack.c.b16 %v488, %v486
      %v515 = vpack.c.b16 %v489, %v487
      %v516 = vpack.c.b16 %v492, %v490
      %v517 = vpack.c.b16 %v493, %v491
      %v518 = vpack.c.b16 %v496, %v494
      %v519 = vpack.c.b16 %v497, %v495
      %v520 = vpack.c.b16 %v500, %v498
      %v521 = vpack.c.b16 %v501, %v499
      %v522 = vpack.c.b16 %v504, %v502
      %v523 = vpack.c.b16 %v505, %v503
      %v524 = vpack.c.b16 %v508, %v506
      %v525 = vpack.c.b16 %v509, %v507
      %542 = vmatprep.subr.bf16.mxu0 %v511
      %543 = vmatpush1.bf16.msra.mxu0 %v510
      %544 = vmatprep.subr.bf16.mxu0 %v513
      %545 = vmatpush1.bf16.msra.mxu0 %v512
      %546 = vmatprep.subr.bf16.mxu0 %v515
      %547 = vmatpush1.bf16.msra.mxu0 %v514
      %548 = vmatprep.subr.bf16.mxu0 %v517
      %549 = vmatpush1.bf16.msra.mxu0 %v516
      %550 = vmatprep.subr.bf16.mxu0 %v519
      %551 = vmatpush1.bf16.msra.mxu0 %v518
      %552 = vmatprep.subr.bf16.mxu0 %v521
      %553 = vmatpush1.bf16.msra.mxu0 %v520
      %554 = vmatprep.subr.bf16.mxu0 %v523
      %555 = vmatpush1.bf16.msra.mxu0 %v522
      %556 = vmatprep.subr.bf16.mxu0 %v525
      %557 = vmatpush1.bf16.msra.mxu0 %v524
      %558 = vmatprep.subr.bf16.mxu0 0
      %559 = vmatpush1.bf16.msra.mxu0 0
      %560 = vmatprep.subr.bf16.mxu0 0
      %561 = vmatpush1.bf16.msra.mxu0 0
      %562 = vmatprep.subr.bf16.mxu0 0
      %563 = vmatpush1.bf16.msra.mxu0 0
      %564 = vmatprep.subr.bf16.mxu0 0
      %565 = vmatpush1.bf16.msra.mxu0 0
      %566 = vmatprep.subr.bf16.mxu0 0
      %567 = vmatpush1.bf16.msra.mxu0 0
      %568 = vmatprep.subr.bf16.mxu0 0
      %569 = vmatpush1.bf16.msra.mxu0 0
      %570 = vmatprep.subr.bf16.mxu0 0
      %571 = vmatpush1.bf16.msra.mxu0 0
      %572 = vmatprep.subr.bf16.mxu0 0
      %573 = vmatpush1.bf16.msra.mxu0 0
      %574 = vmatprep.mubr.bf16.mxu0 0
      %575 = vmatmul.mubr.bf16.gmra.mrb[0].mxu0 %v238
      %v576 = vpop.f32.mrb[0].mxu0
      %v577 = vadd.f32 %v409, %v576
      %v578 = vpop.f32.mrb[0].mxu0
      %v579 = vadd.f32 %v411, %v578
      %v580 = vpop.f32.mrb[0].mxu0
      %v581 = vadd.f32 %v413, %v580
      %v582 = vpop.f32.mrb[0].mxu0
      %v583 = vadd.f32 %v415, %v582
      %584 = vmatprep.mubr.bf16.mxu0 0
      %585 = vmatmul.mubr.bf16.gmra.mrb[0].mxu0 %v239
      %v586 = vpop.f32.mrb[0].mxu0
      %v587 = vadd.f32 %v419, %v586
      %v588 = vpop.f32.mrb[0].mxu0
      %v589 = vadd.f32 %v421, %v588
      %v590 = vpop.f32.mrb[0].mxu0
      %v591 = vadd.f32 %v423, %v590
      %v592 = vpop.f32.mrb[0].mxu0
      %v593 = vadd.f32 %v425, %v592
      %594 = vmatprep.mubr.bf16.mxu0 0
      %595 = vmatmul.mubr.bf16.gmra.mrb[0].mxu0 %v240
      %v596 = vpop.f32.mrb[0].mxu0
      %v597 = vadd.f32 %v429, %v596
      %v598 = vpop.f32.mrb[0].mxu0
      %v599 = vadd.f32 %v431, %v598
      %v600 = vpop.f32.mrb[0].mxu0
      %v601 = vadd.f32 %v433, %v600
      %v602 = vpop.f32.mrb[0].mxu0
      %v603 = vadd.f32 %v435, %v602
      %604 = vmatprep.mubr.bf16.mxu0 0
      %605 = vmatmul.mubr.bf16.gmra.mrb[0].mxu0 %v241
      %v606 = vpop.f32.mrb[0].mxu0
      %v607 = vadd.f32 %v439, %v606
      %v608 = vpop.f32.mrb[0].mxu0
      %v609 = vadd.f32 %v441, %v608
      %v610 = vpop.f32.mrb[0].mxu0
      %v611 = vadd.f32 %v443, %v610
      %v612 = vpop.f32.mrb[0].mxu0
      %v613 = vadd.f32 %v445, %v612
      %614 = vmatprep.mubr.bf16.mxu0 0
      %615 = vmatmul.mubr.bf16.gmra.mrb[0].mxu0 %v242
      %v616 = vpop.f32.mrb[0].mxu0
      %v617 = vadd.f32 %v449, %v616
      %v618 = vpop.f32.mrb[0].mxu0
      %v619 = vadd.f32 %v451, %v618
      %v620 = vpop.f32.mrb[0].mxu0
      %v621 = vadd.f32 %v453, %v620
      %v622 = vpop.f32.mrb[0].mxu0
      %v623 = vadd.f32 %v455, %v622
      %624 = vdwg.mxu0
      %v625 = vld [vmem:[%s165] sm:$0xe]
      %s626 = scalar_lea.vmem %s1, 256
      %v627 = vld [vmem:[%s626] sm:$0xff]
      %v628 = vld [vmem:[%s626 + $0x8] sm:$0xff]
      %v629 = vld [vmem:[%s626 + $0x10] sm:$0xff]
      %v630 = vld [vmem:[%s626 + $0x18] sm:$0xff]
      %v631 = vld [vmem:[%s626 + $0x20] sm:$0xff]
      %v632 = vld [vmem:[%s626 + $0x28] sm:$0xff]
      %v633 = vld [vmem:[%s626 + $0x30] sm:$0xff]
      %v634 = vld [vmem:[%s626 + $0x38] sm:$0xff]
      %v635 = vld [vmem:[%s626 + $0x40] sm:$0xff]
      %v636 = vld [vmem:[%s626 + $0x48] sm:$0xff]
      %v637 = vld [vmem:[%s626 + $0x50] sm:$0xff]
      %v638 = vld [vmem:[%s626 + $0x58] sm:$0xff]
      %v639 = vld [vmem:[%s626 + $0x60] sm:$0xff]
      %v640 = vld [vmem:[%s626 + $0x68] sm:$0xff]
      %v641 = vld [vmem:[%s626 + $0x70] sm:$0xff]
      %v642 = vld [vmem:[%s626 + $0x78] sm:$0xff]
      %v644 = vunpack.c.l.b16 %v625
      %v645 = vpack.c.b16 %v228, %v644
      %vm646 = vcmask 1046528
      %v647 = vrot.slane %v645, 1
      %v648 = vrot.slane %v239, 1
      %v649 = vsel %vm646, %v647, %v648
      %v650 = vrot.slane %v240, 1
      %v651 = vsel %vm646, %v648, %v650
      %v652 = vrot.slane %v241, 1
      %v653 = vsel %vm646, %v650, %v652
      %v654 = vrot.slane %v242, 1
      %v655 = vsel %vm646, %v652, %v654
      %v656 = vrot.slane %v243, 1
      %v657 = vsel %vm646, %v654, %v656
      %v679 = vunpack.c.l.b16 %v627
      %v680 = vunpack.c.h.b16 %v627
      %v681 = vunpack.c.l.b16 %v628
      %v682 = vunpack.c.h.b16 %v628
      %v683 = vunpack.c.l.b16 %v629
      %v684 = vunpack.c.h.b16 %v629
      %v685 = vunpack.c.l.b16 %v630
      %v686 = vunpack.c.h.b16 %v630
      %v687 = vunpack.c.l.b16 %v631
      %v688 = vunpack.c.h.b16 %v631
      %v689 = vunpack.c.l.b16 %v632
      %v690 = vunpack.c.h.b16 %v632
      %v691 = vunpack.c.l.b16 %v633
      %v692 = vunpack.c.h.b16 %v633
      %v693 = vunpack.c.l.b16 %v634
      %v694 = vunpack.c.h.b16 %v634
      %v695 = vunpack.c.l.b16 %v635
      %v696 = vunpack.c.h.b16 %v635
      %v697 = vunpack.c.l.b16 %v636
      %v698 = vunpack.c.h.b16 %v636
      %v699 = vunpack.c.l.b16 %v637
      %v700 = vunpack.c.h.b16 %v637
      %v701 = vunpack.c.l.b16 %v638
      %v702 = vunpack.c.h.b16 %v638
      %v703 = vunpack.c.l.b16 %v639
      %v704 = vunpack.c.h.b16 %v639
      %v705 = vunpack.c.l.b16 %v640
      %v706 = vunpack.c.h.b16 %v640
      %v707 = vunpack.c.l.b16 %v641
      %v708 = vunpack.c.h.b16 %v641
      %v709 = vunpack.c.l.b16 %v642
      %v710 = vunpack.c.h.b16 %v642
      %v711 = vpack.c.b16 %v681, %v679
      %v712 = vpack.c.b16 %v682, %v680
      %v713 = vpack.c.b16 %v685, %v683
      %v714 = vpack.c.b16 %v686, %v684
      %v715 = vpack.c.b16 %v689, %v687
      %v716 = vpack.c.b16 %v690, %v688
      %v717 = vpack.c.b16 %v693, %v691
      %v718 = vpack.c.b16 %v694, %v692
      %v719 = vpack.c.b16 %v697, %v695
      %v720 = vpack.c.b16 %v698, %v696
      %v721 = vpack.c.b16 %v701, %v699
      %v722 = vpack.c.b16 %v702, %v700
      %v723 = vpack.c.b16 %v705, %v703
      %v724 = vpack.c.b16 %v706, %v704
      %v725 = vpack.c.b16 %v709, %v707
      %v726 = vpack.c.b16 %v710, %v708
      %743 = vmatprep.subr.bf16.mxu0 %v712
      %744 = vmatpush1.bf16.msra.mxu0 %v711
      %745 = vmatprep.subr.bf16.mxu0 %v714
      %746 = vmatpush1.bf16.msra.mxu0 %v713
      %747 = vmatprep.subr.bf16.mxu0 %v716
      %748 = vmatpush1.bf16.msra.mxu0 %v715
      %749 = vmatprep.subr.bf16.mxu0 %v718
      %750 = vmatpush1.bf16.msra.mxu0 %v717
      %751 = vmatprep.subr.bf16.mxu0 %v720
      %752 = vmatpush1.bf16.msra.mxu0 %v719
      %753 = vmatprep.subr.bf16.mxu0 %v722
      %754 = vmatpush1.bf16.msra.mxu0 %v721
      %755 = vmatprep.subr.bf16.mxu0 %v724
      %756 = vmatpush1.bf16.msra.mxu0 %v723
      %757 = vmatprep.subr.bf16.mxu0 %v726
      %758 = vmatpush1.bf16.msra.mxu0 %v725
      %759 = vmatprep.subr.bf16.mxu0 0
      %760 = vmatpush1.bf16.msra.mxu0 0
      %761 = vmatprep.subr.bf16.mxu0 0
      %762 = vmatpush1.bf16.msra.mxu0 0
      %763 = vmatprep.subr.bf16.mxu0 0
      %764 = vmatpush1.bf16.msra.mxu0 0
      %765 = vmatprep.subr.bf16.mxu0 0
      %766 = vmatpush1.bf16.msra.mxu0 0
      %767 = vmatprep.subr.bf16.mxu0 0
      %768 = vmatpush1.bf16.msra.mxu0 0
      %769 = vmatprep.subr.bf16.mxu0 0
      %770 = vmatpush1.bf16.msra.mxu0 0
      %771 = vmatprep.subr.bf16.mxu0 0
      %772 = vmatpush1.bf16.msra.mxu0 0
      %773 = vmatprep.subr.bf16.mxu0 0
      %774 = vmatpush1.bf16.msra.mxu0 0
      %775 = vmatprep.mubr.bf16.mxu0 0
      %776 = vmatmul.mubr.bf16.gmra.mrb[0].mxu0 %v649
      %v777 = vpop.f32.mrb[0].mxu0
      %v778 = vadd.f32 0.0, %v777
      %v779 = vpop.f32.mrb[0].mxu0
      %v780 = vadd.f32 0.0, %v779
      %v781 = vpop.f32.mrb[0].mxu0
      %v782 = vadd.f32 0.0, %v781
      %v783 = vpop.f32.mrb[0].mxu0
      %v784 = vadd.f32 0.0, %v783
      %785 = vmatprep.mubr.bf16.mxu0 0
      %786 = vmatmul.mubr.bf16.gmra.mrb[0].mxu0 %v651
      %v787 = vpop.f32.mrb[0].mxu0
      %v788 = vadd.f32 0.0, %v787
      %v789 = vpop.f32.mrb[0].mxu0
      %v790 = vadd.f32 0.0, %v789
      %v791 = vpop.f32.mrb[0].mxu0
      %v792 = vadd.f32 0.0, %v791
      %v793 = vpop.f32.mrb[0].mxu0
      %v794 = vadd.f32 0.0, %v793
      %795 = vmatprep.mubr.bf16.mxu0 0
      %796 = vmatmul.mubr.bf16.gmra.mrb[0].mxu0 %v653
      %v797 = vpop.f32.mrb[0].mxu0
      %v798 = vadd.f32 0.0, %v797
      %v799 = vpop.f32.mrb[0].mxu0
      %v800 = vadd.f32 0.0, %v799
      %v801 = vpop.f32.mrb[0].mxu0
      %v802 = vadd.f32 0.0, %v801
      %v803 = vpop.f32.mrb[0].mxu0
      %v804 = vadd.f32 0.0, %v803
      %805 = vmatprep.mubr.bf16.mxu0 0
      %806 = vmatmul.mubr.bf16.gmra.mrb[0].mxu0 %v655
      %v807 = vpop.f32.mrb[0].mxu0
      %v808 = vadd.f32 0.0, %v807
      %v809 = vpop.f32.mrb[0].mxu0
      %v810 = vadd.f32 0.0, %v809
      %v811 = vpop.f32.mrb[0].mxu0
      %v812 = vadd.f32 0.0, %v811
      %v813 = vpop.f32.mrb[0].mxu0
      %v814 = vadd.f32 0.0, %v813
      %815 = vmatprep.mubr.bf16.mxu0 0
      %816 = vmatmul.mubr.bf16.gmra.mrb[0].mxu0 %v657
      %v817 = vpop.f32.mrb[0].mxu0
      %v818 = vadd.f32 0.0, %v817
      %v819 = vpop.f32.mrb[0].mxu0
      %v820 = vadd.f32 0.0, %v819
      %v821 = vpop.f32.mrb[0].mxu0
      %v822 = vadd.f32 0.0, %v821
      %v823 = vpop.f32.mrb[0].mxu0
      %v824 = vadd.f32 0.0, %v823
      %825 = vdwg.mxu0
      %v826 = vadd.f32 %v577, %v778
      %v827 = vadd.f32 %v579, %v780
      %v828 = vadd.f32 %v581, %v782
      %v829 = vadd.f32 %v583, %v784
      %v830 = vadd.f32 %v587, %v788
      %v831 = vadd.f32 %v589, %v790
      %v832 = vadd.f32 %v591, %v792
      %v833 = vadd.f32 %v593, %v794
      %v834 = vadd.f32 %v597, %v798
      %v835 = vadd.f32 %v599, %v800
      %v836 = vadd.f32 %v601, %v802
      %v837 = vadd.f32 %v603, %v804
      %v838 = vadd.f32 %v607, %v808
      %v839 = vadd.f32 %v609, %v810
      %v840 = vadd.f32 %v611, %v812
      %v841 = vadd.f32 %v613, %v814
      %v842 = vadd.f32 %v617, %v818
      %v843 = vadd.f32 %v619, %v820
      %v844 = vadd.f32 %v621, %v822
      %v845 = vadd.f32 %v623, %v824
      %v846 = vld [vmem:[%s165 + $0x4] sm:$0xe]
      %v847 = vld [vmem:[%s165 + $0x8] sm:$0xf]
      %v848 = vld [vmem:[%s165 + $0xc] sm:$0xf]
      %v849 = vld [vmem:[%s165 + $0x10] sm:$0xf]
      %v850 = vld [vmem:[%s165 + $0x14] sm:$0xf]
      %v851 = vld [vmem:[%s165 + $0x18] sm:$0xf]
      %v852 = vld [vmem:[%s165 + $0x1c] sm:$0xf]
      %v853 = vld [vmem:[%s165 + $0x20] sm:$0xf]
      %v854 = vld [vmem:[%s165 + $0x24] sm:$0xf]
      %v855 = vld [vmem:[%s165 + $0x28] sm:$0xf]
      %v856 = vld [vmem:[%s165 + $0x2c] sm:$0x1]
      %s857 = scalar_lea.vmem %s1, 384
      %v858 = vld [vmem:[%s857] sm:$0xff]
      %v859 = vld [vmem:[%s857 + $0x8] sm:$0xff]
      %v860 = vld [vmem:[%s857 + $0x10] sm:$0xff]
      %v861 = vld [vmem:[%s857 + $0x18] sm:$0xff]
      %v862 = vld [vmem:[%s857 + $0x20] sm:$0xff]
      %v863 = vld [vmem:[%s857 + $0x28] sm:$0xff]
      %v864 = vld [vmem:[%s857 + $0x30] sm:$0xff]
      %v865 = vld [vmem:[%s857 + $0x38] sm:$0xff]
      %v866 = vld [vmem:[%s857 + $0x40] sm:$0xff]
      %v867 = vld [vmem:[%s857 + $0x48] sm:$0xff]
      %v868 = vld [vmem:[%s857 + $0x50] sm:$0xff]
      %v869 = vld [vmem:[%s857 + $0x58] sm:$0xff]
      %v870 = vld [vmem:[%s857 + $0x60] sm:$0xff]
      %v871 = vld [vmem:[%s857 + $0x68] sm:$0xff]
      %v872 = vld [vmem:[%s857 + $0x70] sm:$0xff]
      %v873 = vld [vmem:[%s857 + $0x78] sm:$0xff]
      %v885 = vunpack.c.l.b16 %v846
      %v886 = vunpack.c.l.b16 %v847
      %v887 = vunpack.c.l.b16 %v848
      %v888 = vunpack.c.l.b16 %v849
      %v889 = vunpack.c.l.b16 %v850
      %v890 = vunpack.c.l.b16 %v851
      %v891 = vunpack.c.l.b16 %v852
      %v892 = vunpack.c.l.b16 %v853
      %v893 = vunpack.c.l.b16 %v854
      %v894 = vunpack.c.l.b16 %v855
      %v895 = vunpack.c.l.b16 %v856
      %v896 = vpack.c.b16 %v886, %v885
      %v897 = vpack.c.b16 %v888, %v887
      %v898 = vpack.c.b16 %v890, %v889
      %v899 = vpack.c.b16 %v892, %v891
      %v900 = vpack.c.b16 %v894, %v893
      %v901 = vpack.c.b16 %v895, %v895
      %v902 = vrot.slane %v896, 1
      %v903 = vrot.slane %v897, 1
      %v904 = vsel %vm646, %v902, %v903
      %v905 = vrot.slane %v898, 1
      %v906 = vsel %vm646, %v903, %v905
      %v907 = vrot.slane %v899, 1
      %v908 = vsel %vm646, %v905, %v907
      %v909 = vrot.slane %v900, 1
      %v910 = vsel %vm646, %v907, %v909
      %v911 = vrot.slane %v901, 1
      %v912 = vsel %vm646, %v909, %v911
      %v934 = vunpack.c.l.b16 %v858
      %v935 = vunpack.c.h.b16 %v858
      %v936 = vunpack.c.l.b16 %v859
      %v937 = vunpack.c.h.b16 %v859
      %v938 = vunpack.c.l.b16 %v860
      %v939 = vunpack.c.h.b16 %v860
      %v940 = vunpack.c.l.b16 %v861
      %v941 = vunpack.c.h.b16 %v861
      %v942 = vunpack.c.l.b16 %v862
      %v943 = vunpack.c.h.b16 %v862
      %v944 = vunpack.c.l.b16 %v863
      %v945 = vunpack.c.h.b16 %v863
      %v946 = vunpack.c.l.b16 %v864
      %v947 = vunpack.c.h.b16 %v864
      %v948 = vunpack.c.l.b16 %v865
      %v949 = vunpack.c.h.b16 %v865
      %v950 = vunpack.c.l.b16 %v866
      %v951 = vunpack.c.h.b16 %v866
      %v952 = vunpack.c.l.b16 %v867
      %v953 = vunpack.c.h.b16 %v867
      %v954 = vunpack.c.l.b16 %v868
      %v955 = vunpack.c.h.b16 %v868
      %v956 = vunpack.c.l.b16 %v869
      %v957 = vunpack.c.h.b16 %v869
      %v958 = vunpack.c.l.b16 %v870
      %v959 = vunpack.c.h.b16 %v870
      %v960 = vunpack.c.l.b16 %v871
      %v961 = vunpack.c.h.b16 %v871
      %v962 = vunpack.c.l.b16 %v872
      %v963 = vunpack.c.h.b16 %v872
      %v964 = vunpack.c.l.b16 %v873
      %v965 = vunpack.c.h.b16 %v873
      %v966 = vpack.c.b16 %v936, %v934
      %v967 = vpack.c.b16 %v937, %v935
      %v968 = vpack.c.b16 %v940, %v938
      %v969 = vpack.c.b16 %v941, %v939
      %v970 = vpack.c.b16 %v944, %v942
      %v971 = vpack.c.b16 %v945, %v943
      %v972 = vpack.c.b16 %v948, %v946
      %v973 = vpack.c.b16 %v949, %v947
      %v974 = vpack.c.b16 %v952, %v950
      %v975 = vpack.c.b16 %v953, %v951
      %v976 = vpack.c.b16 %v956, %v954
      %v977 = vpack.c.b16 %v957, %v955
      %v978 = vpack.c.b16 %v960, %v958
      %v979 = vpack.c.b16 %v961, %v959
      %v980 = vpack.c.b16 %v964, %v962
      %v981 = vpack.c.b16 %v965, %v963
      %998 = vmatprep.subr.bf16.mxu0 %v967
      %999 = vmatpush1.bf16.msra.mxu0 %v966
      %1000 = vmatprep.subr.bf16.mxu0 %v969
      %1001 = vmatpush1.bf16.msra.mxu0 %v968
      %1002 = vmatprep.subr.bf16.mxu0 %v971
      %1003 = vmatpush1.bf16.msra.mxu0 %v970
      %1004 = vmatprep.subr.bf16.mxu0 %v973
      %1005 = vmatpush1.bf16.msra.mxu0 %v972
      %1006 = vmatprep.subr.bf16.mxu0 %v975
      %1007 = vmatpush1.bf16.msra.mxu0 %v974
      %1008 = vmatprep.subr.bf16.mxu0 %v977
      %1009 = vmatpush1.bf16.msra.mxu0 %v976
      %1010 = vmatprep.subr.bf16.mxu0 %v979
      %1011 = vmatpush1.bf16.msra.mxu0 %v978
      %1012 = vmatprep.subr.bf16.mxu0 %v981
      %1013 = vmatpush1.bf16.msra.mxu0 %v980
      %1014 = vmatprep.subr.bf16.mxu0 0
      %1015 = vmatpush1.bf16.msra.mxu0 0
      %1016 = vmatprep.subr.bf16.mxu0 0
      %1017 = vmatpush1.bf16.msra.mxu0 0
      %1018 = vmatprep.subr.bf16.mxu0 0
      %1019 = vmatpush1.bf16.msra.mxu0 0
      %1020 = vmatprep.subr.bf16.mxu0 0
      %1021 = vmatpush1.bf16.msra.mxu0 0
      %1022 = vmatprep.subr.bf16.mxu0 0
      %1023 = vmatpush1.bf16.msra.mxu0 0
      %1024 = vmatprep.subr.bf16.mxu0 0
      %1025 = vmatpush1.bf16.msra.mxu0 0
      %1026 = vmatprep.subr.bf16.mxu0 0
      %1027 = vmatpush1.bf16.msra.mxu0 0
      %1028 = vmatprep.subr.bf16.mxu0 0
      %1029 = vmatpush1.bf16.msra.mxu0 0
      %1030 = vmatprep.mubr.bf16.mxu0 0
      %1031 = vmatmul.mubr.bf16.gmra.mrb[0].mxu0 %v904
      %v1032 = vpop.f32.mrb[0].mxu0
      %v1033 = vadd.f32 0.0, %v1032
      %v1034 = vpop.f32.mrb[0].mxu0
      %v1035 = vadd.f32 0.0, %v1034
      %v1036 = vpop.f32.mrb[0].mxu0
      %v1037 = vadd.f32 0.0, %v1036
      %v1038 = vpop.f32.mrb[0].mxu0
      %v1039 = vadd.f32 0.0, %v1038
      %1040 = vmatprep.mubr.bf16.mxu0 0
      %1041 = vmatmul.mubr.bf16.gmra.mrb[0].mxu0 %v906
      %v1042 = vpop.f32.mrb[0].mxu0
      %v1043 = vadd.f32 0.0, %v1042
      %v1044 = vpop.f32.mrb[0].mxu0
      %v1045 = vadd.f32 0.0, %v1044
      %v1046 = vpop.f32.mrb[0].mxu0
      %v1047 = vadd.f32 0.0, %v1046
      %v1048 = vpop.f32.mrb[0].mxu0
      %v1049 = vadd.f32 0.0, %v1048
      %1050 = vmatprep.mubr.bf16.mxu0 0
      %1051 = vmatmul.mubr.bf16.gmra.mrb[0].mxu0 %v908
      %v1052 = vpop.f32.mrb[0].mxu0
      %v1053 = vadd.f32 0.0, %v1052
      %v1054 = vpop.f32.mrb[0].mxu0
      %v1055 = vadd.f32 0.0, %v1054
      %v1056 = vpop.f32.mrb[0].mxu0
      %v1057 = vadd.f32 0.0, %v1056
      %v1058 = vpop.f32.mrb[0].mxu0
      %v1059 = vadd.f32 0.0, %v1058
      %1060 = vmatprep.mubr.bf16.mxu0 0
      %1061 = vmatmul.mubr.bf16.gmra.mrb[0].mxu0 %v910
      %v1062 = vpop.f32.mrb[0].mxu0
      %v1063 = vadd.f32 0.0, %v1062
      %v1064 = vpop.f32.mrb[0].mxu0
      %v1065 = vadd.f32 0.0, %v1064
      %v1066 = vpop.f32.mrb[0].mxu0
      %v1067 = vadd.f32 0.0, %v1066
      %v1068 = vpop.f32.mrb[0].mxu0
      %v1069 = vadd.f32 0.0, %v1068
      %1070 = vmatprep.mubr.bf16.mxu0 0
      %1071 = vmatmul.mubr.bf16.gmra.mrb[0].mxu0 %v912
      %v1072 = vpop.f32.mrb[0].mxu0
      %v1073 = vadd.f32 0.0, %v1072
      %v1074 = vpop.f32.mrb[0].mxu0
      %v1075 = vadd.f32 0.0, %v1074
      %v1076 = vpop.f32.mrb[0].mxu0
      %v1077 = vadd.f32 0.0, %v1076
      %v1078 = vpop.f32.mrb[0].mxu0
      %v1079 = vadd.f32 0.0, %v1078
      %1080 = vdwg.mxu0
      %v1081 = vadd.f32 %v826, %v1033
      %v1082 = vadd.f32 %v827, %v1035
      %v1083 = vadd.f32 %v828, %v1037
      %v1084 = vadd.f32 %v829, %v1039
      %v1085 = vadd.f32 %v830, %v1043
      %v1086 = vadd.f32 %v831, %v1045
      %v1087 = vadd.f32 %v832, %v1047
      %v1088 = vadd.f32 %v833, %v1049
      %v1089 = vadd.f32 %v834, %v1053
      %v1090 = vadd.f32 %v835, %v1055
      %v1091 = vadd.f32 %v836, %v1057
      %v1092 = vadd.f32 %v837, %v1059
      %v1093 = vadd.f32 %v838, %v1063
      %v1094 = vadd.f32 %v839, %v1065
      %v1095 = vadd.f32 %v840, %v1067
      %v1096 = vadd.f32 %v841, %v1069
      %v1097 = vadd.f32 %v842, %v1073
      %v1098 = vadd.f32 %v843, %v1075
      %v1099 = vadd.f32 %v844, %v1077
      %v1100 = vadd.f32 %v845, %v1079
      %v1101 = vld [vmem:[%s165 + $0x2c] sm:$0x3]
      %s1102 = scalar_lea.vmem %s1, 512
      %v1103 = vld [vmem:[%s1102] sm:$0xff]
      %v1104 = vld [vmem:[%s1102 + $0x8] sm:$0xff]
      %v1105 = vld [vmem:[%s1102 + $0x10] sm:$0xff]
      %v1106 = vld [vmem:[%s1102 + $0x18] sm:$0xff]
      %v1107 = vld [vmem:[%s1102 + $0x20] sm:$0xff]
      %v1108 = vld [vmem:[%s1102 + $0x28] sm:$0xff]
      %v1109 = vld [vmem:[%s1102 + $0x30] sm:$0xff]
      %v1110 = vld [vmem:[%s1102 + $0x38] sm:$0xff]
      %v1111 = vld [vmem:[%s1102 + $0x40] sm:$0xff]
      %v1112 = vld [vmem:[%s1102 + $0x48] sm:$0xff]
      %v1113 = vld [vmem:[%s1102 + $0x50] sm:$0xff]
      %v1114 = vld [vmem:[%s1102 + $0x58] sm:$0xff]
      %v1115 = vld [vmem:[%s1102 + $0x60] sm:$0xff]
      %v1116 = vld [vmem:[%s1102 + $0x68] sm:$0xff]
      %v1117 = vld [vmem:[%s1102 + $0x70] sm:$0xff]
      %v1118 = vld [vmem:[%s1102 + $0x78] sm:$0xff]
      %v1120 = vunpack.c.l.b16 %v1101
      %v1121 = vpack.c.b16 %v1120, %v1120
      %vm1122 = vsmask.f32 6400
      %v1124 = vshrl.u32 %v896, 16
      %v1126 = vrot.slane %v1124, 1
      %v1127 = vshll.u32 %v896, 16
      %v1129 = vrot.slane %v1127, 2
      %v1130 = vor.u32 %v1126, %v1129
      %v1132 = vshrl.u32 %v897, 16
      %v1134 = vrot.slane %v1132, 1
      %v1135 = vshll.u32 %v897, 16
      %v1137 = vrot.slane %v1135, 2
      %v1138 = vor.u32 %v1134, %v1137
      %v1139 = vsel %vm1122, %v1130, %v1138
      %v1141 = vshrl.u32 %v898, 16
      %v1143 = vrot.slane %v1141, 1
      %v1144 = vshll.u32 %v898, 16
      %v1146 = vrot.slane %v1144, 2
      %v1147 = vor.u32 %v1143, %v1146
      %v1148 = vsel %vm1122, %v1138, %v1147
      %v1150 = vshrl.u32 %v899, 16
      %v1152 = vrot.slane %v1150, 1
      %v1153 = vshll.u32 %v899, 16
      %v1155 = vrot.slane %v1153, 2
      %v1156 = vor.u32 %v1152, %v1155
      %v1157 = vsel %vm1122, %v1147, %v1156
      %v1159 = vshrl.u32 %v900, 16
      %v1161 = vrot.slane %v1159, 1
      %v1162 = vshll.u32 %v900, 16
      %v1164 = vrot.slane %v1162, 2
      %v1165 = vor.u32 %v1161, %v1164
      %v1166 = vsel %vm1122, %v1156, %v1165
      %v1168 = vshrl.u32 %v1121, 16
      %v1170 = vrot.slane %v1168, 1
      %v1171 = vshll.u32 %v1121, 16
      %v1173 = vrot.slane %v1171, 2
      %v1174 = vor.u32 %v1170, %v1173
      %v1175 = vsel %vm1122, %v1165, %v1174
      %v1197 = vunpack.c.l.b16 %v1103
      %v1198 = vunpack.c.h.b16 %v1103
      %v1199 = vunpack.c.l.b16 %v1104
      %v1200 = vunpack.c.h.b16 %v1104
      %v1201 = vunpack.c.l.b16 %v1105
      %v1202 = vunpack.c.h.b16 %v1105
      %v1203 = vunpack.c.l.b16 %v1106
      %v1204 = vunpack.c.h.b16 %v1106
      %v1205 = vunpack.c.l.b16 %v1107
      %v1206 = vunpack.c.h.b16 %v1107
      %v1207 = vunpack.c.l.b16 %v1108
      %v1208 = vunpack.c.h.b16 %v1108
      %v1209 = vunpack.c.l.b16 %v1109
      %v1210 = vunpack.c.h.b16 %v1109
      %v1211 = vunpack.c.l.b16 %v1110
      %v1212 = vunpack.c.h.b16 %v1110
      %v1213 = vunpack.c.l.b16 %v1111
      %v1214 = vunpack.c.h.b16 %v1111
      %v1215 = vunpack.c.l.b16 %v1112
      %v1216 = vunpack.c.h.b16 %v1112
      %v1217 = vunpack.c.l.b16 %v1113
      %v1218 = vunpack.c.h.b16 %v1113
      %v1219 = vunpack.c.l.b16 %v1114
      %v1220 = vunpack.c.h.b16 %v1114
      %v1221 = vunpack.c.l.b16 %v1115
      %v1222 = vunpack.c.h.b16 %v1115
      %v1223 = vunpack.c.l.b16 %v1116
      %v1224 = vunpack.c.h.b16 %v1116
      %v1225 = vunpack.c.l.b16 %v1117
      %v1226 = vunpack.c.h.b16 %v1117
      %v1227 = vunpack.c.l.b16 %v1118
      %v1228 = vunpack.c.h.b16 %v1118
      %v1229 = vpack.c.b16 %v1199, %v1197
      %v1230 = vpack.c.b16 %v1200, %v1198
      %v1231 = vpack.c.b16 %v1203, %v1201
      %v1232 = vpack.c.b16 %v1204, %v1202
      %v1233 = vpack.c.b16 %v1207, %v1205
      %v1234 = vpack.c.b16 %v1208, %v1206
      %v1235 = vpack.c.b16 %v1211, %v1209
      %v1236 = vpack.c.b16 %v1212, %v1210
      %v1237 = vpack.c.b16 %v1215, %v1213
      %v1238 = vpack.c.b16 %v1216, %v1214
      %v1239 = vpack.c.b16 %v1219, %v1217
      %v1240 = vpack.c.b16 %v1220, %v1218
      %v1241 = vpack.c.b16 %v1223, %v1221
      %v1242 = vpack.c.b16 %v1224, %v1222
      %v1243 = vpack.c.b16 %v1227, %v1225
      %v1244 = vpack.c.b16 %v1228, %v1226
      %1261 = vmatprep.subr.bf16.mxu0 %v1230
      %1262 = vmatpush1.bf16.msra.mxu0 %v1229
      %1263 = vmatprep.subr.bf16.mxu0 %v1232
      %1264 = vmatpush1.bf16.msra.mxu0 %v1231
      %1265 = vmatprep.subr.bf16.mxu0 %v1234
      %1266 = vmatpush1.bf16.msra.mxu0 %v1233
      %1267 = vmatprep.subr.bf16.mxu0 %v1236
      %1268 = vmatpush1.bf16.msra.mxu0 %v1235
      %1269 = vmatprep.subr.bf16.mxu0 %v1238
      %1270 = vmatpush1.bf16.msra.mxu0 %v1237
      %1271 = vmatprep.subr.bf16.mxu0 %v1240
      %1272 = vmatpush1.bf16.msra.mxu0 %v1239
      %1273 = vmatprep.subr.bf16.mxu0 %v1242
      %1274 = vmatpush1.bf16.msra.mxu0 %v1241
      %1275 = vmatprep.subr.bf16.mxu0 %v1244
      %1276 = vmatpush1.bf16.msra.mxu0 %v1243
      %1277 = vmatprep.subr.bf16.mxu0 0
      %1278 = vmatpush1.bf16.msra.mxu0 0
      %1279 = vmatprep.subr.bf16.mxu0 0
      %1280 = vmatpush1.bf16.msra.mxu0 0
      %1281 = vmatprep.subr.bf16.mxu0 0
      %1282 = vmatpush1.bf16.msra.mxu0 0
      %1283 = vmatprep.subr.bf16.mxu0 0
      %1284 = vmatpush1.bf16.msra.mxu0 0
      %1285 = vmatprep.subr.bf16.mxu0 0
      %1286 = vmatpush1.bf16.msra.mxu0 0
      %1287 = vmatprep.subr.bf16.mxu0 0
      %1288 = vmatpush1.bf16.msra.mxu0 0
      %1289 = vmatprep.subr.bf16.mxu0 0
      %1290 = vmatpush1.bf16.msra.mxu0 0
      %1291 = vmatprep.subr.bf16.mxu0 0
      %1292 = vmatpush1.bf16.msra.mxu0 0
      %1293 = vmatprep.mubr.bf16.mxu0 0
      %1294 = vmatmul.mubr.bf16.gmra.mrb[0].mxu0 %v1139
      %v1295 = vpop.f32.mrb[0].mxu0
      %v1296 = vadd.f32 0.0, %v1295
      %v1297 = vpop.f32.mrb[0].mxu0
      %v1298 = vadd.f32 0.0, %v1297
      %v1299 = vpop.f32.mrb[0].mxu0
      %v1300 = vadd.f32 0.0, %v1299
      %v1301 = vpop.f32.mrb[0].mxu0
      %v1302 = vadd.f32 0.0, %v1301
      %1303 = vmatprep.mubr.bf16.mxu0 0
      %1304 = vmatmul.mubr.bf16.gmra.mrb[0].mxu0 %v1148
      %v1305 = vpop.f32.mrb[0].mxu0
      %v1306 = vadd.f32 0.0, %v1305
      %v1307 = vpop.f32.mrb[0].mxu0
      %v1308 = vadd.f32 0.0, %v1307
      %v1309 = vpop.f32.mrb[0].mxu0
      %v1310 = vadd.f32 0.0, %v1309
      %v1311 = vpop.f32.mrb[0].mxu0
      %v1312 = vadd.f32 0.0, %v1311
      %1313 = vmatprep.mubr.bf16.mxu0 0
      %1314 = vmatmul.mubr.bf16.gmra.mrb[0].mxu0 %v1157
      %v1315 = vpop.f32.mrb[0].mxu0
      %v1316 = vadd.f32 0.0, %v1315
      %v1317 = vpop.f32.mrb[0].mxu0
      %v1318 = vadd.f32 0.0, %v1317
      %v1319 = vpop.f32.mrb[0].mxu0
      %v1320 = vadd.f32 0.0, %v1319
      %v1321 = vpop.f32.mrb[0].mxu0
      %v1322 = vadd.f32 0.0, %v1321
      %1323 = vmatprep.mubr.bf16.mxu0 0
      %1324 = vmatmul.mubr.bf16.gmra.mrb[0].mxu0 %v1166
      %v1325 = vpop.f32.mrb[0].mxu0
      %v1326 = vadd.f32 0.0, %v1325
      %v1327 = vpop.f32.mrb[0].mxu0
      %v1328 = vadd.f32 0.0, %v1327
      %v1329 = vpop.f32.mrb[0].mxu0
      %v1330 = vadd.f32 0.0, %v1329
      %v1331 = vpop.f32.mrb[0].mxu0
      %v1332 = vadd.f32 0.0, %v1331
      %1333 = vmatprep.mubr.bf16.mxu0 0
      %1334 = vmatmul.mubr.bf16.gmra.mrb[0].mxu0 %v1175
      %v1335 = vpop.f32.mrb[0].mxu0
      %v1336 = vadd.f32 0.0, %v1335
      %v1337 = vpop.f32.mrb[0].mxu0
      %v1338 = vadd.f32 0.0, %v1337
      %v1339 = vpop.f32.mrb[0].mxu0
      %v1340 = vadd.f32 0.0, %v1339
      %v1341 = vpop.f32.mrb[0].mxu0
      %v1342 = vadd.f32 0.0, %v1341
      %1343 = vdwg.mxu0
      %v1344 = vadd.f32 %v1081, %v1296
      %v1345 = vadd.f32 %v1082, %v1298
      %v1346 = vadd.f32 %v1083, %v1300
      %v1347 = vadd.f32 %v1084, %v1302
      %v1348 = vadd.f32 %v1085, %v1306
      %v1349 = vadd.f32 %v1086, %v1308
      %v1350 = vadd.f32 %v1087, %v1310
      %v1351 = vadd.f32 %v1088, %v1312
      %v1352 = vadd.f32 %v1089, %v1316
      %v1353 = vadd.f32 %v1090, %v1318
      %v1354 = vadd.f32 %v1091, %v1320
      %v1355 = vadd.f32 %v1092, %v1322
      %v1356 = vadd.f32 %v1093, %v1326
      %v1357 = vadd.f32 %v1094, %v1328
      %v1358 = vadd.f32 %v1095, %v1330
      %v1359 = vadd.f32 %v1096, %v1332
      %v1360 = vadd.f32 %v1097, %v1336
      %v1361 = vadd.f32 %v1098, %v1338
      %v1362 = vadd.f32 %v1099, %v1340
      %v1363 = vadd.f32 %v1100, %v1342
      %v1364 = vld [vmem:[%s165 + $0x4] sm:$0xc]
      %s1365 = scalar_lea.vmem %s1, 640
      %v1366 = vld [vmem:[%s1365] sm:$0xff]
      %v1367 = vld [vmem:[%s1365 + $0x8] sm:$0xff]
      %v1368 = vld [vmem:[%s1365 + $0x10] sm:$0xff]
      %v1369 = vld [vmem:[%s1365 + $0x18] sm:$0xff]
      %v1370 = vld [vmem:[%s1365 + $0x20] sm:$0xff]
      %v1371 = vld [vmem:[%s1365 + $0x28] sm:$0xff]
      %v1372 = vld [vmem:[%s1365 + $0x30] sm:$0xff]
      %v1373 = vld [vmem:[%s1365 + $0x38] sm:$0xff]
      %v1374 = vld [vmem:[%s1365 + $0x40] sm:$0xff]
      %v1375 = vld [vmem:[%s1365 + $0x48] sm:$0xff]
      %v1376 = vld [vmem:[%s1365 + $0x50] sm:$0xff]
      %v1377 = vld [vmem:[%s1365 + $0x58] sm:$0xff]
      %v1378 = vld [vmem:[%s1365 + $0x60] sm:$0xff]
      %v1379 = vld [vmem:[%s1365 + $0x68] sm:$0xff]
      %v1380 = vld [vmem:[%s1365 + $0x70] sm:$0xff]
      %v1381 = vld [vmem:[%s1365 + $0x78] sm:$0xff]
      %v1383 = vunpack.c.l.b16 %v1364
      %v1384 = vpack.c.b16 %v886, %v1383
      %vm1385 = vcmask 1045504
      %v1386 = vrot.slane %v1384, 2
      %v1387 = vrot.slane %v897, 2
      %v1388 = vsel %vm1385, %v1386, %v1387
      %v1389 = vrot.slane %v898, 2
      %v1390 = vsel %vm1385, %v1387, %v1389
      %v1391 = vrot.slane %v899, 2
      %v1392 = vsel %vm1385, %v1389, %v1391
      %v1393 = vrot.slane %v900, 2
      %v1394 = vsel %vm1385, %v1391, %v1393
      %v1395 = vrot.slane %v1121, 2
      %v1396 = vsel %vm1385, %v1393, %v1395
      %v1418 = vunpack.c.l.b16 %v1366
      %v1419 = vunpack.c.h.b16 %v1366
      %v1420 = vunpack.c.l.b16 %v1367
      %v1421 = vunpack.c.h.b16 %v1367
      %v1422 = vunpack.c.l.b16 %v1368
      %v1423 = vunpack.c.h.b16 %v1368
      %v1424 = vunpack.c.l.b16 %v1369
      %v1425 = vunpack.c.h.b16 %v1369
      %v1426 = vunpack.c.l.b16 %v1370
      %v1427 = vunpack.c.h.b16 %v1370
      %v1428 = vunpack.c.l.b16 %v1371
      %v1429 = vunpack.c.h.b16 %v1371
      %v1430 = vunpack.c.l.b16 %v1372
      %v1431 = vunpack.c.h.b16 %v1372
      %v1432 = vunpack.c.l.b16 %v1373
      %v1433 = vunpack.c.h.b16 %v1373
      %v1434 = vunpack.c.l.b16 %v1374
      %v1435 = vunpack.c.h.b16 %v1374
      %v1436 = vunpack.c.l.b16 %v1375
      %v1437 = vunpack.c.h.b16 %v1375
      %v1438 = vunpack.c.l.b16 %v1376
      %v1439 = vunpack.c.h.b16 %v1376
      %v1440 = vunpack.c.l.b16 %v1377
      %v1441 = vunpack.c.h.b16 %v1377
      %v1442 = vunpack.c.l.b16 %v1378
      %v1443 = vunpack.c.h.b16 %v1378
      %v1444 = vunpack.c.l.b16 %v1379
      %v1445 = vunpack.c.h.b16 %v1379
      %v1446 = vunpack.c.l.b16 %v1380
      %v1447 = vunpack.c.h.b16 %v1380
      %v1448 = vunpack.c.l.b16 %v1381
      %v1449 = vunpack.c.h.b16 %v1381
      %v1450 = vpack.c.b16 %v1420, %v1418
      %v1451 = vpack.c.b16 %v1421, %v1419
      %v1452 = vpack.c.b16 %v1424, %v1422
      %v1453 = vpack.c.b16 %v1425, %v1423
      %v1454 = vpack.c.b16 %v1428, %v1426
      %v1455 = vpack.c.b16 %v1429, %v1427
      %v1456 = vpack.c.b16 %v1432, %v1430
      %v1457 = vpack.c.b16 %v1433, %v1431
      %v1458 = vpack.c.b16 %v1436, %v1434
      %v1459 = vpack.c.b16 %v1437, %v1435
      %v1460 = vpack.c.b16 %v1440, %v1438
      %v1461 = vpack.c.b16 %v1441, %v1439
      %v1462 = vpack.c.b16 %v1444, %v1442
      %v1463 = vpack.c.b16 %v1445, %v1443
      %v1464 = vpack.c.b16 %v1448, %v1446
      %v1465 = vpack.c.b16 %v1449, %v1447
      %1482 = vmatprep.subr.bf16.mxu0 %v1451
      %1483 = vmatpush1.bf16.msra.mxu0 %v1450
      %1484 = vmatprep.subr.bf16.mxu0 %v1453
      %1485 = vmatpush1.bf16.msra.mxu0 %v1452
      %1486 = vmatprep.subr.bf16.mxu0 %v1455
      %1487 = vmatpush1.bf16.msra.mxu0 %v1454
      %1488 = vmatprep.subr.bf16.mxu0 %v1457
      %1489 = vmatpush1.bf16.msra.mxu0 %v1456
      %1490 = vmatprep.subr.bf16.mxu0 %v1459
      %1491 = vmatpush1.bf16.msra.mxu0 %v1458
      %1492 = vmatprep.subr.bf16.mxu0 %v1461
      %1493 = vmatpush1.bf16.msra.mxu0 %v1460
      %1494 = vmatprep.subr.bf16.mxu0 %v1463
      %1495 = vmatpush1.bf16.msra.mxu0 %v1462
      %1496 = vmatprep.subr.bf16.mxu0 %v1465
      %1497 = vmatpush1.bf16.msra.mxu0 %v1464
      %1498 = vmatprep.subr.bf16.mxu0 0
      %1499 = vmatpush1.bf16.msra.mxu0 0
      %1500 = vmatprep.subr.bf16.mxu0 0
      %1501 = vmatpush1.bf16.msra.mxu0 0
      %1502 = vmatprep.subr.bf16.mxu0 0
      %1503 = vmatpush1.bf16.msra.mxu0 0
      %1504 = vmatprep.subr.bf16.mxu0 0
      %1505 = vmatpush1.bf16.msra.mxu0 0
      %1506 = vmatprep.subr.bf16.mxu0 0
      %1507 = vmatpush1.bf16.msra.mxu0 0
      %1508 = vmatprep.subr.bf16.mxu0 0
      %1509 = vmatpush1.bf16.msra.mxu0 0
      %1510 = vmatprep.subr.bf16.mxu0 0
      %1511 = vmatpush1.bf16.msra.mxu0 0
      %1512 = vmatprep.subr.bf16.mxu0 0
      %1513 = vmatpush1.bf16.msra.mxu0 0
      %1514 = vmatprep.mubr.bf16.mxu0 0
      %1515 = vmatmul.mubr.bf16.gmra.mrb[0].mxu0 %v1388
      %v1516 = vpop.f32.mrb[0].mxu0
      %v1517 = vadd.f32 0.0, %v1516
      %v1518 = vpop.f32.mrb[0].mxu0
      %v1519 = vadd.f32 0.0, %v1518
      %v1520 = vpop.f32.mrb[0].mxu0
      %v1521 = vadd.f32 0.0, %v1520
      %v1522 = vpop.f32.mrb[0].mxu0
      %v1523 = vadd.f32 0.0, %v1522
      %1524 = vmatprep.mubr.bf16.mxu0 0
      %1525 = vmatmul.mubr.bf16.gmra.mrb[0].mxu0 %v1390
      %v1526 = vpop.f32.mrb[0].mxu0
      %v1527 = vadd.f32 0.0, %v1526
      %v1528 = vpop.f32.mrb[0].mxu0
      %v1529 = vadd.f32 0.0, %v1528
      %v1530 = vpop.f32.mrb[0].mxu0
      %v1531 = vadd.f32 0.0, %v1530
      %v1532 = vpop.f32.mrb[0].mxu0
      %v1533 = vadd.f32 0.0, %v1532
      %1534 = vmatprep.mubr.bf16.mxu0 0
      %1535 = vmatmul.mubr.bf16.gmra.mrb[0].mxu0 %v1392
      %v1536 = vpop.f32.mrb[0].mxu0
      %v1537 = vadd.f32 0.0, %v1536
      %v1538 = vpop.f32.mrb[0].mxu0
      %v1539 = vadd.f32 0.0, %v1538
      %v1540 = vpop.f32.mrb[0].mxu0
      %v1541 = vadd.f32 0.0, %v1540
      %v1542 = vpop.f32.mrb[0].mxu0
      %v1543 = vadd.f32 0.0, %v1542
      %1544 = vmatprep.mubr.bf16.mxu0 0
      %1545 = vmatmul.mubr.bf16.gmra.mrb[0].mxu0 %v1394
      %v1546 = vpop.f32.mrb[0].mxu0
      %v1547 = vadd.f32 0.0, %v1546
      %v1548 = vpop.f32.mrb[0].mxu0
      %v1549 = vadd.f32 0.0, %v1548
      %v1550 = vpop.f32.mrb[0].mxu0
      %v1551 = vadd.f32 0.0, %v1550
      %v1552 = vpop.f32.mrb[0].mxu0
      %v1553 = vadd.f32 0.0, %v1552
      %1554 = vmatprep.mubr.bf16.mxu0 0
      %1555 = vmatmul.mubr.bf16.gmra.mrb[0].mxu0 %v1396
      %v1556 = vpop.f32.mrb[0].mxu0
      %v1557 = vadd.f32 0.0, %v1556
      %v1558 = vpop.f32.mrb[0].mxu0
      %v1559 = vadd.f32 0.0, %v1558
      %v1560 = vpop.f32.mrb[0].mxu0
      %v1561 = vadd.f32 0.0, %v1560
      %v1562 = vpop.f32.mrb[0].mxu0
      %v1563 = vadd.f32 0.0, %v1562
      %1564 = vdwg.mxu0
      %v1565 = vadd.f32 %v1344, %v1517
      %v1566 = vadd.f32 %v1345, %v1519
      %v1567 = vadd.f32 %v1346, %v1521
      %v1568 = vadd.f32 %v1347, %v1523
      %v1569 = vadd.f32 %v1348, %v1527
      %v1570 = vadd.f32 %v1349, %v1529
      %v1571 = vadd.f32 %v1350, %v1531
      %v1572 = vadd.f32 %v1351, %v1533
      %v1573 = vadd.f32 %v1352, %v1537
      %v1574 = vadd.f32 %v1353, %v1539
      %v1575 = vadd.f32 %v1354, %v1541
      %v1576 = vadd.f32 %v1355, %v1543
      %v1577 = vadd.f32 %v1356, %v1547
      %v1578 = vadd.f32 %v1357, %v1549
      %v1579 = vadd.f32 %v1358, %v1551
      %v1580 = vadd.f32 %v1359, %v1553
      %v1581 = vadd.f32 %v1360, %v1557
      %v1582 = vadd.f32 %v1361, %v1559
      %v1583 = vadd.f32 %v1362, %v1561
      %v1584 = vadd.f32 %v1363, %v1563
      %v1585 = vld [vmem:[%s165 + $0x8] sm:$0xc]
      %v1586 = vld [vmem:[%s165 + $0xc] sm:$0xf]
      %v1587 = vld [vmem:[%s165 + $0x10] sm:$0xf]
      %v1588 = vld [vmem:[%s165 + $0x14] sm:$0xf]
      %v1589 = vld [vmem:[%s165 + $0x18] sm:$0xf]
      %v1590 = vld [vmem:[%s165 + $0x1c] sm:$0xf]
      %v1591 = vld [vmem:[%s165 + $0x20] sm:$0xf]
      %v1592 = vld [vmem:[%s165 + $0x24] sm:$0xf]
      %v1593 = vld [vmem:[%s165 + $0x28] sm:$0xf]
      %v1594 = vld [vmem:[%s165 + $0x2c] sm:$0xf]
      %v1595 = vld [vmem:[%s165 + $0x30] sm:$0x3]
      %s1596 = scalar_lea.vmem %s1, 768
      %v1597 = vld [vmem:[%s1596] sm:$0xff]
      %v1598 = vld [vmem:[%s1596 + $0x8] sm:$0xff]
      %v1599 = vld [vmem:[%s1596 + $0x10] sm:$0xff]
      %v1600 = vld [vmem:[%s1596 + $0x18] sm:$0xff]
      %v1601 = vld [vmem:[%s1596 + $0x20] sm:$0xff]
      %v1602 = vld [vmem:[%s1596 + $0x28] sm:$0xff]
      %v1603 = vld [vmem:[%s1596 + $0x30] sm:$0xff]
      %v1604 = vld [vmem:[%s1596 + $0x38] sm:$0xff]
      %v1605 = vld [vmem:[%s1596 + $0x40] sm:$0xff]
      %v1606 = vld [vmem:[%s1596 + $0x48] sm:$0xff]
      %v1607 = vld [vmem:[%s1596 + $0x50] sm:$0xff]
      %v1608 = vld [vmem:[%s1596 + $0x58] sm:$0xff]
      %v1609 = vld [vmem:[%s1596 + $0x60] sm:$0xff]
      %v1610 = vld [vmem:[%s1596 + $0x68] sm:$0xff]
      %v1611 = vld [vmem:[%s1596 + $0x70] sm:$0xff]
      %v1612 = vld [vmem:[%s1596 + $0x78] sm:$0xff]
      %v1624 = vunpack.c.l.b16 %v1585
      %v1625 = vunpack.c.l.b16 %v1586
      %v1626 = vunpack.c.l.b16 %v1587
      %v1627 = vunpack.c.l.b16 %v1588
      %v1628 = vunpack.c.l.b16 %v1589
      %v1629 = vunpack.c.l.b16 %v1590
      %v1630 = vunpack.c.l.b16 %v1591
      %v1631 = vunpack.c.l.b16 %v1592
      %v1632 = vunpack.c.l.b16 %v1593
      %v1633 = vunpack.c.l.b16 %v1594
      %v1634 = vunpack.c.l.b16 %v1595
      %v1635 = vpack.c.b16 %v1625, %v1624
      %v1636 = vpack.c.b16 %v1627, %v1626
      %v1637 = vpack.c.b16 %v1629, %v1628
      %v1638 = vpack.c.b16 %v1631, %v1630
      %v1639 = vpack.c.b16 %v1633, %v1632
      %v1640 = vpack.c.b16 %v1634, %v1634
      %v1641 = vrot.slane %v1635, 2
      %v1642 = vrot.slane %v1636, 2
      %v1643 = vsel %vm1385, %v1641, %v1642
      %v1644 = vrot.slane %v1637, 2
      %v1645 = vsel %vm1385, %v1642, %v1644
      %v1646 = vrot.slane %v1638, 2
      %v1647 = vsel %vm1385, %v1644, %v1646
      %v1648 = vrot.slane %v1639, 2
      %v1649 = vsel %vm1385, %v1646, %v1648
      %v1650 = vrot.slane %v1640, 2
      %v1651 = vsel %vm1385, %v1648, %v1650
      %v1673 = vunpack.c.l.b16 %v1597
      %v1674 = vunpack.c.h.b16 %v1597
      %v1675 = vunpack.c.l.b16 %v1598
      %v1676 = vunpack.c.h.b16 %v1598
      %v1677 = vunpack.c.l.b16 %v1599
      %v1678 = vunpack.c.h.b16 %v1599
      %v1679 = vunpack.c.l.b16 %v1600
      %v1680 = vunpack.c.h.b16 %v1600
      %v1681 = vunpack.c.l.b16 %v1601
      %v1682 = vunpack.c.h.b16 %v1601
      %v1683 = vunpack.c.l.b16 %v1602
      %v1684 = vunpack.c.h.b16 %v1602
      %v1685 = vunpack.c.l.b16 %v1603
      %v1686 = vunpack.c.h.b16 %v1603
      %v1687 = vunpack.c.l.b16 %v1604
      %v1688 = vunpack.c.h.b16 %v1604
      %v1689 = vunpack.c.l.b16 %v1605
      %v1690 = vunpack.c.h.b16 %v1605
      %v1691 = vunpack.c.l.b16 %v1606
      %v1692 = vunpack.c.h.b16 %v1606
      %v1693 = vunpack.c.l.b16 %v1607
      %v1694 = vunpack.c.h.b16 %v1607
      %v1695 = vunpack.c.l.b16 %v1608
      %v1696 = vunpack.c.h.b16 %v1608
      %v1697 = vunpack.c.l.b16 %v1609
      %v1698 = vunpack.c.h.b16 %v1609
      %v1699 = vunpack.c.l.b16 %v1610
      %v1700 = vunpack.c.h.b16 %v1610
      %v1701 = vunpack.c.l.b16 %v1611
      %v1702 = vunpack.c.h.b16 %v1611
      %v1703 = vunpack.c.l.b16 %v1612
      %v1704 = vunpack.c.h.b16 %v1612
      %v1705 = vpack.c.b16 %v1675, %v1673
      %v1706 = vpack.c.b16 %v1676, %v1674
      %v1707 = vpack.c.b16 %v1679, %v1677
      %v1708 = vpack.c.b16 %v1680, %v1678
      %v1709 = vpack.c.b16 %v1683, %v1681
      %v1710 = vpack.c.b16 %v1684, %v1682
      %v1711 = vpack.c.b16 %v1687, %v1685
      %v1712 = vpack.c.b16 %v1688, %v1686
      %v1713 = vpack.c.b16 %v1691, %v1689
      %v1714 = vpack.c.b16 %v1692, %v1690
      %v1715 = vpack.c.b16 %v1695, %v1693
      %v1716 = vpack.c.b16 %v1696, %v1694
      %v1717 = vpack.c.b16 %v1699, %v1697
      %v1718 = vpack.c.b16 %v1700, %v1698
      %v1719 = vpack.c.b16 %v1703, %v1701
      %v1720 = vpack.c.b16 %v1704, %v1702
      %1737 = vmatprep.subr.bf16.mxu0 %v1706
      %1738 = vmatpush1.bf16.msra.mxu0 %v1705
      %1739 = vmatprep.subr.bf16.mxu0 %v1708
      %1740 = vmatpush1.bf16.msra.mxu0 %v1707
      %1741 = vmatprep.subr.bf16.mxu0 %v1710
      %1742 = vmatpush1.bf16.msra.mxu0 %v1709
      %1743 = vmatprep.subr.bf16.mxu0 %v1712
      %1744 = vmatpush1.bf16.msra.mxu0 %v1711
      %1745 = vmatprep.subr.bf16.mxu0 %v1714
      %1746 = vmatpush1.bf16.msra.mxu0 %v1713
      %1747 = vmatprep.subr.bf16.mxu0 %v1716
      %1748 = vmatpush1.bf16.msra.mxu0 %v1715
      %1749 = vmatprep.subr.bf16.mxu0 %v1718
      %1750 = vmatpush1.bf16.msra.mxu0 %v1717
      %1751 = vmatprep.subr.bf16.mxu0 %v1720
      %1752 = vmatpush1.bf16.msra.mxu0 %v1719
      %1753 = vmatprep.subr.bf16.mxu0 0
      %1754 = vmatpush1.bf16.msra.mxu0 0
      %1755 = vmatprep.subr.bf16.mxu0 0
      %1756 = vmatpush1.bf16.msra.mxu0 0
      %1757 = vmatprep.subr.bf16.mxu0 0
      %1758 = vmatpush1.bf16.msra.mxu0 0
      %1759 = vmatprep.subr.bf16.mxu0 0
      %1760 = vmatpush1.bf16.msra.mxu0 0
      %1761 = vmatprep.subr.bf16.mxu0 0
      %1762 = vmatpush1.bf16.msra.mxu0 0
      %1763 = vmatprep.subr.bf16.mxu0 0
      %1764 = vmatpush1.bf16.msra.mxu0 0
      %1765 = vmatprep.subr.bf16.mxu0 0
      %1766 = vmatpush1.bf16.msra.mxu0 0
      %1767 = vmatprep.subr.bf16.mxu0 0
      %1768 = vmatpush1.bf16.msra.mxu0 0
      %1769 = vmatprep.mubr.bf16.mxu0 0
      %1770 = vmatmul.mubr.bf16.gmra.mrb[0].mxu0 %v1643
      %v1771 = vpop.f32.mrb[0].mxu0
      %v1772 = vadd.f32 0.0, %v1771
      %v1773 = vpop.f32.mrb[0].mxu0
      %v1774 = vadd.f32 0.0, %v1773
      %v1775 = vpop.f32.mrb[0].mxu0
      %v1776 = vadd.f32 0.0, %v1775
      %v1777 = vpop.f32.mrb[0].mxu0
      %v1778 = vadd.f32 0.0, %v1777
      %1779 = vmatprep.mubr.bf16.mxu0 0
      %1780 = vmatmul.mubr.bf16.gmra.mrb[0].mxu0 %v1645
      %v1781 = vpop.f32.mrb[0].mxu0
      %v1782 = vadd.f32 0.0, %v1781
      %v1783 = vpop.f32.mrb[0].mxu0
      %v1784 = vadd.f32 0.0, %v1783
      %v1785 = vpop.f32.mrb[0].mxu0
      %v1786 = vadd.f32 0.0, %v1785
      %v1787 = vpop.f32.mrb[0].mxu0
      %v1788 = vadd.f32 0.0, %v1787
      %1789 = vmatprep.mubr.bf16.mxu0 0
      %1790 = vmatmul.mubr.bf16.gmra.mrb[0].mxu0 %v1647
      %v1791 = vpop.f32.mrb[0].mxu0
      %v1792 = vadd.f32 0.0, %v1791
      %v1793 = vpop.f32.mrb[0].mxu0
      %v1794 = vadd.f32 0.0, %v1793
      %v1795 = vpop.f32.mrb[0].mxu0
      %v1796 = vadd.f32 0.0, %v1795
      %v1797 = vpop.f32.mrb[0].mxu0
      %v1798 = vadd.f32 0.0, %v1797
      %1799 = vmatprep.mubr.bf16.mxu0 0
      %1800 = vmatmul.mubr.bf16.gmra.mrb[0].mxu0 %v1649
      %v1801 = vpop.f32.mrb[0].mxu0
      %v1802 = vadd.f32 0.0, %v1801
      %v1803 = vpop.f32.mrb[0].mxu0
      %v1804 = vadd.f32 0.0, %v1803
      %v1805 = vpop.f32.mrb[0].mxu0
      %v1806 = vadd.f32 0.0, %v1805
      %v1807 = vpop.f32.mrb[0].mxu0
      %v1808 = vadd.f32 0.0, %v1807
      %1809 = vmatprep.mubr.bf16.mxu0 0
      %1810 = vmatmul.mubr.bf16.gmra.mrb[0].mxu0 %v1651
      %v1811 = vpop.f32.mrb[0].mxu0
      %v1812 = vadd.f32 0.0, %v1811
      %v1813 = vpop.f32.mrb[0].mxu0
      %v1814 = vadd.f32 0.0, %v1813
      %v1815 = vpop.f32.mrb[0].mxu0
      %v1816 = vadd.f32 0.0, %v1815
      %v1817 = vpop.f32.mrb[0].mxu0
      %v1818 = vadd.f32 0.0, %v1817
      %1819 = vdwg.mxu0
      %v1820 = vadd.f32 %v1565, %v1772
      %v1821 = vadd.f32 %v1566, %v1774
      %v1822 = vadd.f32 %v1567, %v1776
      %v1823 = vadd.f32 %v1568, %v1778
      %v1824 = vadd.f32 %v1569, %v1782
      %v1825 = vadd.f32 %v1570, %v1784
      %v1826 = vadd.f32 %v1571, %v1786
      %v1827 = vadd.f32 %v1572, %v1788
      %v1828 = vadd.f32 %v1573, %v1792
      %v1829 = vadd.f32 %v1574, %v1794
      %v1830 = vadd.f32 %v1575, %v1796
      %v1831 = vadd.f32 %v1576, %v1798
      %v1832 = vadd.f32 %v1577, %v1802
      %v1833 = vadd.f32 %v1578, %v1804
      %v1834 = vadd.f32 %v1579, %v1806
      %v1835 = vadd.f32 %v1580, %v1808
      %v1836 = vadd.f32 %v1581, %v1812
      %v1837 = vadd.f32 %v1582, %v1814
      %v1838 = vadd.f32 %v1583, %v1816
      %v1839 = vadd.f32 %v1584, %v1818
      %v1840 = vld [vmem:[%s165 + $0x30] sm:$0x7]
      %s1841 = scalar_lea.vmem %s1, 896
      %v1842 = vld [vmem:[%s1841] sm:$0xff]
      %v1843 = vld [vmem:[%s1841 + $0x8] sm:$0xff]
      %v1844 = vld [vmem:[%s1841 + $0x10] sm:$0xff]
      %v1845 = vld [vmem:[%s1841 + $0x18] sm:$0xff]
      %v1846 = vld [vmem:[%s1841 + $0x20] sm:$0xff]
      %v1847 = vld [vmem:[%s1841 + $0x28] sm:$0xff]
      %v1848 = vld [vmem:[%s1841 + $0x30] sm:$0xff]
      %v1849 = vld [vmem:[%s1841 + $0x38] sm:$0xff]
      %v1850 = vld [vmem:[%s1841 + $0x40] sm:$0xff]
      %v1851 = vld [vmem:[%s1841 + $0x48] sm:$0xff]
      %v1852 = vld [vmem:[%s1841 + $0x50] sm:$0xff]
      %v1853 = vld [vmem:[%s1841 + $0x58] sm:$0xff]
      %v1854 = vld [vmem:[%s1841 + $0x60] sm:$0xff]
      %v1855 = vld [vmem:[%s1841 + $0x68] sm:$0xff]
      %v1856 = vld [vmem:[%s1841 + $0x70] sm:$0xff]
      %v1857 = vld [vmem:[%s1841 + $0x78] sm:$0xff]
      %v1859 = vunpack.c.l.b16 %v1840
      %v1860 = vpack.c.b16 %v1859, %v1859
      %vm1861 = vsmask.f32 5376
      %v1863 = vshrl.u32 %v1635, 16
      %v1865 = vrot.slane %v1863, 2
      %v1866 = vshll.u32 %v1635, 16
      %v1868 = vrot.slane %v1866, 3
      %v1869 = vor.u32 %v1865, %v1868
      %v1871 = vshrl.u32 %v1636, 16
      %v1873 = vrot.slane %v1871, 2
      %v1874 = vshll.u32 %v1636, 16
      %v1876 = vrot.slane %v1874, 3
      %v1877 = vor.u32 %v1873, %v1876
      %v1878 = vsel %vm1861, %v1869, %v1877
      %v1880 = vshrl.u32 %v1637, 16
      %v1882 = vrot.slane %v1880, 2
      %v1883 = vshll.u32 %v1637, 16
      %v1885 = vrot.slane %v1883, 3
      %v1886 = vor.u32 %v1882, %v1885
      %v1887 = vsel %vm1861, %v1877, %v1886
      %v1889 = vshrl.u32 %v1638, 16
      %v1891 = vrot.slane %v1889, 2
      %v1892 = vshll.u32 %v1638, 16
      %v1894 = vrot.slane %v1892, 3
      %v1895 = vor.u32 %v1891, %v1894
      %v1896 = vsel %vm1861, %v1886, %v1895
      %v1898 = vshrl.u32 %v1639, 16
      %v1900 = vrot.slane %v1898, 2
      %v1901 = vshll.u32 %v1639, 16
      %v1903 = vrot.slane %v1901, 3
      %v1904 = vor.u32 %v1900, %v1903
      %v1905 = vsel %vm1861, %v1895, %v1904
      %v1907 = vshrl.u32 %v1860, 16
      %v1909 = vrot.slane %v1907, 2
      %v1910 = vshll.u32 %v1860, 16
      %v1912 = vrot.slane %v1910, 3
      %v1913 = vor.u32 %v1909, %v1912
      %v1914 = vsel %vm1861, %v1904, %v1913
      %v1936 = vunpack.c.l.b16 %v1842
      %v1937 = vunpack.c.h.b16 %v1842
      %v1938 = vunpack.c.l.b16 %v1843
      %v1939 = vunpack.c.h.b16 %v1843
      %v1940 = vunpack.c.l.b16 %v1844
      %v1941 = vunpack.c.h.b16 %v1844
      %v1942 = vunpack.c.l.b16 %v1845
      %v1943 = vunpack.c.h.b16 %v1845
      %v1944 = vunpack.c.l.b16 %v1846
      %v1945 = vunpack.c.h.b16 %v1846
      %v1946 = vunpack.c.l.b16 %v1847
      %v1947 = vunpack.c.h.b16 %v1847
      %v1948 = vunpack.c.l.b16 %v1848
      %v1949 = vunpack.c.h.b16 %v1848
      %v1950 = vunpack.c.l.b16 %v1849
      %v1951 = vunpack.c.h.b16 %v1849
      %v1952 = vunpack.c.l.b16 %v1850
      %v1953 = vunpack.c.h.b16 %v1850
      %v1954 = vunpack.c.l.b16 %v1851
      %v1955 = vunpack.c.h.b16 %v1851
      %v1956 = vunpack.c.l.b16 %v1852
      %v1957 = vunpack.c.h.b16 %v1852
      %v1958 = vunpack.c.l.b16 %v1853
      %v1959 = vunpack.c.h.b16 %v1853
      %v1960 = vunpack.c.l.b16 %v1854
      %v1961 = vunpack.c.h.b16 %v1854
      %v1962 = vunpack.c.l.b16 %v1855
      %v1963 = vunpack.c.h.b16 %v1855
      %v1964 = vunpack.c.l.b16 %v1856
      %v1965 = vunpack.c.h.b16 %v1856
      %v1966 = vunpack.c.l.b16 %v1857
      %v1967 = vunpack.c.h.b16 %v1857
      %v1968 = vpack.c.b16 %v1938, %v1936
      %v1969 = vpack.c.b16 %v1939, %v1937
      %v1970 = vpack.c.b16 %v1942, %v1940
      %v1971 = vpack.c.b16 %v1943, %v1941
      %v1972 = vpack.c.b16 %v1946, %v1944
      %v1973 = vpack.c.b16 %v1947, %v1945
      %v1974 = vpack.c.b16 %v1950, %v1948
      %v1975 = vpack.c.b16 %v1951, %v1949
      %v1976 = vpack.c.b16 %v1954, %v1952
      %v1977 = vpack.c.b16 %v1955, %v1953
      %v1978 = vpack.c.b16 %v1958, %v1956
      %v1979 = vpack.c.b16 %v1959, %v1957
      %v1980 = vpack.c.b16 %v1962, %v1960
      %v1981 = vpack.c.b16 %v1963, %v1961
      %v1982 = vpack.c.b16 %v1966, %v1964
      %v1983 = vpack.c.b16 %v1967, %v1965
      %2000 = vmatprep.subr.bf16.mxu0 %v1969
      %2001 = vmatpush1.bf16.msra.mxu0 %v1968
      %2002 = vmatprep.subr.bf16.mxu0 %v1971
      %2003 = vmatpush1.bf16.msra.mxu0 %v1970
      %2004 = vmatprep.subr.bf16.mxu0 %v1973
      %2005 = vmatpush1.bf16.msra.mxu0 %v1972
      %2006 = vmatprep.subr.bf16.mxu0 %v1975
      %2007 = vmatpush1.bf16.msra.mxu0 %v1974
      %2008 = vmatprep.subr.bf16.mxu0 %v1977
      %2009 = vmatpush1.bf16.msra.mxu0 %v1976
      %2010 = vmatprep.subr.bf16.mxu0 %v1979
      %2011 = vmatpush1.bf16.msra.mxu0 %v1978
      %2012 = vmatprep.subr.bf16.mxu0 %v1981
      %2013 = vmatpush1.bf16.msra.mxu0 %v1980
      %2014 = vmatprep.subr.bf16.mxu0 %v1983
      %2015 = vmatpush1.bf16.msra.mxu0 %v1982
      %2016 = vmatprep.subr.bf16.mxu0 0
      %2017 = vmatpush1.bf16.msra.mxu0 0
      %2018 = vmatprep.subr.bf16.mxu0 0
      %2019 = vmatpush1.bf16.msra.mxu0 0
      %2020 = vmatprep.subr.bf16.mxu0 0
      %2021 = vmatpush1.bf16.msra.mxu0 0
      %2022 = vmatprep.subr.bf16.mxu0 0
      %2023 = vmatpush1.bf16.msra.mxu0 0
      %2024 = vmatprep.subr.bf16.mxu0 0
      %2025 = vmatpush1.bf16.msra.mxu0 0
      %2026 = vmatprep.subr.bf16.mxu0 0
      %2027 = vmatpush1.bf16.msra.mxu0 0
      %2028 = vmatprep.subr.bf16.mxu0 0
      %2029 = vmatpush1.bf16.msra.mxu0 0
      %2030 = vmatprep.subr.bf16.mxu0 0
      %2031 = vmatpush1.bf16.msra.mxu0 0
      %2032 = vmatprep.mubr.bf16.mxu0 0
      %2033 = vmatmul.mubr.bf16.gmra.mrb[0].mxu0 %v1878
      %v2034 = vpop.f32.mrb[0].mxu0
      %v2035 = vadd.f32 0.0, %v2034
      %v2036 = vpop.f32.mrb[0].mxu0
      %v2037 = vadd.f32 0.0, %v2036
      %v2038 = vpop.f32.mrb[0].mxu0
      %v2039 = vadd.f32 0.0, %v2038
      %v2040 = vpop.f32.mrb[0].mxu0
      %v2041 = vadd.f32 0.0, %v2040
      %2042 = vmatprep.mubr.bf16.mxu0 0
      %2043 = vmatmul.mubr.bf16.gmra.mrb[0].mxu0 %v1887
      %v2044 = vpop.f32.mrb[0].mxu0
      %v2045 = vadd.f32 0.0, %v2044
      %v2046 = vpop.f32.mrb[0].mxu0
      %v2047 = vadd.f32 0.0, %v2046
      %v2048 = vpop.f32.mrb[0].mxu0
      %v2049 = vadd.f32 0.0, %v2048
      %v2050 = vpop.f32.mrb[0].mxu0
      %v2051 = vadd.f32 0.0, %v2050
      %2052 = vmatprep.mubr.bf16.mxu0 0
      %2053 = vmatmul.mubr.bf16.gmra.mrb[0].mxu0 %v1896
      %v2054 = vpop.f32.mrb[0].mxu0
      %v2055 = vadd.f32 0.0, %v2054
      %v2056 = vpop.f32.mrb[0].mxu0
      %v2057 = vadd.f32 0.0, %v2056
      %v2058 = vpop.f32.mrb[0].mxu0
      %v2059 = vadd.f32 0.0, %v2058
      %v2060 = vpop.f32.mrb[0].mxu0
      %v2061 = vadd.f32 0.0, %v2060
      %2062 = vmatprep.mubr.bf16.mxu0 0
      %2063 = vmatmul.mubr.bf16.gmra.mrb[0].mxu0 %v1905
      %v2064 = vpop.f32.mrb[0].mxu0
      %v2065 = vadd.f32 0.0, %v2064
      %v2066 = vpop.f32.mrb[0].mxu0
      %v2067 = vadd.f32 0.0, %v2066
      %v2068 = vpop.f32.mrb[0].mxu0
      %v2069 = vadd.f32 0.0, %v2068
      %v2070 = vpop.f32.mrb[0].mxu0
      %v2071 = vadd.f32 0.0, %v2070
      %2072 = vmatprep.mubr.bf16.mxu0 0
      %2073 = vmatmul.mubr.bf16.gmra.mrb[0].mxu0 %v1914
      %v2074 = vpop.f32.mrb[0].mxu0
      %v2075 = vadd.f32 0.0, %v2074
      %v2076 = vpop.f32.mrb[0].mxu0
      %v2077 = vadd.f32 0.0, %v2076
      %v2078 = vpop.f32.mrb[0].mxu0
      %v2079 = vadd.f32 0.0, %v2078
      %v2080 = vpop.f32.mrb[0].mxu0
      %v2081 = vadd.f32 0.0, %v2080
      %2082 = vdwg.mxu0
      %v2083 = vadd.f32 %v1820, %v2035
      %v2084 = vadd.f32 %v1821, %v2037
      %v2085 = vadd.f32 %v1822, %v2039
      %v2086 = vadd.f32 %v1823, %v2041
      %v2087 = vadd.f32 %v1824, %v2045
      %v2088 = vadd.f32 %v1825, %v2047
      %v2089 = vadd.f32 %v1826, %v2049
      %v2090 = vadd.f32 %v1827, %v2051
      %v2091 = vadd.f32 %v1828, %v2055
      %v2092 = vadd.f32 %v1829, %v2057
      %v2093 = vadd.f32 %v1830, %v2059
      %v2094 = vadd.f32 %v1831, %v2061
      %v2095 = vadd.f32 %v1832, %v2065
      %v2096 = vadd.f32 %v1833, %v2067
      %v2097 = vadd.f32 %v1834, %v2069
      %v2098 = vadd.f32 %v1835, %v2071
      %v2099 = vadd.f32 %v1836, %v2075
      %v2100 = vadd.f32 %v1837, %v2077
      %v2101 = vadd.f32 %v1838, %v2079
      %v2102 = vadd.f32 %v1839, %v2081
      %v2103 = vld [vmem:[%s165 + $0x8] sm:$0x8]
      %s2104 = scalar_lea.vmem %s1, 1024
      %v2105 = vld [vmem:[%s2104] sm:$0xff]
      %v2106 = vld [vmem:[%s2104 + $0x8] sm:$0xff]
      %v2107 = vld [vmem:[%s2104 + $0x10] sm:$0xff]
      %v2108 = vld [vmem:[%s2104 + $0x18] sm:$0xff]
      %v2109 = vld [vmem:[%s2104 + $0x20] sm:$0xff]
      %v2110 = vld [vmem:[%s2104 + $0x28] sm:$0xff]
      %v2111 = vld [vmem:[%s2104 + $0x30] sm:$0xff]
      %v2112 = vld [vmem:[%s2104 + $0x38] sm:$0xff]
      %v2113 = vld [vmem:[%s2104 + $0x40] sm:$0xff]
      %v2114 = vld [vmem:[%s2104 + $0x48] sm:$0xff]
      %v2115 = vld [vmem:[%s2104 + $0x50] sm:$0xff]
      %v2116 = vld [vmem:[%s2104 + $0x58] sm:$0xff]
      %v2117 = vld [vmem:[%s2104 + $0x60] sm:$0xff]
      %v2118 = vld [vmem:[%s2104 + $0x68] sm:$0xff]
      %v2119 = vld [vmem:[%s2104 + $0x70] sm:$0xff]
      %v2120 = vld [vmem:[%s2104 + $0x78] sm:$0xff]
      %v2122 = vunpack.c.l.b16 %v2103
      %v2123 = vpack.c.b16 %v1625, %v2122
      %vm2124 = vcmask 1044480
      %v2125 = vrot.slane %v2123, 3
      %v2126 = vrot.slane %v1636, 3
      %v2127 = vsel %vm2124, %v2125, %v2126
      %v2128 = vrot.slane %v1637, 3
      %v2129 = vsel %vm2124, %v2126, %v2128
      %v2130 = vrot.slane %v1638, 3
      %v2131 = vsel %vm2124, %v2128, %v2130
      %v2132 = vrot.slane %v1639, 3
      %v2133 = vsel %vm2124, %v2130, %v2132
      %v2134 = vrot.slane %v1860, 3
      %v2135 = vsel %vm2124, %v2132, %v2134
      %v2157 = vunpack.c.l.b16 %v2105
      %v2158 = vunpack.c.h.b16 %v2105
      %v2159 = vunpack.c.l.b16 %v2106
      %v2160 = vunpack.c.h.b16 %v2106
      %v2161 = vunpack.c.l.b16 %v2107
      %v2162 = vunpack.c.h.b16 %v2107
      %v2163 = vunpack.c.l.b16 %v2108
      %v2164 = vunpack.c.h.b16 %v2108
      %v2165 = vunpack.c.l.b16 %v2109
      %v2166 = vunpack.c.h.b16 %v2109
      %v2167 = vunpack.c.l.b16 %v2110
      %v2168 = vunpack.c.h.b16 %v2110
      %v2169 = vunpack.c.l.b16 %v2111
      %v2170 = vunpack.c.h.b16 %v2111
      %v2171 = vunpack.c.l.b16 %v2112
      %v2172 = vunpack.c.h.b16 %v2112
      %v2173 = vunpack.c.l.b16 %v2113
      %v2174 = vunpack.c.h.b16 %v2113
      %v2175 = vunpack.c.l.b16 %v2114
      %v2176 = vunpack.c.h.b16 %v2114
      %v2177 = vunpack.c.l.b16 %v2115
      %v2178 = vunpack.c.h.b16 %v2115
      %v2179 = vunpack.c.l.b16 %v2116
      %v2180 = vunpack.c.h.b16 %v2116
      %v2181 = vunpack.c.l.b16 %v2117
      %v2182 = vunpack.c.h.b16 %v2117
      %v2183 = vunpack.c.l.b16 %v2118
      %v2184 = vunpack.c.h.b16 %v2118
      %v2185 = vunpack.c.l.b16 %v2119
      %v2186 = vunpack.c.h.b16 %v2119
      %v2187 = vunpack.c.l.b16 %v2120
      %v2188 = vunpack.c.h.b16 %v2120
      %v2189 = vpack.c.b16 %v2159, %v2157
      %v2190 = vpack.c.b16 %v2160, %v2158
      %v2191 = vpack.c.b16 %v2163, %v2161
      %v2192 = vpack.c.b16 %v2164, %v2162
      %v2193 = vpack.c.b16 %v2167, %v2165
      %v2194 = vpack.c.b16 %v2168, %v2166
      %v2195 = vpack.c.b16 %v2171, %v2169
      %v2196 = vpack.c.b16 %v2172, %v2170
      %v2197 = vpack.c.b16 %v2175, %v2173
      %v2198 = vpack.c.b16 %v2176, %v2174
      %v2199 = vpack.c.b16 %v2179, %v2177
      %v2200 = vpack.c.b16 %v2180, %v2178
      %v2201 = vpack.c.b16 %v2183, %v2181
      %v2202 = vpack.c.b16 %v2184, %v2182
      %v2203 = vpack.c.b16 %v2187, %v2185
      %v2204 = vpack.c.b16 %v2188, %v2186
      %2221 = vmatprep.subr.bf16.mxu0 %v2190
      %2222 = vmatpush1.bf16.msra.mxu0 %v2189
      %2223 = vmatprep.subr.bf16.mxu0 %v2192
      %2224 = vmatpush1.bf16.msra.mxu0 %v2191
      %2225 = vmatprep.subr.bf16.mxu0 %v2194
      %2226 = vmatpush1.bf16.msra.mxu0 %v2193
      %2227 = vmatprep.subr.bf16.mxu0 %v2196
      %2228 = vmatpush1.bf16.msra.mxu0 %v2195
      %2229 = vmatprep.subr.bf16.mxu0 %v2198
      %2230 = vmatpush1.bf16.msra.mxu0 %v2197
      %2231 = vmatprep.subr.bf16.mxu0 %v2200
      %2232 = vmatpush1.bf16.msra.mxu0 %v2199
      %2233 = vmatprep.subr.bf16.mxu0 %v2202
      %2234 = vmatpush1.bf16.msra.mxu0 %v2201
      %2235 = vmatprep.subr.bf16.mxu0 %v2204
      %2236 = vmatpush1.bf16.msra.mxu0 %v2203
      %2237 = vmatprep.subr.bf16.mxu0 0
      %2238 = vmatpush1.bf16.msra.mxu0 0
      %2239 = vmatprep.subr.bf16.mxu0 0
      %2240 = vmatpush1.bf16.msra.mxu0 0
      %2241 = vmatprep.subr.bf16.mxu0 0
      %2242 = vmatpush1.bf16.msra.mxu0 0
      %2243 = vmatprep.subr.bf16.mxu0 0
      %2244 = vmatpush1.bf16.msra.mxu0 0
      %2245 = vmatprep.subr.bf16.mxu0 0
      %2246 = vmatpush1.bf16.msra.mxu0 0
      %2247 = vmatprep.subr.bf16.mxu0 0
      %2248 = vmatpush1.bf16.msra.mxu0 0
      %2249 = vmatprep.subr.bf16.mxu0 0
      %2250 = vmatpush1.bf16.msra.mxu0 0
      %2251 = vmatprep.subr.bf16.mxu0 0
      %2252 = vmatpush1.bf16.msra.mxu0 0
      %2253 = vmatprep.mubr.bf16.mxu0 0
      %2254 = vmatmul.mubr.bf16.gmra.mrb[0].mxu0 %v2127
      %v2255 = vpop.f32.mrb[0].mxu0
      %v2256 = vadd.f32 0.0, %v2255
      %v2257 = vpop.f32.mrb[0].mxu0
      %v2258 = vadd.f32 0.0, %v2257
      %v2259 = vpop.f32.mrb[0].mxu0
      %v2260 = vadd.f32 0.0, %v2259
      %v2261 = vpop.f32.mrb[0].mxu0
      %v2262 = vadd.f32 0.0, %v2261
      %2263 = vmatprep.mubr.bf16.mxu0 0
      %2264 = vmatmul.mubr.bf16.gmra.mrb[0].mxu0 %v2129
      %v2265 = vpop.f32.mrb[0].mxu0
      %v2266 = vadd.f32 0.0, %v2265
      %v2267 = vpop.f32.mrb[0].mxu0
      %v2268 = vadd.f32 0.0, %v2267
      %v2269 = vpop.f32.mrb[0].mxu0
      %v2270 = vadd.f32 0.0, %v2269
      %v2271 = vpop.f32.mrb[0].mxu0
      %v2272 = vadd.f32 0.0, %v2271
      %2273 = vmatprep.mubr.bf16.mxu0 0
      %2274 = vmatmul.mubr.bf16.gmra.mrb[0].mxu0 %v2131
      %v2275 = vpop.f32.mrb[0].mxu0
      %v2276 = vadd.f32 0.0, %v2275
      %v2277 = vpop.f32.mrb[0].mxu0
      %v2278 = vadd.f32 0.0, %v2277
      %v2279 = vpop.f32.mrb[0].mxu0
      %v2280 = vadd.f32 0.0, %v2279
      %v2281 = vpop.f32.mrb[0].mxu0
      %v2282 = vadd.f32 0.0, %v2281
      %2283 = vmatprep.mubr.bf16.mxu0 0
      %2284 = vmatmul.mubr.bf16.gmra.mrb[0].mxu0 %v2133
      %v2285 = vpop.f32.mrb[0].mxu0
      %v2286 = vadd.f32 0.0, %v2285
      %v2287 = vpop.f32.mrb[0].mxu0
      %v2288 = vadd.f32 0.0, %v2287
      %v2289 = vpop.f32.mrb[0].mxu0
      %v2290 = vadd.f32 0.0, %v2289
      %v2291 = vpop.f32.mrb[0].mxu0
      %v2292 = vadd.f32 0.0, %v2291
      %2293 = vmatprep.mubr.bf16.mxu0 0
      %2294 = vmatmul.mubr.bf16.gmra.mrb[0].mxu0 %v2135
      %v2295 = vpop.f32.mrb[0].mxu0
      %v2296 = vadd.f32 0.0, %v2295
      %v2297 = vpop.f32.mrb[0].mxu0
      %v2298 = vadd.f32 0.0, %v2297
      %v2299 = vpop.f32.mrb[0].mxu0
      %v2300 = vadd.f32 0.0, %v2299
      %v2301 = vpop.f32.mrb[0].mxu0
      %v2302 = vadd.f32 0.0, %v2301
      %2303 = vdwg.mxu0
      %v2304 = vadd.f32 %v2083, %v2256
      %v2305 = vadd.f32 %v2084, %v2258
      %v2306 = vadd.f32 %v2085, %v2260
      %v2307 = vadd.f32 %v2086, %v2262
      %v2308 = vadd.f32 %v2087, %v2266
      %v2309 = vadd.f32 %v2088, %v2268
      %v2310 = vadd.f32 %v2089, %v2270
      %v2311 = vadd.f32 %v2090, %v2272
      %v2312 = vadd.f32 %v2091, %v2276
      %v2313 = vadd.f32 %v2092, %v2278
      %v2314 = vadd.f32 %v2093, %v2280
      %v2315 = vadd.f32 %v2094, %v2282
      %v2316 = vadd.f32 %v2095, %v2286
      %v2317 = vadd.f32 %v2096, %v2288
      %v2318 = vadd.f32 %v2097, %v2290
      %v2319 = vadd.f32 %v2098, %v2292
      %v2320 = vadd.f32 %v2099, %v2296
      %v2321 = vadd.f32 %v2100, %v2298
      %v2322 = vadd.f32 %v2101, %v2300
      %v2323 = vadd.f32 %v2102, %v2302
      %2334 = vrot.lane.b32.xlu0 %v2304, 64
      %v2335 = vpop.permute.xlu0 %2334
      %2336 = vrot.lane.b32.xlu0 %v2306, 64
      %v2337 = vpop.permute.xlu0 %2336
      %2338 = vrot.lane.b32.xlu0 %v2308, 64
      %v2339 = vpop.permute.xlu0 %2338
      %2340 = vrot.lane.b32.xlu0 %v2310, 64
      %v2341 = vpop.permute.xlu0 %2340
      %2342 = vrot.lane.b32.xlu0 %v2312, 64
      %v2343 = vpop.permute.xlu0 %2342
      %2344 = vrot.lane.b32.xlu0 %v2314, 64
      %v2345 = vpop.permute.xlu0 %2344
      %2346 = vrot.lane.b32.xlu0 %v2316, 64
      %v2347 = vpop.permute.xlu0 %2346
      %2348 = vrot.lane.b32.xlu0 %v2318, 64
      %v2349 = vpop.permute.xlu0 %2348
      %2350 = vrot.lane.b32.xlu0 %v2320, 64
      %v2351 = vpop.permute.xlu0 %2350
      %2352 = vrot.lane.b32.xlu0 %v2322, 64
      %v2353 = vpop.permute.xlu0 %2352
      %v2364 = vmax.f32 %v2304, %v2335
      %v2365 = vmax.f32 %v2306, %v2337
      %v2366 = vmax.f32 %v2308, %v2339
      %v2367 = vmax.f32 %v2310, %v2341
      %v2368 = vmax.f32 %v2312, %v2343
      %v2369 = vmax.f32 %v2314, %v2345
      %v2370 = vmax.f32 %v2316, %v2347
      %v2371 = vmax.f32 %v2318, %v2349
      %v2372 = vmax.f32 %v2320, %v2351
      %v2373 = vmax.f32 %v2322, %v2353
      %2384 = vrot.lane.b32.xlu0 %v2305, 64
      %v2385 = vpop.permute.xlu0 %2384
      %2386 = vrot.lane.b32.xlu0 %v2307, 64
      %v2387 = vpop.permute.xlu0 %2386
      %2388 = vrot.lane.b32.xlu0 %v2309, 64
      %v2389 = vpop.permute.xlu0 %2388
      %2390 = vrot.lane.b32.xlu0 %v2311, 64
      %v2391 = vpop.permute.xlu0 %2390
      %2392 = vrot.lane.b32.xlu0 %v2313, 64
      %v2393 = vpop.permute.xlu0 %2392
      %2394 = vrot.lane.b32.xlu0 %v2315, 64
      %v2395 = vpop.permute.xlu0 %2394
      %2396 = vrot.lane.b32.xlu0 %v2317, 64
      %v2397 = vpop.permute.xlu0 %2396
      %2398 = vrot.lane.b32.xlu0 %v2319, 64
      %v2399 = vpop.permute.xlu0 %2398
      %2400 = vrot.lane.b32.xlu0 %v2321, 64
      %v2401 = vpop.permute.xlu0 %2400
      %2402 = vrot.lane.b32.xlu0 %v2323, 64
      %v2403 = vpop.permute.xlu0 %2402
      %v2414 = vmax.f32 %v2305, %v2385
      %v2415 = vmax.f32 %v2307, %v2387
      %v2416 = vmax.f32 %v2309, %v2389
      %v2417 = vmax.f32 %v2311, %v2391
      %v2418 = vmax.f32 %v2313, %v2393
      %v2419 = vmax.f32 %v2315, %v2395
      %v2420 = vmax.f32 %v2317, %v2397
      %v2421 = vmax.f32 %v2319, %v2399
      %v2422 = vmax.f32 %v2321, %v2401
      %v2423 = vmax.f32 %v2323, %v2403
      %v2424 = vmax.f32 %v2364, %v2414
      %v2425 = vmax.f32 %v2365, %v2415
      %v2426 = vmax.f32 %v2366, %v2416
      %v2427 = vmax.f32 %v2367, %v2417
      %v2428 = vmax.f32 %v2368, %v2418
      %v2429 = vmax.f32 %v2369, %v2419
      %v2430 = vmax.f32 %v2370, %v2420
      %v2431 = vmax.f32 %v2371, %v2421
      %v2432 = vmax.f32 %v2372, %v2422
      %v2433 = vmax.f32 %v2373, %v2423
      %v2434 = vld [vmem:[%s2] sm:$0x1]
      %v2436 = vlaneseq
      %v2437 = vshrl.u32 %v2436, 7
      %v2438 = vsub.s32 0, %v2437
      %v2439 = vrot.slane %v2434, %v2438
      %v2441 = vadd.f32 %v2424, %v2439
      %v2442 = vadd.f32 %v2425, %v2439
      %v2443 = vadd.f32 %v2426, %v2439
      %v2444 = vadd.f32 %v2427, %v2439
      %v2445 = vadd.f32 %v2428, %v2439
      %v2446 = vadd.f32 %v2429, %v2439
      %v2447 = vadd.f32 %v2430, %v2439
      %v2448 = vadd.f32 %v2431, %v2439
      %v2449 = vadd.f32 %v2432, %v2439
      %v2450 = vadd.f32 %v2433, %v2439
      %v2451 = vmax.f32 %v2441, 0.0
      %v2452 = vmax.f32 %v2442, 0.0
      %v2453 = vmax.f32 %v2443, 0.0
      %v2454 = vmax.f32 %v2444, 0.0
      %v2455 = vmax.f32 %v2445, 0.0
      %v2456 = vmax.f32 %v2446, 0.0
      %v2457 = vmax.f32 %v2447, 0.0
      %v2458 = vmax.f32 %v2448, 0.0
      %v2459 = vmax.f32 %v2449, 0.0
      %v2460 = vmax.f32 %v2450, 0.0
      %v2461 = vpack.c.bf16 %v2452, %v2451
      %v2462 = vpack.c.bf16 %v2454, %v2453
      %v2463 = vpack.c.bf16 %v2456, %v2455
      %v2464 = vpack.c.bf16 %v2458, %v2457
      %v2465 = vpack.c.bf16 %v2460, %v2459
      %v2471 = vunpack.c.l.b16 %v2461
      %v2472 = vunpack.c.h.b16 %v2461
      %v2473 = vunpack.c.l.b16 %v2462
      %v2474 = vunpack.c.h.b16 %v2462
      %v2475 = vunpack.c.l.b16 %v2463
      %v2476 = vunpack.c.h.b16 %v2463
      %v2477 = vunpack.c.l.b16 %v2464
      %v2478 = vunpack.c.h.b16 %v2464
      %v2479 = vunpack.c.l.b16 %v2465
      %v2480 = vunpack.c.h.b16 %v2465
      %v2481 = vpack.c.b16 %v2471, %v2471
      %v2482 = vpack.c.b16 %v2472, %v2472
      %v2483 = vpack.c.b16 %v2473, %v2473
      %v2484 = vpack.c.b16 %v2474, %v2474
      %v2485 = vpack.c.b16 %v2475, %v2475
      %v2486 = vpack.c.b16 %v2476, %v2476
      %v2487 = vpack.c.b16 %v2477, %v2477
      %v2488 = vpack.c.b16 %v2478, %v2478
      %v2489 = vpack.c.b16 %v2479, %v2479
      %v2490 = vpack.c.b16 %v2480, %v2480
      %vm2501 = vcmask 519168
      %2502 = vst.msk [vmem:[%s170] sm:$0xf] %vm2501, %v2481
      %2503 = vst.msk [vmem:[%s170 + $0x4] sm:$0xf] %vm2501, %v2482
      %2504 = vst.msk [vmem:[%s170 + $0x8] sm:$0xf] %vm2501, %v2483
      %2505 = vst.msk [vmem:[%s170 + $0xc] sm:$0xf] %vm2501, %v2484
      %2506 = vst.msk [vmem:[%s170 + $0x10] sm:$0xf] %vm2501, %v2485
      %2507 = vst.msk [vmem:[%s170 + $0x14] sm:$0xf] %vm2501, %v2486
      %2508 = vst.msk [vmem:[%s170 + $0x18] sm:$0xf] %vm2501, %v2487
      %2509 = vst.msk [vmem:[%s170 + $0x1c] sm:$0xf] %vm2501, %v2488
      %2510 = vst.msk [vmem:[%s170 + $0x20] sm:$0xf] %vm2501, %v2489
      %2511 = vst.msk [vmem:[%s170 + $0x24] sm:$0xf] %vm2501, %v2490
      %p2512 = scmp.lt.s32.totalorder %s14, 1
      %s2513 = scalar_select %p2512, %s14, 1
      %s2514 = smul.addr %s2513, 10
      %s2515 = smul.addr %s2514, 4
      %s2516 = scalar_lea.vmem %s3, %s2515
      // Predicated region
      $region33: #{example_model_forward.5} parent=31 // pred_check
        %p2517 = pneg %p100
      $region34: #{example_model_forward.5} parent=31 // pred_check_branch
        %2519 = sbr.rel (%p2517) target = $region36
      $region35: #{example_model_forward.5} parent=31 // pred_region
        _
      $region36: #{example_model_forward.5} parent=31 // pred_fallthru
        _
    $region32: #{example_model_forward.5} parent=5 // pred_fallthru
      _
    %p2520 = scmp.le.s32.totalorder 2, %s9
    // Predicated region
    $region37: #{example_model_forward.5} parent=5 // pred_check
      %p2521 = pneg %p2520
    $region38: #{example_model_forward.5} parent=5 // pred_check_branch
      %2523 = sbr.rel (%p2521) target = $region40
    $region39: #{example_model_forward.5} parent=5 // pred_region
      %s2524 = ssub.s32 %s9, 2
      // Predicated region
      $region41: #{example_model_forward.5} parent=39 // pred_check
        %p2525 = pneg %p106
      $region42: #{example_model_forward.5} parent=39 // pred_check_branch
        %2527 = sbr.rel (%p2525) target = $region44
      $region43: #{example_model_forward.5} parent=39 // pred_region
        %p2528 = scmp.lt.s32.totalorder %s15, 1
        %s2529 = scalar_select %p2528, %s15, 1
        %s2530 = smul.addr %s2529, 10
        %s2531 = smul.addr %s2530, 4
        %s2532 = scalar_lea.vmem %s3, %s2531
      $region44: #{example_model_forward.5} parent=39 // pred_fallthru
        _
    $region40: #{example_model_forward.5} parent=5 // pred_fallthru
      _
  $region6: #{example_model_forward.5} parent=0 // loop_footer
    %s13 = sadd.s32 1, %s9
  $region7: #{example_model_forward.5} parent=0 // loop_footer_branch
    %8 = sbr.rel target = $region3
  $region8: #{example_model_forward.5} parent=0 // loop_exit
    _

// kernel: example_model_forward.7
$region0: #{example_model_forward.7}
  #allocation0 [shape = 'u32[]', space=smem, size = 0x4, offset = 0x4, fixed_abs, tag = 'smem constant byte address 0x4 - core index']
  #allocation1 [shape = 'u32[144,128]{1,0:T(1,128)}', space=vmem, size = 0x12000, scoped, tag = 'internal scratch']
  %s0 = inlined_call_operand.vmem [shape: bf16[2,2048], index: 0, kind: input, shape index: {}]
  %s1 = inlined_call_operand.vmem [shape: bf16[2048,128], index: 1, kind: input, shape index: {}]
  %s2 = inlined_call_operand.vmem [shape: f32[1,128], index: 2, kind: input, shape index: {}]
  %s3 = inlined_call_operand.vmem [shape: bf16[128,128], index: 3, kind: input, shape index: {}]
  %s4 = inlined_call_operand.vmem [shape: f32[1,128], index: 4, kind: input, shape index: {}]
  %s5 = inlined_call_operand.hbm [shape: f32[2,128], index: 5, kind: output, shape index: {}]
  %s6 = sld [smem:[#allocation0]]
  $region30: #{example_model_forward.7} parent=0
    _
  %s8 = ssub.s32 1, %s6
  %s9 = scalar_select 0, %s8, %s6
  $region1: #{example_model_forward.7} parent=0
    #allocation2 [shape = 'u8[1024]{0}', space=vmem, size = 0x400, scoped, tag = 'output window, operand 0, single buffered']
    #allocation3 [shape = 's32[1]{0}', space=sflag, size = 0x4, scoped, tag = 'scoped memory for example_model_forward.7']
    %10 = vsyncpa [#allocation3], 0
    // Predicated region
    $region2: #{example_model_forward.7} parent=1 // pred_check
      _
    $region3: #{example_model_forward.7} parent=1 // pred_check_branch
      %12 = sbr.rel (0) target = $region5
    $region4: #{example_model_forward.7} parent=1 // pred_region
      _
    $region5: #{example_model_forward.7} parent=1 // pred_fallthru
      _
    // Predicated region
    $region6: #{example_model_forward.7} parent=1 // pred_check
      _
    $region7: #{example_model_forward.7} parent=1 // pred_check_branch
      %14 = sbr.rel (0) target = $region9
    $region8: #{example_model_forward.7} parent=1 // pred_region
      _
    $region9: #{example_model_forward.7} parent=1 // pred_fallthru
      _
    // Predicated region
    $region10: #{example_model_forward.7} parent=1 // pred_check
      _
    $region11: #{example_model_forward.7} parent=1 // pred_check_branch
      %16 = sbr.rel (0) target = $region13
    $region12: #{example_model_forward.7} parent=1 // pred_region
      _
    $region13: #{example_model_forward.7} parent=1 // pred_fallthru
      _
    // Predicated region
    $region14: #{example_model_forward.7} parent=1 // pred_check
      _
    $region15: #{example_model_forward.7} parent=1 // pred_check_branch
      %18 = sbr.rel (0) target = $region17
    $region16: #{example_model_forward.7} parent=1 // pred_region
      _
    $region17: #{example_model_forward.7} parent=1 // pred_fallthru
      _
    // Predicated region
    $region18: #{example_model_forward.7} parent=1 // pred_check
      _
    $region19: #{example_model_forward.7} parent=1 // pred_check_branch
      %20 = sbr.rel (0) target = $region21
    $region20: #{example_model_forward.7} parent=1 // pred_region
      _
    $region21: #{example_model_forward.7} parent=1 // pred_fallthru
      _
    %v22 = vld [vmem:[%s0] sm:$0xff]
    %v23 = vld [vmem:[%s0 + $0x8] sm:$0xff]
    %v24 = vld [vmem:[%s1] sm:$0xf]
    %v25 = vld [vmem:[%s1 + $0x4] sm:$0xf]
    %v26 = vld [vmem:[%s1 + $0x8] sm:$0xf]
    %v27 = vld [vmem:[%s1 + $0xc] sm:$0xf]
    %v28 = vld [vmem:[%s1 + $0x10] sm:$0xf]
    %v29 = vld [vmem:[%s1 + $0x14] sm:$0xf]
    %v30 = vld [vmem:[%s1 + $0x18] sm:$0xf]
    %v31 = vld [vmem:[%s1 + $0x1c] sm:$0xf]
    %v32 = vld [vmem:[%s1 + $0x20] sm:$0xf]
    %v33 = vld [vmem:[%s1 + $0x24] sm:$0xf]
    %v34 = vld [vmem:[%s1 + $0x28] sm:$0xf]
    %v35 = vld [vmem:[%s1 + $0x2c] sm:$0xf]
    %v36 = vld [vmem:[%s1 + $0x30] sm:$0xf]
    %v37 = vld [vmem:[%s1 + $0x34] sm:$0xf]
    %v38 = vld [vmem:[%s1 + $0x38] sm:$0xf]
    %v39 = vld [vmem:[%s1 + $0x3c] sm:$0xf]
    %v40 = vld [vmem:[%s1 + $0x40] sm:$0xf]
    %v41 = vld [vmem:[%s1 + $0x44] sm:$0xf]
    %v42 = vld [vmem:[%s1 + $0x48] sm:$0xf]
    %v43 = vld [vmem:[%s1 + $0x4c] sm:$0xf]
    %v44 = vld [vmem:[%s1 + $0x50] sm:$0xf]
    %v45 = vld [vmem:[%s1 + $0x54] sm:$0xf]
    %v46 = vld [vmem:[%s1 + $0x58] sm:$0xf]
    %v47 = vld [vmem:[%s1 + $0x5c] sm:$0xf]
    %v48 = vld [vmem:[%s1 + $0x60] sm:$0xf]
    %v49 = vld [vmem:[%s1 + $0x64] sm:$0xf]
    %v50 = vld [vmem:[%s1 + $0x68] sm:$0xf]
    %v51 = vld [vmem:[%s1 + $0x6c] sm:$0xf]
    %v52 = vld [vmem:[%s1 + $0x70] sm:$0xf]
    %v53 = vld [vmem:[%s1 + $0x74] sm:$0xf]
    %v54 = vld [vmem:[%s1 + $0x78] sm:$0xf]
    %v55 = vld [vmem:[%s1 + $0x7c] sm:$0xf]
    %v56 = vld [vmem:[%s1 + $0x80] sm:$0xf]
    %v57 = vld [vmem:[%s1 + $0x84] sm:$0xf]
    %v58 = vld [vmem:[%s1 + $0x88] sm:$0xf]
    %v59 = vld [vmem:[%s1 + $0x8c] sm:$0xf]
    %v60 = vld [vmem:[%s1 + $0x90] sm:$0xf]
    %v61 = vld [vmem:[%s1 + $0x94] sm:$0xf]
    %v62 = vld [vmem:[%s1 + $0x98] sm:$0xf]
    %v63 = vld [vmem:[%s1 + $0x9c] sm:$0xf]
    %v64 = vld [vmem:[%s1 + $0xa0] sm:$0xf]
    %v65 = vld [vmem:[%s1 + $0xa4] sm:$0xf]
    %v66 = vld [vmem:[%s1 + $0xa8] sm:$0xf]
    %v67 = vld [vmem:[%s1 + $0xac] sm:$0xf]
    %v68 = vld [vmem:[%s1 + $0xb0] sm:$0xf]
    %v69 = vld [vmem:[%s1 + $0xb4] sm:$0xf]
    %v70 = vld [vmem:[%s1 + $0xb8] sm:$0xf]
    %v71 = vld [vmem:[%s1 + $0xbc] sm:$0xf]
    %v72 = vld [vmem:[%s1 + $0xc0] sm:$0xf]
    %v73 = vld [vmem:[%s1 + $0xc4] sm:$0xf]
    %v74 = vld [vmem:[%s1 + $0xc8] sm:$0xf]
    %v75 = vld [vmem:[%s1 + $0xcc] sm:$0xf]
    %v76 = vld [vmem:[%s1 + $0xd0] sm:$0xf]
    %v77 = vld [vmem:[%s1 + $0xd4] sm:$0xf]
    %v78 = vld [vmem:[%s1 + $0xd8] sm:$0xf]
    %v79 = vld [vmem:[%s1 + $0xdc] sm:$0xf]
    %v80 = vld [vmem:[%s1 + $0xe0] sm:$0xf]
    %v81 = vld [vmem:[%s1 + $0xe4] sm:$0xf]
    %v82 = vld [vmem:[%s1 + $0xe8] sm:$0xf]
    %v83 = vld [vmem:[%s1 + $0xec] sm:$0xf]
    %v84 = vld [vmem:[%s1 + $0xf0] sm:$0xf]
    %v85 = vld [vmem:[%s1 + $0xf4] sm:$0xf]
    %v86 = vld [vmem:[%s1 + $0xf8] sm:$0xf]
    %v87 = vld [vmem:[%s1 + $0xfc] sm:$0xf]
    %v88 = vld [vmem:[%s1 + $0x100] sm:$0xf]
    %v89 = vld [vmem:[%s1 + $0x104] sm:$0xf]
    %v90 = vld [vmem:[%s1 + $0x108] sm:$0xf]
    %v91 = vld [vmem:[%s1 + $0x10c] sm:$0xf]
    %v92 = vld [vmem:[%s1 + $0x110] sm:$0xf]
    %v93 = vld [vmem:[%s1 + $0x114] sm:$0xf]
    %v94 = vld [vmem:[%s1 + $0x118] sm:$0xf]
    %v95 = vld [vmem:[%s1 + $0x11c] sm:$0xf]
    %v96 = vld [vmem:[%s1 + $0x120] sm:$0xf]
    %v97 = vld [vmem:[%s1 + $0x124] sm:$0xf]
    %v98 = vld [vmem:[%s1 + $0x128] sm:$0xf]
    %v99 = vld [vmem:[%s1 + $0x12c] sm:$0xf]
    %v100 = vld [vmem:[%s1 + $0x130] sm:$0xf]
    %v101 = vld [vmem:[%s1 + $0x134] sm:$0xf]
    %v102 = vld [vmem:[%s1 + $0x138] sm:$0xf]
    %v103 = vld [vmem:[%s1 + $0x13c] sm:$0xf]
    %v104 = vld [vmem:[%s1 + $0x140] sm:$0xf]
    %v105 = vld [vmem:[%s1 + $0x144] sm:$0xf]
    %v106 = vld [vmem:[%s1 + $0x148] sm:$0xf]
    %v107 = vld [vmem:[%s1 + $0x14c] sm:$0xf]
    %v108 = vld [vmem:[%s1 + $0x150] sm:$0xf]
    %v109 = vld [vmem:[%s1 + $0x154] sm:$0xf]
    %v110 = vld [vmem:[%s1 + $0x158] sm:$0xf]
    %v111 = vld [vmem:[%s1 + $0x15c] sm:$0xf]
    %v112 = vld [vmem:[%s1 + $0x160] sm:$0xf]
    %v113 = vld [vmem:[%s1 + $0x164] sm:$0xf]
    %v114 = vld [vmem:[%s1 + $0x168] sm:$0xf]
    %v115 = vld [vmem:[%s1 + $0x16c] sm:$0xf]
    %v116 = vld [vmem:[%s1 + $0x170] sm:$0xf]
    %v117 = vld [vmem:[%s1 + $0x174] sm:$0xf]
    %v118 = vld [vmem:[%s1 + $0x178] sm:$0xf]
    %v119 = vld [vmem:[%s1 + $0x17c] sm:$0xf]
    %v120 = vld [vmem:[%s1 + $0x180] sm:$0xf]
    %v121 = vld [vmem:[%s1 + $0x184] sm:$0xf]
    %v122 = vld [vmem:[%s1 + $0x188] sm:$0xf]
    %v123 = vld [vmem:[%s1 + $0x18c] sm:$0xf]
    %v124 = vld [vmem:[%s1 + $0x190] sm:$0xf]
    %v125 = vld [vmem:[%s1 + $0x194] sm:$0xf]
    %v126 = vld [vmem:[%s1 + $0x198] sm:$0xf]
    %v127 = vld [vmem:[%s1 + $0x19c] sm:$0xf]
    %v128 = vld [vmem:[%s1 + $0x1a0] sm:$0xf]
    %v129 = vld [vmem:[%s1 + $0x1a4] sm:$0xf]
    %v130 = vld [vmem:[%s1 + $0x1a8] sm:$0xf]
    %v131 = vld [vmem:[%s1 + $0x1ac] sm:$0xf]
    %v132 = vld [vmem:[%s1 + $0x1b0] sm:$0xf]
    %v133 = vld [vmem:[%s1 + $0x1b4] sm:$0xf]
    %v134 = vld [vmem:[%s1 + $0x1b8] sm:$0xf]
    %v135 = vld [vmem:[%s1 + $0x1bc] sm:$0xf]
    %v136 = vld [vmem:[%s1 + $0x1c0] sm:$0xf]
    %v137 = vld [vmem:[%s1 + $0x1c4] sm:$0xf]
    %v138 = vld [vmem:[%s1 + $0x1c8] sm:$0xf]
    %v139 = vld [vmem:[%s1 + $0x1cc] sm:$0xf]
    %v140 = vld [vmem:[%s1 + $0x1d0] sm:$0xf]
    %v141 = vld [vmem:[%s1 + $0x1d4] sm:$0xf]
    %v142 = vld [vmem:[%s1 + $0x1d8] sm:$0xf]
    %v143 = vld [vmem:[%s1 + $0x1dc] sm:$0xf]
    %v144 = vld [vmem:[%s1 + $0x1e0] sm:$0xf]
    %v145 = vld [vmem:[%s1 + $0x1e4] sm:$0xf]
    %v146 = vld [vmem:[%s1 + $0x1e8] sm:$0xf]
    %v147 = vld [vmem:[%s1 + $0x1ec] sm:$0xf]
    %v148 = vld [vmem:[%s1 + $0x1f0] sm:$0xf]
    %v149 = vld [vmem:[%s1 + $0x1f4] sm:$0xf]
    %v150 = vld [vmem:[%s1 + $0x1f8] sm:$0xf]
    %v151 = vld [vmem:[%s1 + $0x1fc] sm:$0xf]
    %v152 = vld [vmem:[%s1 + $0x200] sm:$0xf]
    %v153 = vld [vmem:[%s1 + $0x204] sm:$0xf]
    %v154 = vld [vmem:[%s1 + $0x208] sm:$0xf]
    %v155 = vld [vmem:[%s1 + $0x20c] sm:$0xf]
    %v156 = vld [vmem:[%s1 + $0x210] sm:$0xf]
    %v157 = vld [vmem:[%s1 + $0x214] sm:$0xf]
    %v158 = vld [vmem:[%s1 + $0x218] sm:$0xf]
    %v159 = vld [vmem:[%s1 + $0x21c] sm:$0xf]
    %v160 = vld [vmem:[%s1 + $0x220] sm:$0xf]
    %v161 = vld [vmem:[%s1 + $0x224] sm:$0xf]
    %v162 = vld [vmem:[%s1 + $0x228] sm:$0xf]
    %v163 = vld [vmem:[%s1 + $0x22c] sm:$0xf]
    %v164 = vld [vmem:[%s1 + $0x230] sm:$0xf]
    %v165 = vld [vmem:[%s1 + $0x234] sm:$0xf]
    %v166 = vld [vmem:[%s1 + $0x238] sm:$0xf]
    %v167 = vld [vmem:[%s1 + $0x23c] sm:$0xf]
    %v168 = vld [vmem:[%s1 + $0x240] sm:$0xf]
    %v169 = vld [vmem:[%s1 + $0x244] sm:$0xf]
    %v170 = vld [vmem:[%s1 + $0x248] sm:$0xf]
    %v171 = vld [vmem:[%s1 + $0x24c] sm:$0xf]
    %v172 = vld [vmem:[%s1 + $0x250] sm:$0xf]
    %v173 = vld [vmem:[%s1 + $0x254] sm:$0xf]
    %v174 = vld [vmem:[%s1 + $0x258] sm:$0xf]
    %v175 = vld [vmem:[%s1 + $0x25c] sm:$0xf]
    %v176 = vld [vmem:[%s1 + $0x260] sm:$0xf]
    %v177 = vld [vmem:[%s1 + $0x264] sm:$0xf]
    %v178 = vld [vmem:[%s1 + $0x268] sm:$0xf]
    %v179 = vld [vmem:[%s1 + $0x26c] sm:$0xf]
    %v180 = vld [vmem:[%s1 + $0x270] sm:$0xf]
    %v181 = vld [vmem:[%s1 + $0x274] sm:$0xf]
    %v182 = vld [vmem:[%s1 + $0x278] sm:$0xf]
    %v183 = vld [vmem:[%s1 + $0x27c] sm:$0xf]
    %v184 = vld [vmem:[%s1 + $0x280] sm:$0xf]
    %v185 = vld [vmem:[%s1 + $0x284] sm:$0xf]
    %v186 = vld [vmem:[%s1 + $0x288] sm:$0xf]
    %v187 = vld [vmem:[%s1 + $0x28c] sm:$0xf]
    %v188 = vld [vmem:[%s1 + $0x290] sm:$0xf]
    %v189 = vld [vmem:[%s1 + $0x294] sm:$0xf]
    %v190 = vld [vmem:[%s1 + $0x298] sm:$0xf]
    %v191 = vld [vmem:[%s1 + $0x29c] sm:$0xf]
    %v192 = vld [vmem:[%s1 + $0x2a0] sm:$0xf]
    %v193 = vld [vmem:[%s1 + $0x2a4] sm:$0xf]
    %v194 = vld [vmem:[%s1 + $0x2a8] sm:$0xf]
    %v195 = vld [vmem:[%s1 + $0x2ac] sm:$0xf]
    %v196 = vld [vmem:[%s1 + $0x2b0] sm:$0xf]
    %v197 = vld [vmem:[%s1 + $0x2b4] sm:$0xf]
    %v198 = vld [vmem:[%s1 + $0x2b8] sm:$0xf]
    %v199 = vld [vmem:[%s1 + $0x2bc] sm:$0xf]
    %v200 = vld [vmem:[%s1 + $0x2c0] sm:$0xf]
    %v201 = vld [vmem:[%s1 + $0x2c4] sm:$0xf]
    %v202 = vld [vmem:[%s1 + $0x2c8] sm:$0xf]
    %v203 = vld [vmem:[%s1 + $0x2cc] sm:$0xf]
    %v204 = vld [vmem:[%s1 + $0x2d0] sm:$0xf]
    %v205 = vld [vmem:[%s1 + $0x2d4] sm:$0xf]
    %v206 = vld [vmem:[%s1 + $0x2d8] sm:$0xf]
    %v207 = vld [vmem:[%s1 + $0x2dc] sm:$0xf]
    %v208 = vld [vmem:[%s1 + $0x2e0] sm:$0xf]
    %v209 = vld [vmem:[%s1 + $0x2e4] sm:$0xf]
    %v210 = vld [vmem:[%s1 + $0x2e8] sm:$0xf]
    %v211 = vld [vmem:[%s1 + $0x2ec] sm:$0xf]
    %v212 = vld [vmem:[%s1 + $0x2f0] sm:$0xf]
    %v213 = vld [vmem:[%s1 + $0x2f4] sm:$0xf]
    %v214 = vld [vmem:[%s1 + $0x2f8] sm:$0xf]
    %v215 = vld [vmem:[%s1 + $0x2fc] sm:$0xf]
    %v216 = vld [vmem:[%s1 + $0x300] sm:$0xf]
    %v217 = vld [vmem:[%s1 + $0x304] sm:$0xf]
    %v218 = vld [vmem:[%s1 + $0x308] sm:$0xf]
    %v219 = vld [vmem:[%s1 + $0x30c] sm:$0xf]
    %v220 = vld [vmem:[%s1 + $0x310] sm:$0xf]
    %v221 = vld [vmem:[%s1 + $0x314] sm:$0xf]
    %v222 = vld [vmem:[%s1 + $0x318] sm:$0xf]
    %v223 = vld [vmem:[%s1 + $0x31c] sm:$0xf]
    %v224 = vld [vmem:[%s1 + $0x320] sm:$0xf]
    %v225 = vld [vmem:[%s1 + $0x324] sm:$0xf]
    %v226 = vld [vmem:[%s1 + $0x328] sm:$0xf]
    %v227 = vld [vmem:[%s1 + $0x32c] sm:$0xf]
    %v228 = vld [vmem:[%s1 + $0x330] sm:$0xf]
    %v229 = vld [vmem:[%s1 + $0x334] sm:$0xf]
    %v230 = vld [vmem:[%s1 + $0x338] sm:$0xf]
    %v231 = vld [vmem:[%s1 + $0x33c] sm:$0xf]
    %v232 = vld [vmem:[%s1 + $0x340] sm:$0xf]
    %v233 = vld [vmem:[%s1 + $0x344] sm:$0xf]
    %v234 = vld [vmem:[%s1 + $0x348] sm:$0xf]
    %v235 = vld [vmem:[%s1 + $0x34c] sm:$0xf]
    %v236 = vld [vmem:[%s1 + $0x350] sm:$0xf]
    %v237 = vld [vmem:[%s1 + $0x354] sm:$0xf]
    %v238 = vld [vmem:[%s1 + $0x358] sm:$0xf]
    %v239 = vld [vmem:[%s1 + $0x35c] sm:$0xf]
    %v240 = vld [vmem:[%s1 + $0x360] sm:$0xf]
    %v241 = vld [vmem:[%s1 + $0x364] sm:$0xf]
    %v242 = vld [vmem:[%s1 + $0x368] sm:$0xf]
    %v243 = vld [vmem:[%s1 + $0x36c] sm:$0xf]
    %v244 = vld [vmem:[%s1 + $0x370] sm:$0xf]
    %v245 = vld [vmem:[%s1 + $0x374] sm:$0xf]
    %v246 = vld [vmem:[%s1 + $0x378] sm:$0xf]
    %v247 = vld [vmem:[%s1 + $0x37c] sm:$0xf]
    %v248 = vld [vmem:[%s1 + $0x380] sm:$0xf]
    %v249 = vld [vmem:[%s1 + $0x384] sm:$0xf]
    %v250 = vld [vmem:[%s1 + $0x388] sm:$0xf]
    %v251 = vld [vmem:[%s1 + $0x38c] sm:$0xf]
    %v252 = vld [vmem:[%s1 + $0x390] sm:$0xf]
    %v253 = vld [vmem:[%s1 + $0x394] sm:$0xf]
    %v254 = vld [vmem:[%s1 + $0x398] sm:$0xf]
    %v255 = vld [vmem:[%s1 + $0x39c] sm:$0xf]
    %v256 = vld [vmem:[%s1 + $0x3a0] sm:$0xf]
    %v257 = vld [vmem:[%s1 + $0x3a4] sm:$0xf]
    %v258 = vld [vmem:[%s1 + $0x3a8] sm:$0xf]
    %v259 = vld [vmem:[%s1 + $0x3ac] sm:$0xf]
    %v260 = vld [vmem:[%s1 + $0x3b0] sm:$0xf]
    %v261 = vld [vmem:[%s1 + $0x3b4] sm:$0xf]
    %v262 = vld [vmem:[%s1 + $0x3b8] sm:$0xf]
    %v263 = vld [vmem:[%s1 + $0x3bc] sm:$0xf]
    %v264 = vld [vmem:[%s1 + $0x3c0] sm:$0xf]
    %v265 = vld [vmem:[%s1 + $0x3c4] sm:$0xf]
    %v266 = vld [vmem:[%s1 + $0x3c8] sm:$0xf]
    %v267 = vld [vmem:[%s1 + $0x3cc] sm:$0xf]
    %v268 = vld [vmem:[%s1 + $0x3d0] sm:$0xf]
    %v269 = vld [vmem:[%s1 + $0x3d4] sm:$0xf]
    %v270 = vld [vmem:[%s1 + $0x3d8] sm:$0xf]
    %v271 = vld [vmem:[%s1 + $0x3dc] sm:$0xf]
    %v272 = vld [vmem:[%s1 + $0x3e0] sm:$0xf]
    %v273 = vld [vmem:[%s1 + $0x3e4] sm:$0xf]
    %v274 = vld [vmem:[%s1 + $0x3e8] sm:$0xf]
    %v275 = vld [vmem:[%s1 + $0x3ec] sm:$0xf]
    %v276 = vld [vmem:[%s1 + $0x3f0] sm:$0xf]
    %v277 = vld [vmem:[%s1 + $0x3f4] sm:$0xf]
    %v278 = vld [vmem:[%s1 + $0x3f8] sm:$0xf]
    %v279 = vld [vmem:[%s1 + $0x3fc] sm:$0xf]
    %v280 = vld [vmem:[%s2] sm:$0x1]
    %v282 = vlaneseq
    %v283 = vshrl.u32 %v282, 7
    %v284 = vsub.s32 0, %v283
    %v285 = vrot.slane %v280, %v284
    %v289 = vcombine.high %v22, %v22
    %v291 = vunpack.c.l.s4 1966171168
    %v292 = vunpack.c.0.s8 %v291
    %v293 = vlaneseq
    %v294 = vshrl.u32 %v293, 7
    %v295 = vsub.s32 %v292, %v294
    %v296 = vrot.slane %v22, %v295
    %v298 = vunpack.c.l.s4 1966171168
    %v299 = vunpack.c.0.s8 %v298
    %v300 = vlaneseq
    %v301 = vshrl.u32 %v300, 7
    %v302 = vsub.s32 %v299, %v301
    %v303 = vrot.slane %v289, %v302
    %v304 = vcombine.high %v296, %v296
    %v305 = vcombine.high %v303, %v303
    %v307 = vunpack.c.l.s4 1966171168
    %v308 = vunpack.c.0.s8 %v307
    %v309 = vlaneseq
    %v310 = vshrl.u32 %v309, 7
    %v311 = vsub.s32 %v308, %v310
    %v312 = vrot.slane %v296, %v311
    %v314 = vunpack.c.l.s4 1966171168
    %v315 = vunpack.c.0.s8 %v314
    %v316 = vlaneseq
    %v317 = vshrl.u32 %v316, 7
    %v318 = vsub.s32 %v315, %v317
    %v319 = vrot.slane %v303, %v318
    %v321 = vunpack.c.l.s4 1966171168
    %v322 = vunpack.c.0.s8 %v321
    %v323 = vlaneseq
    %v324 = vshrl.u32 %v323, 7
    %v325 = vsub.s32 %v322, %v324
    %v326 = vrot.slane %v304, %v325
    %v328 = vunpack.c.l.s4 1966171168
    %v329 = vunpack.c.0.s8 %v328
    %v330 = vlaneseq
    %v331 = vshrl.u32 %v330, 7
    %v332 = vsub.s32 %v329, %v331
    %v333 = vrot.slane %v305, %v332
    %v334 = vcombine.high %v312, %v312
    %v335 = vcombine.high %v319, %v319
    %v336 = vcombine.high %v326, %v326
    %v337 = vcombine.high %v333, %v333
    %v338 = vcombine.high %v23, %v23
    %v340 = vunpack.c.l.s4 1966171168
    %v341 = vunpack.c.0.s8 %v340
    %v342 = vlaneseq
    %v343 = vshrl.u32 %v342, 7
    %v344 = vsub.s32 %v341, %v343
    %v345 = vrot.slane %v23, %v344
    %v347 = vunpack.c.l.s4 1966171168
    %v348 = vunpack.c.0.s8 %v347
    %v349 = vlaneseq
    %v350 = vshrl.u32 %v349, 7
    %v351 = vsub.s32 %v348, %v350
    %v352 = vrot.slane %v338, %v351
    %v353 = vcombine.high %v345, %v345
    %v354 = vcombine.high %v352, %v352
    %v356 = vunpack.c.l.s4 1966171168
    %v357 = vunpack.c.0.s8 %v356
    %v358 = vlaneseq
    %v359 = vshrl.u32 %v358, 7
    %v360 = vsub.s32 %v357, %v359
    %v361 = vrot.slane %v345, %v360
    %v363 = vunpack.c.l.s4 1966171168
    %v364 = vunpack.c.0.s8 %v363
    %v365 = vlaneseq
    %v366 = vshrl.u32 %v365, 7
    %v367 = vsub.s32 %v364, %v366
    %v368 = vrot.slane %v352, %v367
    %v370 = vunpack.c.l.s4 1966171168
    %v371 = vunpack.c.0.s8 %v370
    %v372 = vlaneseq
    %v373 = vshrl.u32 %v372, 7
    %v374 = vsub.s32 %v371, %v373
    %v375 = vrot.slane %v353, %v374
    %v377 = vunpack.c.l.s4 1966171168
    %v378 = vunpack.c.0.s8 %v377
    %v379 = vlaneseq
    %v380 = vshrl.u32 %v379, 7
    %v381 = vsub.s32 %v378, %v380
    %v382 = vrot.slane %v354, %v381
    %v383 = vcombine.high %v361, %v361
    %v384 = vcombine.high %v368, %v368
    %v385 = vcombine.high %v375, %v375
    %v386 = vcombine.high %v382, %v382
    %v659 = vunpack.c.l.b16 %v24
    %v660 = vunpack.c.l.b16 %v25
    %v661 = vunpack.c.l.b16 %v26
    %v662 = vunpack.c.l.b16 %v27
    %v663 = vunpack.c.l.b16 %v28
    %v664 = vunpack.c.l.b16 %v29
    %v665 = vunpack.c.l.b16 %v30
    %v666 = vunpack.c.l.b16 %v31
    %v667 = vunpack.c.l.b16 %v32
    %v668 = vunpack.c.l.b16 %v33
    %v669 = vunpack.c.l.b16 %v34
    %v670 = vunpack.c.l.b16 %v35
    %v671 = vunpack.c.l.b16 %v36
    %v672 = vunpack.c.l.b16 %v37
    %v673 = vunpack.c.l.b16 %v38
    %v674 = vunpack.c.l.b16 %v39
    %v675 = vunpack.c.l.b16 %v40
    %v676 = vunpack.c.l.b16 %v41
    %v677 = vunpack.c.l.b16 %v42
    %v678 = vunpack.c.l.b16 %v43
    %v679 = vunpack.c.l.b16 %v44
    %v680 = vunpack.c.l.b16 %v45
    %v681 = vunpack.c.l.b16 %v46
    %v682 = vunpack.c.l.b16 %v47
    %v683 = vunpack.c.l.b16 %v48
    %v684 = vunpack.c.l.b16 %v49
    %v685 = vunpack.c.l.b16 %v50
    %v686 = vunpack.c.l.b16 %v51
    %v687 = vunpack.c.l.b16 %v52
    %v688 = vunpack.c.l.b16 %v53
    %v689 = vunpack.c.l.b16 %v54
    %v690 = vunpack.c.l.b16 %v55
    %v691 = vunpack.c.l.b16 %v56
    %v692 = vunpack.c.l.b16 %v57
    %v693 = vunpack.c.l.b16 %v58
    %v694 = vunpack.c.l.b16 %v59
    %v695 = vunpack.c.l.b16 %v60
    %v696 = vunpack.c.l.b16 %v61
    %v697 = vunpack.c.l.b16 %v62
    %v698 = vunpack.c.l.b16 %v63
    %v699 = vunpack.c.l.b16 %v64
    %v700 = vunpack.c.l.b16 %v65
    %v701 = vunpack.c.l.b16 %v66
    %v702 = vunpack.c.l.b16 %v67
    %v703 = vunpack.c.l.b16 %v68
    %v704 = vunpack.c.l.b16 %v69
    %v705 = vunpack.c.l.b16 %v70
    %v706 = vunpack.c.l.b16 %v71
    %v707 = vunpack.c.l.b16 %v72
    %v708 = vunpack.c.l.b16 %v73
    %v709 = vunpack.c.l.b16 %v74
    %v710 = vunpack.c.l.b16 %v75
    %v711 = vunpack.c.l.b16 %v76
    %v712 = vunpack.c.l.b16 %v77
    %v713 = vunpack.c.l.b16 %v78
    %v714 = vunpack.c.l.b16 %v79
    %v715 = vunpack.c.l.b16 %v80
    %v716 = vunpack.c.l.b16 %v81
    %v717 = vunpack.c.l.b16 %v82
    %v718 = vunpack.c.l.b16 %v83
    %v719 = vunpack.c.l.b16 %v84
    %v720 = vunpack.c.l.b16 %v85
    %v721 = vunpack.c.l.b16 %v86
    %v722 = vunpack.c.l.b16 %v87
    %v723 = vunpack.c.l.b16 %v88
    %v724 = vunpack.c.l.b16 %v89
    %v725 = vunpack.c.l.b16 %v90
    %v726 = vunpack.c.l.b16 %v91
    %v727 = vunpack.c.l.b16 %v92
    %v728 = vunpack.c.l.b16 %v93
    %v729 = vunpack.c.l.b16 %v94
    %v730 = vunpack.c.l.b16 %v95
    %v731 = vunpack.c.l.b16 %v96
    %v732 = vunpack.c.l.b16 %v97
    %v733 = vunpack.c.l.b16 %v98
    %v734 = vunpack.c.l.b16 %v99
    %v735 = vunpack.c.l.b16 %v100
    %v736 = vunpack.c.l.b16 %v101
    %v737 = vunpack.c.l.b16 %v102
    %v738 = vunpack.c.l.b16 %v103
    %v739 = vunpack.c.l.b16 %v104
    %v740 = vunpack.c.l.b16 %v105
    %v741 = vunpack.c.l.b16 %v106
    %v742 = vunpack.c.l.b16 %v107
    %v743 = vunpack.c.l.b16 %v108
    %v744 = vunpack.c.l.b16 %v109
    %v745 = vunpack.c.l.b16 %v110
    %v746 = vunpack.c.l.b16 %v111
    %v747 = vunpack.c.l.b16 %v112
    %v748 = vunpack.c.l.b16 %v113
    %v749 = vunpack.c.l.b16 %v114
    %v750 = vunpack.c.l.b16 %v115
    %v751 = vunpack.c.l.b16 %v116
    %v752 = vunpack.c.l.b16 %v117
    %v753 = vunpack.c.l.b16 %v118
    %v754 = vunpack.c.l.b16 %v119
    %v755 = vunpack.c.l.b16 %v120
    %v756 = vunpack.c.l.b16 %v121
    %v757 = vunpack.c.l.b16 %v122
    %v758 = vunpack.c.l.b16 %v123
    %v759 = vunpack.c.l.b16 %v124
    %v760 = vunpack.c.l.b16 %v125
    %v761 = vunpack.c.l.b16 %v126
    %v762 = vunpack.c.l.b16 %v127
    %v763 = vunpack.c.l.b16 %v128
    %v764 = vunpack.c.l.b16 %v129
    %v765 = vunpack.c.l.b16 %v130
    %v766 = vunpack.c.l.b16 %v131
    %v767 = vunpack.c.l.b16 %v132
    %v768 = vunpack.c.l.b16 %v133
    %v769 = vunpack.c.l.b16 %v134
    %v770 = vunpack.c.l.b16 %v135
    %v771 = vunpack.c.l.b16 %v136
    %v772 = vunpack.c.l.b16 %v137
    %v773 = vunpack.c.l.b16 %v138
    %v774 = vunpack.c.l.b16 %v139
    %v775 = vunpack.c.l.b16 %v140
    %v776 = vunpack.c.l.b16 %v141
    %v777 = vunpack.c.l.b16 %v142
    %v778 = vunpack.c.l.b16 %v143
    %v779 = vunpack.c.l.b16 %v144
    %v780 = vunpack.c.l.b16 %v145
    %v781 = vunpack.c.l.b16 %v146
    %v782 = vunpack.c.l.b16 %v147
    %v783 = vunpack.c.l.b16 %v148
    %v784 = vunpack.c.l.b16 %v149
    %v785 = vunpack.c.l.b16 %v150
    %v786 = vunpack.c.l.b16 %v151
    %v787 = vunpack.c.l.b16 %v152
    %v788 = vunpack.c.l.b16 %v153
    %v789 = vunpack.c.l.b16 %v154
    %v790 = vunpack.c.l.b16 %v155
    %v791 = vunpack.c.l.b16 %v156
    %v792 = vunpack.c.l.b16 %v157
    %v793 = vunpack.c.l.b16 %v158
    %v794 = vunpack.c.l.b16 %v159
    %v795 = vunpack.c.l.b16 %v160
    %v796 = vunpack.c.l.b16 %v161
    %v797 = vunpack.c.l.b16 %v162
    %v798 = vunpack.c.l.b16 %v163
    %v799 = vunpack.c.l.b16 %v164
    %v800 = vunpack.c.l.b16 %v165
    %v801 = vunpack.c.l.b16 %v166
    %v802 = vunpack.c.l.b16 %v167
    %v803 = vunpack.c.l.b16 %v168
    %v804 = vunpack.c.l.b16 %v169
    %v805 = vunpack.c.l.b16 %v170
    %v806 = vunpack.c.l.b16 %v171
    %v807 = vunpack.c.l.b16 %v172
    %v808 = vunpack.c.l.b16 %v173
    %v809 = vunpack.c.l.b16 %v174
    %v810 = vunpack.c.l.b16 %v175
    %v811 = vunpack.c.l.b16 %v176
    %v812 = vunpack.c.l.b16 %v177
    %v813 = vunpack.c.l.b16 %v178
    %v814 = vunpack.c.l.b16 %v179
    %v815 = vunpack.c.l.b16 %v180
    %v816 = vunpack.c.l.b16 %v181
    %v817 = vunpack.c.l.b16 %v182
    %v818 = vunpack.c.l.b16 %v183
    %v819 = vunpack.c.l.b16 %v184
    %v820 = vunpack.c.l.b16 %v185
    %v821 = vunpack.c.l.b16 %v186
    %v822 = vunpack.c.l.b16 %v187
    %v823 = vunpack.c.l.b16 %v188
    %v824 = vunpack.c.l.b16 %v189
    %v825 = vunpack.c.l.b16 %v190
    %v826 = vunpack.c.l.b16 %v191
    %v827 = vunpack.c.l.b16 %v192
    %v828 = vunpack.c.l.b16 %v193
    %v829 = vunpack.c.l.b16 %v194
    %v830 = vunpack.c.l.b16 %v195
    %v831 = vunpack.c.l.b16 %v196
    %v832 = vunpack.c.l.b16 %v197
    %v833 = vunpack.c.l.b16 %v198
    %v834 = vunpack.c.l.b16 %v199
    %v835 = vunpack.c.l.b16 %v200
    %v836 = vunpack.c.l.b16 %v201
    %v837 = vunpack.c.l.b16 %v202
    %v838 = vunpack.c.l.b16 %v203
    %v839 = vunpack.c.l.b16 %v204
    %v840 = vunpack.c.l.b16 %v205
    %v841 = vunpack.c.l.b16 %v206
    %v842 = vunpack.c.l.b16 %v207
    %v843 = vunpack.c.l.b16 %v208
    %v844 = vunpack.c.l.b16 %v209
    %v845 = vunpack.c.l.b16 %v210
    %v846 = vunpack.c.l.b16 %v211
    %v847 = vunpack.c.l.b16 %v212
    %v848 = vunpack.c.l.b16 %v213
    %v849 = vunpack.c.l.b16 %v214
    %v850 = vunpack.c.l.b16 %v215
    %v851 = vunpack.c.l.b16 %v216
    %v852 = vunpack.c.l.b16 %v217
    %v853 = vunpack.c.l.b16 %v218
    %v854 = vunpack.c.l.b16 %v219
    %v855 = vunpack.c.l.b16 %v220
    %v856 = vunpack.c.l.b16 %v221
    %v857 = vunpack.c.l.b16 %v222
    %v858 = vunpack.c.l.b16 %v223
    %v859 = vunpack.c.l.b16 %v224
    %v860 = vunpack.c.l.b16 %v225
    %v861 = vunpack.c.l.b16 %v226
    %v862 = vunpack.c.l.b16 %v227
    %v863 = vunpack.c.l.b16 %v228
    %v864 = vunpack.c.l.b16 %v229
    %v865 = vunpack.c.l.b16 %v230
    %v866 = vunpack.c.l.b16 %v231
    %v867 = vunpack.c.l.b16 %v232
    %v868 = vunpack.c.l.b16 %v233
    %v869 = vunpack.c.l.b16 %v234
    %v870 = vunpack.c.l.b16 %v235
    %v871 = vunpack.c.l.b16 %v236
    %v872 = vunpack.c.l.b16 %v237
    %v873 = vunpack.c.l.b16 %v238
    %v874 = vunpack.c.l.b16 %v239
    %v875 = vunpack.c.l.b16 %v240
    %v876 = vunpack.c.l.b16 %v241
    %v877 = vunpack.c.l.b16 %v242
    %v878 = vunpack.c.l.b16 %v243
    %v879 = vunpack.c.l.b16 %v244
    %v880 = vunpack.c.l.b16 %v245
    %v881 = vunpack.c.l.b16 %v246
    %v882 = vunpack.c.l.b16 %v247
    %v883 = vunpack.c.l.b16 %v248
    %v884 = vunpack.c.l.b16 %v249
    %v885 = vunpack.c.l.b16 %v250
    %v886 = vunpack.c.l.b16 %v251
    %v887 = vunpack.c.l.b16 %v252
    %v888 = vunpack.c.l.b16 %v253
    %v889 = vunpack.c.l.b16 %v254
    %v890 = vunpack.c.l.b16 %v255
    %v891 = vunpack.c.l.b16 %v256
    %v892 = vunpack.c.l.b16 %v257
    %v893 = vunpack.c.l.b16 %v258
    %v894 = vunpack.c.l.b16 %v259
    %v895 = vunpack.c.l.b16 %v260
    %v896 = vunpack.c.l.b16 %v261
    %v897 = vunpack.c.l.b16 %v262
    %v898 = vunpack.c.l.b16 %v263
    %v899 = vunpack.c.l.b16 %v264
    %v900 = vunpack.c.l.b16 %v265
    %v901 = vunpack.c.l.b16 %v266
    %v902 = vunpack.c.l.b16 %v267
    %v903 = vunpack.c.l.b16 %v268
    %v904 = vunpack.c.l.b16 %v269
    %v905 = vunpack.c.l.b16 %v270
    %v906 = vunpack.c.l.b16 %v271
    %v907 = vunpack.c.l.b16 %v272
    %v908 = vunpack.c.l.b16 %v273
    %v909 = vunpack.c.l.b16 %v274
    %v910 = vunpack.c.l.b16 %v275
    %v911 = vunpack.c.l.b16 %v276
    %v912 = vunpack.c.l.b16 %v277
    %v913 = vunpack.c.l.b16 %v278
    %v914 = vunpack.c.l.b16 %v279
    %v915 = vpack.c.b16 %v660, %v659
    %v916 = vpack.c.b16 %v662, %v661
    %v917 = vpack.c.b16 %v664, %v663
    %v918 = vpack.c.b16 %v666, %v665
    %v919 = vpack.c.b16 %v668, %v667
    %v920 = vpack.c.b16 %v670, %v669
    %v921 = vpack.c.b16 %v672, %v671
    %v922 = vpack.c.b16 %v674, %v673
    %v923 = vpack.c.b16 %v676, %v675
    %v924 = vpack.c.b16 %v678, %v677
    %v925 = vpack.c.b16 %v680, %v679
    %v926 = vpack.c.b16 %v682, %v681
    %v927 = vpack.c.b16 %v684, %v683
    %v928 = vpack.c.b16 %v686, %v685
    %v929 = vpack.c.b16 %v688, %v687
    %v930 = vpack.c.b16 %v690, %v689
    %v931 = vpack.c.b16 %v692, %v691
    %v932 = vpack.c.b16 %v694, %v693
    %v933 = vpack.c.b16 %v696, %v695
    %v934 = vpack.c.b16 %v698, %v697
    %v935 = vpack.c.b16 %v700, %v699
    %v936 = vpack.c.b16 %v702, %v701
    %v937 = vpack.c.b16 %v704, %v703
    %v938 = vpack.c.b16 %v706, %v705
    %v939 = vpack.c.b16 %v708, %v707
    %v940 = vpack.c.b16 %v710, %v709
    %v941 = vpack.c.b16 %v712, %v711
    %v942 = vpack.c.b16 %v714, %v713
    %v943 = vpack.c.b16 %v716, %v715
    %v944 = vpack.c.b16 %v718, %v717
    %v945 = vpack.c.b16 %v720, %v719
    %v946 = vpack.c.b16 %v722, %v721
    %v947 = vpack.c.b16 %v724, %v723
    %v948 = vpack.c.b16 %v726, %v725
    %v949 = vpack.c.b16 %v728, %v727
    %v950 = vpack.c.b16 %v730, %v729
    %v951 = vpack.c.b16 %v732, %v731
    %v952 = vpack.c.b16 %v734, %v733
    %v953 = vpack.c.b16 %v736, %v735
    %v954 = vpack.c.b16 %v738, %v737
    %v955 = vpack.c.b16 %v740, %v739
    %v956 = vpack.c.b16 %v742, %v741
    %v957 = vpack.c.b16 %v744, %v743
    %v958 = vpack.c.b16 %v746, %v745
    %v959 = vpack.c.b16 %v748, %v747
    %v960 = vpack.c.b16 %v750, %v749
    %v961 = vpack.c.b16 %v752, %v751
    %v962 = vpack.c.b16 %v754, %v753
    %v963 = vpack.c.b16 %v756, %v755
    %v964 = vpack.c.b16 %v758, %v757
    %v965 = vpack.c.b16 %v760, %v759
    %v966 = vpack.c.b16 %v762, %v761
    %v967 = vpack.c.b16 %v764, %v763
    %v968 = vpack.c.b16 %v766, %v765
    %v969 = vpack.c.b16 %v768, %v767
    %v970 = vpack.c.b16 %v770, %v769
    %v971 = vpack.c.b16 %v772, %v771
    %v972 = vpack.c.b16 %v774, %v773
    %v973 = vpack.c.b16 %v776, %v775
    %v974 = vpack.c.b16 %v778, %v777
    %v975 = vpack.c.b16 %v780, %v779
    %v976 = vpack.c.b16 %v782, %v781
    %v977 = vpack.c.b16 %v784, %v783
    %v978 = vpack.c.b16 %v786, %v785
    %v979 = vpack.c.b16 %v788, %v787
    %v980 = vpack.c.b16 %v790, %v789
    %v981 = vpack.c.b16 %v792, %v791
    %v982 = vpack.c.b16 %v794, %v793
    %v983 = vpack.c.b16 %v796, %v795
    %v984 = vpack.c.b16 %v798, %v797
    %v985 = vpack.c.b16 %v800, %v799
    %v986 = vpack.c.b16 %v802, %v801
    %v987 = vpack.c.b16 %v804, %v803
    %v988 = vpack.c.b16 %v806, %v805
    %v989 = vpack.c.b16 %v808, %v807
    %v990 = vpack.c.b16 %v810, %v809
    %v991 = vpack.c.b16 %v812, %v811
    %v992 = vpack.c.b16 %v814, %v813
    %v993 = vpack.c.b16 %v816, %v815
    %v994 = vpack.c.b16 %v818, %v817
    %v995 = vpack.c.b16 %v820, %v819
    %v996 = vpack.c.b16 %v822, %v821
    %v997 = vpack.c.b16 %v824, %v823
    %v998 = vpack.c.b16 %v826, %v825
    %v999 = vpack.c.b16 %v828, %v827
    %v1000 = vpack.c.b16 %v830, %v829
    %v1001 = vpack.c.b16 %v832, %v831
    %v1002 = vpack.c.b16 %v834, %v833
    %v1003 = vpack.c.b16 %v836, %v835
    %v1004 = vpack.c.b16 %v838, %v837
    %v1005 = vpack.c.b16 %v840, %v839
    %v1006 = vpack.c.b16 %v842, %v841
    %v1007 = vpack.c.b16 %v844, %v843
    %v1008 = vpack.c.b16 %v846, %v845
    %v1009 = vpack.c.b16 %v848, %v847
    %v1010 = vpack.c.b16 %v850, %v849
    %v1011 = vpack.c.b16 %v852, %v851
    %v1012 = vpack.c.b16 %v854, %v853
    %v1013 = vpack.c.b16 %v856, %v855
    %v1014 = vpack.c.b16 %v858, %v857
    %v1015 = vpack.c.b16 %v860, %v859
    %v1016 = vpack.c.b16 %v862, %v861
    %v1017 = vpack.c.b16 %v864, %v863
    %v1018 = vpack.c.b16 %v866, %v865
    %v1019 = vpack.c.b16 %v868, %v867
    %v1020 = vpack.c.b16 %v870, %v869
    %v1021 = vpack.c.b16 %v872, %v871
    %v1022 = vpack.c.b16 %v874, %v873
    %v1023 = vpack.c.b16 %v876, %v875
    %v1024 = vpack.c.b16 %v878, %v877
    %v1025 = vpack.c.b16 %v880, %v879
    %v1026 = vpack.c.b16 %v882, %v881
    %v1027 = vpack.c.b16 %v884, %v883
    %v1028 = vpack.c.b16 %v886, %v885
    %v1029 = vpack.c.b16 %v888, %v887
    %v1030 = vpack.c.b16 %v890, %v889
    %v1031 = vpack.c.b16 %v892, %v891
    %v1032 = vpack.c.b16 %v894, %v893
    %v1033 = vpack.c.b16 %v896, %v895
    %v1034 = vpack.c.b16 %v898, %v897
    %v1035 = vpack.c.b16 %v900, %v899
    %v1036 = vpack.c.b16 %v902, %v901
    %v1037 = vpack.c.b16 %v904, %v903
    %v1038 = vpack.c.b16 %v906, %v905
    %v1039 = vpack.c.b16 %v908, %v907
    %v1040 = vpack.c.b16 %v910, %v909
    %v1041 = vpack.c.b16 %v912, %v911
    %v1042 = vpack.c.b16 %v914, %v913
    %1171 = vmatprep.subr.bf16.mxu0 0
    %1172 = vmatpush1.bf16.msra.mxu0 %v915
    %1173 = vmatprep.subr.bf16.mxu0 0
    %1174 = vmatpush1.bf16.msra.mxu0 %v916
    %1175 = vmatprep.subr.bf16.mxu0 0
    %1176 = vmatpush1.bf16.msra.mxu0 %v917
    %1177 = vmatprep.subr.bf16.mxu0 0
    %1178 = vmatpush1.bf16.msra.mxu0 %v918
    %1179 = vmatprep.subr.bf16.mxu0 0
    %1180 = vmatpush1.bf16.msra.mxu0 %v919
    %1181 = vmatprep.subr.bf16.mxu0 0
    %1182 = vmatpush1.bf16.msra.mxu0 %v920
    %1183 = vmatprep.subr.bf16.mxu0 0
    %1184 = vmatpush1.bf16.msra.mxu0 %v921
    %1185 = vmatprep.subr.bf16.mxu0 0
    %1186 = vmatpush1.bf16.msra.mxu0 %v922
    %1187 = vmatprep.subr.bf16.mxu0 0
    %1188 = vmatpush1.bf16.msra.mxu0 %v923
    %1189 = vmatprep.subr.bf16.mxu0 0
    %1190 = vmatpush1.bf16.msra.mxu0 %v924
    %1191 = vmatprep.subr.bf16.mxu0 0
    %1192 = vmatpush1.bf16.msra.mxu0 %v925
    %1193 = vmatprep.subr.bf16.mxu0 0
    %1194 = vmatpush1.bf16.msra.mxu0 %v926
    %1195 = vmatprep.subr.bf16.mxu0 0
    %1196 = vmatpush1.bf16.msra.mxu0 %v927
    %1197 = vmatprep.subr.bf16.mxu0 0
    %1198 = vmatpush1.bf16.msra.mxu0 %v928
    %1199 = vmatprep.subr.bf16.mxu0 0
    %1200 = vmatpush1.bf16.msra.mxu0 %v929
    %1201 = vmatprep.subr.bf16.mxu0 0
    %1202 = vmatpush1.bf16.msra.mxu0 %v930
    %1203 = vmatprep.mubr.bf16.mxu0 %v326
    %1204 = vmatmul.mubr.bf16.gmra.mrb[0].mxu0 %v312
    %v1205 = vpop.f32.mrb[0].mxu0
    %v1206 = vadd.f32 %v285, %v1205
    %v1207 = vpop.f32.mrb[0].mxu0
    %v1208 = vpop.f32.mrb[0].mxu0
    %v1209 = vpop.f32.mrb[0].mxu0
    %1210 = vdwg.mxu0
    %1211 = vmatprep.subr.bf16.mxu0 0
    %1212 = vmatpush1.bf16.msra.mxu0 %v931
    %1213 = vmatprep.subr.bf16.mxu0 0
    %1214 = vmatpush1.bf16.msra.mxu0 %v932
    %1215 = vmatprep.subr.bf16.mxu0 0
    %1216 = vmatpush1.bf16.msra.mxu0 %v933
    %1217 = vmatprep.subr.bf16.mxu0 0
    %1218 = vmatpush1.bf16.msra.mxu0 %v934
    %1219 = vmatprep.subr.bf16.mxu0 0
    %1220 = vmatpush1.bf16.msra.mxu0 %v935
    %1221 = vmatprep.subr.bf16.mxu0 0
    %1222 = vmatpush1.bf16.msra.mxu0 %v936
    %1223 = vmatprep.subr.bf16.mxu0 0
    %1224 = vmatpush1.bf16.msra.mxu0 %v937
    %1225 = vmatprep.subr.bf16.mxu0 0
    %1226 = vmatpush1.bf16.msra.mxu0 %v938
    %1227 = vmatprep.subr.bf16.mxu0 0
    %1228 = vmatpush1.bf16.msra.mxu0 %v939
    %1229 = vmatprep.subr.bf16.mxu0 0
    %1230 = vmatpush1.bf16.msra.mxu0 %v940
    %1231 = vmatprep.subr.bf16.mxu0 0
    %1232 = vmatpush1.bf16.msra.mxu0 %v941
    %1233 = vmatprep.subr.bf16.mxu0 0
    %1234 = vmatpush1.bf16.msra.mxu0 %v942
    %1235 = vmatprep.subr.bf16.mxu0 0
    %1236 = vmatpush1.bf16.msra.mxu0 %v943
    %1237 = vmatprep.subr.bf16.mxu0 0
    %1238 = vmatpush1.bf16.msra.mxu0 %v944
    %1239 = vmatprep.subr.bf16.mxu0 0
    %1240 = vmatpush1.bf16.msra.mxu0 %v945
    %1241 = vmatprep.subr.bf16.mxu0 0
    %1242 = vmatpush1.bf16.msra.mxu0 %v946
    %1243 = vmatprep.mubr.bf16.mxu0 %v336
    %1244 = vmatmul.mubr.bf16.gmra.mrb[0].mxu0 %v334
    %v1245 = vpop.f32.mrb[0].mxu0
    %v1246 = vadd.f32 %v1206, %v1245
    %v1247 = vpop.f32.mrb[0].mxu0
    %v1248 = vpop.f32.mrb[0].mxu0
    %v1249 = vpop.f32.mrb[0].mxu0
    %1250 = vdwg.mxu0
    %1251 = vmatprep.subr.bf16.mxu0 0
    %1252 = vmatpush1.bf16.msra.mxu0 %v947
    %1253 = vmatprep.subr.bf16.mxu0 0
    %1254 = vmatpush1.bf16.msra.mxu0 %v948
    %1255 = vmatprep.subr.bf16.mxu0 0
    %1256 = vmatpush1.bf16.msra.mxu0 %v949
    %1257 = vmatprep.subr.bf16.mxu0 0
    %1258 = vmatpush1.bf16.msra.mxu0 %v950
    %1259 = vmatprep.subr.bf16.mxu0 0
    %1260 = vmatpush1.bf16.msra.mxu0 %v951
    %1261 = vmatprep.subr.bf16.mxu0 0
    %1262 = vmatpush1.bf16.msra.mxu0 %v952
    %1263 = vmatprep.subr.bf16.mxu0 0
    %1264 = vmatpush1.bf16.msra.mxu0 %v953
    %1265 = vmatprep.subr.bf16.mxu0 0
    %1266 = vmatpush1.bf16.msra.mxu0 %v954
    %1267 = vmatprep.subr.bf16.mxu0 0
    %1268 = vmatpush1.bf16.msra.mxu0 %v955
    %1269 = vmatprep.subr.bf16.mxu0 0
    %1270 = vmatpush1.bf16.msra.mxu0 %v956
    %1271 = vmatprep.subr.bf16.mxu0 0
    %1272 = vmatpush1.bf16.msra.mxu0 %v957
    %1273 = vmatprep.subr.bf16.mxu0 0
    %1274 = vmatpush1.bf16.msra.mxu0 %v958
    %1275 = vmatprep.subr.bf16.mxu0 0
    %1276 = vmatpush1.bf16.msra.mxu0 %v959
    %1277 = vmatprep.subr.bf16.mxu0 0
    %1278 = vmatpush1.bf16.msra.mxu0 %v960
    %1279 = vmatprep.subr.bf16.mxu0 0
    %1280 = vmatpush1.bf16.msra.mxu0 %v961
    %1281 = vmatprep.subr.bf16.mxu0 0
    %1282 = vmatpush1.bf16.msra.mxu0 %v962
    %1283 = vmatprep.mubr.bf16.mxu0 %v333
    %1284 = vmatmul.mubr.bf16.gmra.mrb[0].mxu0 %v319
    %v1285 = vpop.f32.mrb[0].mxu0
    %v1286 = vadd.f32 %v1246, %v1285
    %v1287 = vpop.f32.mrb[0].mxu0
    %v1288 = vpop.f32.mrb[0].mxu0
    %v1289 = vpop.f32.mrb[0].mxu0
    %1290 = vdwg.mxu0
    %1291 = vmatprep.subr.bf16.mxu0 0
    %1292 = vmatpush1.bf16.msra.mxu0 %v963
    %1293 = vmatprep.subr.bf16.mxu0 0
    %1294 = vmatpush1.bf16.msra.mxu0 %v964
    %1295 = vmatprep.subr.bf16.mxu0 0
    %1296 = vmatpush1.bf16.msra.mxu0 %v965
    %1297 = vmatprep.subr.bf16.mxu0 0
    %1298 = vmatpush1.bf16.msra.mxu0 %v966
    %1299 = vmatprep.subr.bf16.mxu0 0
    %1300 = vmatpush1.bf16.msra.mxu0 %v967
    %1301 = vmatprep.subr.bf16.mxu0 0
    %1302 = vmatpush1.bf16.msra.mxu0 %v968
    %1303 = vmatprep.subr.bf16.mxu0 0
    %1304 = vmatpush1.bf16.msra.mxu0 %v969
    %1305 = vmatprep.subr.bf16.mxu0 0
    %1306 = vmatpush1.bf16.msra.mxu0 %v970
    %1307 = vmatprep.subr.bf16.mxu0 0
    %1308 = vmatpush1.bf16.msra.mxu0 %v971
    %1309 = vmatprep.subr.bf16.mxu0 0
    %1310 = vmatpush1.bf16.msra.mxu0 %v972
    %1311 = vmatprep.subr.bf16.mxu0 0
    %1312 = vmatpush1.bf16.msra.mxu0 %v973
    %1313 = vmatprep.subr.bf16.mxu0 0
    %1314 = vmatpush1.bf16.msra.mxu0 %v974
    %1315 = vmatprep.subr.bf16.mxu0 0
    %1316 = vmatpush1.bf16.msra.mxu0 %v975
    %1317 = vmatprep.subr.bf16.mxu0 0
    %1318 = vmatpush1.bf16.msra.mxu0 %v976
    %1319 = vmatprep.subr.bf16.mxu0 0
    %1320 = vmatpush1.bf16.msra.mxu0 %v977
    %1321 = vmatprep.subr.bf16.mxu0 0
    %1322 = vmatpush1.bf16.msra.mxu0 %v978
    %1323 = vmatprep.mubr.bf16.mxu0 %v337
    %1324 = vmatmul.mubr.bf16.gmra.mrb[0].mxu0 %v335
    %v1325 = vpop.f32.mrb[0].mxu0
    %v1326 = vadd.f32 %v1286, %v1325
    %v1327 = vpop.f32.mrb[0].mxu0
    %v1328 = vpop.f32.mrb[0].mxu0
    %v1329 = vpop.f32.mrb[0].mxu0
    %1330 = vdwg.mxu0
    %1331 = vmatprep.subr.bf16.mxu0 0
    %1332 = vmatpush1.bf16.msra.mxu0 %v979
    %1333 = vmatprep.subr.bf16.mxu0 0
    %1334 = vmatpush1.bf16.msra.mxu0 %v980
    %1335 = vmatprep.subr.bf16.mxu0 0
    %1336 = vmatpush1.bf16.msra.mxu0 %v981
    %1337 = vmatprep.subr.bf16.mxu0 0
    %1338 = vmatpush1.bf16.msra.mxu0 %v982
    %1339 = vmatprep.subr.bf16.mxu0 0
    %1340 = vmatpush1.bf16.msra.mxu0 %v983
    %1341 = vmatprep.subr.bf16.mxu0 0
    %1342 = vmatpush1.bf16.msra.mxu0 %v984
    %1343 = vmatprep.subr.bf16.mxu0 0
    %1344 = vmatpush1.bf16.msra.mxu0 %v985
    %1345 = vmatprep.subr.bf16.mxu0 0
    %1346 = vmatpush1.bf16.msra.mxu0 %v986
    %1347 = vmatprep.subr.bf16.mxu0 0
    %1348 = vmatpush1.bf16.msra.mxu0 %v987
    %1349 = vmatprep.subr.bf16.mxu0 0
    %1350 = vmatpush1.bf16.msra.mxu0 %v988
    %1351 = vmatprep.subr.bf16.mxu0 0
    %1352 = vmatpush1.bf16.msra.mxu0 %v989
    %1353 = vmatprep.subr.bf16.mxu0 0
    %1354 = vmatpush1.bf16.msra.mxu0 %v990
    %1355 = vmatprep.subr.bf16.mxu0 0
    %1356 = vmatpush1.bf16.msra.mxu0 %v991
    %1357 = vmatprep.subr.bf16.mxu0 0
    %1358 = vmatpush1.bf16.msra.mxu0 %v992
    %1359 = vmatprep.subr.bf16.mxu0 0
    %1360 = vmatpush1.bf16.msra.mxu0 %v993
    %1361 = vmatprep.subr.bf16.mxu0 0
    %1362 = vmatpush1.bf16.msra.mxu0 %v994
    %1363 = vmatprep.mubr.bf16.mxu0 %v375
    %1364 = vmatmul.mubr.bf16.gmra.mrb[0].mxu0 %v361
    %v1365 = vpop.f32.mrb[0].mxu0
    %v1366 = vadd.f32 %v1326, %v1365
    %v1367 = vpop.f32.mrb[0].mxu0
    %v1368 = vpop.f32.mrb[0].mxu0
    %v1369 = vpop.f32.mrb[0].mxu0
    %1370 = vdwg.mxu0
    %1371 = vmatprep.subr.bf16.mxu0 0
    %1372 = vmatpush1.bf16.msra.mxu0 %v995
    %1373 = vmatprep.subr.bf16.mxu0 0
    %1374 = vmatpush1.bf16.msra.mxu0 %v996
    %1375 = vmatprep.subr.bf16.mxu0 0
    %1376 = vmatpush1.bf16.msra.mxu0 %v997
    %1377 = vmatprep.subr.bf16.mxu0 0
    %1378 = vmatpush1.bf16.msra.mxu0 %v998
    %1379 = vmatprep.subr.bf16.mxu0 0
    %1380 = vmatpush1.bf16.msra.mxu0 %v999
    %1381 = vmatprep.subr.bf16.mxu0 0
    %1382 = vmatpush1.bf16.msra.mxu0 %v1000
    %1383 = vmatprep.subr.bf16.mxu0 0
    %1384 = vmatpush1.bf16.msra.mxu0 %v1001
    %1385 = vmatprep.subr.bf16.mxu0 0
    %1386 = vmatpush1.bf16.msra.mxu0 %v1002
    %1387 = vmatprep.subr.bf16.mxu0 0
    %1388 = vmatpush1.bf16.msra.mxu0 %v1003
    %1389 = vmatprep.subr.bf16.mxu0 0
    %1390 = vmatpush1.bf16.msra.mxu0 %v1004
    %1391 = vmatprep.subr.bf16.mxu0 0
    %1392 = vmatpush1.bf16.msra.mxu0 %v1005
    %1393 = vmatprep.subr.bf16.mxu0 0
    %1394 = vmatpush1.bf16.msra.mxu0 %v1006
    %1395 = vmatprep.subr.bf16.mxu0 0
    %1396 = vmatpush1.bf16.msra.mxu0 %v1007
    %1397 = vmatprep.subr.bf16.mxu0 0
    %1398 = vmatpush1.bf16.msra.mxu0 %v1008
    %1399 = vmatprep.subr.bf16.mxu0 0
    %1400 = vmatpush1.bf16.msra.mxu0 %v1009
    %1401 = vmatprep.subr.bf16.mxu0 0
    %1402 = vmatpush1.bf16.msra.mxu0 %v1010
    %1403 = vmatprep.mubr.bf16.mxu0 %v385
    %1404 = vmatmul.mubr.bf16.gmra.mrb[0].mxu0 %v383
    %v1405 = vpop.f32.mrb[0].mxu0
    %v1406 = vadd.f32 %v1366, %v1405
    %v1407 = vpop.f32.mrb[0].mxu0
    %v1408 = vpop.f32.mrb[0].mxu0
    %v1409 = vpop.f32.mrb[0].mxu0
    %1410 = vdwg.mxu0
    %1411 = vmatprep.subr.bf16.mxu0 0
    %1412 = vmatpush1.bf16.msra.mxu0 %v1011
    %1413 = vmatprep.subr.bf16.mxu0 0
    %1414 = vmatpush1.bf16.msra.mxu0 %v1012
    %1415 = vmatprep.subr.bf16.mxu0 0
    %1416 = vmatpush1.bf16.msra.mxu0 %v1013
    %1417 = vmatprep.subr.bf16.mxu0 0
    %1418 = vmatpush1.bf16.msra.mxu0 %v1014
    %1419 = vmatprep.subr.bf16.mxu0 0
    %1420 = vmatpush1.bf16.msra.mxu0 %v1015
    %1421 = vmatprep.subr.bf16.mxu0 0
    %1422 = vmatpush1.bf16.msra.mxu0 %v1016
    %1423 = vmatprep.subr.bf16.mxu0 0
    %1424 = vmatpush1.bf16.msra.mxu0 %v1017
    %1425 = vmatprep.subr.bf16.mxu0 0
    %1426 = vmatpush1.bf16.msra.mxu0 %v1018
    %1427 = vmatprep.subr.bf16.mxu0 0
    %1428 = vmatpush1.bf16.msra.mxu0 %v1019
    %1429 = vmatprep.subr.bf16.mxu0 0
    %1430 = vmatpush1.bf16.msra.mxu0 %v1020
    %1431 = vmatprep.subr.bf16.mxu0 0
    %1432 = vmatpush1.bf16.msra.mxu0 %v1021
    %1433 = vmatprep.subr.bf16.mxu0 0
    %1434 = vmatpush1.bf16.msra.mxu0 %v1022
    %1435 = vmatprep.subr.bf16.mxu0 0
    %1436 = vmatpush1.bf16.msra.mxu0 %v1023
    %1437 = vmatprep.subr.bf16.mxu0 0
    %1438 = vmatpush1.bf16.msra.mxu0 %v1024
    %1439 = vmatprep.subr.bf16.mxu0 0
    %1440 = vmatpush1.bf16.msra.mxu0 %v1025
    %1441 = vmatprep.subr.bf16.mxu0 0
    %1442 = vmatpush1.bf16.msra.mxu0 %v1026
    %1443 = vmatprep.mubr.bf16.mxu0 %v382
    %1444 = vmatmul.mubr.bf16.gmra.mrb[0].mxu0 %v368
    %v1445 = vpop.f32.mrb[0].mxu0
    %v1446 = vadd.f32 %v1406, %v1445
    %v1447 = vpop.f32.mrb[0].mxu0
    %v1448 = vpop.f32.mrb[0].mxu0
    %v1449 = vpop.f32.mrb[0].mxu0
    %1450 = vdwg.mxu0
    %1451 = vmatprep.subr.bf16.mxu0 0
    %1452 = vmatpush1.bf16.msra.mxu0 %v1027
    %1453 = vmatprep.subr.bf16.mxu0 0
    %1454 = vmatpush1.bf16.msra.mxu0 %v1028
    %1455 = vmatprep.subr.bf16.mxu0 0
    %1456 = vmatpush1.bf16.msra.mxu0 %v1029
    %1457 = vmatprep.subr.bf16.mxu0 0
    %1458 = vmatpush1.bf16.msra.mxu0 %v1030
    %1459 = vmatprep.subr.bf16.mxu0 0
    %1460 = vmatpush1.bf16.msra.mxu0 %v1031
    %1461 = vmatprep.subr.bf16.mxu0 0
    %1462 = vmatpush1.bf16.msra.mxu0 %v1032
    %1463 = vmatprep.subr.bf16.mxu0 0
    %1464 = vmatpush1.bf16.msra.mxu0 %v1033
    %1465 = vmatprep.subr.bf16.mxu0 0
    %1466 = vmatpush1.bf16.msra.mxu0 %v1034
    %1467 = vmatprep.subr.bf16.mxu0 0
    %1468 = vmatpush1.bf16.msra.mxu0 %v1035
    %1469 = vmatprep.subr.bf16.mxu0 0
    %1470 = vmatpush1.bf16.msra.mxu0 %v1036
    %1471 = vmatprep.subr.bf16.mxu0 0
    %1472 = vmatpush1.bf16.msra.mxu0 %v1037
    %1473 = vmatprep.subr.bf16.mxu0 0
    %1474 = vmatpush1.bf16.msra.mxu0 %v1038
    %1475 = vmatprep.subr.bf16.mxu0 0
    %1476 = vmatpush1.bf16.msra.mxu0 %v1039
    %1477 = vmatprep.subr.bf16.mxu0 0
    %1478 = vmatpush1.bf16.msra.mxu0 %v1040
    %1479 = vmatprep.subr.bf16.mxu0 0
    %1480 = vmatpush1.bf16.msra.mxu0 %v1041
    %1481 = vmatprep.subr.bf16.mxu0 0
    %1482 = vmatpush1.bf16.msra.mxu0 %v1042
    %1483 = vmatprep.mubr.bf16.mxu0 %v386
    %1484 = vmatmul.mubr.bf16.gmra.mrb[0].mxu0 %v384
    %v1485 = vpop.f32.mrb[0].mxu0
    %v1486 = vadd.f32 %v1446, %v1485
    %v1487 = vpop.f32.mrb[0].mxu0
    %v1488 = vpop.f32.mrb[0].mxu0
    %v1489 = vpop.f32.mrb[0].mxu0
    %1490 = vdwg.mxu0
    %v1491 = vmax.f32 %v1486, 0.0
    %v1492 = vpack.c.bf16 %v1491, %v1491
    %v1493 = vld [vmem:[%s3] sm:$0xf]
    %v1494 = vld [vmem:[%s3 + $0x4] sm:$0xf]
    %v1495 = vld [vmem:[%s3 + $0x8] sm:$0xf]
    %v1496 = vld [vmem:[%s3 + $0xc] sm:$0xf]
    %v1497 = vld [vmem:[%s3 + $0x10] sm:$0xf]
    %v1498 = vld [vmem:[%s3 + $0x14] sm:$0xf]
    %v1499 = vld [vmem:[%s3 + $0x18] sm:$0xf]
    %v1500 = vld [vmem:[%s3 + $0x1c] sm:$0xf]
    %v1501 = vld [vmem:[%s3 + $0x20] sm:$0xf]
    %v1502 = vld [vmem:[%s3 + $0x24] sm:$0xf]
    %v1503 = vld [vmem:[%s3 + $0x28] sm:$0xf]
    %v1504 = vld [vmem:[%s3 + $0x2c] sm:$0xf]
    %v1505 = vld [vmem:[%s3 + $0x30] sm:$0xf]
    %v1506 = vld [vmem:[%s3 + $0x34] sm:$0xf]
    %v1507 = vld [vmem:[%s3 + $0x38] sm:$0xf]
    %v1508 = vld [vmem:[%s3 + $0x3c] sm:$0xf]
    %v1509 = vld [vmem:[%s4] sm:$0x1]
    %v1511 = vlaneseq
    %v1512 = vshrl.u32 %v1511, 7
    %v1513 = vsub.s32 0, %v1512
    %v1514 = vrot.slane %v1509, %v1513
    %v1532 = vunpack.c.l.b16 %v1493
    %v1533 = vunpack.c.l.b16 %v1494
    %v1534 = vunpack.c.l.b16 %v1495
    %v1535 = vunpack.c.l.b16 %v1496
    %v1536 = vunpack.c.l.b16 %v1497
    %v1537 = vunpack.c.l.b16 %v1498
    %v1538 = vunpack.c.l.b16 %v1499
    %v1539 = vunpack.c.l.b16 %v1500
    %v1540 = vunpack.c.l.b16 %v1501
    %v1541 = vunpack.c.l.b16 %v1502
    %v1542 = vunpack.c.l.b16 %v1503
    %v1543 = vunpack.c.l.b16 %v1504
    %v1544 = vunpack.c.l.b16 %v1505
    %v1545 = vunpack.c.l.b16 %v1506
    %v1546 = vunpack.c.l.b16 %v1507
    %v1547 = vunpack.c.l.b16 %v1508
    %v1548 = vpack.c.b16 %v1533, %v1532
    %v1549 = vpack.c.b16 %v1535, %v1534
    %v1550 = vpack.c.b16 %v1537, %v1536
    %v1551 = vpack.c.b16 %v1539, %v1538
    %v1552 = vpack.c.b16 %v1541, %v1540
    %v1553 = vpack.c.b16 %v1543, %v1542
    %v1554 = vpack.c.b16 %v1545, %v1544
    %v1555 = vpack.c.b16 %v1547, %v1546
    %1564 = vmatprep.subr.bf16.mxu0 0
    %1565 = vmatpush1.bf16.msra.mxu0 %v1548
    %1566 = vmatprep.subr.bf16.mxu0 0
    %1567 = vmatpush1.bf16.msra.mxu0 %v1549
    %1568 = vmatprep.subr.bf16.mxu0 0
    %1569 = vmatpush1.bf16.msra.mxu0 %v1550
    %1570 = vmatprep.subr.bf16.mxu0 0
    %1571 = vmatpush1.bf16.msra.mxu0 %v1551
    %1572 = vmatprep.subr.bf16.mxu0 0
    %1573 = vmatpush1.bf16.msra.mxu0 %v1552
    %1574 = vmatprep.subr.bf16.mxu0 0
    %1575 = vmatpush1.bf16.msra.mxu0 %v1553
    %1576 = vmatprep.subr.bf16.mxu0 0
    %1577 = vmatpush1.bf16.msra.mxu0 %v1554
    %1578 = vmatprep.subr.bf16.mxu0 0
    %1579 = vmatpush1.bf16.msra.mxu0 %v1555
    %1580 = vmatprep.subr.bf16.mxu0 0
    %1581 = vmatpush1.bf16.msra.mxu0 0
    %1582 = vmatprep.subr.bf16.mxu0 0
    %1583 = vmatpush1.bf16.msra.mxu0 0
    %1584 = vmatprep.subr.bf16.mxu0 0
    %1585 = vmatpush1.bf16.msra.mxu0 0
    %1586 = vmatprep.subr.bf16.mxu0 0
    %1587 = vmatpush1.bf16.msra.mxu0 0
    %1588 = vmatprep.subr.bf16.mxu0 0
    %1589 = vmatpush1.bf16.msra.mxu0 0
    %1590 = vmatprep.subr.bf16.mxu0 0
    %1591 = vmatpush1.bf16.msra.mxu0 0
    %1592 = vmatprep.subr.bf16.mxu0 0
    %1593 = vmatpush1.bf16.msra.mxu0 0
    %1594 = vmatprep.subr.bf16.mxu0 0
    %1595 = vmatpush1.bf16.msra.mxu0 0
    %1596 = vmatprep.mubr.bf16.mxu0 0
    %1597 = vmatmul.mubr.bf16.gmra.mrb[0].mxu0 %v1492
    %v1598 = vpop.f32.mrb[0].mxu0
    %v1599 = vadd.f32 %v1514, %v1598
    %v1600 = vpop.f32.mrb[0].mxu0
    %v1601 = vpop.f32.mrb[0].mxu0
    %v1602 = vpop.f32.mrb[0].mxu0
    %1603 = vdwg.mxu0
    %1604 = vst [vmem:[#allocation2] sm:$0x3] %v1599
    // Predicated region
    $region22: #{example_model_forward.7} parent=1 // pred_check
      _
    $region23: #{example_model_forward.7} parent=1 // pred_check_branch
      %1606 = sbr.rel (0) target = $region25
    $region24: #{example_model_forward.7} parent=1 // pred_region
      %s1608 = ssub.s32 32, 32
      %1609 = vsyncadd [#allocation3], %s1608
      %s1611 = sshll.u32 [#allocation2], 4
      %s1612 = int_to_ptr.vmem [resolvable:$true] %s1611
      %1614 = dma.vmem_to_hbm [thread:$0]  %s1612, 32, %s5, [#allocation3]
    $region25: #{example_model_forward.7} parent=1 // pred_fallthru
      _
    // Predicated region
    $region26: #{example_model_forward.7} parent=1 // pred_check
      _
    $region27: #{example_model_forward.7} parent=1 // pred_check_branch
      %1616 = sbr.rel (0) target = $region29
    $region28: #{example_model_forward.7} parent=1 // pred_region
      %1617 = dma.done [#allocation3], 32
    $region29: #{example_model_forward.7} parent=1 // pred_fallthru
      _
    %1618 = vsyncpa [#allocation3], 1

// kernel: example_model_forward.6
$region0: #{example_model_forward.6}
  #allocation0 [shape = 'u32[]', space=smem, size = 0x4, offset = 0x4, fixed_abs, tag = 'smem constant byte address 0x4 - core index']
  #allocation1 [shape = 'u32[144,128]{1,0:T(1,128)}', space=vmem, size = 0x12000, scoped, tag = 'internal scratch']
  %s0 = inlined_call_operand.vmem [shape: bf16[2,44,256], index: 0, kind: input, shape index: {}]
  %s1 = inlined_call_operand.vmem [shape: bf16[9,256,512], index: 1, kind: input, shape index: {}]
  %s2 = inlined_call_operand.vmem [shape: f32[1,128], index: 2, kind: input, shape index: {}]
  %s3 = inlined_call_operand.vmem [shape: bf16[2,24,128], index: 3, kind: output, shape index: {}]
  %s4 = sld [smem:[#allocation0]]
  $region45: #{example_model_forward.6} parent=0
    _
  %s6 = ssub.s32 1, %s4
  %s7 = scalar_select 0, %s6, %s4
  loop: start=0, step=1, limit=4
  $region2: #{example_model_forward.6} parent=0 // loop_pre_header
    _
  $region3: #{example_model_forward.6} parent=0 // loop_header
    %s9 = sphi 0, %s13
    %p10 = scmp.ge.s32.totalorder %s9, 4
    %s19 = sphi 0, %s21
    %s22 = sphi 0, %s19
    %s23 = sphi 0, %s22
    %s39 = sphi 0, %s23
    %s43 = sphi 0, %s43
    %s45 = sphi 0, %s43
    %s46 = sphi 0, %s45
    %s60 = sphi 0, %s46
    %s64 = sphi 0, %s64
    %s66 = sphi 0, %s64
    %s67 = sphi 0, %s66
    %s81 = sphi 0, %s67
    %s87 = sphi 0, %s89
    %s90 = sphi 0, %s87
    %s91 = sphi 0, %s90
    %s107 = sphi 0, %s91
  $region4: #{example_model_forward.6} parent=0 // loop_header_branch
    %12 = sbr.rel (%p10) target = $region8
  $region5: #{example_model_forward.6} parent=0 // loop_body
    %s14 = ssub.s32 %s9, 1
    %s15 = ssub.s32 %s9, 2
    %s16 = sadd.s32 %s9, 1
    %s17 = ssub.s32 %s9, %s16
    %p18 = scmp.eq.s32.totalorder %s17, 0
    %s20 = sadd.s32 %s19, 1
    %s21 = scalar_select %p18, %s19, %s20
    %p24 = pneg %p18
    %p25 = scmp.eq.s32.totalorder %s9, 1
    %p26 = por %p24, %p25
    %p27 = scmp.ne.s32.totalorder %s19, %s22
    %p28 = scmp.eq.s32.totalorder %s9, 0
    %p29 = por %p27, %p28
    %p30 = scmp.ne.s32.totalorder %s19, %s22
    %p31 = scmp.eq.s32.totalorder %s14, 1
    %p32 = por %p30, %p31
    %p33 = scmp.ne.s32.totalorder %s22, %s23
    %p34 = scmp.eq.s32.totalorder %s14, 0
    %p35 = por %p33, %p34
    %p36 = scmp.ne.s32.totalorder %s22, %s23
    %p37 = scmp.eq.s32.totalorder %s15, 1
    %p38 = por %p36, %p37
    %p40 = scmp.ne.s32.totalorder %s23, %s39
    %p41 = scmp.eq.s32.totalorder %s15, 0
    %p42 = por %p40, %p41
    %s44 = sadd.s32 %s43, 1
    %p47 = scmp.eq.s32.totalorder %s9, 1
    %p48 = scmp.ne.s32.totalorder %s43, %s45
    %p49 = scmp.eq.s32.totalorder %s9, 0
    %p50 = por %p48, %p49
    %p51 = scmp.ne.s32.totalorder %s43, %s45
    %p52 = scmp.eq.s32.totalorder %s14, 1
    %p53 = por %p51, %p52
    %p54 = scmp.ne.s32.totalorder %s45, %s46
    %p55 = scmp.eq.s32.totalorder %s14, 0
    %p56 = por %p54, %p55
    %p57 = scmp.ne.s32.totalorder %s45, %s46
    %p58 = scmp.eq.s32.totalorder %s15, 1
    %p59 = por %p57, %p58
    %p61 = scmp.ne.s32.totalorder %s46, %s60
    %p62 = scmp.eq.s32.totalorder %s15, 0
    %p63 = por %p61, %p62
    %s65 = sadd.s32 %s64, 1
    %p68 = scmp.eq.s32.totalorder %s9, 1
    %p69 = scmp.ne.s32.totalorder %s64, %s66
    %p70 = scmp.eq.s32.totalorder %s9, 0
    %p71 = por %p69, %p70
    %p72 = scmp.ne.s32.totalorder %s64, %s66
    %p73 = scmp.eq.s32.totalorder %s14, 1
    %p74 = por %p72, %p73
    %p75 = scmp.ne.s32.totalorder %s66, %s67
    %p76 = scmp.eq.s32.totalorder %s14, 0
    %p77 = por %p75, %p76
    %p78 = scmp.ne.s32.totalorder %s66, %s67
    %p79 = scmp.eq.s32.totalorder %s15, 1
    %p80 = por %p78, %p79
    %p82 = scmp.ne.s32.totalorder %s67, %s81
    %p83 = scmp.eq.s32.totalorder %s15, 0
    %p84 = por %p82, %p83
    %s85 = ssub.s32 %s9, %s16
    %p86 = scmp.eq.s32.totalorder %s85, 0
    %s88 = sadd.s32 %s87, 1
    %s89 = scalar_select %p86, %s87, %s88
    %p92 = pneg %p86
    %p93 = scmp.eq.s32.totalorder %s9, 1
    %p94 = por %p92, %p93
    %p95 = scmp.ne.s32.totalorder %s87, %s90
    %p96 = scmp.eq.s32.totalorder %s9, 0
    %p97 = por %p95, %p96
    %p98 = scmp.ne.s32.totalorder %s87, %s90
    %p99 = scmp.eq.s32.totalorder %s14, 1
    %p100 = por %p98, %p99
    %p101 = scmp.ne.s32.totalorder %s90, %s91
    %p102 = scmp.eq.s32.totalorder %s14, 0
    %p103 = por %p101, %p102
    %p104 = scmp.ne.s32.totalorder %s90, %s91
    %p105 = scmp.eq.s32.totalorder %s15, 1
    %p106 = por %p104, %p105
    %p108 = scmp.ne.s32.totalorder %s91, %s107
    %p109 = scmp.eq.s32.totalorder %s15, 0
    %p110 = por %p108, %p109
    %p111 = scmp.le.s32.totalorder 1, %s9
    %p112 = scmp.lt.s32.totalorder %s9, 3
    %p113 = pnand %p111, %p112
    %p114 = pneg %p113
    // Predicated region
    $region9: #{example_model_forward.6} parent=5 // pred_check
      _
    $region10: #{example_model_forward.6} parent=5 // pred_check_branch
      %116 = sbr.rel (%p113) target = $region12
    $region11: #{example_model_forward.6} parent=5 // pred_region
      %s117 = ssub.s32 %s9, 1
      // Predicated region
      $region13: #{example_model_forward.6} parent=11 // pred_check
        %p118 = pneg %p56
      $region14: #{example_model_forward.6} parent=11 // pred_check_branch
        %120 = sbr.rel (%p118) target = $region16
      $region15: #{example_model_forward.6} parent=11 // pred_region
        _
      $region16: #{example_model_forward.6} parent=11 // pred_fallthru
        _
      // Predicated region
      $region17: #{example_model_forward.6} parent=11 // pred_check
        %p121 = pneg %p77
      $region18: #{example_model_forward.6} parent=11 // pred_check_branch
        %123 = sbr.rel (%p121) target = $region20
      $region19: #{example_model_forward.6} parent=11 // pred_region
        _
      $region20: #{example_model_forward.6} parent=11 // pred_fallthru
        _
    $region12: #{example_model_forward.6} parent=5 // pred_fallthru
      _
    %p124 = scmp.lt.s32.totalorder %s9, 2
    // Predicated region
    $region21: #{example_model_forward.6} parent=5 // pred_check
      %p125 = pneg %p124
    $region22: #{example_model_forward.6} parent=5 // pred_check_branch
      %127 = sbr.rel (%p125) target = $region24
    $region23: #{example_model_forward.6} parent=5 // pred_region
      // Predicated region
      $region25: #{example_model_forward.6} parent=23 // pred_check
        %p128 = pneg %p29
      $region26: #{example_model_forward.6} parent=23 // pred_check_branch
        %130 = sbr.rel (%p128) target = $region28
      $region27: #{example_model_forward.6} parent=23 // pred_region
        %p131 = scmp.lt.s32.totalorder %s9, 1
        %s132 = scalar_select %p131, %s9, 1
        %s133 = smul.addr %s132, 12
        %s134 = smul.addr %s133, 4
        %s135 = scalar_lea.vmem %s0, %s134
      $region28: #{example_model_forward.6} parent=23 // pred_fallthru
        _
    $region24: #{example_model_forward.6} parent=5 // pred_fallthru
      _
    %p136 = scmp.le.s32.totalorder 1, %s9
    %p137 = scmp.lt.s32.totalorder %s9, 3
    %p138 = pnand %p136, %p137
    %p139 = pneg %p138
    // Predicated region
    $region29: #{example_model_forward.6} parent=5 // pred_check
      _
    $region30: #{example_model_forward.6} parent=5 // pred_check_branch
      %141 = sbr.rel (%p138) target = $region32
    $region31: #{example_model_forward.6} parent=5 // pred_region
      %s142 = ssub.s32 %s9, 1
      %p143 = scmp.lt.s32.totalorder %s14, 1
      %s144 = scalar_select %p143, %s14, 1
      %s145 = smul.addr %s144, 12
      %s146 = smul.addr %s145, 4
      %s147 = scalar_lea.vmem %s0, %s146
      %p148 = pneg %p35
      %p149 = pneg %p32
      %p150 = pneg %p56
      %p151 = pneg %p53
      %p152 = pneg %p77
      %p153 = pneg %p74
      %p154 = pneg %p103
      %p155 = pneg %p100
      %p156 = scmp.lt.s32.totalorder %s14, 1
      %s157 = scalar_select %p156, %s14, 1
      %s158 = smul.addr %s157, 3
      %s159 = smul.addr %s158, 4
      %s160 = scalar_lea.vmem %s3, %s159
      %p161 = scmp.lt.s32.totalorder %s14, 1
      %s162 = scalar_select %p161, %s14, 1
      %s163 = smul.addr %s162, 12
      %s164 = smul.addr %s163, 4
      %s165 = scalar_lea.vmem %s0, %s164
      %p166 = scmp.lt.s32.totalorder %s14, 1
      %s167 = scalar_select %p166, %s14, 1
      %s168 = smul.addr %s167, 3
      %s169 = smul.addr %s168, 4
      %s170 = scalar_lea.vmem %s3, %s169
      %v171 = vld [vmem:[%s165] sm:$0xff]
      %v172 = vld [vmem:[%s165 + $0x8] sm:$0xff]
      %v173 = vld [vmem:[%s165 + $0x10] sm:$0xff]
      %v174 = vld [vmem:[%s1] sm:$0xff]
      %v175 = vld [vmem:[%s1 + $0x8] sm:$0xff]
      %v176 = vld [vmem:[%s1 + $0x10] sm:$0xff]
      %v177 = vld [vmem:[%s1 + $0x18] sm:$0xff]
      %v178 = vld [vmem:[%s1 + $0x20] sm:$0xff]
      %v179 = vld [vmem:[%s1 + $0x28] sm:$0xff]
      %v180 = vld [vmem:[%s1 + $0x30] sm:$0xff]
      %v181 = vld [vmem:[%s1 + $0x38] sm:$0xff]
      %v182 = vld [vmem:[%s1 + $0x40] sm:$0xff]
      %v183 = vld [vmem:[%s1 + $0x48] sm:$0xff]
      %v184 = vld [vmem:[%s1 + $0x50] sm:$0xff]
      %v185 = vld [vmem:[%s1 + $0x58] sm:$0xff]
      %v186 = vld [vmem:[%s1 + $0x60] sm:$0xff]
      %v187 = vld [vmem:[%s1 + $0x68] sm:$0xff]
      %v188 = vld [vmem:[%s1 + $0x70] sm:$0xff]
      %v189 = vld [vmem:[%s1 + $0x78] sm:$0xff]
      %v190 = vld [vmem:[%s1 + $0x80] sm:$0xff]
      %v191 = vld [vmem:[%s1 + $0x88] sm:$0xff]
      %v192 = vld [vmem:[%s1 + $0x90] sm:$0xff]
      %v193 = vld [vmem:[%s1 + $0x98] sm:$0xff]
      %v194 = vld [vmem:[%s1 + $0xa0] sm:$0xff]
      %v195 = vld [vmem:[%s1 + $0xa8] sm:$0xff]
      %v196 = vld [vmem:[%s1 + $0xb0] sm:$0xff]
      %v197 = vld [vmem:[%s1 + $0xb8] sm:$0xff]
      %v198 = vld [vmem:[%s1 + $0xc0] sm:$0xff]
      %v199 = vld [vmem:[%s1 + $0xc8] sm:$0xff]
      %v200 = vld [vmem:[%s1 + $0xd0] sm:$0xff]
      %v201 = vld [vmem:[%s1 + $0xd8] sm:$0xff]
      %v202 = vld [vmem:[%s1 + $0xe0] sm:$0xff]
      %v203 = vld [vmem:[%s1 + $0xe8] sm:$0xff]
      %v204 = vld [vmem:[%s1 + $0xf0] sm:$0xff]
      %v205 = vld [vmem:[%s1 + $0xf8] sm:$0xff]
      %v206 = vld [vmem:[%s1 + $0x100] sm:$0xff]
      %v207 = vld [vmem:[%s1 + $0x108] sm:$0xff]
      %v208 = vld [vmem:[%s1 + $0x110] sm:$0xff]
      %v209 = vld [vmem:[%s1 + $0x118] sm:$0xff]
      %v210 = vld [vmem:[%s1 + $0x120] sm:$0xff]
      %v211 = vld [vmem:[%s1 + $0x128] sm:$0xff]
      %v212 = vld [vmem:[%s1 + $0x130] sm:$0xff]
      %v213 = vld [vmem:[%s1 + $0x138] sm:$0xff]
      %v214 = vld [vmem:[%s1 + $0x140] sm:$0xff]
      %v215 = vld [vmem:[%s1 + $0x148] sm:$0xff]
      %v216 = vld [vmem:[%s1 + $0x150] sm:$0xff]
      %v217 = vld [vmem:[%s1 + $0x158] sm:$0xff]
      %v218 = vld [vmem:[%s1 + $0x160] sm:$0xff]
      %v219 = vld [vmem:[%s1 + $0x168] sm:$0xff]
      %v220 = vld [vmem:[%s1 + $0x170] sm:$0xff]
      %v221 = vld [vmem:[%s1 + $0x178] sm:$0xff]
      %v222 = vld [vmem:[%s1 + $0x180] sm:$0xff]
      %v223 = vld [vmem:[%s1 + $0x188] sm:$0xff]
      %v224 = vld [vmem:[%s1 + $0x190] sm:$0xff]
      %v225 = vld [vmem:[%s1 + $0x198] sm:$0xff]
      %v226 = vld [vmem:[%s1 + $0x1a0] sm:$0xff]
      %v227 = vld [vmem:[%s1 + $0x1a8] sm:$0xff]
      %v228 = vld [vmem:[%s1 + $0x1b0] sm:$0xff]
      %v229 = vld [vmem:[%s1 + $0x1b8] sm:$0xff]
      %v230 = vld [vmem:[%s1 + $0x1c0] sm:$0xff]
      %v231 = vld [vmem:[%s1 + $0x1c8] sm:$0xff]
      %v232 = vld [vmem:[%s1 + $0x1d0] sm:$0xff]
      %v233 = vld [vmem:[%s1 + $0x1d8] sm:$0xff]
      %v234 = vld [vmem:[%s1 + $0x1e0] sm:$0xff]
      %v235 = vld [vmem:[%s1 + $0x1e8] sm:$0xff]
      %v236 = vld [vmem:[%s1 + $0x1f0] sm:$0xff]
      %v237 = vld [vmem:[%s1 + $0x1f8] sm:$0xff]
      %v238 = vld [vmem:[%s165 + $0x18] sm:$0x11]
      %s239 = scalar_lea.vmem %s1, 512
      %v240 = vld [vmem:[%s239] sm:$0xff]
      %v241 = vld [vmem:[%s239 + $0x8] sm:$0xff]
      %v242 = vld [vmem:[%s239 + $0x10] sm:$0xff]
      %v243 = vld [vmem:[%s239 + $0x18] sm:$0xff]
      %v244 = vld [vmem:[%s239 + $0x20] sm:$0xff]
      %v245 = vld [vmem:[%s239 + $0x28] sm:$0xff]
      %v246 = vld [vmem:[%s239 + $0x30] sm:$0xff]
      %v247 = vld [vmem:[%s239 + $0x38] sm:$0xff]
      %v248 = vld [vmem:[%s239 + $0x40] sm:$0xff]
      %v249 = vld [vmem:[%s239 + $0x48] sm:$0xff]
      %v250 = vld [vmem:[%s239 + $0x50] sm:$0xff]
      %v251 = vld [vmem:[%s239 + $0x58] sm:$0xff]
      %v252 = vld [vmem:[%s239 + $0x60] sm:$0xff]
      %v253 = vld [vmem:[%s239 + $0x68] sm:$0xff]
      %v254 = vld [vmem:[%s239 + $0x70] sm:$0xff]
      %v255 = vld [vmem:[%s239 + $0x78] sm:$0xff]
      %v256 = vld [vmem:[%s239 + $0x80] sm:$0xff]
      %v257 = vld [vmem:[%s239 + $0x88] sm:$0xff]
      %v258 = vld [vmem:[%s239 + $0x90] sm:$0xff]
      %v259 = vld [vmem:[%s239 + $0x98] sm:$0xff]
      %v260 = vld [vmem:[%s239 + $0xa0] sm:$0xff]
      %v261 = vld [vmem:[%s239 + $0xa8] sm:$0xff]
      %v262 = vld [vmem:[%s239 + $0xb0] sm:$0xff]
      %v263 = vld [vmem:[%s239 + $0xb8] sm:$0xff]
      %v264 = vld [vmem:[%s239 + $0xc0] sm:$0xff]
      %v265 = vld [vmem:[%s239 + $0xc8] sm:$0xff]
      %v266 = vld [vmem:[%s239 + $0xd0] sm:$0xff]
      %v267 = vld [vmem:[%s239 + $0xd8] sm:$0xff]
      %v268 = vld [vmem:[%s239 + $0xe0] sm:$0xff]
      %v269 = vld [vmem:[%s239 + $0xe8] sm:$0xff]
      %v270 = vld [vmem:[%s239 + $0xf0] sm:$0xff]
      %v271 = vld [vmem:[%s239 + $0xf8] sm:$0xff]
      %v272 = vld [vmem:[%s239 + $0x100] sm:$0xff]
      %v273 = vld [vmem:[%s239 + $0x108] sm:$0xff]
      %v274 = vld [vmem:[%s239 + $0x110] sm:$0xff]
      %v275 = vld [vmem:[%s239 + $0x118] sm:$0xff]
      %v276 = vld [vmem:[%s239 + $0x120] sm:$0xff]
      %v277 = vld [vmem:[%s239 + $0x128] sm:$0xff]
      %v278 = vld [vmem:[%s239 + $0x130] sm:$0xff]
      %v279 = vld [vmem:[%s239 + $0x138] sm:$0xff]
      %v280 = vld [vmem:[%s239 + $0x140] sm:$0xff]
      %v281 = vld [vmem:[%s239 + $0x148] sm:$0xff]
      %v282 = vld [vmem:[%s239 + $0x150] sm:$0xff]
      %v283 = vld [vmem:[%s239 + $0x158] sm:$0xff]
      %v284 = vld [vmem:[%s239 + $0x160] sm:$0xff]
      %v285 = vld [vmem:[%s239 + $0x168] sm:$0xff]
      %v286 = vld [vmem:[%s239 + $0x170] sm:$0xff]
      %v287 = vld [vmem:[%s239 + $0x178] sm:$0xff]
      %v288 = vld [vmem:[%s239 + $0x180] sm:$0xff]
      %v289 = vld [vmem:[%s239 + $0x188] sm:$0xff]
      %v290 = vld [vmem:[%s239 + $0x190] sm:$0xff]
      %v291 = vld [vmem:[%s239 + $0x198] sm:$0xff]
      %v292 = vld [vmem:[%s239 + $0x1a0] sm:$0xff]
      %v293 = vld [vmem:[%s239 + $0x1a8] sm:$0xff]
      %v294 = vld [vmem:[%s239 + $0x1b0] sm:$0xff]
      %v295 = vld [vmem:[%s239 + $0x1b8] sm:$0xff]
      %v296 = vld [vmem:[%s239 + $0x1c0] sm:$0xff]
      %v297 = vld [vmem:[%s239 + $0x1c8] sm:$0xff]
      %v298 = vld [vmem:[%s239 + $0x1d0] sm:$0xff]
      %v299 = vld [vmem:[%s239 + $0x1d8] sm:$0xff]
      %v300 = vld [vmem:[%s239 + $0x1e0] sm:$0xff]
      %v301 = vld [vmem:[%s239 + $0x1e8] sm:$0xff]
      %v302 = vld [vmem:[%s239 + $0x1f0] sm:$0xff]
      %v303 = vld [vmem:[%s239 + $0x1f8] sm:$0xff]
      %v308 = vunpack.c.l.b16 %v171
      %v309 = vunpack.c.h.b16 %v171
      %v310 = vunpack.c.l.b16 %v172
      %v311 = vunpack.c.h.b16 %v172
      %v312 = vunpack.c.l.b16 %v173
      %v313 = vunpack.c.h.b16 %v173
      %v314 = vunpack.c.l.b16 %v238
      %v315 = vunpack.c.h.b16 %v238
      %v316 = vpack.c.b16 %v310, %v308
      %v317 = vpack.c.b16 %v311, %v309
      %v318 = vpack.c.b16 %v314, %v312
      %v319 = vpack.c.b16 %v315, %v313
      %vm320 = vsmask.f32 7424
      %v322 = vshrl.u32 %v316, 16
      %v324 = vshll.u32 %v316, 16
      %v326 = vrot.slane %v324, 1
      %v327 = vor.u32 %v322, %v326
      %v329 = vshll.u32 %v318, 16
      %v331 = vrot.slane %v329, 1
      %v332 = vsel %vm320, %v327, %v331
      %v334 = vshrl.u32 %v317, 16
      %v336 = vshll.u32 %v317, 16
      %v338 = vrot.slane %v336, 1
      %v339 = vor.u32 %v334, %v338
      %v341 = vshll.u32 %v319, 16
      %v343 = vrot.slane %v341, 1
      %v344 = vsel %vm320, %v339, %v343
      %v345 = vshrl.u32 %v318, 16
      %v347 = vor.u32 %v345, %v331
      %v348 = vshrl.u32 %v319, 16
      %v350 = vor.u32 %v348, %v343
      %v419 = vunpack.c.l.b16 %v240
      %v420 = vunpack.c.h.b16 %v240
      %v421 = vunpack.c.l.b16 %v241
      %v422 = vunpack.c.h.b16 %v241
      %v423 = vunpack.c.l.b16 %v242
      %v424 = vunpack.c.h.b16 %v242
      %v425 = vunpack.c.l.b16 %v243
      %v426 = vunpack.c.h.b16 %v243
      %v427 = vunpack.c.l.b16 %v244
      %v428 = vunpack.c.h.b16 %v244
      %v429 = vunpack.c.l.b16 %v245
      %v430 = vunpack.c.h.b16 %v245
      %v431 = vunpack.c.l.b16 %v246
      %v432 = vunpack.c.h.b16 %v246
      %v433 = vunpack.c.l.b16 %v247
      %v434 = vunpack.c.h.b16 %v247
      %v435 = vunpack.c.l.b16 %v248
      %v436 = vunpack.c.h.b16 %v248
      %v437 = vunpack.c.l.b16 %v249
      %v438 = vunpack.c.h.b16 %v249
      %v439 = vunpack.c.l.b16 %v250
      %v440 = vunpack.c.h.b16 %v250
      %v441 = vunpack.c.l.b16 %v251
      %v442 = vunpack.c.h.b16 %v251
      %v443 = vunpack.c.l.b16 %v252
      %v444 = vunpack.c.h.b16 %v252
      %v445 = vunpack.c.l.b16 %v253
      %v446 = vunpack.c.h.b16 %v253
      %v447 = vunpack.c.l.b16 %v254
      %v448 = vunpack.c.h.b16 %v254
      %v449 = vunpack.c.l.b16 %v255
      %v450 = vunpack.c.h.b16 %v255
      %v451 = vunpack.c.l.b16 %v256
      %v452 = vunpack.c.h.b16 %v256
      %v453 = vunpack.c.l.b16 %v257
      %v454 = vunpack.c.h.b16 %v257
      %v455 = vunpack.c.l.b16 %v258
      %v456 = vunpack.c.h.b16 %v258
      %v457 = vunpack.c.l.b16 %v259
      %v458 = vunpack.c.h.b16 %v259
      %v459 = vunpack.c.l.b16 %v260
      %v460 = vunpack.c.h.b16 %v260
      %v461 = vunpack.c.l.b16 %v261
      %v462 = vunpack.c.h.b16 %v261
      %v463 = vunpack.c.l.b16 %v262
      %v464 = vunpack.c.h.b16 %v262
      %v465 = vunpack.c.l.b16 %v263
      %v466 = vunpack.c.h.b16 %v263
      %v467 = vunpack.c.l.b16 %v264
      %v468 = vunpack.c.h.b16 %v264
      %v469 = vunpack.c.l.b16 %v265
      %v470 = vunpack.c.h.b16 %v265
      %v471 = vunpack.c.l.b16 %v266
      %v472 = vunpack.c.h.b16 %v266
      %v473 = vunpack.c.l.b16 %v267
      %v474 = vunpack.c.h.b16 %v267
      %v475 = vunpack.c.l.b16 %v268
      %v476 = vunpack.c.h.b16 %v268
      %v477 = vunpack.c.l.b16 %v269
      %v478 = vunpack.c.h.b16 %v269
      %v479 = vunpack.c.l.b16 %v270
      %v480 = vunpack.c.h.b16 %v270
      %v481 = vunpack.c.l.b16 %v271
      %v482 = vunpack.c.h.b16 %v271
      %v483 = vunpack.c.l.b16 %v272
      %v484 = vunpack.c.h.b16 %v272
      %v485 = vunpack.c.l.b16 %v273
      %v486 = vunpack.c.h.b16 %v273
      %v487 = vunpack.c.l.b16 %v274
      %v488 = vunpack.c.h.b16 %v274
      %v489 = vunpack.c.l.b16 %v275
      %v490 = vunpack.c.h.b16 %v275
      %v491 = vunpack.c.l.b16 %v276
      %v492 = vunpack.c.h.b16 %v276
      %v493 = vunpack.c.l.b16 %v277
      %v494 = vunpack.c.h.b16 %v277
      %v495 = vunpack.c.l.b16 %v278
      %v496 = vunpack.c.h.b16 %v278
      %v497 = vunpack.c.l.b16 %v279
      %v498 = vunpack.c.h.b16 %v279
      %v499 = vunpack.c.l.b16 %v280
      %v500 = vunpack.c.h.b16 %v280
      %v501 = vunpack.c.l.b16 %v281
      %v502 = vunpack.c.h.b16 %v281
      %v503 = vunpack.c.l.b16 %v282
      %v504 = vunpack.c.h.b16 %v282
      %v505 = vunpack.c.l.b16 %v283
      %v506 = vunpack.c.h.b16 %v283
      %v507 = vunpack.c.l.b16 %v284
      %v508 = vunpack.c.h.b16 %v284
      %v509 = vunpack.c.l.b16 %v285
      %v510 = vunpack.c.h.b16 %v285
      %v511 = vunpack.c.l.b16 %v286
      %v512 = vunpack.c.h.b16 %v286
      %v513 = vunpack.c.l.b16 %v287
      %v514 = vunpack.c.h.b16 %v287
      %v515 = vunpack.c.l.b16 %v288
      %v516 = vunpack.c.h.b16 %v288
      %v517 = vunpack.c.l.b16 %v289
      %v518 = vunpack.c.h.b16 %v289
      %v519 = vunpack.c.l.b16 %v290
      %v520 = vunpack.c.h.b16 %v290
      %v521 = vunpack.c.l.b16 %v291
      %v522 = vunpack.c.h.b16 %v291
      %v523 = vunpack.c.l.b16 %v292
      %v524 = vunpack.c.h.b16 %v292
      %v525 = vunpack.c.l.b16 %v293
      %v526 = vunpack.c.h.b16 %v293
      %v527 = vunpack.c.l.b16 %v294
      %v528 = vunpack.c.h.b16 %v294
      %v529 = vunpack.c.l.b16 %v295
      %v530 = vunpack.c.h.b16 %v295
      %v531 = vunpack.c.l.b16 %v296
      %v532 = vunpack.c.h.b16 %v296
      %v533 = vunpack.c.l.b16 %v297
      %v534 = vunpack.c.h.b16 %v297
      %v535 = vunpack.c.l.b16 %v298
      %v536 = vunpack.c.h.b16 %v298
      %v537 = vunpack.c.l.b16 %v299
      %v538 = vunpack.c.h.b16 %v299
      %v539 = vunpack.c.l.b16 %v300
      %v540 = vunpack.c.h.b16 %v300
      %v541 = vunpack.c.l.b16 %v301
      %v542 = vunpack.c.h.b16 %v301
      %v543 = vunpack.c.l.b16 %v302
      %v544 = vunpack.c.h.b16 %v302
      %v545 = vunpack.c.l.b16 %v303
      %v546 = vunpack.c.h.b16 %v303
      %v547 = vpack.c.b16 %v423, %v419
      %v548 = vpack.c.b16 %v424, %v420
      %v549 = vpack.c.b16 %v425, %v421
      %v550 = vpack.c.b16 %v426, %v422
      %v551 = vpack.c.b16 %v431, %v427
      %v552 = vpack.c.b16 %v432, %v428
      %v553 = vpack.c.b16 %v433, %v429
      %v554 = vpack.c.b16 %v434, %v430
      %v555 = vpack.c.b16 %v439, %v435
      %v556 = vpack.c.b16 %v440, %v436
      %v557 = vpack.c.b16 %v441, %v437
      %v558 = vpack.c.b16 %v442, %v438
      %v559 = vpack.c.b16 %v447, %v443
      %v560 = vpack.c.b16 %v448, %v444
      %v561 = vpack.c.b16 %v449, %v445
      %v562 = vpack.c.b16 %v450, %v446
      %v563 = vpack.c.b16 %v455, %v451
      %v564 = vpack.c.b16 %v456, %v452
      %v565 = vpack.c.b16 %v457, %v453
      %v566 = vpack.c.b16 %v458, %v454
      %v567 = vpack.c.b16 %v463, %v459
      %v568 = vpack.c.b16 %v464, %v460
      %v569 = vpack.c.b16 %v465, %v461
      %v570 = vpack.c.b16 %v466, %v462
      %v571 = vpack.c.b16 %v471, %v467
      %v572 = vpack.c.b16 %v472, %v468
      %v573 = vpack.c.b16 %v473, %v469
      %v574 = vpack.c.b16 %v474, %v470
      %v575 = vpack.c.b16 %v479, %v475
      %v576 = vpack.c.b16 %v480, %v476
      %v577 = vpack.c.b16 %v481, %v477
      %v578 = vpack.c.b16 %v482, %v478
      %v579 = vpack.c.b16 %v487, %v483
      %v580 = vpack.c.b16 %v488, %v484
      %v581 = vpack.c.b16 %v489, %v485
      %v582 = vpack.c.b16 %v490, %v486
      %v583 = vpack.c.b16 %v495, %v491
      %v584 = vpack.c.b16 %v496, %v492
      %v585 = vpack.c.b16 %v497, %v493
      %v586 = vpack.c.b16 %v498, %v494
      %v587 = vpack.c.b16 %v503, %v499
      %v588 = vpack.c.b16 %v504, %v500
      %v589 = vpack.c.b16 %v505, %v501
      %v590 = vpack.c.b16 %v506, %v502
      %v591 = vpack.c.b16 %v511, %v507
      %v592 = vpack.c.b16 %v512, %v508
      %v593 = vpack.c.b16 %v513, %v509
      %v594 = vpack.c.b16 %v514, %v510
      %v595 = vpack.c.b16 %v519, %v515
      %v596 = vpack.c.b16 %v520, %v516
      %v597 = vpack.c.b16 %v521, %v517
      %v598 = vpack.c.b16 %v522, %v518
      %v599 = vpack.c.b16 %v527, %v523
      %v600 = vpack.c.b16 %v528, %v524
      %v601 = vpack.c.b16 %v529, %v525
      %v602 = vpack.c.b16 %v530, %v526
      %v603 = vpack.c.b16 %v535, %v531
      %v604 = vpack.c.b16 %v536, %v532
      %v605 = vpack.c.b16 %v537, %v533
      %v606 = vpack.c.b16 %v538, %v534
      %v607 = vpack.c.b16 %v543, %v539
      %v608 = vpack.c.b16 %v544, %v540
      %v609 = vpack.c.b16 %v545, %v541
      %v610 = vpack.c.b16 %v546, %v542
      %675 = vmatprep.subr.bf16.mxu0 %v548
      %676 = vmatpush1.bf16.msra.mxu0 %v547
      %677 = vmatprep.subr.bf16.mxu0 %v552
      %678 = vmatpush1.bf16.msra.mxu0 %v551
      %679 = vmatprep.subr.bf16.mxu0 %v556
      %680 = vmatpush1.bf16.msra.mxu0 %v555
      %681 = vmatprep.subr.bf16.mxu0 %v560
      %682 = vmatpush1.bf16.msra.mxu0 %v559
      %683 = vmatprep.subr.bf16.mxu0 %v564
      %684 = vmatpush1.bf16.msra.mxu0 %v563
      %685 = vmatprep.subr.bf16.mxu0 %v568
      %686 = vmatpush1.bf16.msra.mxu0 %v567
      %687 = vmatprep.subr.bf16.mxu0 %v572
      %688 = vmatpush1.bf16.msra.mxu0 %v571
      %689 = vmatprep.subr.bf16.mxu0 %v576
      %690 = vmatpush1.bf16.msra.mxu0 %v575
      %691 = vmatprep.subr.bf16.mxu0 %v580
      %692 = vmatpush1.bf16.msra.mxu0 %v579
      %693 = vmatprep.subr.bf16.mxu0 %v584
      %694 = vmatpush1.bf16.msra.mxu0 %v583
      %695 = vmatprep.subr.bf16.mxu0 %v588
      %696 = vmatpush1.bf16.msra.mxu0 %v587
      %697 = vmatprep.subr.bf16.mxu0 %v592
      %698 = vmatpush1.bf16.msra.mxu0 %v591
      %699 = vmatprep.subr.bf16.mxu0 %v596
      %700 = vmatpush1.bf16.msra.mxu0 %v595
      %701 = vmatprep.subr.bf16.mxu0 %v600
      %702 = vmatpush1.bf16.msra.mxu0 %v599
      %703 = vmatprep.subr.bf16.mxu0 %v604
      %704 = vmatpush1.bf16.msra.mxu0 %v603
      %705 = vmatprep.subr.bf16.mxu0 %v608
      %706 = vmatpush1.bf16.msra.mxu0 %v607
      %707 = vmatprep.mubr.bf16.mxu0 %v344
      %708 = vmatmul.mubr.bf16.gmra.mrb[0].mxu0 %v332
      %v709 = vpop.f32.mrb[0].mxu0
      %v710 = vadd.f32 0.0, %v709
      %v711 = vpop.f32.mrb[0].mxu0
      %v712 = vadd.f32 0.0, %v711
      %v713 = vpop.f32.mrb[0].mxu0
      %v714 = vadd.f32 0.0, %v713
      %v715 = vpop.f32.mrb[0].mxu0
      %v716 = vadd.f32 0.0, %v715
      %717 = vmatprep.mubr.bf16.mxu0 %v350
      %718 = vmatmul.mubr.bf16.gmra.mrb[0].mxu0 %v347
      %v719 = vpop.f32.mrb[0].mxu0
      %v720 = vadd.f32 0.0, %v719
      %v721 = vpop.f32.mrb[0].mxu0
      %v722 = vadd.f32 0.0, %v721
      %v723 = vpop.f32.mrb[0].mxu0
      %v724 = vpop.f32.mrb[0].mxu0
      %725 = vdwg.mxu0
      %726 = vmatprep.subr.bf16.mxu0 %v550
      %727 = vmatpush1.bf16.msra.mxu0 %v549
      %728 = vmatprep.subr.bf16.mxu0 %v554
      %729 = vmatpush1.bf16.msra.mxu0 %v553
      %730 = vmatprep.subr.bf16.mxu0 %v558
      %731 = vmatpush1.bf16.msra.mxu0 %v557
      %732 = vmatprep.subr.bf16.mxu0 %v562
      %733 = vmatpush1.bf16.msra.mxu0 %v561
      %734 = vmatprep.subr.bf16.mxu0 %v566
      %735 = vmatpush1.bf16.msra.mxu0 %v565
      %736 = vmatprep.subr.bf16.mxu0 %v570
      %737 = vmatpush1.bf16.msra.mxu0 %v569
      %738 = vmatprep.subr.bf16.mxu0 %v574
      %739 = vmatpush1.bf16.msra.mxu0 %v573
      %740 = vmatprep.subr.bf16.mxu0 %v578
      %741 = vmatpush1.bf16.msra.mxu0 %v577
      %742 = vmatprep.subr.bf16.mxu0 %v582
      %743 = vmatpush1.bf16.msra.mxu0 %v581
      %744 = vmatprep.subr.bf16.mxu0 %v586
      %745 = vmatpush1.bf16.msra.mxu0 %v585
      %746 = vmatprep.subr.bf16.mxu0 %v590
      %747 = vmatpush1.bf16.msra.mxu0 %v589
      %748 = vmatprep.subr.bf16.mxu0 %v594
      %749 = vmatpush1.bf16.msra.mxu0 %v593
      %750 = vmatprep.subr.bf16.mxu0 %v598
      %751 = vmatpush1.bf16.msra.mxu0 %v597
      %752 = vmatprep.subr.bf16.mxu0 %v602
      %753 = vmatpush1.bf16.msra.mxu0 %v601
      %754 = vmatprep.subr.bf16.mxu0 %v606
      %755 = vmatpush1.bf16.msra.mxu0 %v605
      %756 = vmatprep.subr.bf16.mxu0 %v610
      %757 = vmatpush1.bf16.msra.mxu0 %v609
      %758 = vmatprep.mubr.bf16.mxu0 %v344
      %759 = vmatmul.mubr.bf16.gmra.mrb[0].mxu0 %v332
      %v760 = vpop.f32.mrb[0].mxu0
      %v761 = vadd.f32 0.0, %v760
      %v762 = vpop.f32.mrb[0].mxu0
      %v763 = vadd.f32 0.0, %v762
      %v764 = vpop.f32.mrb[0].mxu0
      %v765 = vadd.f32 0.0, %v764
      %v766 = vpop.f32.mrb[0].mxu0
      %v767 = vadd.f32 0.0, %v766
      %768 = vmatprep.mubr.bf16.mxu0 %v350
      %769 = vmatmul.mubr.bf16.gmra.mrb[0].mxu0 %v347
      %v770 = vpop.f32.mrb[0].mxu0
      %v771 = vadd.f32 0.0, %v770
      %v772 = vpop.f32.mrb[0].mxu0
      %v773 = vadd.f32 0.0, %v772
      %v774 = vpop.f32.mrb[0].mxu0
      %v775 = vpop.f32.mrb[0].mxu0
      %776 = vdwg.mxu0
      %v777 = vpack.c.b16 %v312, %v312
      %v778 = vpack.c.b16 %v313, %v313
      %v847 = vunpack.c.l.b16 %v174
      %v848 = vunpack.c.h.b16 %v174
      %v849 = vunpack.c.l.b16 %v175
      %v850 = vunpack.c.h.b16 %v175
      %v851 = vunpack.c.l.b16 %v176
      %v852 = vunpack.c.h.b16 %v176
      %v853 = vunpack.c.l.b16 %v177
      %v854 = vunpack.c.h.b16 %v177
      %v855 = vunpack.c.l.b16 %v178
      %v856 = vunpack.c.h.b16 %v178
      %v857 = vunpack.c.l.b16 %v179
      %v858 = vunpack.c.h.b16 %v179
      %v859 = vunpack.c.l.b16 %v180
      %v860 = vunpack.c.h.b16 %v180
      %v861 = vunpack.c.l.b16 %v181
      %v862 = vunpack.c.h.b16 %v181
      %v863 = vunpack.c.l.b16 %v182
      %v864 = vunpack.c.h.b16 %v182
      %v865 = vunpack.c.l.b16 %v183
      %v866 = vunpack.c.h.b16 %v183
      %v867 = vunpack.c.l.b16 %v184
      %v868 = vunpack.c.h.b16 %v184
      %v869 = vunpack.c.l.b16 %v185
      %v870 = vunpack.c.h.b16 %v185
      %v871 = vunpack.c.l.b16 %v186
      %v872 = vunpack.c.h.b16 %v186
      %v873 = vunpack.c.l.b16 %v187
      %v874 = vunpack.c.h.b16 %v187
      %v875 = vunpack.c.l.b16 %v188
      %v876 = vunpack.c.h.b16 %v188
      %v877 = vunpack.c.l.b16 %v189
      %v878 = vunpack.c.h.b16 %v189
      %v879 = vunpack.c.l.b16 %v190
      %v880 = vunpack.c.h.b16 %v190
      %v881 = vunpack.c.l.b16 %v191
      %v882 = vunpack.c.h.b16 %v191
      %v883 = vunpack.c.l.b16 %v192
      %v884 = vunpack.c.h.b16 %v192
      %v885 = vunpack.c.l.b16 %v193
      %v886 = vunpack.c.h.b16 %v193
      %v887 = vunpack.c.l.b16 %v194
      %v888 = vunpack.c.h.b16 %v194
      %v889 = vunpack.c.l.b16 %v195
      %v890 = vunpack.c.h.b16 %v195
      %v891 = vunpack.c.l.b16 %v196
      %v892 = vunpack.c.h.b16 %v196
      %v893 = vunpack.c.l.b16 %v197
      %v894 = vunpack.c.h.b16 %v197
      %v895 = vunpack.c.l.b16 %v198
      %v896 = vunpack.c.h.b16 %v198
      %v897 = vunpack.c.l.b16 %v199
      %v898 = vunpack.c.h.b16 %v199
      %v899 = vunpack.c.l.b16 %v200
      %v900 = vunpack.c.h.b16 %v200
      %v901 = vunpack.c.l.b16 %v201
      %v902 = vunpack.c.h.b16 %v201
      %v903 = vunpack.c.l.b16 %v202
      %v904 = vunpack.c.h.b16 %v202
      %v905 = vunpack.c.l.b16 %v203
      %v906 = vunpack.c.h.b16 %v203
      %v907 = vunpack.c.l.b16 %v204
      %v908 = vunpack.c.h.b16 %v204
      %v909 = vunpack.c.l.b16 %v205
      %v910 = vunpack.c.h.b16 %v205
      %v911 = vunpack.c.l.b16 %v206
      %v912 = vunpack.c.h.b16 %v206
      %v913 = vunpack.c.l.b16 %v207
      %v914 = vunpack.c.h.b16 %v207
      %v915 = vunpack.c.l.b16 %v208
      %v916 = vunpack.c.h.b16 %v208
      %v917 = vunpack.c.l.b16 %v209
      %v918 = vunpack.c.h.b16 %v209
      %v919 = vunpack.c.l.b16 %v210
      %v920 = vunpack.c.h.b16 %v210
      %v921 = vunpack.c.l.b16 %v211
      %v922 = vunpack.c.h.b16 %v211
      %v923 = vunpack.c.l.b16 %v212
      %v924 = vunpack.c.h.b16 %v212
      %v925 = vunpack.c.l.b16 %v213
      %v926 = vunpack.c.h.b16 %v213
      %v927 = vunpack.c.l.b16 %v214
      %v928 = vunpack.c.h.b16 %v214
      %v929 = vunpack.c.l.b16 %v215
      %v930 = vunpack.c.h.b16 %v215
      %v931 = vunpack.c.l.b16 %v216
      %v932 = vunpack.c.h.b16 %v216
      %v933 = vunpack.c.l.b16 %v217
      %v934 = vunpack.c.h.b16 %v217
      %v935 = vunpack.c.l.b16 %v218
      %v936 = vunpack.c.h.b16 %v218
      %v937 = vunpack.c.l.b16 %v219
      %v938 = vunpack.c.h.b16 %v219
      %v939 = vunpack.c.l.b16 %v220
      %v940 = vunpack.c.h.b16 %v220
      %v941 = vunpack.c.l.b16 %v221
      %v942 = vunpack.c.h.b16 %v221
      %v943 = vunpack.c.l.b16 %v222
      %v944 = vunpack.c.h.b16 %v222
      %v945 = vunpack.c.l.b16 %v223
      %v946 = vunpack.c.h.b16 %v223
      %v947 = vunpack.c.l.b16 %v224
      %v948 = vunpack.c.h.b16 %v224
      %v949 = vunpack.c.l.b16 %v225
      %v950 = vunpack.c.h.b16 %v225
      %v951 = vunpack.c.l.b16 %v226
      %v952 = vunpack.c.h.b16 %v226
      %v953 = vunpack.c.l.b16 %v227
      %v954 = vunpack.c.h.b16 %v227
      %v955 = vunpack.c.l.b16 %v228
      %v956 = vunpack.c.h.b16 %v228
      %v957 = vunpack.c.l.b16 %v229
      %v958 = vunpack.c.h.b16 %v229
      %v959 = vunpack.c.l.b16 %v230
      %v960 = vunpack.c.h.b16 %v230
      %v961 = vunpack.c.l.b16 %v231
      %v962 = vunpack.c.h.b16 %v231
      %v963 = vunpack.c.l.b16 %v232
      %v964 = vunpack.c.h.b16 %v232
      %v965 = vunpack.c.l.b16 %v233
      %v966 = vunpack.c.h.b16 %v233
      %v967 = vunpack.c.l.b16 %v234
      %v968 = vunpack.c.h.b16 %v234
      %v969 = vunpack.c.l.b16 %v235
      %v970 = vunpack.c.h.b16 %v235
      %v971 = vunpack.c.l.b16 %v236
      %v972 = vunpack.c.h.b16 %v236
      %v973 = vunpack.c.l.b16 %v237
      %v974 = vunpack.c.h.b16 %v237
      %v975 = vpack.c.b16 %v851, %v847
      %v976 = vpack.c.b16 %v852, %v848
      %v977 = vpack.c.b16 %v853, %v849
      %v978 = vpack.c.b16 %v854, %v850
      %v979 = vpack.c.b16 %v859, %v855
      %v980 = vpack.c.b16 %v860, %v856
      %v981 = vpack.c.b16 %v861, %v857
      %v982 = vpack.c.b16 %v862, %v858
      %v983 = vpack.c.b16 %v867, %v863
      %v984 = vpack.c.b16 %v868, %v864
      %v985 = vpack.c.b16 %v869, %v865
      %v986 = vpack.c.b16 %v870, %v866
      %v987 = vpack.c.b16 %v875, %v871
      %v988 = vpack.c.b16 %v876, %v872
      %v989 = vpack.c.b16 %v877, %v873
      %v990 = vpack.c.b16 %v878, %v874
      %v991 = vpack.c.b16 %v883, %v879
      %v992 = vpack.c.b16 %v884, %v880
      %v993 = vpack.c.b16 %v885, %v881
      %v994 = vpack.c.b16 %v886, %v882
      %v995 = vpack.c.b16 %v891, %v887
      %v996 = vpack.c.b16 %v892, %v888
      %v997 = vpack.c.b16 %v893, %v889
      %v998 = vpack.c.b16 %v894, %v890
      %v999 = vpack.c.b16 %v899, %v895
      %v1000 = vpack.c.b16 %v900, %v896
      %v1001 = vpack.c.b16 %v901, %v897
      %v1002 = vpack.c.b16 %v902, %v898
      %v1003 = vpack.c.b16 %v907, %v903
      %v1004 = vpack.c.b16 %v908, %v904
      %v1005 = vpack.c.b16 %v909, %v905
      %v1006 = vpack.c.b16 %v910, %v906
      %v1007 = vpack.c.b16 %v915, %v911
      %v1008 = vpack.c.b16 %v916, %v912
      %v1009 = vpack.c.b16 %v917, %v913
      %v1010 = vpack.c.b16 %v918, %v914
      %v1011 = vpack.c.b16 %v923, %v919
      %v1012 = vpack.c.b16 %v924, %v920
      %v1013 = vpack.c.b16 %v925, %v921
      %v1014 = vpack.c.b16 %v926, %v922
      %v1015 = vpack.c.b16 %v931, %v927
      %v1016 = vpack.c.b16 %v932, %v928
      %v1017 = vpack.c.b16 %v933, %v929
      %v1018 = vpack.c.b16 %v934, %v930
      %v1019 = vpack.c.b16 %v939, %v935
      %v1020 = vpack.c.b16 %v940, %v936
      %v1021 = vpack.c.b16 %v941, %v937
      %v1022 = vpack.c.b16 %v942, %v938
      %v1023 = vpack.c.b16 %v947, %v943
      %v1024 = vpack.c.b16 %v948, %v944
      %v1025 = vpack.c.b16 %v949, %v945
      %v1026 = vpack.c.b16 %v950, %v946
      %v1027 = vpack.c.b16 %v955, %v951
      %v1028 = vpack.c.b16 %v956, %v952
      %v1029 = vpack.c.b16 %v957, %v953
      %v1030 = vpack.c.b16 %v958, %v954
      %v1031 = vpack.c.b16 %v963, %v959
      %v1032 = vpack.c.b16 %v964, %v960
      %v1033 = vpack.c.b16 %v965, %v961
      %v1034 = vpack.c.b16 %v966, %v962
      %v1035 = vpack.c.b16 %v971, %v967
      %v1036 = vpack.c.b16 %v972, %v968
      %v1037 = vpack.c.b16 %v973, %v969
      %v1038 = vpack.c.b16 %v974, %v970
      %1103 = vmatprep.subr.bf16.mxu0 %v976
      %1104 = vmatpush1.bf16.msra.mxu0 %v975
      %1105 = vmatprep.subr.bf16.mxu0 %v980
      %1106 = vmatpush1.bf16.msra.mxu0 %v979
      %1107 = vmatprep.subr.bf16.mxu0 %v984
      %1108 = vmatpush1.bf16.msra.mxu0 %v983
      %1109 = vmatprep.subr.bf16.mxu0 %v988
      %1110 = vmatpush1.bf16.msra.mxu0 %v987
      %1111 = vmatprep.subr.bf16.mxu0 %v992
      %1112 = vmatpush1.bf16.msra.mxu0 %v991
      %1113 = vmatprep.subr.bf16.mxu0 %v996
      %1114 = vmatpush1.bf16.msra.mxu0 %v995
      %1115 = vmatprep.subr.bf16.mxu0 %v1000
      %1116 = vmatpush1.bf16.msra.mxu0 %v999
      %1117 = vmatprep.subr.bf16.mxu0 %v1004
      %1118 = vmatpush1.bf16.msra.mxu0 %v1003
      %1119 = vmatprep.subr.bf16.mxu0 %v1008
      %1120 = vmatpush1.bf16.msra.mxu0 %v1007
      %1121 = vmatprep.subr.bf16.mxu0 %v1012
      %1122 = vmatpush1.bf16.msra.mxu0 %v1011
      %1123 = vmatprep.subr.bf16.mxu0 %v1016
      %1124 = vmatpush1.bf16.msra.mxu0 %v1015
      %1125 = vmatprep.subr.bf16.mxu0 %v1020
      %1126 = vmatpush1.bf16.msra.mxu0 %v1019
      %1127 = vmatprep.subr.bf16.mxu0 %v1024
      %1128 = vmatpush1.bf16.msra.mxu0 %v1023
      %1129 = vmatprep.subr.bf16.mxu0 %v1028
      %1130 = vmatpush1.bf16.msra.mxu0 %v1027
      %1131 = vmatprep.subr.bf16.mxu0 %v1032
      %1132 = vmatpush1.bf16.msra.mxu0 %v1031
      %1133 = vmatprep.subr.bf16.mxu0 %v1036
      %1134 = vmatpush1.bf16.msra.mxu0 %v1035
      %1135 = vmatprep.mubr.bf16.mxu0 %v317
      %1136 = vmatmul.mubr.bf16.gmra.mrb[0].mxu0 %v316
      %v1137 = vpop.f32.mrb[0].mxu0
      %v1138 = vadd.f32 %v710, %v1137
      %v1139 = vpop.f32.mrb[0].mxu0
      %v1140 = vadd.f32 %v712, %v1139
      %v1141 = vpop.f32.mrb[0].mxu0
      %v1142 = vadd.f32 %v714, %v1141
      %v1143 = vpop.f32.mrb[0].mxu0
      %v1144 = vadd.f32 %v716, %v1143
      %1145 = vmatprep.mubr.bf16.mxu0 %v778
      %1146 = vmatmul.mubr.bf16.gmra.mrb[0].mxu0 %v777
      %v1147 = vpop.f32.mrb[0].mxu0
      %v1148 = vadd.f32 %v720, %v1147
      %v1149 = vpop.f32.mrb[0].mxu0
      %v1150 = vadd.f32 %v722, %v1149
      %v1151 = vpop.f32.mrb[0].mxu0
      %v1152 = vpop.f32.mrb[0].mxu0
      %1153 = vdwg.mxu0
      %1154 = vmatprep.subr.bf16.mxu0 %v978
      %1155 = vmatpush1.bf16.msra.mxu0 %v977
      %1156 = vmatprep.subr.bf16.mxu0 %v982
      %1157 = vmatpush1.bf16.msra.mxu0 %v981
      %1158 = vmatprep.subr.bf16.mxu0 %v986
      %1159 = vmatpush1.bf16.msra.mxu0 %v985
      %1160 = vmatprep.subr.bf16.mxu0 %v990
      %1161 = vmatpush1.bf16.msra.mxu0 %v989
      %1162 = vmatprep.subr.bf16.mxu0 %v994
      %1163 = vmatpush1.bf16.msra.mxu0 %v993
      %1164 = vmatprep.subr.bf16.mxu0 %v998
      %1165 = vmatpush1.bf16.msra.mxu0 %v997
      %1166 = vmatprep.subr.bf16.mxu0 %v1002
      %1167 = vmatpush1.bf16.msra.mxu0 %v1001
      %1168 = vmatprep.subr.bf16.mxu0 %v1006
      %1169 = vmatpush1.bf16.msra.mxu0 %v1005
      %1170 = vmatprep.subr.bf16.mxu0 %v1010
      %1171 = vmatpush1.bf16.msra.mxu0 %v1009
      %1172 = vmatprep.subr.bf16.mxu0 %v1014
      %1173 = vmatpush1.bf16.msra.mxu0 %v1013
      %1174 = vmatprep.subr.bf16.mxu0 %v1018
      %1175 = vmatpush1.bf16.msra.mxu0 %v1017
      %1176 = vmatprep.subr.bf16.mxu0 %v1022
      %1177 = vmatpush1.bf16.msra.mxu0 %v1021
      %1178 = vmatprep.subr.bf16.mxu0 %v1026
      %1179 = vmatpush1.bf16.msra.mxu0 %v1025
      %1180 = vmatprep.subr.bf16.mxu0 %v1030
      %1181 = vmatpush1.bf16.msra.mxu0 %v1029
      %1182 = vmatprep.subr.bf16.mxu0 %v1034
      %1183 = vmatpush1.bf16.msra.mxu0 %v1033
      %1184 = vmatprep.subr.bf16.mxu0 %v1038
      %1185 = vmatpush1.bf16.msra.mxu0 %v1037
      %1186 = vmatprep.mubr.bf16.mxu0 %v317
      %1187 = vmatmul.mubr.bf16.gmra.mrb[0].mxu0 %v316
      %v1188 = vpop.f32.mrb[0].mxu0
      %v1189 = vadd.f32 %v761, %v1188
      %v1190 = vpop.f32.mrb[0].mxu0
      %v1191 = vadd.f32 %v763, %v1190
      %v1192 = vpop.f32.mrb[0].mxu0
      %v1193 = vadd.f32 %v765, %v1192
      %v1194 = vpop.f32.mrb[0].mxu0
      %v1195 = vadd.f32 %v767, %v1194
      %1196 = vmatprep.mubr.bf16.mxu0 %v778
      %1197 = vmatmul.mubr.bf16.gmra.mrb[0].mxu0 %v777
      %v1198 = vpop.f32.mrb[0].mxu0
      %v1199 = vadd.f32 %v771, %v1198
      %v1200 = vpop.f32.mrb[0].mxu0
      %v1201 = vadd.f32 %v773, %v1200
      %v1202 = vpop.f32.mrb[0].mxu0
      %v1203 = vpop.f32.mrb[0].mxu0
      %1204 = vdwg.mxu0
      %v1205 = vld [vmem:[%s165] sm:$0xee]
      %s1206 = scalar_lea.vmem %s1, 1024
      %v1207 = vld [vmem:[%s1206] sm:$0xff]
      %v1208 = vld [vmem:[%s1206 + $0x8] sm:$0xff]
      %v1209 = vld [vmem:[%s1206 + $0x10] sm:$0xff]
      %v1210 = vld [vmem:[%s1206 + $0x18] sm:$0xff]
      %v1211 = vld [vmem:[%s1206 + $0x20] sm:$0xff]
      %v1212 = vld [vmem:[%s1206 + $0x28] sm:$0xff]
      %v1213 = vld [vmem:[%s1206 + $0x30] sm:$0xff]
      %v1214 = vld [vmem:[%s1206 + $0x38] sm:$0xff]
      %v1215 = vld [vmem:[%s1206 + $0x40] sm:$0xff]
      %v1216 = vld [vmem:[%s1206 + $0x48] sm:$0xff]
      %v1217 = vld [vmem:[%s1206 + $0x50] sm:$0xff]
      %v1218 = vld [vmem:[%s1206 + $0x58] sm:$0xff]
      %v1219 = vld [vmem:[%s1206 + $0x60] sm:$0xff]
      %v1220 = vld [vmem:[%s1206 + $0x68] sm:$0xff]
      %v1221 = vld [vmem:[%s1206 + $0x70] sm:$0xff]
      %v1222 = vld [vmem:[%s1206 + $0x78] sm:$0xff]
      %v1223 = vld [vmem:[%s1206 + $0x80] sm:$0xff]
      %v1224 = vld [vmem:[%s1206 + $0x88] sm:$0xff]
      %v1225 = vld [vmem:[%s1206 + $0x90] sm:$0xff]
      %v1226 = vld [vmem:[%s1206 + $0x98] sm:$0xff]
      %v1227 = vld [vmem:[%s1206 + $0xa0] sm:$0xff]
      %v1228 = vld [vmem:[%s1206 + $0xa8] sm:$0xff]
      %v1229 = vld [vmem:[%s1206 + $0xb0] sm:$0xff]
      %v1230 = vld [vmem:[%s1206 + $0xb8] sm:$0xff]
      %v1231 = vld [vmem:[%s1206 + $0xc0] sm:$0xff]
      %v1232 = vld [vmem:[%s1206 + $0xc8] sm:$0xff]
      %v1233 = vld [vmem:[%s1206 + $0xd0] sm:$0xff]
      %v1234 = vld [vmem:[%s1206 + $0xd8] sm:$0xff]
      %v1235 = vld [vmem:[%s1206 + $0xe0] sm:$0xff]
      %v1236 = vld [vmem:[%s1206 + $0xe8] sm:$0xff]
      %v1237 = vld [vmem:[%s1206 + $0xf0] sm:$0xff]
      %v1238 = vld [vmem:[%s1206 + $0xf8] sm:$0xff]
      %v1239 = vld [vmem:[%s1206 + $0x100] sm:$0xff]
      %v1240 = vld [vmem:[%s1206 + $0x108] sm:$0xff]
      %v1241 = vld [vmem:[%s1206 + $0x110] sm:$0xff]
      %v1242 = vld [vmem:[%s1206 + $0x118] sm:$0xff]
      %v1243 = vld [vmem:[%s1206 + $0x120] sm:$0xff]
      %v1244 = vld [vmem:[%s1206 + $0x128] sm:$0xff]
      %v1245 = vld [vmem:[%s1206 + $0x130] sm:$0xff]
      %v1246 = vld [vmem:[%s1206 + $0x138] sm:$0xff]
      %v1247 = vld [vmem:[%s1206 + $0x140] sm:$0xff]
      %v1248 = vld [vmem:[%s1206 + $0x148] sm:$0xff]
      %v1249 = vld [vmem:[%s1206 + $0x150] sm:$0xff]
      %v1250 = vld [vmem:[%s1206 + $0x158] sm:$0xff]
      %v1251 = vld [vmem:[%s1206 + $0x160] sm:$0xff]
      %v1252 = vld [vmem:[%s1206 + $0x168] sm:$0xff]
      %v1253 = vld [vmem:[%s1206 + $0x170] sm:$0xff]
      %v1254 = vld [vmem:[%s1206 + $0x178] sm:$0xff]
      %v1255 = vld [vmem:[%s1206 + $0x180] sm:$0xff]
      %v1256 = vld [vmem:[%s1206 + $0x188] sm:$0xff]
      %v1257 = vld [vmem:[%s1206 + $0x190] sm:$0xff]
      %v1258 = vld [vmem:[%s1206 + $0x198] sm:$0xff]
      %v1259 = vld [vmem:[%s1206 + $0x1a0] sm:$0xff]
      %v1260 = vld [vmem:[%s1206 + $0x1a8] sm:$0xff]
      %v1261 = vld [vmem:[%s1206 + $0x1b0] sm:$0xff]
      %v1262 = vld [vmem:[%s1206 + $0x1b8] sm:$0xff]
      %v1263 = vld [vmem:[%s1206 + $0x1c0] sm:$0xff]
      %v1264 = vld [vmem:[%s1206 + $0x1c8] sm:$0xff]
      %v1265 = vld [vmem:[%s1206 + $0x1d0] sm:$0xff]
      %v1266 = vld [vmem:[%s1206 + $0x1d8] sm:$0xff]
      %v1267 = vld [vmem:[%s1206 + $0x1e0] sm:$0xff]
      %v1268 = vld [vmem:[%s1206 + $0x1e8] sm:$0xff]
      %v1269 = vld [vmem:[%s1206 + $0x1f0] sm:$0xff]
      %v1270 = vld [vmem:[%s1206 + $0x1f8] sm:$0xff]
      %v1272 = vunpack.c.l.b16 %v1205
      %v1273 = vunpack.c.h.b16 %v1205
      %v1274 = vpack.c.b16 %v310, %v1272
      %v1275 = vpack.c.b16 %v311, %v1273
      %vm1276 = vcmask 1046528
      %v1277 = vrot.slane %v1274, 1
      %v1278 = vrot.slane %v318, 1
      %v1279 = vsel %vm1276, %v1277, %v1278
      %v1280 = vrot.slane %v1275, 1
      %v1281 = vrot.slane %v319, 1
      %v1282 = vsel %vm1276, %v1280, %v1281
      %v1351 = vunpack.c.l.b16 %v1207
      %v1352 = vunpack.c.h.b16 %v1207
      %v1353 = vunpack.c.l.b16 %v1208
      %v1354 = vunpack.c.h.b16 %v1208
      %v1355 = vunpack.c.l.b16 %v1209
      %v1356 = vunpack.c.h.b16 %v1209
      %v1357 = vunpack.c.l.b16 %v1210
      %v1358 = vunpack.c.h.b16 %v1210
      %v1359 = vunpack.c.l.b16 %v1211
      %v1360 = vunpack.c.h.b16 %v1211
      %v1361 = vunpack.c.l.b16 %v1212
      %v1362 = vunpack.c.h.b16 %v1212
      %v1363 = vunpack.c.l.b16 %v1213
      %v1364 = vunpack.c.h.b16 %v1213
      %v1365 = vunpack.c.l.b16 %v1214
      %v1366 = vunpack.c.h.b16 %v1214
      %v1367 = vunpack.c.l.b16 %v1215
      %v1368 = vunpack.c.h.b16 %v1215
      %v1369 = vunpack.c.l.b16 %v1216
      %v1370 = vunpack.c.h.b16 %v1216
      %v1371 = vunpack.c.l.b16 %v1217
      %v1372 = vunpack.c.h.b16 %v1217
      %v1373 = vunpack.c.l.b16 %v1218
      %v1374 = vunpack.c.h.b16 %v1218
      %v1375 = vunpack.c.l.b16 %v1219
      %v1376 = vunpack.c.h.b16 %v1219
      %v1377 = vunpack.c.l.b16 %v1220
      %v1378 = vunpack.c.h.b16 %v1220
      %v1379 = vunpack.c.l.b16 %v1221
      %v1380 = vunpack.c.h.b16 %v1221
      %v1381 = vunpack.c.l.b16 %v1222
      %v1382 = vunpack.c.h.b16 %v1222
      %v1383 = vunpack.c.l.b16 %v1223
      %v1384 = vunpack.c.h.b16 %v1223
      %v1385 = vunpack.c.l.b16 %v1224
      %v1386 = vunpack.c.h.b16 %v1224
      %v1387 = vunpack.c.l.b16 %v1225
      %v1388 = vunpack.c.h.b16 %v1225
      %v1389 = vunpack.c.l.b16 %v1226
      %v1390 = vunpack.c.h.b16 %v1226
      %v1391 = vunpack.c.l.b16 %v1227
      %v1392 = vunpack.c.h.b16 %v1227
      %v1393 = vunpack.c.l.b16 %v1228
      %v1394 = vunpack.c.h.b16 %v1228
      %v1395 = vunpack.c.l.b16 %v1229
      %v1396 = vunpack.c.h.b16 %v1229
      %v1397 = vunpack.c.l.b16 %v1230
      %v1398 = vunpack.c.h.b16 %v1230
      %v1399 = vunpack.c.l.b16 %v1231
      %v1400 = vunpack.c.h.b16 %v1231
      %v1401 = vunpack.c.l.b16 %v1232
      %v1402 = vunpack.c.h.b16 %v1232
      %v1403 = vunpack.c.l.b16 %v1233
      %v1404 = vunpack.c.h.b16 %v1233
      %v1405 = vunpack.c.l.b16 %v1234
      %v1406 = vunpack.c.h.b16 %v1234
      %v1407 = vunpack.c.l.b16 %v1235
      %v1408 = vunpack.c.h.b16 %v1235
      %v1409 = vunpack.c.l.b16 %v1236
      %v1410 = vunpack.c.h.b16 %v1236
      %v1411 = vunpack.c.l.b16 %v1237
      %v1412 = vunpack.c.h.b16 %v1237
      %v1413 = vunpack.c.l.b16 %v1238
      %v1414 = vunpack.c.h.b16 %v1238
      %v1415 = vunpack.c.l.b16 %v1239
      %v1416 = vunpack.c.h.b16 %v1239
      %v1417 = vunpack.c.l.b16 %v1240
      %v1418 = vunpack.c.h.b16 %v1240
      %v1419 = vunpack.c.l.b16 %v1241
      %v1420 = vunpack.c.h.b16 %v1241
      %v1421 = vunpack.c.l.b16 %v1242
      %v1422 = vunpack.c.h.b16 %v1242
      %v1423 = vunpack.c.l.b16 %v1243
      %v1424 = vunpack.c.h.b16 %v1243
      %v1425 = vunpack.c.l.b16 %v1244
      %v1426 = vunpack.c.h.b16 %v1244
      %v1427 = vunpack.c.l.b16 %v1245
      %v1428 = vunpack.c.h.b16 %v1245
      %v1429 = vunpack.c.l.b16 %v1246
      %v1430 = vunpack.c.h.b16 %v1246
      %v1431 = vunpack.c.l.b16 %v1247
      %v1432 = vunpack.c.h.b16 %v1247
      %v1433 = vunpack.c.l.b16 %v1248
      %v1434 = vunpack.c.h.b16 %v1248
      %v1435 = vunpack.c.l.b16 %v1249
      %v1436 = vunpack.c.h.b16 %v1249
      %v1437 = vunpack.c.l.b16 %v1250
      %v1438 = vunpack.c.h.b16 %v1250
      %v1439 = vunpack.c.l.b16 %v1251
      %v1440 = vunpack.c.h.b16 %v1251
      %v1441 = vunpack.c.l.b16 %v1252
      %v1442 = vunpack.c.h.b16 %v1252
      %v1443 = vunpack.c.l.b16 %v1253
      %v1444 = vunpack.c.h.b16 %v1253
      %v1445 = vunpack.c.l.b16 %v1254
      %v1446 = vunpack.c.h.b16 %v1254
      %v1447 = vunpack.c.l.b16 %v1255
      %v1448 = vunpack.c.h.b16 %v1255
      %v1449 = vunpack.c.l.b16 %v1256
      %v1450 = vunpack.c.h.b16 %v1256
      %v1451 = vunpack.c.l.b16 %v1257
      %v1452 = vunpack.c.h.b16 %v1257
      %v1453 = vunpack.c.l.b16 %v1258
      %v1454 = vunpack.c.h.b16 %v1258
      %v1455 = vunpack.c.l.b16 %v1259
      %v1456 = vunpack.c.h.b16 %v1259
      %v1457 = vunpack.c.l.b16 %v1260
      %v1458 = vunpack.c.h.b16 %v1260
      %v1459 = vunpack.c.l.b16 %v1261
      %v1460 = vunpack.c.h.b16 %v1261
      %v1461 = vunpack.c.l.b16 %v1262
      %v1462 = vunpack.c.h.b16 %v1262
      %v1463 = vunpack.c.l.b16 %v1263
      %v1464 = vunpack.c.h.b16 %v1263
      %v1465 = vunpack.c.l.b16 %v1264
      %v1466 = vunpack.c.h.b16 %v1264
      %v1467 = vunpack.c.l.b16 %v1265
      %v1468 = vunpack.c.h.b16 %v1265
      %v1469 = vunpack.c.l.b16 %v1266
      %v1470 = vunpack.c.h.b16 %v1266
      %v1471 = vunpack.c.l.b16 %v1267
      %v1472 = vunpack.c.h.b16 %v1267
      %v1473 = vunpack.c.l.b16 %v1268
      %v1474 = vunpack.c.h.b16 %v1268
      %v1475 = vunpack.c.l.b16 %v1269
      %v1476 = vunpack.c.h.b16 %v1269
      %v1477 = vunpack.c.l.b16 %v1270
      %v1478 = vunpack.c.h.b16 %v1270
      %v1479 = vpack.c.b16 %v1355, %v1351
      %v1480 = vpack.c.b16 %v1356, %v1352
      %v1481 = vpack.c.b16 %v1357, %v1353
      %v1482 = vpack.c.b16 %v1358, %v1354
      %v1483 = vpack.c.b16 %v1363, %v1359
      %v1484 = vpack.c.b16 %v1364, %v1360
      %v1485 = vpack.c.b16 %v1365, %v1361
      %v1486 = vpack.c.b16 %v1366, %v1362
      %v1487 = vpack.c.b16 %v1371, %v1367
      %v1488 = vpack.c.b16 %v1372, %v1368
      %v1489 = vpack.c.b16 %v1373, %v1369
      %v1490 = vpack.c.b16 %v1374, %v1370
      %v1491 = vpack.c.b16 %v1379, %v1375
      %v1492 = vpack.c.b16 %v1380, %v1376
      %v1493 = vpack.c.b16 %v1381, %v1377
      %v1494 = vpack.c.b16 %v1382, %v1378
      %v1495 = vpack.c.b16 %v1387, %v1383
      %v1496 = vpack.c.b16 %v1388, %v1384
      %v1497 = vpack.c.b16 %v1389, %v1385
      %v1498 = vpack.c.b16 %v1390, %v1386
      %v1499 = vpack.c.b16 %v1395, %v1391
      %v1500 = vpack.c.b16 %v1396, %v1392
      %v1501 = vpack.c.b16 %v1397, %v1393
      %v1502 = vpack.c.b16 %v1398, %v1394
      %v1503 = vpack.c.b16 %v1403, %v1399
      %v1504 = vpack.c.b16 %v1404, %v1400
      %v1505 = vpack.c.b16 %v1405, %v1401
      %v1506 = vpack.c.b16 %v1406, %v1402
      %v1507 = vpack.c.b16 %v1411, %v1407
      %v1508 = vpack.c.b16 %v1412, %v1408
      %v1509 = vpack.c.b16 %v1413, %v1409
      %v1510 = vpack.c.b16 %v1414, %v1410
      %v1511 = vpack.c.b16 %v1419, %v1415
      %v1512 = vpack.c.b16 %v1420, %v1416
      %v1513 = vpack.c.b16 %v1421, %v1417
      %v1514 = vpack.c.b16 %v1422, %v1418
      %v1515 = vpack.c.b16 %v1427, %v1423
      %v1516 = vpack.c.b16 %v1428, %v1424
      %v1517 = vpack.c.b16 %v1429, %v1425
      %v1518 = vpack.c.b16 %v1430, %v1426
      %v1519 = vpack.c.b16 %v1435, %v1431
      %v1520 = vpack.c.b16 %v1436, %v1432
      %v1521 = vpack.c.b16 %v1437, %v1433
      %v1522 = vpack.c.b16 %v1438, %v1434
      %v1523 = vpack.c.b16 %v1443, %v1439
      %v1524 = vpack.c.b16 %v1444, %v1440
      %v1525 = vpack.c.b16 %v1445, %v1441
      %v1526 = vpack.c.b16 %v1446, %v1442
      %v1527 = vpack.c.b16 %v1451, %v1447
      %v1528 = vpack.c.b16 %v1452, %v1448
      %v1529 = vpack.c.b16 %v1453, %v1449
      %v1530 = vpack.c.b16 %v1454, %v1450
      %v1531 = vpack.c.b16 %v1459, %v1455
      %v1532 = vpack.c.b16 %v1460, %v1456
      %v1533 = vpack.c.b16 %v1461, %v1457
      %v1534 = vpack.c.b16 %v1462, %v1458
      %v1535 = vpack.c.b16 %v1467, %v1463
      %v1536 = vpack.c.b16 %v1468, %v1464
      %v1537 = vpack.c.b16 %v1469, %v1465
      %v1538 = vpack.c.b16 %v1470, %v1466
      %v1539 = vpack.c.b16 %v1475, %v1471
      %v1540 = vpack.c.b16 %v1476, %v1472
      %v1541 = vpack.c.b16 %v1477, %v1473
      %v1542 = vpack.c.b16 %v1478, %v1474
      %1607 = vmatprep.subr.bf16.mxu0 %v1480
      %1608 = vmatpush1.bf16.msra.mxu0 %v1479
      %1609 = vmatprep.subr.bf16.mxu0 %v1484
      %1610 = vmatpush1.bf16.msra.mxu0 %v1483
      %1611 = vmatprep.subr.bf16.mxu0 %v1488
      %1612 = vmatpush1.bf16.msra.mxu0 %v1487
      %1613 = vmatprep.subr.bf16.mxu0 %v1492
      %1614 = vmatpush1.bf16.msra.mxu0 %v1491
      %1615 = vmatprep.subr.bf16.mxu0 %v1496
      %1616 = vmatpush1.bf16.msra.mxu0 %v1495
      %1617 = vmatprep.subr.bf16.mxu0 %v1500
      %1618 = vmatpush1.bf16.msra.mxu0 %v1499
      %1619 = vmatprep.subr.bf16.mxu0 %v1504
      %1620 = vmatpush1.bf16.msra.mxu0 %v1503
      %1621 = vmatprep.subr.bf16.mxu0 %v1508
      %1622 = vmatpush1.bf16.msra.mxu0 %v1507
      %1623 = vmatprep.subr.bf16.mxu0 %v1512
      %1624 = vmatpush1.bf16.msra.mxu0 %v1511
      %1625 = vmatprep.subr.bf16.mxu0 %v1516
      %1626 = vmatpush1.bf16.msra.mxu0 %v1515
      %1627 = vmatprep.subr.bf16.mxu0 %v1520
      %1628 = vmatpush1.bf16.msra.mxu0 %v1519
      %1629 = vmatprep.subr.bf16.mxu0 %v1524
      %1630 = vmatpush1.bf16.msra.mxu0 %v1523
      %1631 = vmatprep.subr.bf16.mxu0 %v1528
      %1632 = vmatpush1.bf16.msra.mxu0 %v1527
      %1633 = vmatprep.subr.bf16.mxu0 %v1532
      %1634 = vmatpush1.bf16.msra.mxu0 %v1531
      %1635 = vmatprep.subr.bf16.mxu0 %v1536
      %1636 = vmatpush1.bf16.msra.mxu0 %v1535
      %1637 = vmatprep.subr.bf16.mxu0 %v1540
      %1638 = vmatpush1.bf16.msra.mxu0 %v1539
      %1639 = vmatprep.mubr.bf16.mxu0 %v1282
      %1640 = vmatmul.mubr.bf16.gmra.mrb[0].mxu0 %v1279
      %v1641 = vpop.f32.mrb[0].mxu0
      %v1642 = vadd.f32 0.0, %v1641
      %v1643 = vpop.f32.mrb[0].mxu0
      %v1644 = vadd.f32 0.0, %v1643
      %v1645 = vpop.f32.mrb[0].mxu0
      %v1646 = vadd.f32 0.0, %v1645
      %v1647 = vpop.f32.mrb[0].mxu0
      %v1648 = vadd.f32 0.0, %v1647
      %1649 = vmatprep.mubr.bf16.mxu0 %v1281
      %1650 = vmatmul.mubr.bf16.gmra.mrb[0].mxu0 %v1278
      %v1651 = vpop.f32.mrb[0].mxu0
      %v1652 = vadd.f32 0.0, %v1651
      %v1653 = vpop.f32.mrb[0].mxu0
      %v1654 = vadd.f32 0.0, %v1653
      %v1655 = vpop.f32.mrb[0].mxu0
      %v1656 = vpop.f32.mrb[0].mxu0
      %1657 = vdwg.mxu0
      %1658 = vmatprep.subr.bf16.mxu0 %v1482
      %1659 = vmatpush1.bf16.msra.mxu0 %v1481
      %1660 = vmatprep.subr.bf16.mxu0 %v1486
      %1661 = vmatpush1.bf16.msra.mxu0 %v1485
      %1662 = vmatprep.subr.bf16.mxu0 %v1490
      %1663 = vmatpush1.bf16.msra.mxu0 %v1489
      %1664 = vmatprep.subr.bf16.mxu0 %v1494
      %1665 = vmatpush1.bf16.msra.mxu0 %v1493
      %1666 = vmatprep.subr.bf16.mxu0 %v1498
      %1667 = vmatpush1.bf16.msra.mxu0 %v1497
      %1668 = vmatprep.subr.bf16.mxu0 %v1502
      %1669 = vmatpush1.bf16.msra.mxu0 %v1501
      %1670 = vmatprep.subr.bf16.mxu0 %v1506
      %1671 = vmatpush1.bf16.msra.mxu0 %v1505
      %1672 = vmatprep.subr.bf16.mxu0 %v1510
      %1673 = vmatpush1.bf16.msra.mxu0 %v1509
      %1674 = vmatprep.subr.bf16.mxu0 %v1514
      %1675 = vmatpush1.bf16.msra.mxu0 %v1513
      %1676 = vmatprep.subr.bf16.mxu0 %v1518
      %1677 = vmatpush1.bf16.msra.mxu0 %v1517
      %1678 = vmatprep.subr.bf16.mxu0 %v1522
      %1679 = vmatpush1.bf16.msra.mxu0 %v1521
      %1680 = vmatprep.subr.bf16.mxu0 %v1526
      %1681 = vmatpush1.bf16.msra.mxu0 %v1525
      %1682 = vmatprep.subr.bf16.mxu0 %v1530
      %1683 = vmatpush1.bf16.msra.mxu0 %v1529
      %1684 = vmatprep.subr.bf16.mxu0 %v1534
      %1685 = vmatpush1.bf16.msra.mxu0 %v1533
      %1686 = vmatprep.subr.bf16.mxu0 %v1538
      %1687 = vmatpush1.bf16.msra.mxu0 %v1537
      %1688 = vmatprep.subr.bf16.mxu0 %v1542
      %1689 = vmatpush1.bf16.msra.mxu0 %v1541
      %1690 = vmatprep.mubr.bf16.mxu0 %v1282
      %1691 = vmatmul.mubr.bf16.gmra.mrb[0].mxu0 %v1279
      %v1692 = vpop.f32.mrb[0].mxu0
      %v1693 = vadd.f32 0.0, %v1692
      %v1694 = vpop.f32.mrb[0].mxu0
      %v1695 = vadd.f32 0.0, %v1694
      %v1696 = vpop.f32.mrb[0].mxu0
      %v1697 = vadd.f32 0.0, %v1696
      %v1698 = vpop.f32.mrb[0].mxu0
      %v1699 = vadd.f32 0.0, %v1698
      %1700 = vmatprep.mubr.bf16.mxu0 %v1281
      %1701 = vmatmul.mubr.bf16.gmra.mrb[0].mxu0 %v1278
      %v1702 = vpop.f32.mrb[0].mxu0
      %v1703 = vadd.f32 0.0, %v1702
      %v1704 = vpop.f32.mrb[0].mxu0
      %v1705 = vadd.f32 0.0, %v1704
      %v1706 = vpop.f32.mrb[0].mxu0
      %v1707 = vpop.f32.mrb[0].mxu0
      %1708 = vdwg.mxu0
      %v1709 = vadd.f32 %v1138, %v1642
      %v1710 = vadd.f32 %v1140, %v1644
      %v1711 = vadd.f32 %v1189, %v1693
      %v1712 = vadd.f32 %v1191, %v1695
      %v1713 = vadd.f32 %v1142, %v1646
      %v1714 = vadd.f32 %v1144, %v1648
      %v1715 = vadd.f32 %v1193, %v1697
      %v1716 = vadd.f32 %v1195, %v1699
      %v1717 = vadd.f32 %v1148, %v1652
      %v1718 = vadd.f32 %v1150, %v1654
      %v1719 = vadd.f32 %v1199, %v1703
      %v1720 = vadd.f32 %v1201, %v1705
      %v1721 = vld [vmem:[%s165] sm:$0x88]
      %v1722 = vld [vmem:[%s165 + $0x18] sm:$0x77]
      %s1723 = scalar_lea.vmem %s1, 1536
      %v1724 = vld [vmem:[%s1723] sm:$0xff]
      %v1725 = vld [vmem:[%s1723 + $0x8] sm:$0xff]
      %v1726 = vld [vmem:[%s1723 + $0x10] sm:$0xff]
      %v1727 = vld [vmem:[%s1723 + $0x18] sm:$0xff]
      %v1728 = vld [vmem:[%s1723 + $0x20] sm:$0xff]
      %v1729 = vld [vmem:[%s1723 + $0x28] sm:$0xff]
      %v1730 = vld [vmem:[%s1723 + $0x30] sm:$0xff]
      %v1731 = vld [vmem:[%s1723 + $0x38] sm:$0xff]
      %v1732 = vld [vmem:[%s1723 + $0x40] sm:$0xff]
      %v1733 = vld [vmem:[%s1723 + $0x48] sm:$0xff]
      %v1734 = vld [vmem:[%s1723 + $0x50] sm:$0xff]
      %v1735 = vld [vmem:[%s1723 + $0x58] sm:$0xff]
      %v1736 = vld [vmem:[%s1723 + $0x60] sm:$0xff]
      %v1737 = vld [vmem:[%s1723 + $0x68] sm:$0xff]
      %v1738 = vld [vmem:[%s1723 + $0x70] sm:$0xff]
      %v1739 = vld [vmem:[%s1723 + $0x78] sm:$0xff]
      %v1740 = vld [vmem:[%s1723 + $0x80] sm:$0xff]
      %v1741 = vld [vmem:[%s1723 + $0x88] sm:$0xff]
      %v1742 = vld [vmem:[%s1723 + $0x90] sm:$0xff]
      %v1743 = vld [vmem:[%s1723 + $0x98] sm:$0xff]
      %v1744 = vld [vmem:[%s1723 + $0xa0] sm:$0xff]
      %v1745 = vld [vmem:[%s1723 + $0xa8] sm:$0xff]
      %v1746 = vld [vmem:[%s1723 + $0xb0] sm:$0xff]
      %v1747 = vld [vmem:[%s1723 + $0xb8] sm:$0xff]
      %v1748 = vld [vmem:[%s1723 + $0xc0] sm:$0xff]
      %v1749 = vld [vmem:[%s1723 + $0xc8] sm:$0xff]
      %v1750 = vld [vmem:[%s1723 + $0xd0] sm:$0xff]
      %v1751 = vld [vmem:[%s1723 + $0xd8] sm:$0xff]
      %v1752 = vld [vmem:[%s1723 + $0xe0] sm:$0xff]
      %v1753 = vld [vmem:[%s1723 + $0xe8] sm:$0xff]
      %v1754 = vld [vmem:[%s1723 + $0xf0] sm:$0xff]
      %v1755 = vld [vmem:[%s1723 + $0xf8] sm:$0xff]
      %v1756 = vld [vmem:[%s1723 + $0x100] sm:$0xff]
      %v1757 = vld [vmem:[%s1723 + $0x108] sm:$0xff]
      %v1758 = vld [vmem:[%s1723 + $0x110] sm:$0xff]
      %v1759 = vld [vmem:[%s1723 + $0x118] sm:$0xff]
      %v1760 = vld [vmem:[%s1723 + $0x120] sm:$0xff]
      %v1761 = vld [vmem:[%s1723 + $0x128] sm:$0xff]
      %v1762 = vld [vmem:[%s1723 + $0x130] sm:$0xff]
      %v1763 = vld [vmem:[%s1723 + $0x138] sm:$0xff]
      %v1764 = vld [vmem:[%s1723 + $0x140] sm:$0xff]
      %v1765 = vld [vmem:[%s1723 + $0x148] sm:$0xff]
      %v1766 = vld [vmem:[%s1723 + $0x150] sm:$0xff]
      %v1767 = vld [vmem:[%s1723 + $0x158] sm:$0xff]
      %v1768 = vld [vmem:[%s1723 + $0x160] sm:$0xff]
      %v1769 = vld [vmem:[%s1723 + $0x168] sm:$0xff]
      %v1770 = vld [vmem:[%s1723 + $0x170] sm:$0xff]
      %v1771 = vld [vmem:[%s1723 + $0x178] sm:$0xff]
      %v1772 = vld [vmem:[%s1723 + $0x180] sm:$0xff]
      %v1773 = vld [vmem:[%s1723 + $0x188] sm:$0xff]
      %v1774 = vld [vmem:[%s1723 + $0x190] sm:$0xff]
      %v1775 = vld [vmem:[%s1723 + $0x198] sm:$0xff]
      %v1776 = vld [vmem:[%s1723 + $0x1a0] sm:$0xff]
      %v1777 = vld [vmem:[%s1723 + $0x1a8] sm:$0xff]
      %v1778 = vld [vmem:[%s1723 + $0x1b0] sm:$0xff]
      %v1779 = vld [vmem:[%s1723 + $0x1b8] sm:$0xff]
      %v1780 = vld [vmem:[%s1723 + $0x1c0] sm:$0xff]
      %v1781 = vld [vmem:[%s1723 + $0x1c8] sm:$0xff]
      %v1782 = vld [vmem:[%s1723 + $0x1d0] sm:$0xff]
      %v1783 = vld [vmem:[%s1723 + $0x1d8] sm:$0xff]
      %v1784 = vld [vmem:[%s1723 + $0x1e0] sm:$0xff]
      %v1785 = vld [vmem:[%s1723 + $0x1e8] sm:$0xff]
      %v1786 = vld [vmem:[%s1723 + $0x1f0] sm:$0xff]
      %v1787 = vld [vmem:[%s1723 + $0x1f8] sm:$0xff]
      %v1790 = vunpack.c.l.b16 %v1721
      %v1791 = vunpack.c.h.b16 %v1721
      %v1792 = vunpack.c.l.b16 %v1722
      %v1793 = vunpack.c.h.b16 %v1722
      %v1794 = vpack.c.b16 %v310, %v1790
      %v1795 = vpack.c.b16 %v311, %v1791
      %v1796 = vpack.c.b16 %v1792, %v312
      %v1797 = vpack.c.b16 %v1793, %v313
      %vm1798 = vcmask 1044480
      %v1799 = vrot.slane %v1794, 3
      %v1800 = vrot.slane %v1796, 3
      %v1801 = vsel %vm1798, %v1799, %v1800
      %v1802 = vrot.slane %v1795, 3
      %v1803 = vrot.slane %v1797, 3
      %v1804 = vsel %vm1798, %v1802, %v1803
      %v1873 = vunpack.c.l.b16 %v1724
      %v1874 = vunpack.c.h.b16 %v1724
      %v1875 = vunpack.c.l.b16 %v1725
      %v1876 = vunpack.c.h.b16 %v1725
      %v1877 = vunpack.c.l.b16 %v1726
      %v1878 = vunpack.c.h.b16 %v1726
      %v1879 = vunpack.c.l.b16 %v1727
      %v1880 = vunpack.c.h.b16 %v1727
      %v1881 = vunpack.c.l.b16 %v1728
      %v1882 = vunpack.c.h.b16 %v1728
      %v1883 = vunpack.c.l.b16 %v1729
      %v1884 = vunpack.c.h.b16 %v1729
      %v1885 = vunpack.c.l.b16 %v1730
      %v1886 = vunpack.c.h.b16 %v1730
      %v1887 = vunpack.c.l.b16 %v1731
      %v1888 = vunpack.c.h.b16 %v1731
      %v1889 = vunpack.c.l.b16 %v1732
      %v1890 = vunpack.c.h.b16 %v1732
      %v1891 = vunpack.c.l.b16 %v1733
      %v1892 = vunpack.c.h.b16 %v1733
      %v1893 = vunpack.c.l.b16 %v1734
      %v1894 = vunpack.c.h.b16 %v1734
      %v1895 = vunpack.c.l.b16 %v1735
      %v1896 = vunpack.c.h.b16 %v1735
      %v1897 = vunpack.c.l.b16 %v1736
      %v1898 = vunpack.c.h.b16 %v1736
      %v1899 = vunpack.c.l.b16 %v1737
      %v1900 = vunpack.c.h.b16 %v1737
      %v1901 = vunpack.c.l.b16 %v1738
      %v1902 = vunpack.c.h.b16 %v1738
      %v1903 = vunpack.c.l.b16 %v1739
      %v1904 = vunpack.c.h.b16 %v1739
      %v1905 = vunpack.c.l.b16 %v1740
      %v1906 = vunpack.c.h.b16 %v1740
      %v1907 = vunpack.c.l.b16 %v1741
      %v1908 = vunpack.c.h.b16 %v1741
      %v1909 = vunpack.c.l.b16 %v1742
      %v1910 = vunpack.c.h.b16 %v1742
      %v1911 = vunpack.c.l.b16 %v1743
      %v1912 = vunpack.c.h.b16 %v1743
      %v1913 = vunpack.c.l.b16 %v1744
      %v1914 = vunpack.c.h.b16 %v1744
      %v1915 = vunpack.c.l.b16 %v1745
      %v1916 = vunpack.c.h.b16 %v1745
      %v1917 = vunpack.c.l.b16 %v1746
      %v1918 = vunpack.c.h.b16 %v1746
      %v1919 = vunpack.c.l.b16 %v1747
      %v1920 = vunpack.c.h.b16 %v1747
      %v1921 = vunpack.c.l.b16 %v1748
      %v1922 = vunpack.c.h.b16 %v1748
      %v1923 = vunpack.c.l.b16 %v1749
      %v1924 = vunpack.c.h.b16 %v1749
      %v1925 = vunpack.c.l.b16 %v1750
      %v1926 = vunpack.c.h.b16 %v1750
      %v1927 = vunpack.c.l.b16 %v1751
      %v1928 = vunpack.c.h.b16 %v1751
      %v1929 = vunpack.c.l.b16 %v1752
      %v1930 = vunpack.c.h.b16 %v1752
      %v1931 = vunpack.c.l.b16 %v1753
      %v1932 = vunpack.c.h.b16 %v1753
      %v1933 = vunpack.c.l.b16 %v1754
      %v1934 = vunpack.c.h.b16 %v1754
      %v1935 = vunpack.c.l.b16 %v1755
      %v1936 = vunpack.c.h.b16 %v1755
      %v1937 = vunpack.c.l.b16 %v1756
      %v1938 = vunpack.c.h.b16 %v1756
      %v1939 = vunpack.c.l.b16 %v1757
      %v1940 = vunpack.c.h.b16 %v1757
      %v1941 = vunpack.c.l.b16 %v1758
      %v1942 = vunpack.c.h.b16 %v1758
      %v1943 = vunpack.c.l.b16 %v1759
      %v1944 = vunpack.c.h.b16 %v1759
      %v1945 = vunpack.c.l.b16 %v1760
      %v1946 = vunpack.c.h.b16 %v1760
      %v1947 = vunpack.c.l.b16 %v1761
      %v1948 = vunpack.c.h.b16 %v1761
      %v1949 = vunpack.c.l.b16 %v1762
      %v1950 = vunpack.c.h.b16 %v1762
      %v1951 = vunpack.c.l.b16 %v1763
      %v1952 = vunpack.c.h.b16 %v1763
      %v1953 = vunpack.c.l.b16 %v1764
      %v1954 = vunpack.c.h.b16 %v1764
      %v1955 = vunpack.c.l.b16 %v1765
      %v1956 = vunpack.c.h.b16 %v1765
      %v1957 = vunpack.c.l.b16 %v1766
      %v1958 = vunpack.c.h.b16 %v1766
      %v1959 = vunpack.c.l.b16 %v1767
      %v1960 = vunpack.c.h.b16 %v1767
      %v1961 = vunpack.c.l.b16 %v1768
      %v1962 = vunpack.c.h.b16 %v1768
      %v1963 = vunpack.c.l.b16 %v1769
      %v1964 = vunpack.c.h.b16 %v1769
      %v1965 = vunpack.c.l.b16 %v1770
      %v1966 = vunpack.c.h.b16 %v1770
      %v1967 = vunpack.c.l.b16 %v1771
      %v1968 = vunpack.c.h.b16 %v1771
      %v1969 = vunpack.c.l.b16 %v1772
      %v1970 = vunpack.c.h.b16 %v1772
      %v1971 = vunpack.c.l.b16 %v1773
      %v1972 = vunpack.c.h.b16 %v1773
      %v1973 = vunpack.c.l.b16 %v1774
      %v1974 = vunpack.c.h.b16 %v1774
      %v1975 = vunpack.c.l.b16 %v1775
      %v1976 = vunpack.c.h.b16 %v1775
      %v1977 = vunpack.c.l.b16 %v1776
      %v1978 = vunpack.c.h.b16 %v1776
      %v1979 = vunpack.c.l.b16 %v1777
      %v1980 = vunpack.c.h.b16 %v1777
      %v1981 = vunpack.c.l.b16 %v1778
      %v1982 = vunpack.c.h.b16 %v1778
      %v1983 = vunpack.c.l.b16 %v1779
      %v1984 = vunpack.c.h.b16 %v1779
      %v1985 = vunpack.c.l.b16 %v1780
      %v1986 = vunpack.c.h.b16 %v1780
      %v1987 = vunpack.c.l.b16 %v1781
      %v1988 = vunpack.c.h.b16 %v1781
      %v1989 = vunpack.c.l.b16 %v1782
      %v1990 = vunpack.c.h.b16 %v1782
      %v1991 = vunpack.c.l.b16 %v1783
      %v1992 = vunpack.c.h.b16 %v1783
      %v1993 = vunpack.c.l.b16 %v1784
      %v1994 = vunpack.c.h.b16 %v1784
      %v1995 = vunpack.c.l.b16 %v1785
      %v1996 = vunpack.c.h.b16 %v1785
      %v1997 = vunpack.c.l.b16 %v1786
      %v1998 = vunpack.c.h.b16 %v1786
      %v1999 = vunpack.c.l.b16 %v1787
      %v2000 = vunpack.c.h.b16 %v1787
      %v2001 = vpack.c.b16 %v1877, %v1873
      %v2002 = vpack.c.b16 %v1878, %v1874
      %v2003 = vpack.c.b16 %v1879, %v1875
      %v2004 = vpack.c.b16 %v1880, %v1876
      %v2005 = vpack.c.b16 %v1885, %v1881
      %v2006 = vpack.c.b16 %v1886, %v1882
      %v2007 = vpack.c.b16 %v1887, %v1883
      %v2008 = vpack.c.b16 %v1888, %v1884
      %v2009 = vpack.c.b16 %v1893, %v1889
      %v2010 = vpack.c.b16 %v1894, %v1890
      %v2011 = vpack.c.b16 %v1895, %v1891
      %v2012 = vpack.c.b16 %v1896, %v1892
      %v2013 = vpack.c.b16 %v1901, %v1897
      %v2014 = vpack.c.b16 %v1902, %v1898
      %v2015 = vpack.c.b16 %v1903, %v1899
      %v2016 = vpack.c.b16 %v1904, %v1900
      %v2017 = vpack.c.b16 %v1909, %v1905
      %v2018 = vpack.c.b16 %v1910, %v1906
      %v2019 = vpack.c.b16 %v1911, %v1907
      %v2020 = vpack.c.b16 %v1912, %v1908
      %v2021 = vpack.c.b16 %v1917, %v1913
      %v2022 = vpack.c.b16 %v1918, %v1914
      %v2023 = vpack.c.b16 %v1919, %v1915
      %v2024 = vpack.c.b16 %v1920, %v1916
      %v2025 = vpack.c.b16 %v1925, %v1921
      %v2026 = vpack.c.b16 %v1926, %v1922
      %v2027 = vpack.c.b16 %v1927, %v1923
      %v2028 = vpack.c.b16 %v1928, %v1924
      %v2029 = vpack.c.b16 %v1933, %v1929
      %v2030 = vpack.c.b16 %v1934, %v1930
      %v2031 = vpack.c.b16 %v1935, %v1931
      %v2032 = vpack.c.b16 %v1936, %v1932
      %v2033 = vpack.c.b16 %v1941, %v1937
      %v2034 = vpack.c.b16 %v1942, %v1938
      %v2035 = vpack.c.b16 %v1943, %v1939
      %v2036 = vpack.c.b16 %v1944, %v1940
      %v2037 = vpack.c.b16 %v1949, %v1945
      %v2038 = vpack.c.b16 %v1950, %v1946
      %v2039 = vpack.c.b16 %v1951, %v1947
      %v2040 = vpack.c.b16 %v1952, %v1948
      %v2041 = vpack.c.b16 %v1957, %v1953
      %v2042 = vpack.c.b16 %v1958, %v1954
      %v2043 = vpack.c.b16 %v1959, %v1955
      %v2044 = vpack.c.b16 %v1960, %v1956
      %v2045 = vpack.c.b16 %v1965, %v1961
      %v2046 = vpack.c.b16 %v1966, %v1962
      %v2047 = vpack.c.b16 %v1967, %v1963
      %v2048 = vpack.c.b16 %v1968, %v1964
      %v2049 = vpack.c.b16 %v1973, %v1969
      %v2050 = vpack.c.b16 %v1974, %v1970
      %v2051 = vpack.c.b16 %v1975, %v1971
      %v2052 = vpack.c.b16 %v1976, %v1972
      %v2053 = vpack.c.b16 %v1981, %v1977
      %v2054 = vpack.c.b16 %v1982, %v1978
      %v2055 = vpack.c.b16 %v1983, %v1979
      %v2056 = vpack.c.b16 %v1984, %v1980
      %v2057 = vpack.c.b16 %v1989, %v1985
      %v2058 = vpack.c.b16 %v1990, %v1986
      %v2059 = vpack.c.b16 %v1991, %v1987
      %v2060 = vpack.c.b16 %v1992, %v1988
      %v2061 = vpack.c.b16 %v1997, %v1993
      %v2062 = vpack.c.b16 %v1998, %v1994
      %v2063 = vpack.c.b16 %v1999, %v1995
      %v2064 = vpack.c.b16 %v2000, %v1996
      %2129 = vmatprep.subr.bf16.mxu0 %v2002
      %2130 = vmatpush1.bf16.msra.mxu0 %v2001
      %2131 = vmatprep.subr.bf16.mxu0 %v2006
      %2132 = vmatpush1.bf16.msra.mxu0 %v2005
      %2133 = vmatprep.subr.bf16.mxu0 %v2010
      %2134 = vmatpush1.bf16.msra.mxu0 %v2009
      %2135 = vmatprep.subr.bf16.mxu0 %v2014
      %2136 = vmatpush1.bf16.msra.mxu0 %v2013
      %2137 = vmatprep.subr.bf16.mxu0 %v2018
      %2138 = vmatpush1.bf16.msra.mxu0 %v2017
      %2139 = vmatprep.subr.bf16.mxu0 %v2022
      %2140 = vmatpush1.bf16.msra.mxu0 %v2021
      %2141 = vmatprep.subr.bf16.mxu0 %v2026
      %2142 = vmatpush1.bf16.msra.mxu0 %v2025
      %2143 = vmatprep.subr.bf16.mxu0 %v2030
      %2144 = vmatpush1.bf16.msra.mxu0 %v2029
      %2145 = vmatprep.subr.bf16.mxu0 %v2034
      %2146 = vmatpush1.bf16.msra.mxu0 %v2033
      %2147 = vmatprep.subr.bf16.mxu0 %v2038
      %2148 = vmatpush1.bf16.msra.mxu0 %v2037
      %2149 = vmatprep.subr.bf16.mxu0 %v2042
      %2150 = vmatpush1.bf16.msra.mxu0 %v2041
      %2151 = vmatprep.subr.bf16.mxu0 %v2046
      %2152 = vmatpush1.bf16.msra.mxu0 %v2045
      %2153 = vmatprep.subr.bf16.mxu0 %v2050
      %2154 = vmatpush1.bf16.msra.mxu0 %v2049
      %2155 = vmatprep.subr.bf16.mxu0 %v2054
      %2156 = vmatpush1.bf16.msra.mxu0 %v2053
      %2157 = vmatprep.subr.bf16.mxu0 %v2058
      %2158 = vmatpush1.bf16.msra.mxu0 %v2057
      %2159 = vmatprep.subr.bf16.mxu0 %v2062
      %2160 = vmatpush1.bf16.msra.mxu0 %v2061
      %2161 = vmatprep.mubr.bf16.mxu0 %v1804
      %2162 = vmatmul.mubr.bf16.gmra.mrb[0].mxu0 %v1801
      %v2163 = vpop.f32.mrb[0].mxu0
      %v2164 = vadd.f32 0.0, %v2163
      %v2165 = vpop.f32.mrb[0].mxu0
      %v2166 = vadd.f32 0.0, %v2165
      %v2167 = vpop.f32.mrb[0].mxu0
      %v2168 = vadd.f32 0.0, %v2167
      %v2169 = vpop.f32.mrb[0].mxu0
      %v2170 = vadd.f32 0.0, %v2169
      %2171 = vmatprep.mubr.bf16.mxu0 %v1803
      %2172 = vmatmul.mubr.bf16.gmra.mrb[0].mxu0 %v1800
      %v2173 = vpop.f32.mrb[0].mxu0
      %v2174 = vadd.f32 0.0, %v2173
      %v2175 = vpop.f32.mrb[0].mxu0
      %v2176 = vadd.f32 0.0, %v2175
      %v2177 = vpop.f32.mrb[0].mxu0
      %v2178 = vpop.f32.mrb[0].mxu0
      %2179 = vdwg.mxu0
      %2180 = vmatprep.subr.bf16.mxu0 %v2004
      %2181 = vmatpush1.bf16.msra.mxu0 %v2003
      %2182 = vmatprep.subr.bf16.mxu0 %v2008
      %2183 = vmatpush1.bf16.msra.mxu0 %v2007
      %2184 = vmatprep.subr.bf16.mxu0 %v2012
      %2185 = vmatpush1.bf16.msra.mxu0 %v2011
      %2186 = vmatprep.subr.bf16.mxu0 %v2016
      %2187 = vmatpush1.bf16.msra.mxu0 %v2015
      %2188 = vmatprep.subr.bf16.mxu0 %v2020
      %2189 = vmatpush1.bf16.msra.mxu0 %v2019
      %2190 = vmatprep.subr.bf16.mxu0 %v2024
      %2191 = vmatpush1.bf16.msra.mxu0 %v2023
      %2192 = vmatprep.subr.bf16.mxu0 %v2028
      %2193 = vmatpush1.bf16.msra.mxu0 %v2027
      %2194 = vmatprep.subr.bf16.mxu0 %v2032
      %2195 = vmatpush1.bf16.msra.mxu0 %v2031
      %2196 = vmatprep.subr.bf16.mxu0 %v2036
      %2197 = vmatpush1.bf16.msra.mxu0 %v2035
      %2198 = vmatprep.subr.bf16.mxu0 %v2040
      %2199 = vmatpush1.bf16.msra.mxu0 %v2039
      %2200 = vmatprep.subr.bf16.mxu0 %v2044
      %2201 = vmatpush1.bf16.msra.mxu0 %v2043
      %2202 = vmatprep.subr.bf16.mxu0 %v2048
      %2203 = vmatpush1.bf16.msra.mxu0 %v2047
      %2204 = vmatprep.subr.bf16.mxu0 %v2052
      %2205 = vmatpush1.bf16.msra.mxu0 %v2051
      %2206 = vmatprep.subr.bf16.mxu0 %v2056
      %2207 = vmatpush1.bf16.msra.mxu0 %v2055
      %2208 = vmatprep.subr.bf16.mxu0 %v2060
      %2209 = vmatpush1.bf16.msra.mxu0 %v2059
      %2210 = vmatprep.subr.bf16.mxu0 %v2064
      %2211 = vmatpush1.bf16.msra.mxu0 %v2063
      %2212 = vmatprep.mubr.bf16.mxu0 %v1804
      %2213 = vmatmul.mubr.bf16.gmra.mrb[0].mxu0 %v1801
      %v2214 = vpop.f32.mrb[0].mxu0
      %v2215 = vadd.f32 0.0, %v2214
      %v2216 = vpop.f32.mrb[0].mxu0
      %v2217 = vadd.f32 0.0, %v2216
      %v2218 = vpop.f32.mrb[0].mxu0
      %v2219 = vadd.f32 0.0, %v2218
      %v2220 = vpop.f32.mrb[0].mxu0
      %v2221 = vadd.f32 0.0, %v2220
      %2222 = vmatprep.mubr.bf16.mxu0 %v1803
      %2223 = vmatmul.mubr.bf16.gmra.mrb[0].mxu0 %v1800
      %v2224 = vpop.f32.mrb[0].mxu0
      %v2225 = vadd.f32 0.0, %v2224
      %v2226 = vpop.f32.mrb[0].mxu0
      %v2227 = vadd.f32 0.0, %v2226
      %v2228 = vpop.f32.mrb[0].mxu0
      %v2229 = vpop.f32.mrb[0].mxu0
      %2230 = vdwg.mxu0
      %v2231 = vadd.f32 %v1709, %v2164
      %v2232 = vadd.f32 %v1710, %v2166
      %v2233 = vadd.f32 %v1711, %v2215
      %v2234 = vadd.f32 %v1712, %v2217
      %v2235 = vadd.f32 %v1713, %v2168
      %v2236 = vadd.f32 %v1714, %v2170
      %v2237 = vadd.f32 %v1715, %v2219
      %v2238 = vadd.f32 %v1716, %v2221
      %v2239 = vadd.f32 %v1717, %v2174
      %v2240 = vadd.f32 %v1718, %v2176
      %v2241 = vadd.f32 %v1719, %v2225
      %v2242 = vadd.f32 %v1720, %v2227
      %v2243 = vld [vmem:[%s165 + $0x18] sm:$0xff]
      %s2244 = scalar_lea.vmem %s1, 2048
      %v2245 = vld [vmem:[%s2244] sm:$0xff]
      %v2246 = vld [vmem:[%s2244 + $0x8] sm:$0xff]
      %v2247 = vld [vmem:[%s2244 + $0x10] sm:$0xff]
      %v2248 = vld [vmem:[%s2244 + $0x18] sm:$0xff]
      %v2249 = vld [vmem:[%s2244 + $0x20] sm:$0xff]
      %v2250 = vld [vmem:[%s2244 + $0x28] sm:$0xff]
      %v2251 = vld [vmem:[%s2244 + $0x30] sm:$0xff]
      %v2252 = vld [vmem:[%s2244 + $0x38] sm:$0xff]
      %v2253 = vld [vmem:[%s2244 + $0x40] sm:$0xff]
      %v2254 = vld [vmem:[%s2244 + $0x48] sm:$0xff]
      %v2255 = vld [vmem:[%s2244 + $0x50] sm:$0xff]
      %v2256 = vld [vmem:[%s2244 + $0x58] sm:$0xff]
      %v2257 = vld [vmem:[%s2244 + $0x60] sm:$0xff]
      %v2258 = vld [vmem:[%s2244 + $0x68] sm:$0xff]
      %v2259 = vld [vmem:[%s2244 + $0x70] sm:$0xff]
      %v2260 = vld [vmem:[%s2244 + $0x78] sm:$0xff]
      %v2261 = vld [vmem:[%s2244 + $0x80] sm:$0xff]
      %v2262 = vld [vmem:[%s2244 + $0x88] sm:$0xff]
      %v2263 = vld [vmem:[%s2244 + $0x90] sm:$0xff]
      %v2264 = vld [vmem:[%s2244 + $0x98] sm:$0xff]
      %v2265 = vld [vmem:[%s2244 + $0xa0] sm:$0xff]
      %v2266 = vld [vmem:[%s2244 + $0xa8] sm:$0xff]
      %v2267 = vld [vmem:[%s2244 + $0xb0] sm:$0xff]
      %v2268 = vld [vmem:[%s2244 + $0xb8] sm:$0xff]
      %v2269 = vld [vmem:[%s2244 + $0xc0] sm:$0xff]
      %v2270 = vld [vmem:[%s2244 + $0xc8] sm:$0xff]
      %v2271 = vld [vmem:[%s2244 + $0xd0] sm:$0xff]
      %v2272 = vld [vmem:[%s2244 + $0xd8] sm:$0xff]
      %v2273 = vld [vmem:[%s2244 + $0xe0] sm:$0xff]
      %v2274 = vld [vmem:[%s2244 + $0xe8] sm:$0xff]
      %v2275 = vld [vmem:[%s2244 + $0xf0] sm:$0xff]
      %v2276 = vld [vmem:[%s2244 + $0xf8] sm:$0xff]
      %v2277 = vld [vmem:[%s2244 + $0x100] sm:$0xff]
      %v2278 = vld [vmem:[%s2244 + $0x108] sm:$0xff]
      %v2279 = vld [vmem:[%s2244 + $0x110] sm:$0xff]
      %v2280 = vld [vmem:[%s2244 + $0x118] sm:$0xff]
      %v2281 = vld [vmem:[%s2244 + $0x120] sm:$0xff]
      %v2282 = vld [vmem:[%s2244 + $0x128] sm:$0xff]
      %v2283 = vld [vmem:[%s2244 + $0x130] sm:$0xff]
      %v2284 = vld [vmem:[%s2244 + $0x138] sm:$0xff]
      %v2285 = vld [vmem:[%s2244 + $0x140] sm:$0xff]
      %v2286 = vld [vmem:[%s2244 + $0x148] sm:$0xff]
      %v2287 = vld [vmem:[%s2244 + $0x150] sm:$0xff]
      %v2288 = vld [vmem:[%s2244 + $0x158] sm:$0xff]
      %v2289 = vld [vmem:[%s2244 + $0x160] sm:$0xff]
      %v2290 = vld [vmem:[%s2244 + $0x168] sm:$0xff]
      %v2291 = vld [vmem:[%s2244 + $0x170] sm:$0xff]
      %v2292 = vld [vmem:[%s2244 + $0x178] sm:$0xff]
      %v2293 = vld [vmem:[%s2244 + $0x180] sm:$0xff]
      %v2294 = vld [vmem:[%s2244 + $0x188] sm:$0xff]
      %v2295 = vld [vmem:[%s2244 + $0x190] sm:$0xff]
      %v2296 = vld [vmem:[%s2244 + $0x198] sm:$0xff]
      %v2297 = vld [vmem:[%s2244 + $0x1a0] sm:$0xff]
      %v2298 = vld [vmem:[%s2244 + $0x1a8] sm:$0xff]
      %v2299 = vld [vmem:[%s2244 + $0x1b0] sm:$0xff]
      %v2300 = vld [vmem:[%s2244 + $0x1b8] sm:$0xff]
      %v2301 = vld [vmem:[%s2244 + $0x1c0] sm:$0xff]
      %v2302 = vld [vmem:[%s2244 + $0x1c8] sm:$0xff]
      %v2303 = vld [vmem:[%s2244 + $0x1d0] sm:$0xff]
      %v2304 = vld [vmem:[%s2244 + $0x1d8] sm:$0xff]
      %v2305 = vld [vmem:[%s2244 + $0x1e0] sm:$0xff]
      %v2306 = vld [vmem:[%s2244 + $0x1e8] sm:$0xff]
      %v2307 = vld [vmem:[%s2244 + $0x1f0] sm:$0xff]
      %v2308 = vld [vmem:[%s2244 + $0x1f8] sm:$0xff]
      %v2310 = vunpack.c.l.b16 %v2243
      %v2311 = vunpack.c.h.b16 %v2243
      %v2312 = vpack.c.b16 %v2310, %v312
      %v2313 = vpack.c.b16 %v2311, %v313
      %vm2314 = vsmask.f32 4352
      %v2316 = vshrl.u32 %v1794, 16
      %v2318 = vrot.slane %v2316, 3
      %v2319 = vshll.u32 %v1794, 16
      %v2321 = vrot.slane %v2319, 4
      %v2322 = vor.u32 %v2318, %v2321
      %v2324 = vshrl.u32 %v2312, 16
      %v2326 = vrot.slane %v2324, 3
      %v2327 = vshll.u32 %v2312, 16
      %v2329 = vrot.slane %v2327, 4
      %v2330 = vor.u32 %v2326, %v2329
      %v2331 = vsel %vm2314, %v2322, %v2330
      %v2333 = vshrl.u32 %v1795, 16
      %v2335 = vrot.slane %v2333, 3
      %v2336 = vshll.u32 %v1795, 16
      %v2338 = vrot.slane %v2336, 4
      %v2339 = vor.u32 %v2335, %v2338
      %v2341 = vshrl.u32 %v2313, 16
      %v2343 = vrot.slane %v2341, 3
      %v2344 = vshll.u32 %v2313, 16
      %v2346 = vrot.slane %v2344, 4
      %v2347 = vor.u32 %v2343, %v2346
      %v2348 = vsel %vm2314, %v2339, %v2347
      %v2417 = vunpack.c.l.b16 %v2245
      %v2418 = vunpack.c.h.b16 %v2245
      %v2419 = vunpack.c.l.b16 %v2246
      %v2420 = vunpack.c.h.b16 %v2246
      %v2421 = vunpack.c.l.b16 %v2247
      %v2422 = vunpack.c.h.b16 %v2247
      %v2423 = vunpack.c.l.b16 %v2248
      %v2424 = vunpack.c.h.b16 %v2248
      %v2425 = vunpack.c.l.b16 %v2249
      %v2426 = vunpack.c.h.b16 %v2249
      %v2427 = vunpack.c.l.b16 %v2250
      %v2428 = vunpack.c.h.b16 %v2250
      %v2429 = vunpack.c.l.b16 %v2251
      %v2430 = vunpack.c.h.b16 %v2251
      %v2431 = vunpack.c.l.b16 %v2252
      %v2432 = vunpack.c.h.b16 %v2252
      %v2433 = vunpack.c.l.b16 %v2253
      %v2434 = vunpack.c.h.b16 %v2253
      %v2435 = vunpack.c.l.b16 %v2254
      %v2436 = vunpack.c.h.b16 %v2254
      %v2437 = vunpack.c.l.b16 %v2255
      %v2438 = vunpack.c.h.b16 %v2255
      %v2439 = vunpack.c.l.b16 %v2256
      %v2440 = vunpack.c.h.b16 %v2256
      %v2441 = vunpack.c.l.b16 %v2257
      %v2442 = vunpack.c.h.b16 %v2257
      %v2443 = vunpack.c.l.b16 %v2258
      %v2444 = vunpack.c.h.b16 %v2258
      %v2445 = vunpack.c.l.b16 %v2259
      %v2446 = vunpack.c.h.b16 %v2259
      %v2447 = vunpack.c.l.b16 %v2260
      %v2448 = vunpack.c.h.b16 %v2260
      %v2449 = vunpack.c.l.b16 %v2261
      %v2450 = vunpack.c.h.b16 %v2261
      %v2451 = vunpack.c.l.b16 %v2262
      %v2452 = vunpack.c.h.b16 %v2262
      %v2453 = vunpack.c.l.b16 %v2263
      %v2454 = vunpack.c.h.b16 %v2263
      %v2455 = vunpack.c.l.b16 %v2264
      %v2456 = vunpack.c.h.b16 %v2264
      %v2457 = vunpack.c.l.b16 %v2265
      %v2458 = vunpack.c.h.b16 %v2265
      %v2459 = vunpack.c.l.b16 %v2266
      %v2460 = vunpack.c.h.b16 %v2266
      %v2461 = vunpack.c.l.b16 %v2267
      %v2462 = vunpack.c.h.b16 %v2267
      %v2463 = vunpack.c.l.b16 %v2268
      %v2464 = vunpack.c.h.b16 %v2268
      %v2465 = vunpack.c.l.b16 %v2269
      %v2466 = vunpack.c.h.b16 %v2269
      %v2467 = vunpack.c.l.b16 %v2270
      %v2468 = vunpack.c.h.b16 %v2270
      %v2469 = vunpack.c.l.b16 %v2271
      %v2470 = vunpack.c.h.b16 %v2271
      %v2471 = vunpack.c.l.b16 %v2272
      %v2472 = vunpack.c.h.b16 %v2272
      %v2473 = vunpack.c.l.b16 %v2273
      %v2474 = vunpack.c.h.b16 %v2273
      %v2475 = vunpack.c.l.b16 %v2274
      %v2476 = vunpack.c.h.b16 %v2274
      %v2477 = vunpack.c.l.b16 %v2275
      %v2478 = vunpack.c.h.b16 %v2275
      %v2479 = vunpack.c.l.b16 %v2276
      %v2480 = vunpack.c.h.b16 %v2276
      %v2481 = vunpack.c.l.b16 %v2277
      %v2482 = vunpack.c.h.b16 %v2277
      %v2483 = vunpack.c.l.b16 %v2278
      %v2484 = vunpack.c.h.b16 %v2278
      %v2485 = vunpack.c.l.b16 %v2279
      %v2486 = vunpack.c.h.b16 %v2279
      %v2487 = vunpack.c.l.b16 %v2280
      %v2488 = vunpack.c.h.b16 %v2280
      %v2489 = vunpack.c.l.b16 %v2281
      %v2490 = vunpack.c.h.b16 %v2281
      %v2491 = vunpack.c.l.b16 %v2282
      %v2492 = vunpack.c.h.b16 %v2282
      %v2493 = vunpack.c.l.b16 %v2283
      %v2494 = vunpack.c.h.b16 %v2283
      %v2495 = vunpack.c.l.b16 %v2284
      %v2496 = vunpack.c.h.b16 %v2284
      %v2497 = vunpack.c.l.b16 %v2285
      %v2498 = vunpack.c.h.b16 %v2285
      %v2499 = vunpack.c.l.b16 %v2286
      %v2500 = vunpack.c.h.b16 %v2286
      %v2501 = vunpack.c.l.b16 %v2287
      %v2502 = vunpack.c.h.b16 %v2287
      %v2503 = vunpack.c.l.b16 %v2288
      %v2504 = vunpack.c.h.b16 %v2288
      %v2505 = vunpack.c.l.b16 %v2289
      %v2506 = vunpack.c.h.b16 %v2289
      %v2507 = vunpack.c.l.b16 %v2290
      %v2508 = vunpack.c.h.b16 %v2290
      %v2509 = vunpack.c.l.b16 %v2291
      %v2510 = vunpack.c.h.b16 %v2291
      %v2511 = vunpack.c.l.b16 %v2292
      %v2512 = vunpack.c.h.b16 %v2292
      %v2513 = vunpack.c.l.b16 %v2293
      %v2514 = vunpack.c.h.b16 %v2293
      %v2515 = vunpack.c.l.b16 %v2294
      %v2516 = vunpack.c.h.b16 %v2294
      %v2517 = vunpack.c.l.b16 %v2295
      %v2518 = vunpack.c.h.b16 %v2295
      %v2519 = vunpack.c.l.b16 %v2296
      %v2520 = vunpack.c.h.b16 %v2296
      %v2521 = vunpack.c.l.b16 %v2297
      %v2522 = vunpack.c.h.b16 %v2297
      %v2523 = vunpack.c.l.b16 %v2298
      %v2524 = vunpack.c.h.b16 %v2298
      %v2525 = vunpack.c.l.b16 %v2299
      %v2526 = vunpack.c.h.b16 %v2299
      %v2527 = vunpack.c.l.b16 %v2300
      %v2528 = vunpack.c.h.b16 %v2300
      %v2529 = vunpack.c.l.b16 %v2301
      %v2530 = vunpack.c.h.b16 %v2301
      %v2531 = vunpack.c.l.b16 %v2302
      %v2532 = vunpack.c.h.b16 %v2302
      %v2533 = vunpack.c.l.b16 %v2303
      %v2534 = vunpack.c.h.b16 %v2303
      %v2535 = vunpack.c.l.b16 %v2304
      %v2536 = vunpack.c.h.b16 %v2304
      %v2537 = vunpack.c.l.b16 %v2305
      %v2538 = vunpack.c.h.b16 %v2305
      %v2539 = vunpack.c.l.b16 %v2306
      %v2540 = vunpack.c.h.b16 %v2306
      %v2541 = vunpack.c.l.b16 %v2307
      %v2542 = vunpack.c.h.b16 %v2307
      %v2543 = vunpack.c.l.b16 %v2308
      %v2544 = vunpack.c.h.b16 %v2308
      %v2545 = vpack.c.b16 %v2421, %v2417
      %v2546 = vpack.c.b16 %v2422, %v2418
      %v2547 = vpack.c.b16 %v2423, %v2419
      %v2548 = vpack.c.b16 %v2424, %v2420
      %v2549 = vpack.c.b16 %v2429, %v2425
      %v2550 = vpack.c.b16 %v2430, %v2426
      %v2551 = vpack.c.b16 %v2431, %v2427
      %v2552 = vpack.c.b16 %v2432, %v2428
      %v2553 = vpack.c.b16 %v2437, %v2433
      %v2554 = vpack.c.b16 %v2438, %v2434
      %v2555 = vpack.c.b16 %v2439, %v2435
      %v2556 = vpack.c.b16 %v2440, %v2436
      %v2557 = vpack.c.b16 %v2445, %v2441
      %v2558 = vpack.c.b16 %v2446, %v2442
      %v2559 = vpack.c.b16 %v2447, %v2443
      %v2560 = vpack.c.b16 %v2448, %v2444
      %v2561 = vpack.c.b16 %v2453, %v2449
      %v2562 = vpack.c.b16 %v2454, %v2450
      %v2563 = vpack.c.b16 %v2455, %v2451
      %v2564 = vpack.c.b16 %v2456, %v2452
      %v2565 = vpack.c.b16 %v2461, %v2457
      %v2566 = vpack.c.b16 %v2462, %v2458
      %v2567 = vpack.c.b16 %v2463, %v2459
      %v2568 = vpack.c.b16 %v2464, %v2460
      %v2569 = vpack.c.b16 %v2469, %v2465
      %v2570 = vpack.c.b16 %v2470, %v2466
      %v2571 = vpack.c.b16 %v2471, %v2467
      %v2572 = vpack.c.b16 %v2472, %v2468
      %v2573 = vpack.c.b16 %v2477, %v2473
      %v2574 = vpack.c.b16 %v2478, %v2474
      %v2575 = vpack.c.b16 %v2479, %v2475
      %v2576 = vpack.c.b16 %v2480, %v2476
      %v2577 = vpack.c.b16 %v2485, %v2481
      %v2578 = vpack.c.b16 %v2486, %v2482
      %v2579 = vpack.c.b16 %v2487, %v2483
      %v2580 = vpack.c.b16 %v2488, %v2484
      %v2581 = vpack.c.b16 %v2493, %v2489
      %v2582 = vpack.c.b16 %v2494, %v2490
      %v2583 = vpack.c.b16 %v2495, %v2491
      %v2584 = vpack.c.b16 %v2496, %v2492
      %v2585 = vpack.c.b16 %v2501, %v2497
      %v2586 = vpack.c.b16 %v2502, %v2498
      %v2587 = vpack.c.b16 %v2503, %v2499
      %v2588 = vpack.c.b16 %v2504, %v2500
      %v2589 = vpack.c.b16 %v2509, %v2505
      %v2590 = vpack.c.b16 %v2510, %v2506
      %v2591 = vpack.c.b16 %v2511, %v2507
      %v2592 = vpack.c.b16 %v2512, %v2508
      %v2593 = vpack.c.b16 %v2517, %v2513
      %v2594 = vpack.c.b16 %v2518, %v2514
      %v2595 = vpack.c.b16 %v2519, %v2515
      %v2596 = vpack.c.b16 %v2520, %v2516
      %v2597 = vpack.c.b16 %v2525, %v2521
      %v2598 = vpack.c.b16 %v2526, %v2522
      %v2599 = vpack.c.b16 %v2527, %v2523
      %v2600 = vpack.c.b16 %v2528, %v2524
      %v2601 = vpack.c.b16 %v2533, %v2529
      %v2602 = vpack.c.b16 %v2534, %v2530
      %v2603 = vpack.c.b16 %v2535, %v2531
      %v2604 = vpack.c.b16 %v2536, %v2532
      %v2605 = vpack.c.b16 %v2541, %v2537
      %v2606 = vpack.c.b16 %v2542, %v2538
      %v2607 = vpack.c.b16 %v2543, %v2539
      %v2608 = vpack.c.b16 %v2544, %v2540
      %2673 = vmatprep.subr.bf16.mxu0 %v2546
      %2674 = vmatpush1.bf16.msra.mxu0 %v2545
      %2675 = vmatprep.subr.bf16.mxu0 %v2550
      %2676 = vmatpush1.bf16.msra.mxu0 %v2549
      %2677 = vmatprep.subr.bf16.mxu0 %v2554
      %2678 = vmatpush1.bf16.msra.mxu0 %v2553
      %2679 = vmatprep.subr.bf16.mxu0 %v2558
      %2680 = vmatpush1.bf16.msra.mxu0 %v2557
      %2681 = vmatprep.subr.bf16.mxu0 %v2562
      %2682 = vmatpush1.bf16.msra.mxu0 %v2561
      %2683 = vmatprep.subr.bf16.mxu0 %v2566
      %2684 = vmatpush1.bf16.msra.mxu0 %v2565
      %2685 = vmatprep.subr.bf16.mxu0 %v2570
      %2686 = vmatpush1.bf16.msra.mxu0 %v2569
      %2687 = vmatprep.subr.bf16.mxu0 %v2574
      %2688 = vmatpush1.bf16.msra.mxu0 %v2573
      %2689 = vmatprep.subr.bf16.mxu0 %v2578
      %2690 = vmatpush1.bf16.msra.mxu0 %v2577
      %2691 = vmatprep.subr.bf16.mxu0 %v2582
      %2692 = vmatpush1.bf16.msra.mxu0 %v2581
      %2693 = vmatprep.subr.bf16.mxu0 %v2586
      %2694 = vmatpush1.bf16.msra.mxu0 %v2585
      %2695 = vmatprep.subr.bf16.mxu0 %v2590
      %2696 = vmatpush1.bf16.msra.mxu0 %v2589
      %2697 = vmatprep.subr.bf16.mxu0 %v2594
      %2698 = vmatpush1.bf16.msra.mxu0 %v2593
      %2699 = vmatprep.subr.bf16.mxu0 %v2598
      %2700 = vmatpush1.bf16.msra.mxu0 %v2597
      %2701 = vmatprep.subr.bf16.mxu0 %v2602
      %2702 = vmatpush1.bf16.msra.mxu0 %v2601
      %2703 = vmatprep.subr.bf16.mxu0 %v2606
      %2704 = vmatpush1.bf16.msra.mxu0 %v2605
      %2705 = vmatprep.mubr.bf16.mxu0 %v2348
      %2706 = vmatmul.mubr.bf16.gmra.mrb[0].mxu0 %v2331
      %v2707 = vpop.f32.mrb[0].mxu0
      %v2708 = vadd.f32 0.0, %v2707
      %v2709 = vpop.f32.mrb[0].mxu0
      %v2710 = vadd.f32 0.0, %v2709
      %v2711 = vpop.f32.mrb[0].mxu0
      %v2712 = vadd.f32 0.0, %v2711
      %v2713 = vpop.f32.mrb[0].mxu0
      %v2714 = vadd.f32 0.0, %v2713
      %2715 = vmatprep.mubr.bf16.mxu0 %v2347
      %2716 = vmatmul.mubr.bf16.gmra.mrb[0].mxu0 %v2330
      %v2717 = vpop.f32.mrb[0].mxu0
      %v2718 = vadd.f32 0.0, %v2717
      %v2719 = vpop.f32.mrb[0].mxu0
      %v2720 = vadd.f32 0.0, %v2719
      %v2721 = vpop.f32.mrb[0].mxu0
      %v2722 = vpop.f32.mrb[0].mxu0
      %2723 = vdwg.mxu0
      %2724 = vmatprep.subr.bf16.mxu0 %v2548
      %2725 = vmatpush1.bf16.msra.mxu0 %v2547
      %2726 = vmatprep.subr.bf16.mxu0 %v2552
      %2727 = vmatpush1.bf16.msra.mxu0 %v2551
      %2728 = vmatprep.subr.bf16.mxu0 %v2556
      %2729 = vmatpush1.bf16.msra.mxu0 %v2555
      %2730 = vmatprep.subr.bf16.mxu0 %v2560
      %2731 = vmatpush1.bf16.msra.mxu0 %v2559
      %2732 = vmatprep.subr.bf16.mxu0 %v2564
      %2733 = vmatpush1.bf16.msra.mxu0 %v2563
      %2734 = vmatprep.subr.bf16.mxu0 %v2568
      %2735 = vmatpush1.bf16.msra.mxu0 %v2567
      %2736 = vmatprep.subr.bf16.mxu0 %v2572
      %2737 = vmatpush1.bf16.msra.mxu0 %v2571
      %2738 = vmatprep.subr.bf16.mxu0 %v2576
      %2739 = vmatpush1.bf16.msra.mxu0 %v2575
      %2740 = vmatprep.subr.bf16.mxu0 %v2580
      %2741 = vmatpush1.bf16.msra.mxu0 %v2579
      %2742 = vmatprep.subr.bf16.mxu0 %v2584
      %2743 = vmatpush1.bf16.msra.mxu0 %v2583
      %2744 = vmatprep.subr.bf16.mxu0 %v2588
      %2745 = vmatpush1.bf16.msra.mxu0 %v2587
      %2746 = vmatprep.subr.bf16.mxu0 %v2592
      %2747 = vmatpush1.bf16.msra.mxu0 %v2591
      %2748 = vmatprep.subr.bf16.mxu0 %v2596
      %2749 = vmatpush1.bf16.msra.mxu0 %v2595
      %2750 = vmatprep.subr.bf16.mxu0 %v2600
      %2751 = vmatpush1.bf16.msra.mxu0 %v2599
      %2752 = vmatprep.subr.bf16.mxu0 %v2604
      %2753 = vmatpush1.bf16.msra.mxu0 %v2603
      %2754 = vmatprep.subr.bf16.mxu0 %v2608
      %2755 = vmatpush1.bf16.msra.mxu0 %v2607
      %2756 = vmatprep.mubr.bf16.mxu0 %v2348
      %2757 = vmatmul.mubr.bf16.gmra.mrb[0].mxu0 %v2331
      %v2758 = vpop.f32.mrb[0].mxu0
      %v2759 = vadd.f32 0.0, %v2758
      %v2760 = vpop.f32.mrb[0].mxu0
      %v2761 = vadd.f32 0.0, %v2760
      %v2762 = vpop.f32.mrb[0].mxu0
      %v2763 = vadd.f32 0.0, %v2762
      %v2764 = vpop.f32.mrb[0].mxu0
      %v2765 = vadd.f32 0.0, %v2764
      %2766 = vmatprep.mubr.bf16.mxu0 %v2347
      %2767 = vmatmul.mubr.bf16.gmra.mrb[0].mxu0 %v2330
      %v2768 = vpop.f32.mrb[0].mxu0
      %v2769 = vadd.f32 0.0, %v2768
      %v2770 = vpop.f32.mrb[0].mxu0
      %v2771 = vadd.f32 0.0, %v2770
      %v2772 = vpop.f32.mrb[0].mxu0
      %v2773 = vpop.f32.mrb[0].mxu0
      %2774 = vdwg.mxu0
      %v2775 = vadd.f32 %v2231, %v2708
      %v2776 = vadd.f32 %v2232, %v2710
      %v2777 = vadd.f32 %v2233, %v2759
      %v2778 = vadd.f32 %v2234, %v2761
      %v2779 = vadd.f32 %v2235, %v2712
      %v2780 = vadd.f32 %v2236, %v2714
      %v2781 = vadd.f32 %v2237, %v2763
      %v2782 = vadd.f32 %v2238, %v2765
      %v2783 = vadd.f32 %v2239, %v2718
      %v2784 = vadd.f32 %v2240, %v2720
      %v2785 = vadd.f32 %v2241, %v2769
      %v2786 = vadd.f32 %v2242, %v2771
      %s2787 = scalar_lea.vmem %s1, 2560
      %v2788 = vld [vmem:[%s2787] sm:$0xff]
      %v2789 = vld [vmem:[%s2787 + $0x8] sm:$0xff]
      %v2790 = vld [vmem:[%s2787 + $0x10] sm:$0xff]
      %v2791 = vld [vmem:[%s2787 + $0x18] sm:$0xff]
      %v2792 = vld [vmem:[%s2787 + $0x20] sm:$0xff]
      %v2793 = vld [vmem:[%s2787 + $0x28] sm:$0xff]
      %v2794 = vld [vmem:[%s2787 + $0x30] sm:$0xff]
      %v2795 = vld [vmem:[%s2787 + $0x38] sm:$0xff]
      %v2796 = vld [vmem:[%s2787 + $0x40] sm:$0xff]
      %v2797 = vld [vmem:[%s2787 + $0x48] sm:$0xff]
      %v2798 = vld [vmem:[%s2787 + $0x50] sm:$0xff]
      %v2799 = vld [vmem:[%s2787 + $0x58] sm:$0xff]
      %v2800 = vld [vmem:[%s2787 + $0x60] sm:$0xff]
      %v2801 = vld [vmem:[%s2787 + $0x68] sm:$0xff]
      %v2802 = vld [vmem:[%s2787 + $0x70] sm:$0xff]
      %v2803 = vld [vmem:[%s2787 + $0x78] sm:$0xff]
      %v2804 = vld [vmem:[%s2787 + $0x80] sm:$0xff]
      %v2805 = vld [vmem:[%s2787 + $0x88] sm:$0xff]
      %v2806 = vld [vmem:[%s2787 + $0x90] sm:$0xff]
      %v2807 = vld [vmem:[%s2787 + $0x98] sm:$0xff]
      %v2808 = vld [vmem:[%s2787 + $0xa0] sm:$0xff]
      %v2809 = vld [vmem:[%s2787 + $0xa8] sm:$0xff]
      %v2810 = vld [vmem:[%s2787 + $0xb0] sm:$0xff]
      %v2811 = vld [vmem:[%s2787 + $0xb8] sm:$0xff]
      %v2812 = vld [vmem:[%s2787 + $0xc0] sm:$0xff]
      %v2813 = vld [vmem:[%s2787 + $0xc8] sm:$0xff]
      %v2814 = vld [vmem:[%s2787 + $0xd0] sm:$0xff]
      %v2815 = vld [vmem:[%s2787 + $0xd8] sm:$0xff]
      %v2816 = vld [vmem:[%s2787 + $0xe0] sm:$0xff]
      %v2817 = vld [vmem:[%s2787 + $0xe8] sm:$0xff]
      %v2818 = vld [vmem:[%s2787 + $0xf0] sm:$0xff]
      %v2819 = vld [vmem:[%s2787 + $0xf8] sm:$0xff]
      %v2820 = vld [vmem:[%s2787 + $0x100] sm:$0xff]
      %v2821 = vld [vmem:[%s2787 + $0x108] sm:$0xff]
      %v2822 = vld [vmem:[%s2787 + $0x110] sm:$0xff]
      %v2823 = vld [vmem:[%s2787 + $0x118] sm:$0xff]
      %v2824 = vld [vmem:[%s2787 + $0x120] sm:$0xff]
      %v2825 = vld [vmem:[%s2787 + $0x128] sm:$0xff]
      %v2826 = vld [vmem:[%s2787 + $0x130] sm:$0xff]
      %v2827 = vld [vmem:[%s2787 + $0x138] sm:$0xff]
      %v2828 = vld [vmem:[%s2787 + $0x140] sm:$0xff]
      %v2829 = vld [vmem:[%s2787 + $0x148] sm:$0xff]
      %v2830 = vld [vmem:[%s2787 + $0x150] sm:$0xff]
      %v2831 = vld [vmem:[%s2787 + $0x158] sm:$0xff]
      %v2832 = vld [vmem:[%s2787 + $0x160] sm:$0xff]
      %v2833 = vld [vmem:[%s2787 + $0x168] sm:$0xff]
      %v2834 = vld [vmem:[%s2787 + $0x170] sm:$0xff]
      %v2835 = vld [vmem:[%s2787 + $0x178] sm:$0xff]
      %v2836 = vld [vmem:[%s2787 + $0x180] sm:$0xff]
      %v2837 = vld [vmem:[%s2787 + $0x188] sm:$0xff]
      %v2838 = vld [vmem:[%s2787 + $0x190] sm:$0xff]
      %v2839 = vld [vmem:[%s2787 + $0x198] sm:$0xff]
      %v2840 = vld [vmem:[%s2787 + $0x1a0] sm:$0xff]
      %v2841 = vld [vmem:[%s2787 + $0x1a8] sm:$0xff]
      %v2842 = vld [vmem:[%s2787 + $0x1b0] sm:$0xff]
      %v2843 = vld [vmem:[%s2787 + $0x1b8] sm:$0xff]
      %v2844 = vld [vmem:[%s2787 + $0x1c0] sm:$0xff]
      %v2845 = vld [vmem:[%s2787 + $0x1c8] sm:$0xff]
      %v2846 = vld [vmem:[%s2787 + $0x1d0] sm:$0xff]
      %v2847 = vld [vmem:[%s2787 + $0x1d8] sm:$0xff]
      %v2848 = vld [vmem:[%s2787 + $0x1e0] sm:$0xff]
      %v2849 = vld [vmem:[%s2787 + $0x1e8] sm:$0xff]
      %v2850 = vld [vmem:[%s2787 + $0x1f0] sm:$0xff]
      %v2851 = vld [vmem:[%s2787 + $0x1f8] sm:$0xff]
      %v2852 = vpack.c.b16 %v312, %v310
      %v2853 = vpack.c.b16 %v313, %v311
      %v2854 = vpack.c.b16 %v2310, %v2310
      %v2855 = vpack.c.b16 %v2311, %v2311
      %v2924 = vunpack.c.l.b16 %v2788
      %v2925 = vunpack.c.h.b16 %v2788
      %v2926 = vunpack.c.l.b16 %v2789
      %v2927 = vunpack.c.h.b16 %v2789
      %v2928 = vunpack.c.l.b16 %v2790
      %v2929 = vunpack.c.h.b16 %v2790
      %v2930 = vunpack.c.l.b16 %v2791
      %v2931 = vunpack.c.h.b16 %v2791
      %v2932 = vunpack.c.l.b16 %v2792
      %v2933 = vunpack.c.h.b16 %v2792
      %v2934 = vunpack.c.l.b16 %v2793
      %v2935 = vunpack.c.h.b16 %v2793
      %v2936 = vunpack.c.l.b16 %v2794
      %v2937 = vunpack.c.h.b16 %v2794
      %v2938 = vunpack.c.l.b16 %v2795
      %v2939 = vunpack.c.h.b16 %v2795
      %v2940 = vunpack.c.l.b16 %v2796
      %v2941 = vunpack.c.h.b16 %v2796
      %v2942 = vunpack.c.l.b16 %v2797
      %v2943 = vunpack.c.h.b16 %v2797
      %v2944 = vunpack.c.l.b16 %v2798
      %v2945 = vunpack.c.h.b16 %v2798
      %v2946 = vunpack.c.l.b16 %v2799
      %v2947 = vunpack.c.h.b16 %v2799
      %v2948 = vunpack.c.l.b16 %v2800
      %v2949 = vunpack.c.h.b16 %v2800
      %v2950 = vunpack.c.l.b16 %v2801
      %v2951 = vunpack.c.h.b16 %v2801
      %v2952 = vunpack.c.l.b16 %v2802
      %v2953 = vunpack.c.h.b16 %v2802
      %v2954 = vunpack.c.l.b16 %v2803
      %v2955 = vunpack.c.h.b16 %v2803
      %v2956 = vunpack.c.l.b16 %v2804
      %v2957 = vunpack.c.h.b16 %v2804
      %v2958 = vunpack.c.l.b16 %v2805
      %v2959 = vunpack.c.h.b16 %v2805
      %v2960 = vunpack.c.l.b16 %v2806
      %v2961 = vunpack.c.h.b16 %v2806
      %v2962 = vunpack.c.l.b16 %v2807
      %v2963 = vunpack.c.h.b16 %v2807
      %v2964 = vunpack.c.l.b16 %v2808
      %v2965 = vunpack.c.h.b16 %v2808
      %v2966 = vunpack.c.l.b16 %v2809
      %v2967 = vunpack.c.h.b16 %v2809
      %v2968 = vunpack.c.l.b16 %v2810
      %v2969 = vunpack.c.h.b16 %v2810
      %v2970 = vunpack.c.l.b16 %v2811
      %v2971 = vunpack.c.h.b16 %v2811
      %v2972 = vunpack.c.l.b16 %v2812
      %v2973 = vunpack.c.h.b16 %v2812
      %v2974 = vunpack.c.l.b16 %v2813
      %v2975 = vunpack.c.h.b16 %v2813
      %v2976 = vunpack.c.l.b16 %v2814
      %v2977 = vunpack.c.h.b16 %v2814
      %v2978 = vunpack.c.l.b16 %v2815
      %v2979 = vunpack.c.h.b16 %v2815
      %v2980 = vunpack.c.l.b16 %v2816
      %v2981 = vunpack.c.h.b16 %v2816
      %v2982 = vunpack.c.l.b16 %v2817
      %v2983 = vunpack.c.h.b16 %v2817
      %v2984 = vunpack.c.l.b16 %v2818
      %v2985 = vunpack.c.h.b16 %v2818
      %v2986 = vunpack.c.l.b16 %v2819
      %v2987 = vunpack.c.h.b16 %v2819
      %v2988 = vunpack.c.l.b16 %v2820
      %v2989 = vunpack.c.h.b16 %v2820
      %v2990 = vunpack.c.l.b16 %v2821
      %v2991 = vunpack.c.h.b16 %v2821
      %v2992 = vunpack.c.l.b16 %v2822
      %v2993 = vunpack.c.h.b16 %v2822
      %v2994 = vunpack.c.l.b16 %v2823
      %v2995 = vunpack.c.h.b16 %v2823
      %v2996 = vunpack.c.l.b16 %v2824
      %v2997 = vunpack.c.h.b16 %v2824
      %v2998 = vunpack.c.l.b16 %v2825
      %v2999 = vunpack.c.h.b16 %v2825
      %v3000 = vunpack.c.l.b16 %v2826
      %v3001 = vunpack.c.h.b16 %v2826
      %v3002 = vunpack.c.l.b16 %v2827
      %v3003 = vunpack.c.h.b16 %v2827
      %v3004 = vunpack.c.l.b16 %v2828
      %v3005 = vunpack.c.h.b16 %v2828
      %v3006 = vunpack.c.l.b16 %v2829
      %v3007 = vunpack.c.h.b16 %v2829
      %v3008 = vunpack.c.l.b16 %v2830
      %v3009 = vunpack.c.h.b16 %v2830
      %v3010 = vunpack.c.l.b16 %v2831
      %v3011 = vunpack.c.h.b16 %v2831
      %v3012 = vunpack.c.l.b16 %v2832
      %v3013 = vunpack.c.h.b16 %v2832
      %v3014 = vunpack.c.l.b16 %v2833
      %v3015 = vunpack.c.h.b16 %v2833
      %v3016 = vunpack.c.l.b16 %v2834
      %v3017 = vunpack.c.h.b16 %v2834
      %v3018 = vunpack.c.l.b16 %v2835
      %v3019 = vunpack.c.h.b16 %v2835
      %v3020 = vunpack.c.l.b16 %v2836
      %v3021 = vunpack.c.h.b16 %v2836
      %v3022 = vunpack.c.l.b16 %v2837
      %v3023 = vunpack.c.h.b16 %v2837
      %v3024 = vunpack.c.l.b16 %v2838
      %v3025 = vunpack.c.h.b16 %v2838
      %v3026 = vunpack.c.l.b16 %v2839
      %v3027 = vunpack.c.h.b16 %v2839
      %v3028 = vunpack.c.l.b16 %v2840
      %v3029 = vunpack.c.h.b16 %v2840
      %v3030 = vunpack.c.l.b16 %v2841
      %v3031 = vunpack.c.h.b16 %v2841
      %v3032 = vunpack.c.l.b16 %v2842
      %v3033 = vunpack.c.h.b16 %v2842
      %v3034 = vunpack.c.l.b16 %v2843
      %v3035 = vunpack.c.h.b16 %v2843
      %v3036 = vunpack.c.l.b16 %v2844
      %v3037 = vunpack.c.h.b16 %v2844
      %v3038 = vunpack.c.l.b16 %v2845
      %v3039 = vunpack.c.h.b16 %v2845
      %v3040 = vunpack.c.l.b16 %v2846
      %v3041 = vunpack.c.h.b16 %v2846
      %v3042 = vunpack.c.l.b16 %v2847
      %v3043 = vunpack.c.h.b16 %v2847
      %v3044 = vunpack.c.l.b16 %v2848
      %v3045 = vunpack.c.h.b16 %v2848
      %v3046 = vunpack.c.l.b16 %v2849
      %v3047 = vunpack.c.h.b16 %v2849
      %v3048 = vunpack.c.l.b16 %v2850
      %v3049 = vunpack.c.h.b16 %v2850
      %v3050 = vunpack.c.l.b16 %v2851
      %v3051 = vunpack.c.h.b16 %v2851
      %v3052 = vpack.c.b16 %v2928, %v2924
      %v3053 = vpack.c.b16 %v2929, %v2925
      %v3054 = vpack.c.b16 %v2930, %v2926
      %v3055 = vpack.c.b16 %v2931, %v2927
      %v3056 = vpack.c.b16 %v2936, %v2932
      %v3057 = vpack.c.b16 %v2937, %v2933
      %v3058 = vpack.c.b16 %v2938, %v2934
      %v3059 = vpack.c.b16 %v2939, %v2935
      %v3060 = vpack.c.b16 %v2944, %v2940
      %v3061 = vpack.c.b16 %v2945, %v2941
      %v3062 = vpack.c.b16 %v2946, %v2942
      %v3063 = vpack.c.b16 %v2947, %v2943
      %v3064 = vpack.c.b16 %v2952, %v2948
      %v3065 = vpack.c.b16 %v2953, %v2949
      %v3066 = vpack.c.b16 %v2954, %v2950
      %v3067 = vpack.c.b16 %v2955, %v2951
      %v3068 = vpack.c.b16 %v2960, %v2956
      %v3069 = vpack.c.b16 %v2961, %v2957
      %v3070 = vpack.c.b16 %v2962, %v2958
      %v3071 = vpack.c.b16 %v2963, %v2959
      %v3072 = vpack.c.b16 %v2968, %v2964
      %v3073 = vpack.c.b16 %v2969, %v2965
      %v3074 = vpack.c.b16 %v2970, %v2966
      %v3075 = vpack.c.b16 %v2971, %v2967
      %v3076 = vpack.c.b16 %v2976, %v2972
      %v3077 = vpack.c.b16 %v2977, %v2973
      %v3078 = vpack.c.b16 %v2978, %v2974
      %v3079 = vpack.c.b16 %v2979, %v2975
      %v3080 = vpack.c.b16 %v2984, %v2980
      %v3081 = vpack.c.b16 %v2985, %v2981
      %v3082 = vpack.c.b16 %v2986, %v2982
      %v3083 = vpack.c.b16 %v2987, %v2983
      %v3084 = vpack.c.b16 %v2992, %v2988
      %v3085 = vpack.c.b16 %v2993, %v2989
      %v3086 = vpack.c.b16 %v2994, %v2990
      %v3087 = vpack.c.b16 %v2995, %v2991
      %v3088 = vpack.c.b16 %v3000, %v2996
      %v3089 = vpack.c.b16 %v3001, %v2997
      %v3090 = vpack.c.b16 %v3002, %v2998
      %v3091 = vpack.c.b16 %v3003, %v2999
      %v3092 = vpack.c.b16 %v3008, %v3004
      %v3093 = vpack.c.b16 %v3009, %v3005
      %v3094 = vpack.c.b16 %v3010, %v3006
      %v3095 = vpack.c.b16 %v3011, %v3007
      %v3096 = vpack.c.b16 %v3016, %v3012
      %v3097 = vpack.c.b16 %v3017, %v3013
      %v3098 = vpack.c.b16 %v3018, %v3014
      %v3099 = vpack.c.b16 %v3019, %v3015
      %v3100 = vpack.c.b16 %v3024, %v3020
      %v3101 = vpack.c.b16 %v3025, %v3021
      %v3102 = vpack.c.b16 %v3026, %v3022
      %v3103 = vpack.c.b16 %v3027, %v3023
      %v3104 = vpack.c.b16 %v3032, %v3028
      %v3105 = vpack.c.b16 %v3033, %v3029
      %v3106 = vpack.c.b16 %v3034, %v3030
      %v3107 = vpack.c.b16 %v3035, %v3031
      %v3108 = vpack.c.b16 %v3040, %v3036
      %v3109 = vpack.c.b16 %v3041, %v3037
      %v3110 = vpack.c.b16 %v3042, %v3038
      %v3111 = vpack.c.b16 %v3043, %v3039
      %v3112 = vpack.c.b16 %v3048, %v3044
      %v3113 = vpack.c.b16 %v3049, %v3045
      %v3114 = vpack.c.b16 %v3050, %v3046
      %v3115 = vpack.c.b16 %v3051, %v3047
      %3180 = vmatprep.subr.bf16.mxu0 %v3053
      %3181 = vmatpush1.bf16.msra.mxu0 %v3052
      %3182 = vmatprep.subr.bf16.mxu0 %v3057
      %3183 = vmatpush1.bf16.msra.mxu0 %v3056
      %3184 = vmatprep.subr.bf16.mxu0 %v3061
      %3185 = vmatpush1.bf16.msra.mxu0 %v3060
      %3186 = vmatprep.subr.bf16.mxu0 %v3065
      %3187 = vmatpush1.bf16.msra.mxu0 %v3064
      %3188 = vmatprep.subr.bf16.mxu0 %v3069
      %3189 = vmatpush1.bf16.msra.mxu0 %v3068
      %3190 = vmatprep.subr.bf16.mxu0 %v3073
      %3191 = vmatpush1.bf16.msra.mxu0 %v3072
      %3192 = vmatprep.subr.bf16.mxu0 %v3077
      %3193 = vmatpush1.bf16.msra.mxu0 %v3076
      %3194 = vmatprep.subr.bf16.mxu0 %v3081
      %3195 = vmatpush1.bf16.msra.mxu0 %v3080
      %3196 = vmatprep.subr.bf16.mxu0 %v3085
      %3197 = vmatpush1.bf16.msra.mxu0 %v3084
      %3198 = vmatprep.subr.bf16.mxu0 %v3089
      %3199 = vmatpush1.bf16.msra.mxu0 %v3088
      %3200 = vmatprep.subr.bf16.mxu0 %v3093
      %3201 = vmatpush1.bf16.msra.mxu0 %v3092
      %3202 = vmatprep.subr.bf16.mxu0 %v3097
      %3203 = vmatpush1.bf16.msra.mxu0 %v3096
      %3204 = vmatprep.subr.bf16.mxu0 %v3101
      %3205 = vmatpush1.bf16.msra.mxu0 %v3100
      %3206 = vmatprep.subr.bf16.mxu0 %v3105
      %3207 = vmatpush1.bf16.msra.mxu0 %v3104
      %3208 = vmatprep.subr.bf16.mxu0 %v3109
      %3209 = vmatpush1.bf16.msra.mxu0 %v3108
      %3210 = vmatprep.subr.bf16.mxu0 %v3113
      %3211 = vmatpush1.bf16.msra.mxu0 %v3112
      %3212 = vmatprep.mubr.bf16.mxu0 %v2853
      %3213 = vmatmul.mubr.bf16.gmra.mrb[0].mxu0 %v2852
      %v3214 = vpop.f32.mrb[0].mxu0
      %v3215 = vadd.f32 0.0, %v3214
      %v3216 = vpop.f32.mrb[0].mxu0
      %v3217 = vadd.f32 0.0, %v3216
      %v3218 = vpop.f32.mrb[0].mxu0
      %v3219 = vadd.f32 0.0, %v3218
      %v3220 = vpop.f32.mrb[0].mxu0
      %v3221 = vadd.f32 0.0, %v3220
      %3222 = vmatprep.mubr.bf16.mxu0 %v2855
      %3223 = vmatmul.mubr.bf16.gmra.mrb[0].mxu0 %v2854
      %v3224 = vpop.f32.mrb[0].mxu0
      %v3225 = vadd.f32 0.0, %v3224
      %v3226 = vpop.f32.mrb[0].mxu0
      %v3227 = vadd.f32 0.0, %v3226
      %v3228 = vpop.f32.mrb[0].mxu0
      %v3229 = vpop.f32.mrb[0].mxu0
      %3230 = vdwg.mxu0
      %3231 = vmatprep.subr.bf16.mxu0 %v3055
      %3232 = vmatpush1.bf16.msra.mxu0 %v3054
      %3233 = vmatprep.subr.bf16.mxu0 %v3059
      %3234 = vmatpush1.bf16.msra.mxu0 %v3058
      %3235 = vmatprep.subr.bf16.mxu0 %v3063
      %3236 = vmatpush1.bf16.msra.mxu0 %v3062
      %3237 = vmatprep.subr.bf16.mxu0 %v3067
      %3238 = vmatpush1.bf16.msra.mxu0 %v3066
      %3239 = vmatprep.subr.bf16.mxu0 %v3071
      %3240 = vmatpush1.bf16.msra.mxu0 %v3070
      %3241 = vmatprep.subr.bf16.mxu0 %v3075
      %3242 = vmatpush1.bf16.msra.mxu0 %v3074
      %3243 = vmatprep.subr.bf16.mxu0 %v3079
      %3244 = vmatpush1.bf16.msra.mxu0 %v3078
      %3245 = vmatprep.subr.bf16.mxu0 %v3083
      %3246 = vmatpush1.bf16.msra.mxu0 %v3082
      %3247 = vmatprep.subr.bf16.mxu0 %v3087
      %3248 = vmatpush1.bf16.msra.mxu0 %v3086
      %3249 = vmatprep.subr.bf16.mxu0 %v3091
      %3250 = vmatpush1.bf16.msra.mxu0 %v3090
      %3251 = vmatprep.subr.bf16.mxu0 %v3095
      %3252 = vmatpush1.bf16.msra.mxu0 %v3094
      %3253 = vmatprep.subr.bf16.mxu0 %v3099
      %3254 = vmatpush1.bf16.msra.mxu0 %v3098
      %3255 = vmatprep.subr.bf16.mxu0 %v3103
      %3256 = vmatpush1.bf16.msra.mxu0 %v3102
      %3257 = vmatprep.subr.bf16.mxu0 %v3107
      %3258 = vmatpush1.bf16.msra.mxu0 %v3106
      %3259 = vmatprep.subr.bf16.mxu0 %v3111
      %3260 = vmatpush1.bf16.msra.mxu0 %v3110
      %3261 = vmatprep.subr.bf16.mxu0 %v3115
      %3262 = vmatpush1.bf16.msra.mxu0 %v3114
      %3263 = vmatprep.mubr.bf16.mxu0 %v2853
      %3264 = vmatmul.mubr.bf16.gmra.mrb[0].mxu0 %v2852
      %v3265 = vpop.f32.mrb[0].mxu0
      %v3266 = vadd.f32 0.0, %v3265
      %v3267 = vpop.f32.mrb[0].mxu0
      %v3268 = vadd.f32 0.0, %v3267
      %v3269 = vpop.f32.mrb[0].mxu0
      %v3270 = vadd.f32 0.0, %v3269
      %v3271 = vpop.f32.mrb[0].mxu0
      %v3272 = vadd.f32 0.0, %v3271
      %3273 = vmatprep.mubr.bf16.mxu0 %v2855
      %3274 = vmatmul.mubr.bf16.gmra.mrb[0].mxu0 %v2854
      %v3275 = vpop.f32.mrb[0].mxu0
      %v3276 = vadd.f32 0.0, %v3275
      %v3277 = vpop.f32.mrb[0].mxu0
      %v3278 = vadd.f32 0.0, %v3277
      %v3279 = vpop.f32.mrb[0].mxu0
      %v3280 = vpop.f32.mrb[0].mxu0
      %3281 = vdwg.mxu0
      %v3282 = vadd.f32 %v2775, %v3215
      %v3283 = vadd.f32 %v2776, %v3217
      %v3284 = vadd.f32 %v2777, %v3266
      %v3285 = vadd.f32 %v2778, %v3268
      %v3286 = vadd.f32 %v2779, %v3219
      %v3287 = vadd.f32 %v2780, %v3221
      %v3288 = vadd.f32 %v2781, %v3270
      %v3289 = vadd.f32 %v2782, %v3272
      %v3290 = vadd.f32 %v2783, %v3225
      %v3291 = vadd.f32 %v2784, %v3227
      %v3292 = vadd.f32 %v2785, %v3276
      %v3293 = vadd.f32 %v2786, %v3278
      %v3294 = vld [vmem:[%s165 + $0x8] sm:$0xcc]
      %v3295 = vld [vmem:[%s165 + $0x10] sm:$0xff]
      %v3296 = vld [vmem:[%s165 + $0x18] sm:$0xff]
      %v3297 = vld [vmem:[%s165 + $0x20] sm:$0x33]
      %s3298 = scalar_lea.vmem %s1, 3072
      %v3299 = vld [vmem:[%s3298] sm:$0xff]
      %v3300 = vld [vmem:[%s3298 + $0x8] sm:$0xff]
      %v3301 = vld [vmem:[%s3298 + $0x10] sm:$0xff]
      %v3302 = vld [vmem:[%s3298 + $0x18] sm:$0xff]
      %v3303 = vld [vmem:[%s3298 + $0x20] sm:$0xff]
      %v3304 = vld [vmem:[%s3298 + $0x28] sm:$0xff]
      %v3305 = vld [vmem:[%s3298 + $0x30] sm:$0xff]
      %v3306 = vld [vmem:[%s3298 + $0x38] sm:$0xff]
      %v3307 = vld [vmem:[%s3298 + $0x40] sm:$0xff]
      %v3308 = vld [vmem:[%s3298 + $0x48] sm:$0xff]
      %v3309 = vld [vmem:[%s3298 + $0x50] sm:$0xff]
      %v3310 = vld [vmem:[%s3298 + $0x58] sm:$0xff]
      %v3311 = vld [vmem:[%s3298 + $0x60] sm:$0xff]
      %v3312 = vld [vmem:[%s3298 + $0x68] sm:$0xff]
      %v3313 = vld [vmem:[%s3298 + $0x70] sm:$0xff]
      %v3314 = vld [vmem:[%s3298 + $0x78] sm:$0xff]
      %v3315 = vld [vmem:[%s3298 + $0x80] sm:$0xff]
      %v3316 = vld [vmem:[%s3298 + $0x88] sm:$0xff]
      %v3317 = vld [vmem:[%s3298 + $0x90] sm:$0xff]
      %v3318 = vld [vmem:[%s3298 + $0x98] sm:$0xff]
      %v3319 = vld [vmem:[%s3298 + $0xa0] sm:$0xff]
      %v3320 = vld [vmem:[%s3298 + $0xa8] sm:$0xff]
      %v3321 = vld [vmem:[%s3298 + $0xb0] sm:$0xff]
      %v3322 = vld [vmem:[%s3298 + $0xb8] sm:$0xff]
      %v3323 = vld [vmem:[%s3298 + $0xc0] sm:$0xff]
      %v3324 = vld [vmem:[%s3298 + $0xc8] sm:$0xff]
      %v3325 = vld [vmem:[%s3298 + $0xd0] sm:$0xff]
      %v3326 = vld [vmem:[%s3298 + $0xd8] sm:$0xff]
      %v3327 = vld [vmem:[%s3298 + $0xe0] sm:$0xff]
      %v3328 = vld [vmem:[%s3298 + $0xe8] sm:$0xff]
      %v3329 = vld [vmem:[%s3298 + $0xf0] sm:$0xff]
      %v3330 = vld [vmem:[%s3298 + $0xf8] sm:$0xff]
      %v3331 = vld [vmem:[%s3298 + $0x100] sm:$0xff]
      %v3332 = vld [vmem:[%s3298 + $0x108] sm:$0xff]
      %v3333 = vld [vmem:[%s3298 + $0x110] sm:$0xff]
      %v3334 = vld [vmem:[%s3298 + $0x118] sm:$0xff]
      %v3335 = vld [vmem:[%s3298 + $0x120] sm:$0xff]
      %v3336 = vld [vmem:[%s3298 + $0x128] sm:$0xff]
      %v3337 = vld [vmem:[%s3298 + $0x130] sm:$0xff]
      %v3338 = vld [vmem:[%s3298 + $0x138] sm:$0xff]
      %v3339 = vld [vmem:[%s3298 + $0x140] sm:$0xff]
      %v3340 = vld [vmem:[%s3298 + $0x148] sm:$0xff]
      %v3341 = vld [vmem:[%s3298 + $0x150] sm:$0xff]
      %v3342 = vld [vmem:[%s3298 + $0x158] sm:$0xff]
      %v3343 = vld [vmem:[%s3298 + $0x160] sm:$0xff]
      %v3344 = vld [vmem:[%s3298 + $0x168] sm:$0xff]
      %v3345 = vld [vmem:[%s3298 + $0x170] sm:$0xff]
      %v3346 = vld [vmem:[%s3298 + $0x178] sm:$0xff]
      %v3347 = vld [vmem:[%s3298 + $0x180] sm:$0xff]
      %v3348 = vld [vmem:[%s3298 + $0x188] sm:$0xff]
      %v3349 = vld [vmem:[%s3298 + $0x190] sm:$0xff]
      %v3350 = vld [vmem:[%s3298 + $0x198] sm:$0xff]
      %v3351 = vld [vmem:[%s3298 + $0x1a0] sm:$0xff]
      %v3352 = vld [vmem:[%s3298 + $0x1a8] sm:$0xff]
      %v3353 = vld [vmem:[%s3298 + $0x1b0] sm:$0xff]
      %v3354 = vld [vmem:[%s3298 + $0x1b8] sm:$0xff]
      %v3355 = vld [vmem:[%s3298 + $0x1c0] sm:$0xff]
      %v3356 = vld [vmem:[%s3298 + $0x1c8] sm:$0xff]
      %v3357 = vld [vmem:[%s3298 + $0x1d0] sm:$0xff]
      %v3358 = vld [vmem:[%s3298 + $0x1d8] sm:$0xff]
      %v3359 = vld [vmem:[%s3298 + $0x1e0] sm:$0xff]
      %v3360 = vld [vmem:[%s3298 + $0x1e8] sm:$0xff]
      %v3361 = vld [vmem:[%s3298 + $0x1f0] sm:$0xff]
      %v3362 = vld [vmem:[%s3298 + $0x1f8] sm:$0xff]
      %v3367 = vunpack.c.l.b16 %v3294
      %v3368 = vunpack.c.h.b16 %v3294
      %v3369 = vunpack.c.l.b16 %v3295
      %v3370 = vunpack.c.h.b16 %v3295
      %v3371 = vunpack.c.l.b16 %v3296
      %v3372 = vunpack.c.h.b16 %v3296
      %v3373 = vunpack.c.l.b16 %v3297
      %v3374 = vunpack.c.h.b16 %v3297
      %v3375 = vpack.c.b16 %v3369, %v3367
      %v3376 = vpack.c.b16 %v3370, %v3368
      %v3377 = vpack.c.b16 %v3373, %v3371
      %v3378 = vpack.c.b16 %v3374, %v3372
      %vm3379 = vcmask 1045504
      %v3380 = vrot.slane %v3375, 2
      %v3381 = vrot.slane %v3377, 2
      %v3382 = vsel %vm3379, %v3380, %v3381
      %v3383 = vrot.slane %v3376, 2
      %v3384 = vrot.slane %v3378, 2
      %v3385 = vsel %vm3379, %v3383, %v3384
      %v3454 = vunpack.c.l.b16 %v3299
      %v3455 = vunpack.c.h.b16 %v3299
      %v3456 = vunpack.c.l.b16 %v3300
      %v3457 = vunpack.c.h.b16 %v3300
      %v3458 = vunpack.c.l.b16 %v3301
      %v3459 = vunpack.c.h.b16 %v3301
      %v3460 = vunpack.c.l.b16 %v3302
      %v3461 = vunpack.c.h.b16 %v3302
      %v3462 = vunpack.c.l.b16 %v3303
      %v3463 = vunpack.c.h.b16 %v3303
      %v3464 = vunpack.c.l.b16 %v3304
      %v3465 = vunpack.c.h.b16 %v3304
      %v3466 = vunpack.c.l.b16 %v3305
      %v3467 = vunpack.c.h.b16 %v3305
      %v3468 = vunpack.c.l.b16 %v3306
      %v3469 = vunpack.c.h.b16 %v3306
      %v3470 = vunpack.c.l.b16 %v3307
      %v3471 = vunpack.c.h.b16 %v3307
      %v3472 = vunpack.c.l.b16 %v3308
      %v3473 = vunpack.c.h.b16 %v3308
      %v3474 = vunpack.c.l.b16 %v3309
      %v3475 = vunpack.c.h.b16 %v3309
      %v3476 = vunpack.c.l.b16 %v3310
      %v3477 = vunpack.c.h.b16 %v3310
      %v3478 = vunpack.c.l.b16 %v3311
      %v3479 = vunpack.c.h.b16 %v3311
      %v3480 = vunpack.c.l.b16 %v3312
      %v3481 = vunpack.c.h.b16 %v3312
      %v3482 = vunpack.c.l.b16 %v3313
      %v3483 = vunpack.c.h.b16 %v3313
      %v3484 = vunpack.c.l.b16 %v3314
      %v3485 = vunpack.c.h.b16 %v3314
      %v3486 = vunpack.c.l.b16 %v3315
      %v3487 = vunpack.c.h.b16 %v3315
      %v3488 = vunpack.c.l.b16 %v3316
      %v3489 = vunpack.c.h.b16 %v3316
      %v3490 = vunpack.c.l.b16 %v3317
      %v3491 = vunpack.c.h.b16 %v3317
      %v3492 = vunpack.c.l.b16 %v3318
      %v3493 = vunpack.c.h.b16 %v3318
      %v3494 = vunpack.c.l.b16 %v3319
      %v3495 = vunpack.c.h.b16 %v3319
      %v3496 = vunpack.c.l.b16 %v3320
      %v3497 = vunpack.c.h.b16 %v3320
      %v3498 = vunpack.c.l.b16 %v3321
      %v3499 = vunpack.c.h.b16 %v3321
      %v3500 = vunpack.c.l.b16 %v3322
      %v3501 = vunpack.c.h.b16 %v3322
      %v3502 = vunpack.c.l.b16 %v3323
      %v3503 = vunpack.c.h.b16 %v3323
      %v3504 = vunpack.c.l.b16 %v3324
      %v3505 = vunpack.c.h.b16 %v3324
      %v3506 = vunpack.c.l.b16 %v3325
      %v3507 = vunpack.c.h.b16 %v3325
      %v3508 = vunpack.c.l.b16 %v3326
      %v3509 = vunpack.c.h.b16 %v3326
      %v3510 = vunpack.c.l.b16 %v3327
      %v3511 = vunpack.c.h.b16 %v3327
      %v3512 = vunpack.c.l.b16 %v3328
      %v3513 = vunpack.c.h.b16 %v3328
      %v3514 = vunpack.c.l.b16 %v3329
      %v3515 = vunpack.c.h.b16 %v3329
      %v3516 = vunpack.c.l.b16 %v3330
      %v3517 = vunpack.c.h.b16 %v3330
      %v3518 = vunpack.c.l.b16 %v3331
      %v3519 = vunpack.c.h.b16 %v3331
      %v3520 = vunpack.c.l.b16 %v3332
      %v3521 = vunpack.c.h.b16 %v3332
      %v3522 = vunpack.c.l.b16 %v3333
      %v3523 = vunpack.c.h.b16 %v3333
      %v3524 = vunpack.c.l.b16 %v3334
      %v3525 = vunpack.c.h.b16 %v3334
      %v3526 = vunpack.c.l.b16 %v3335
      %v3527 = vunpack.c.h.b16 %v3335
      %v3528 = vunpack.c.l.b16 %v3336
      %v3529 = vunpack.c.h.b16 %v3336
      %v3530 = vunpack.c.l.b16 %v3337
      %v3531 = vunpack.c.h.b16 %v3337
      %v3532 = vunpack.c.l.b16 %v3338
      %v3533 = vunpack.c.h.b16 %v3338
      %v3534 = vunpack.c.l.b16 %v3339
      %v3535 = vunpack.c.h.b16 %v3339
      %v3536 = vunpack.c.l.b16 %v3340
      %v3537 = vunpack.c.h.b16 %v3340
      %v3538 = vunpack.c.l.b16 %v3341
      %v3539 = vunpack.c.h.b16 %v3341
      %v3540 = vunpack.c.l.b16 %v3342
      %v3541 = vunpack.c.h.b16 %v3342
      %v3542 = vunpack.c.l.b16 %v3343
      %v3543 = vunpack.c.h.b16 %v3343
      %v3544 = vunpack.c.l.b16 %v3344
      %v3545 = vunpack.c.h.b16 %v3344
      %v3546 = vunpack.c.l.b16 %v3345
      %v3547 = vunpack.c.h.b16 %v3345
      %v3548 = vunpack.c.l.b16 %v3346
      %v3549 = vunpack.c.h.b16 %v3346
      %v3550 = vunpack.c.l.b16 %v3347
      %v3551 = vunpack.c.h.b16 %v3347
      %v3552 = vunpack.c.l.b16 %v3348
      %v3553 = vunpack.c.h.b16 %v3348
      %v3554 = vunpack.c.l.b16 %v3349
      %v3555 = vunpack.c.h.b16 %v3349
      %v3556 = vunpack.c.l.b16 %v3350
      %v3557 = vunpack.c.h.b16 %v3350
      %v3558 = vunpack.c.l.b16 %v3351
      %v3559 = vunpack.c.h.b16 %v3351
      %v3560 = vunpack.c.l.b16 %v3352
      %v3561 = vunpack.c.h.b16 %v3352
      %v3562 = vunpack.c.l.b16 %v3353
      %v3563 = vunpack.c.h.b16 %v3353
      %v3564 = vunpack.c.l.b16 %v3354
      %v3565 = vunpack.c.h.b16 %v3354
      %v3566 = vunpack.c.l.b16 %v3355
      %v3567 = vunpack.c.h.b16 %v3355
      %v3568 = vunpack.c.l.b16 %v3356
      %v3569 = vunpack.c.h.b16 %v3356
      %v3570 = vunpack.c.l.b16 %v3357
      %v3571 = vunpack.c.h.b16 %v3357
      %v3572 = vunpack.c.l.b16 %v3358
      %v3573 = vunpack.c.h.b16 %v3358
      %v3574 = vunpack.c.l.b16 %v3359
      %v3575 = vunpack.c.h.b16 %v3359
      %v3576 = vunpack.c.l.b16 %v3360
      %v3577 = vunpack.c.h.b16 %v3360
      %v3578 = vunpack.c.l.b16 %v3361
      %v3579 = vunpack.c.h.b16 %v3361
      %v3580 = vunpack.c.l.b16 %v3362
      %v3581 = vunpack.c.h.b16 %v3362
      %v3582 = vpack.c.b16 %v3458, %v3454
      %v3583 = vpack.c.b16 %v3459, %v3455
      %v3584 = vpack.c.b16 %v3460, %v3456
      %v3585 = vpack.c.b16 %v3461, %v3457
      %v3586 = vpack.c.b16 %v3466, %v3462
      %v3587 = vpack.c.b16 %v3467, %v3463
      %v3588 = vpack.c.b16 %v3468, %v3464
      %v3589 = vpack.c.b16 %v3469, %v3465
      %v3590 = vpack.c.b16 %v3474, %v3470
      %v3591 = vpack.c.b16 %v3475, %v3471
      %v3592 = vpack.c.b16 %v3476, %v3472
      %v3593 = vpack.c.b16 %v3477, %v3473
      %v3594 = vpack.c.b16 %v3482, %v3478
      %v3595 = vpack.c.b16 %v3483, %v3479
      %v3596 = vpack.c.b16 %v3484, %v3480
      %v3597 = vpack.c.b16 %v3485, %v3481
      %v3598 = vpack.c.b16 %v3490, %v3486
      %v3599 = vpack.c.b16 %v3491, %v3487
      %v3600 = vpack.c.b16 %v3492, %v3488
      %v3601 = vpack.c.b16 %v3493, %v3489
      %v3602 = vpack.c.b16 %v3498, %v3494
      %v3603 = vpack.c.b16 %v3499, %v3495
      %v3604 = vpack.c.b16 %v3500, %v3496
      %v3605 = vpack.c.b16 %v3501, %v3497
      %v3606 = vpack.c.b16 %v3506, %v3502
      %v3607 = vpack.c.b16 %v3507, %v3503
      %v3608 = vpack.c.b16 %v3508, %v3504
      %v3609 = vpack.c.b16 %v3509, %v3505
      %v3610 = vpack.c.b16 %v3514, %v3510
      %v3611 = vpack.c.b16 %v3515, %v3511
      %v3612 = vpack.c.b16 %v3516, %v3512
      %v3613 = vpack.c.b16 %v3517, %v3513
      %v3614 = vpack.c.b16 %v3522, %v3518
      %v3615 = vpack.c.b16 %v3523, %v3519
      %v3616 = vpack.c.b16 %v3524, %v3520
      %v3617 = vpack.c.b16 %v3525, %v3521
      %v3618 = vpack.c.b16 %v3530, %v3526
      %v3619 = vpack.c.b16 %v3531, %v3527
      %v3620 = vpack.c.b16 %v3532, %v3528
      %v3621 = vpack.c.b16 %v3533, %v3529
      %v3622 = vpack.c.b16 %v3538, %v3534
      %v3623 = vpack.c.b16 %v3539, %v3535
      %v3624 = vpack.c.b16 %v3540, %v3536
      %v3625 = vpack.c.b16 %v3541, %v3537
      %v3626 = vpack.c.b16 %v3546, %v3542
      %v3627 = vpack.c.b16 %v3547, %v3543
      %v3628 = vpack.c.b16 %v3548, %v3544
      %v3629 = vpack.c.b16 %v3549, %v3545
      %v3630 = vpack.c.b16 %v3554, %v3550
      %v3631 = vpack.c.b16 %v3555, %v3551
      %v3632 = vpack.c.b16 %v3556, %v3552
      %v3633 = vpack.c.b16 %v3557, %v3553
      %v3634 = vpack.c.b16 %v3562, %v3558
      %v3635 = vpack.c.b16 %v3563, %v3559
      %v3636 = vpack.c.b16 %v3564, %v3560
      %v3637 = vpack.c.b16 %v3565, %v3561
      %v3638 = vpack.c.b16 %v3570, %v3566
      %v3639 = vpack.c.b16 %v3571, %v3567
      %v3640 = vpack.c.b16 %v3572, %v3568
      %v3641 = vpack.c.b16 %v3573, %v3569
      %v3642 = vpack.c.b16 %v3578, %v3574
      %v3643 = vpack.c.b16 %v3579, %v3575
      %v3644 = vpack.c.b16 %v3580, %v3576
      %v3645 = vpack.c.b16 %v3581, %v3577
      %3710 = vmatprep.subr.bf16.mxu0 %v3583
      %3711 = vmatpush1.bf16.msra.mxu0 %v3582
      %3712 = vmatprep.subr.bf16.mxu0 %v3587
      %3713 = vmatpush1.bf16.msra.mxu0 %v3586
      %3714 = vmatprep.subr.bf16.mxu0 %v3591
      %3715 = vmatpush1.bf16.msra.mxu0 %v3590
      %3716 = vmatprep.subr.bf16.mxu0 %v3595
      %3717 = vmatpush1.bf16.msra.mxu0 %v3594
      %3718 = vmatprep.subr.bf16.mxu0 %v3599
      %3719 = vmatpush1.bf16.msra.mxu0 %v3598
      %3720 = vmatprep.subr.bf16.mxu0 %v3603
      %3721 = vmatpush1.bf16.msra.mxu0 %v3602
      %3722 = vmatprep.subr.bf16.mxu0 %v3607
      %3723 = vmatpush1.bf16.msra.mxu0 %v3606
      %3724 = vmatprep.subr.bf16.mxu0 %v3611
      %3725 = vmatpush1.bf16.msra.mxu0 %v3610
      %3726 = vmatprep.subr.bf16.mxu0 %v3615
      %3727 = vmatpush1.bf16.msra.mxu0 %v3614
      %3728 = vmatprep.subr.bf16.mxu0 %v3619
      %3729 = vmatpush1.bf16.msra.mxu0 %v3618
      %3730 = vmatprep.subr.bf16.mxu0 %v3623
      %3731 = vmatpush1.bf16.msra.mxu0 %v3622
      %3732 = vmatprep.subr.bf16.mxu0 %v3627
      %3733 = vmatpush1.bf16.msra.mxu0 %v3626
      %3734 = vmatprep.subr.bf16.mxu0 %v3631
      %3735 = vmatpush1.bf16.msra.mxu0 %v3630
      %3736 = vmatprep.subr.bf16.mxu0 %v3635
      %3737 = vmatpush1.bf16.msra.mxu0 %v3634
      %3738 = vmatprep.subr.bf16.mxu0 %v3639
      %3739 = vmatpush1.bf16.msra.mxu0 %v3638
      %3740 = vmatprep.subr.bf16.mxu0 %v3643
      %3741 = vmatpush1.bf16.msra.mxu0 %v3642
      %3742 = vmatprep.mubr.bf16.mxu0 %v3385
      %3743 = vmatmul.mubr.bf16.gmra.mrb[0].mxu0 %v3382
      %v3744 = vpop.f32.mrb[0].mxu0
      %v3745 = vadd.f32 0.0, %v3744
      %v3746 = vpop.f32.mrb[0].mxu0
      %v3747 = vadd.f32 0.0, %v3746
      %v3748 = vpop.f32.mrb[0].mxu0
      %v3749 = vadd.f32 0.0, %v3748
      %v3750 = vpop.f32.mrb[0].mxu0
      %v3751 = vadd.f32 0.0, %v3750
      %3752 = vmatprep.mubr.bf16.mxu0 %v3384
      %3753 = vmatmul.mubr.bf16.gmra.mrb[0].mxu0 %v3381
      %v3754 = vpop.f32.mrb[0].mxu0
      %v3755 = vadd.f32 0.0, %v3754
      %v3756 = vpop.f32.mrb[0].mxu0
      %v3757 = vadd.f32 0.0, %v3756
      %v3758 = vpop.f32.mrb[0].mxu0
      %v3759 = vpop.f32.mrb[0].mxu0
      %3760 = vdwg.mxu0
      %3761 = vmatprep.subr.bf16.mxu0 %v3585
      %3762 = vmatpush1.bf16.msra.mxu0 %v3584
      %3763 = vmatprep.subr.bf16.mxu0 %v3589
      %3764 = vmatpush1.bf16.msra.mxu0 %v3588
      %3765 = vmatprep.subr.bf16.mxu0 %v3593
      %3766 = vmatpush1.bf16.msra.mxu0 %v3592
      %3767 = vmatprep.subr.bf16.mxu0 %v3597
      %3768 = vmatpush1.bf16.msra.mxu0 %v3596
      %3769 = vmatprep.subr.bf16.mxu0 %v3601
      %3770 = vmatpush1.bf16.msra.mxu0 %v3600
      %3771 = vmatprep.subr.bf16.mxu0 %v3605
      %3772 = vmatpush1.bf16.msra.mxu0 %v3604
      %3773 = vmatprep.subr.bf16.mxu0 %v3609
      %3774 = vmatpush1.bf16.msra.mxu0 %v3608
      %3775 = vmatprep.subr.bf16.mxu0 %v3613
      %3776 = vmatpush1.bf16.msra.mxu0 %v3612
      %3777 = vmatprep.subr.bf16.mxu0 %v3617
      %3778 = vmatpush1.bf16.msra.mxu0 %v3616
      %3779 = vmatprep.subr.bf16.mxu0 %v3621
      %3780 = vmatpush1.bf16.msra.mxu0 %v3620
      %3781 = vmatprep.subr.bf16.mxu0 %v3625
      %3782 = vmatpush1.bf16.msra.mxu0 %v3624
      %3783 = vmatprep.subr.bf16.mxu0 %v3629
      %3784 = vmatpush1.bf16.msra.mxu0 %v3628
      %3785 = vmatprep.subr.bf16.mxu0 %v3633
      %3786 = vmatpush1.bf16.msra.mxu0 %v3632
      %3787 = vmatprep.subr.bf16.mxu0 %v3637
      %3788 = vmatpush1.bf16.msra.mxu0 %v3636
      %3789 = vmatprep.subr.bf16.mxu0 %v3641
      %3790 = vmatpush1.bf16.msra.mxu0 %v3640
      %3791 = vmatprep.subr.bf16.mxu0 %v3645
      %3792 = vmatpush1.bf16.msra.mxu0 %v3644
      %3793 = vmatprep.mubr.bf16.mxu0 %v3385
      %3794 = vmatmul.mubr.bf16.gmra.mrb[0].mxu0 %v3382
      %v3795 = vpop.f32.mrb[0].mxu0
      %v3796 = vadd.f32 0.0, %v3795
      %v3797 = vpop.f32.mrb[0].mxu0
      %v3798 = vadd.f32 0.0, %v3797
      %v3799 = vpop.f32.mrb[0].mxu0
      %v3800 = vadd.f32 0.0, %v3799
      %v3801 = vpop.f32.mrb[0].mxu0
      %v3802 = vadd.f32 0.0, %v3801
      %3803 = vmatprep.mubr.bf16.mxu0 %v3384
      %3804 = vmatmul.mubr.bf16.gmra.mrb[0].mxu0 %v3381
      %v3805 = vpop.f32.mrb[0].mxu0
      %v3806 = vadd.f32 0.0, %v3805
      %v3807 = vpop.f32.mrb[0].mxu0
      %v3808 = vadd.f32 0.0, %v3807
      %v3809 = vpop.f32.mrb[0].mxu0
      %v3810 = vpop.f32.mrb[0].mxu0
      %3811 = vdwg.mxu0
      %v3812 = vadd.f32 %v3282, %v3745
      %v3813 = vadd.f32 %v3283, %v3747
      %v3814 = vadd.f32 %v3284, %v3796
      %v3815 = vadd.f32 %v3285, %v3798
      %v3816 = vadd.f32 %v3286, %v3749
      %v3817 = vadd.f32 %v3287, %v3751
      %v3818 = vadd.f32 %v3288, %v3800
      %v3819 = vadd.f32 %v3289, %v3802
      %v3820 = vadd.f32 %v3290, %v3755
      %v3821 = vadd.f32 %v3291, %v3757
      %v3822 = vadd.f32 %v3292, %v3806
      %v3823 = vadd.f32 %v3293, %v3808
      %v3824 = vld [vmem:[%s165 + $0x20] sm:$0x77]
      %s3825 = scalar_lea.vmem %s1, 3584
      %v3826 = vld [vmem:[%s3825] sm:$0xff]
      %v3827 = vld [vmem:[%s3825 + $0x8] sm:$0xff]
      %v3828 = vld [vmem:[%s3825 + $0x10] sm:$0xff]
      %v3829 = vld [vmem:[%s3825 + $0x18] sm:$0xff]
      %v3830 = vld [vmem:[%s3825 + $0x20] sm:$0xff]
      %v3831 = vld [vmem:[%s3825 + $0x28] sm:$0xff]
      %v3832 = vld [vmem:[%s3825 + $0x30] sm:$0xff]
      %v3833 = vld [vmem:[%s3825 + $0x38] sm:$0xff]
      %v3834 = vld [vmem:[%s3825 + $0x40] sm:$0xff]
      %v3835 = vld [vmem:[%s3825 + $0x48] sm:$0xff]
      %v3836 = vld [vmem:[%s3825 + $0x50] sm:$0xff]
      %v3837 = vld [vmem:[%s3825 + $0x58] sm:$0xff]
      %v3838 = vld [vmem:[%s3825 + $0x60] sm:$0xff]
      %v3839 = vld [vmem:[%s3825 + $0x68] sm:$0xff]
      %v3840 = vld [vmem:[%s3825 + $0x70] sm:$0xff]
      %v3841 = vld [vmem:[%s3825 + $0x78] sm:$0xff]
      %v3842 = vld [vmem:[%s3825 + $0x80] sm:$0xff]
      %v3843 = vld [vmem:[%s3825 + $0x88] sm:$0xff]
      %v3844 = vld [vmem:[%s3825 + $0x90] sm:$0xff]
      %v3845 = vld [vmem:[%s3825 + $0x98] sm:$0xff]
      %v3846 = vld [vmem:[%s3825 + $0xa0] sm:$0xff]
      %v3847 = vld [vmem:[%s3825 + $0xa8] sm:$0xff]
      %v3848 = vld [vmem:[%s3825 + $0xb0] sm:$0xff]
      %v3849 = vld [vmem:[%s3825 + $0xb8] sm:$0xff]
      %v3850 = vld [vmem:[%s3825 + $0xc0] sm:$0xff]
      %v3851 = vld [vmem:[%s3825 + $0xc8] sm:$0xff]
      %v3852 = vld [vmem:[%s3825 + $0xd0] sm:$0xff]
      %v3853 = vld [vmem:[%s3825 + $0xd8] sm:$0xff]
      %v3854 = vld [vmem:[%s3825 + $0xe0] sm:$0xff]
      %v3855 = vld [vmem:[%s3825 + $0xe8] sm:$0xff]
      %v3856 = vld [vmem:[%s3825 + $0xf0] sm:$0xff]
      %v3857 = vld [vmem:[%s3825 + $0xf8] sm:$0xff]
      %v3858 = vld [vmem:[%s3825 + $0x100] sm:$0xff]
      %v3859 = vld [vmem:[%s3825 + $0x108] sm:$0xff]
      %v3860 = vld [vmem:[%s3825 + $0x110] sm:$0xff]
      %v3861 = vld [vmem:[%s3825 + $0x118] sm:$0xff]
      %v3862 = vld [vmem:[%s3825 + $0x120] sm:$0xff]
      %v3863 = vld [vmem:[%s3825 + $0x128] sm:$0xff]
      %v3864 = vld [vmem:[%s3825 + $0x130] sm:$0xff]
      %v3865 = vld [vmem:[%s3825 + $0x138] sm:$0xff]
      %v3866 = vld [vmem:[%s3825 + $0x140] sm:$0xff]
      %v3867 = vld [vmem:[%s3825 + $0x148] sm:$0xff]
      %v3868 = vld [vmem:[%s3825 + $0x150] sm:$0xff]
      %v3869 = vld [vmem:[%s3825 + $0x158] sm:$0xff]
      %v3870 = vld [vmem:[%s3825 + $0x160] sm:$0xff]
      %v3871 = vld [vmem:[%s3825 + $0x168] sm:$0xff]
      %v3872 = vld [vmem:[%s3825 + $0x170] sm:$0xff]
      %v3873 = vld [vmem:[%s3825 + $0x178] sm:$0xff]
      %v3874 = vld [vmem:[%s3825 + $0x180] sm:$0xff]
      %v3875 = vld [vmem:[%s3825 + $0x188] sm:$0xff]
      %v3876 = vld [vmem:[%s3825 + $0x190] sm:$0xff]
      %v3877 = vld [vmem:[%s3825 + $0x198] sm:$0xff]
      %v3878 = vld [vmem:[%s3825 + $0x1a0] sm:$0xff]
      %v3879 = vld [vmem:[%s3825 + $0x1a8] sm:$0xff]
      %v3880 = vld [vmem:[%s3825 + $0x1b0] sm:$0xff]
      %v3881 = vld [vmem:[%s3825 + $0x1b8] sm:$0xff]
      %v3882 = vld [vmem:[%s3825 + $0x1c0] sm:$0xff]
      %v3883 = vld [vmem:[%s3825 + $0x1c8] sm:$0xff]
      %v3884 = vld [vmem:[%s3825 + $0x1d0] sm:$0xff]
      %v3885 = vld [vmem:[%s3825 + $0x1d8] sm:$0xff]
      %v3886 = vld [vmem:[%s3825 + $0x1e0] sm:$0xff]
      %v3887 = vld [vmem:[%s3825 + $0x1e8] sm:$0xff]
      %v3888 = vld [vmem:[%s3825 + $0x1f0] sm:$0xff]
      %v3889 = vld [vmem:[%s3825 + $0x1f8] sm:$0xff]
      %v3891 = vunpack.c.l.b16 %v3824
      %v3892 = vunpack.c.h.b16 %v3824
      %v3893 = vpack.c.b16 %v3891, %v3371
      %v3894 = vpack.c.b16 %v3892, %v3372
      %vm3895 = vsmask.f32 5376
      %v3897 = vshrl.u32 %v3375, 16
      %v3899 = vrot.slane %v3897, 2
      %v3900 = vshll.u32 %v3375, 16
      %v3902 = vrot.slane %v3900, 3
      %v3903 = vor.u32 %v3899, %v3902
      %v3905 = vshrl.u32 %v3893, 16
      %v3907 = vrot.slane %v3905, 2
      %v3908 = vshll.u32 %v3893, 16
      %v3910 = vrot.slane %v3908, 3
      %v3911 = vor.u32 %v3907, %v3910
      %v3912 = vsel %vm3895, %v3903, %v3911
      %v3914 = vshrl.u32 %v3376, 16
      %v3916 = vrot.slane %v3914, 2
      %v3917 = vshll.u32 %v3376, 16
      %v3919 = vrot.slane %v3917, 3
      %v3920 = vor.u32 %v3916, %v3919
      %v3922 = vshrl.u32 %v3894, 16
      %v3924 = vrot.slane %v3922, 2
      %v3925 = vshll.u32 %v3894, 16
      %v3927 = vrot.slane %v3925, 3
      %v3928 = vor.u32 %v3924, %v3927
      %v3929 = vsel %vm3895, %v3920, %v3928
      %v3998 = vunpack.c.l.b16 %v3826
      %v3999 = vunpack.c.h.b16 %v3826
      %v4000 = vunpack.c.l.b16 %v3827
      %v4001 = vunpack.c.h.b16 %v3827
      %v4002 = vunpack.c.l.b16 %v3828
      %v4003 = vunpack.c.h.b16 %v3828
      %v4004 = vunpack.c.l.b16 %v3829
      %v4005 = vunpack.c.h.b16 %v3829
      %v4006 = vunpack.c.l.b16 %v3830
      %v4007 = vunpack.c.h.b16 %v3830
      %v4008 = vunpack.c.l.b16 %v3831
      %v4009 = vunpack.c.h.b16 %v3831
      %v4010 = vunpack.c.l.b16 %v3832
      %v4011 = vunpack.c.h.b16 %v3832
      %v4012 = vunpack.c.l.b16 %v3833
      %v4013 = vunpack.c.h.b16 %v3833
      %v4014 = vunpack.c.l.b16 %v3834
      %v4015 = vunpack.c.h.b16 %v3834
      %v4016 = vunpack.c.l.b16 %v3835
      %v4017 = vunpack.c.h.b16 %v3835
      %v4018 = vunpack.c.l.b16 %v3836
      %v4019 = vunpack.c.h.b16 %v3836
      %v4020 = vunpack.c.l.b16 %v3837
      %v4021 = vunpack.c.h.b16 %v3837
      %v4022 = vunpack.c.l.b16 %v3838
      %v4023 = vunpack.c.h.b16 %v3838
      %v4024 = vunpack.c.l.b16 %v3839
      %v4025 = vunpack.c.h.b16 %v3839
      %v4026 = vunpack.c.l.b16 %v3840
      %v4027 = vunpack.c.h.b16 %v3840
      %v4028 = vunpack.c.l.b16 %v3841
      %v4029 = vunpack.c.h.b16 %v3841
      %v4030 = vunpack.c.l.b16 %v3842
      %v4031 = vunpack.c.h.b16 %v3842
      %v4032 = vunpack.c.l.b16 %v3843
      %v4033 = vunpack.c.h.b16 %v3843
      %v4034 = vunpack.c.l.b16 %v3844
      %v4035 = vunpack.c.h.b16 %v3844
      %v4036 = vunpack.c.l.b16 %v3845
      %v4037 = vunpack.c.h.b16 %v3845
      %v4038 = vunpack.c.l.b16 %v3846
      %v4039 = vunpack.c.h.b16 %v3846
      %v4040 = vunpack.c.l.b16 %v3847
      %v4041 = vunpack.c.h.b16 %v3847
      %v4042 = vunpack.c.l.b16 %v3848
      %v4043 = vunpack.c.h.b16 %v3848
      %v4044 = vunpack.c.l.b16 %v3849
      %v4045 = vunpack.c.h.b16 %v3849
      %v4046 = vunpack.c.l.b16 %v3850
      %v4047 = vunpack.c.h.b16 %v3850
      %v4048 = vunpack.c.l.b16 %v3851
      %v4049 = vunpack.c.h.b16 %v3851
      %v4050 = vunpack.c.l.b16 %v3852
      %v4051 = vunpack.c.h.b16 %v3852
      %v4052 = vunpack.c.l.b16 %v3853
      %v4053 = vunpack.c.h.b16 %v3853
      %v4054 = vunpack.c.l.b16 %v3854
      %v4055 = vunpack.c.h.b16 %v3854
      %v4056 = vunpack.c.l.b16 %v3855
      %v4057 = vunpack.c.h.b16 %v3855
      %v4058 = vunpack.c.l.b16 %v3856
      %v4059 = vunpack.c.h.b16 %v3856
      %v4060 = vunpack.c.l.b16 %v3857
      %v4061 = vunpack.c.h.b16 %v3857
      %v4062 = vunpack.c.l.b16 %v3858
      %v4063 = vunpack.c.h.b16 %v3858
      %v4064 = vunpack.c.l.b16 %v3859
      %v4065 = vunpack.c.h.b16 %v3859
      %v4066 = vunpack.c.l.b16 %v3860
      %v4067 = vunpack.c.h.b16 %v3860
      %v4068 = vunpack.c.l.b16 %v3861
      %v4069 = vunpack.c.h.b16 %v3861
      %v4070 = vunpack.c.l.b16 %v3862
      %v4071 = vunpack.c.h.b16 %v3862
      %v4072 = vunpack.c.l.b16 %v3863
      %v4073 = vunpack.c.h.b16 %v3863
      %v4074 = vunpack.c.l.b16 %v3864
      %v4075 = vunpack.c.h.b16 %v3864
      %v4076 = vunpack.c.l.b16 %v3865
      %v4077 = vunpack.c.h.b16 %v3865
      %v4078 = vunpack.c.l.b16 %v3866
      %v4079 = vunpack.c.h.b16 %v3866
      %v4080 = vunpack.c.l.b16 %v3867
      %v4081 = vunpack.c.h.b16 %v3867
      %v4082 = vunpack.c.l.b16 %v3868
      %v4083 = vunpack.c.h.b16 %v3868
      %v4084 = vunpack.c.l.b16 %v3869
      %v4085 = vunpack.c.h.b16 %v3869
      %v4086 = vunpack.c.l.b16 %v3870
      %v4087 = vunpack.c.h.b16 %v3870
      %v4088 = vunpack.c.l.b16 %v3871
      %v4089 = vunpack.c.h.b16 %v3871
      %v4090 = vunpack.c.l.b16 %v3872
      %v4091 = vunpack.c.h.b16 %v3872
      %v4092 = vunpack.c.l.b16 %v3873
      %v4093 = vunpack.c.h.b16 %v3873
      %v4094 = vunpack.c.l.b16 %v3874
      %v4095 = vunpack.c.h.b16 %v3874
      %v4096 = vunpack.c.l.b16 %v3875
      %v4097 = vunpack.c.h.b16 %v3875
      %v4098 = vunpack.c.l.b16 %v3876
      %v4099 = vunpack.c.h.b16 %v3876
      %v4100 = vunpack.c.l.b16 %v3877
      %v4101 = vunpack.c.h.b16 %v3877
      %v4102 = vunpack.c.l.b16 %v3878
      %v4103 = vunpack.c.h.b16 %v3878
      %v4104 = vunpack.c.l.b16 %v3879
      %v4105 = vunpack.c.h.b16 %v3879
      %v4106 = vunpack.c.l.b16 %v3880
      %v4107 = vunpack.c.h.b16 %v3880
      %v4108 = vunpack.c.l.b16 %v3881
      %v4109 = vunpack.c.h.b16 %v3881
      %v4110 = vunpack.c.l.b16 %v3882
      %v4111 = vunpack.c.h.b16 %v3882
      %v4112 = vunpack.c.l.b16 %v3883
      %v4113 = vunpack.c.h.b16 %v3883
      %v4114 = vunpack.c.l.b16 %v3884
      %v4115 = vunpack.c.h.b16 %v3884
      %v4116 = vunpack.c.l.b16 %v3885
      %v4117 = vunpack.c.h.b16 %v3885
      %v4118 = vunpack.c.l.b16 %v3886
      %v4119 = vunpack.c.h.b16 %v3886
      %v4120 = vunpack.c.l.b16 %v3887
      %v4121 = vunpack.c.h.b16 %v3887
      %v4122 = vunpack.c.l.b16 %v3888
      %v4123 = vunpack.c.h.b16 %v3888
      %v4124 = vunpack.c.l.b16 %v3889
      %v4125 = vunpack.c.h.b16 %v3889
      %v4126 = vpack.c.b16 %v4002, %v3998
      %v4127 = vpack.c.b16 %v4003, %v3999
      %v4128 = vpack.c.b16 %v4004, %v4000
      %v4129 = vpack.c.b16 %v4005, %v4001
      %v4130 = vpack.c.b16 %v4010, %v4006
      %v4131 = vpack.c.b16 %v4011, %v4007
      %v4132 = vpack.c.b16 %v4012, %v4008
      %v4133 = vpack.c.b16 %v4013, %v4009
      %v4134 = vpack.c.b16 %v4018, %v4014
      %v4135 = vpack.c.b16 %v4019, %v4015
      %v4136 = vpack.c.b16 %v4020, %v4016
      %v4137 = vpack.c.b16 %v4021, %v4017
      %v4138 = vpack.c.b16 %v4026, %v4022
      %v4139 = vpack.c.b16 %v4027, %v4023
      %v4140 = vpack.c.b16 %v4028, %v4024
      %v4141 = vpack.c.b16 %v4029, %v4025
      %v4142 = vpack.c.b16 %v4034, %v4030
      %v4143 = vpack.c.b16 %v4035, %v4031
      %v4144 = vpack.c.b16 %v4036, %v4032
      %v4145 = vpack.c.b16 %v4037, %v4033
      %v4146 = vpack.c.b16 %v4042, %v4038
      %v4147 = vpack.c.b16 %v4043, %v4039
      %v4148 = vpack.c.b16 %v4044, %v4040
      %v4149 = vpack.c.b16 %v4045, %v4041
      %v4150 = vpack.c.b16 %v4050, %v4046
      %v4151 = vpack.c.b16 %v4051, %v4047
      %v4152 = vpack.c.b16 %v4052, %v4048
      %v4153 = vpack.c.b16 %v4053, %v4049
      %v4154 = vpack.c.b16 %v4058, %v4054
      %v4155 = vpack.c.b16 %v4059, %v4055
      %v4156 = vpack.c.b16 %v4060, %v4056
      %v4157 = vpack.c.b16 %v4061, %v4057
      %v4158 = vpack.c.b16 %v4066, %v4062
      %v4159 = vpack.c.b16 %v4067, %v4063
      %v4160 = vpack.c.b16 %v4068, %v4064
      %v4161 = vpack.c.b16 %v4069, %v4065
      %v4162 = vpack.c.b16 %v4074, %v4070
      %v4163 = vpack.c.b16 %v4075, %v4071
      %v4164 = vpack.c.b16 %v4076, %v4072
      %v4165 = vpack.c.b16 %v4077, %v4073
      %v4166 = vpack.c.b16 %v4082, %v4078
      %v4167 = vpack.c.b16 %v4083, %v4079
      %v4168 = vpack.c.b16 %v4084, %v4080
      %v4169 = vpack.c.b16 %v4085, %v4081
      %v4170 = vpack.c.b16 %v4090, %v4086
      %v4171 = vpack.c.b16 %v4091, %v4087
      %v4172 = vpack.c.b16 %v4092, %v4088
      %v4173 = vpack.c.b16 %v4093, %v4089
      %v4174 = vpack.c.b16 %v4098, %v4094
      %v4175 = vpack.c.b16 %v4099, %v4095
      %v4176 = vpack.c.b16 %v4100, %v4096
      %v4177 = vpack.c.b16 %v4101, %v4097
      %v4178 = vpack.c.b16 %v4106, %v4102
      %v4179 = vpack.c.b16 %v4107, %v4103
      %v4180 = vpack.c.b16 %v4108, %v4104
      %v4181 = vpack.c.b16 %v4109, %v4105
      %v4182 = vpack.c.b16 %v4114, %v4110
      %v4183 = vpack.c.b16 %v4115, %v4111
      %v4184 = vpack.c.b16 %v4116, %v4112
      %v4185 = vpack.c.b16 %v4117, %v4113
      %v4186 = vpack.c.b16 %v4122, %v4118
      %v4187 = vpack.c.b16 %v4123, %v4119
      %v4188 = vpack.c.b16 %v4124, %v4120
      %v4189 = vpack.c.b16 %v4125, %v4121
      %4254 = vmatprep.subr.bf16.mxu0 %v4127
      %4255 = vmatpush1.bf16.msra.mxu0 %v4126
      %4256 = vmatprep.subr.bf16.mxu0 %v4131
      %4257 = vmatpush1.bf16.msra.mxu0 %v4130
      %4258 = vmatprep.subr.bf16.mxu0 %v4135
      %4259 = vmatpush1.bf16.msra.mxu0 %v4134
      %4260 = vmatprep.subr.bf16.mxu0 %v4139
      %4261 = vmatpush1.bf16.msra.mxu0 %v4138
      %4262 = vmatprep.subr.bf16.mxu0 %v4143
      %4263 = vmatpush1.bf16.msra.mxu0 %v4142
      %4264 = vmatprep.subr.bf16.mxu0 %v4147
      %4265 = vmatpush1.bf16.msra.mxu0 %v4146
      %4266 = vmatprep.subr.bf16.mxu0 %v4151
      %4267 = vmatpush1.bf16.msra.mxu0 %v4150
      %4268 = vmatprep.subr.bf16.mxu0 %v4155
      %4269 = vmatpush1.bf16.msra.mxu0 %v4154
      %4270 = vmatprep.subr.bf16.mxu0 %v4159
      %4271 = vmatpush1.bf16.msra.mxu0 %v4158
      %4272 = vmatprep.subr.bf16.mxu0 %v4163
      %4273 = vmatpush1.bf16.msra.mxu0 %v4162
      %4274 = vmatprep.subr.bf16.mxu0 %v4167
      %4275 = vmatpush1.bf16.msra.mxu0 %v4166
      %4276 = vmatprep.subr.bf16.mxu0 %v4171
      %4277 = vmatpush1.bf16.msra.mxu0 %v4170
      %4278 = vmatprep.subr.bf16.mxu0 %v4175
      %4279 = vmatpush1.bf16.msra.mxu0 %v4174
      %4280 = vmatprep.subr.bf16.mxu0 %v4179
      %4281 = vmatpush1.bf16.msra.mxu0 %v4178
      %4282 = vmatprep.subr.bf16.mxu0 %v4183
      %4283 = vmatpush1.bf16.msra.mxu0 %v4182
      %4284 = vmatprep.subr.bf16.mxu0 %v4187
      %4285 = vmatpush1.bf16.msra.mxu0 %v4186
      %4286 = vmatprep.mubr.bf16.mxu0 %v3929
      %4287 = vmatmul.mubr.bf16.gmra.mrb[0].mxu0 %v3912
      %v4288 = vpop.f32.mrb[0].mxu0
      %v4289 = vadd.f32 0.0, %v4288
      %v4290 = vpop.f32.mrb[0].mxu0
      %v4291 = vadd.f32 0.0, %v4290
      %v4292 = vpop.f32.mrb[0].mxu0
      %v4293 = vadd.f32 0.0, %v4292
      %v4294 = vpop.f32.mrb[0].mxu0
      %v4295 = vadd.f32 0.0, %v4294
      %4296 = vmatprep.mubr.bf16.mxu0 %v3928
      %4297 = vmatmul.mubr.bf16.gmra.mrb[0].mxu0 %v3911
      %v4298 = vpop.f32.mrb[0].mxu0
      %v4299 = vadd.f32 0.0, %v4298
      %v4300 = vpop.f32.mrb[0].mxu0
      %v4301 = vadd.f32 0.0, %v4300
      %v4302 = vpop.f32.mrb[0].mxu0
      %v4303 = vpop.f32.mrb[0].mxu0
      %4304 = vdwg.mxu0
      %4305 = vmatprep.subr.bf16.mxu0 %v4129
      %4306 = vmatpush1.bf16.msra.mxu0 %v4128
      %4307 = vmatprep.subr.bf16.mxu0 %v4133
      %4308 = vmatpush1.bf16.msra.mxu0 %v4132
      %4309 = vmatprep.subr.bf16.mxu0 %v4137
      %4310 = vmatpush1.bf16.msra.mxu0 %v4136
      %4311 = vmatprep.subr.bf16.mxu0 %v4141
      %4312 = vmatpush1.bf16.msra.mxu0 %v4140
      %4313 = vmatprep.subr.bf16.mxu0 %v4145
      %4314 = vmatpush1.bf16.msra.mxu0 %v4144
      %4315 = vmatprep.subr.bf16.mxu0 %v4149
      %4316 = vmatpush1.bf16.msra.mxu0 %v4148
      %4317 = vmatprep.subr.bf16.mxu0 %v4153
      %4318 = vmatpush1.bf16.msra.mxu0 %v4152
      %4319 = vmatprep.subr.bf16.mxu0 %v4157
      %4320 = vmatpush1.bf16.msra.mxu0 %v4156
      %4321 = vmatprep.subr.bf16.mxu0 %v4161
      %4322 = vmatpush1.bf16.msra.mxu0 %v4160
      %4323 = vmatprep.subr.bf16.mxu0 %v4165
      %4324 = vmatpush1.bf16.msra.mxu0 %v4164
      %4325 = vmatprep.subr.bf16.mxu0 %v4169
      %4326 = vmatpush1.bf16.msra.mxu0 %v4168
      %4327 = vmatprep.subr.bf16.mxu0 %v4173
      %4328 = vmatpush1.bf16.msra.mxu0 %v4172
      %4329 = vmatprep.subr.bf16.mxu0 %v4177
      %4330 = vmatpush1.bf16.msra.mxu0 %v4176
      %4331 = vmatprep.subr.bf16.mxu0 %v4181
      %4332 = vmatpush1.bf16.msra.mxu0 %v4180
      %4333 = vmatprep.subr.bf16.mxu0 %v4185
      %4334 = vmatpush1.bf16.msra.mxu0 %v4184
      %4335 = vmatprep.subr.bf16.mxu0 %v4189
      %4336 = vmatpush1.bf16.msra.mxu0 %v4188
      %4337 = vmatprep.mubr.bf16.mxu0 %v3929
      %4338 = vmatmul.mubr.bf16.gmra.mrb[0].mxu0 %v3912
      %v4339 = vpop.f32.mrb[0].mxu0
      %v4340 = vadd.f32 0.0, %v4339
      %v4341 = vpop.f32.mrb[0].mxu0
      %v4342 = vadd.f32 0.0, %v4341
      %v4343 = vpop.f32.mrb[0].mxu0
      %v4344 = vadd.f32 0.0, %v4343
      %v4345 = vpop.f32.mrb[0].mxu0
      %v4346 = vadd.f32 0.0, %v4345
      %4347 = vmatprep.mubr.bf16.mxu0 %v3928
      %4348 = vmatmul.mubr.bf16.gmra.mrb[0].mxu0 %v3911
      %v4349 = vpop.f32.mrb[0].mxu0
      %v4350 = vadd.f32 0.0, %v4349
      %v4351 = vpop.f32.mrb[0].mxu0
      %v4352 = vadd.f32 0.0, %v4351
      %v4353 = vpop.f32.mrb[0].mxu0
      %v4354 = vpop.f32.mrb[0].mxu0
      %4355 = vdwg.mxu0
      %v4356 = vadd.f32 %v3812, %v4289
      %v4357 = vadd.f32 %v3813, %v4291
      %v4358 = vadd.f32 %v3814, %v4340
      %v4359 = vadd.f32 %v3815, %v4342
      %v4360 = vadd.f32 %v3816, %v4293
      %v4361 = vadd.f32 %v3817, %v4295
      %v4362 = vadd.f32 %v3818, %v4344
      %v4363 = vadd.f32 %v3819, %v4346
      %v4364 = vadd.f32 %v3820, %v4299
      %v4365 = vadd.f32 %v3821, %v4301
      %v4366 = vadd.f32 %v3822, %v4350
      %v4367 = vadd.f32 %v3823, %v4352
      %v4368 = vld [vmem:[%s165 + $0x8] sm:$0x88]
      %s4369 = scalar_lea.vmem %s1, 4096
      %v4370 = vld [vmem:[%s4369] sm:$0xff]
      %v4371 = vld [vmem:[%s4369 + $0x8] sm:$0xff]
      %v4372 = vld [vmem:[%s4369 + $0x10] sm:$0xff]
      %v4373 = vld [vmem:[%s4369 + $0x18] sm:$0xff]
      %v4374 = vld [vmem:[%s4369 + $0x20] sm:$0xff]
      %v4375 = vld [vmem:[%s4369 + $0x28] sm:$0xff]
      %v4376 = vld [vmem:[%s4369 + $0x30] sm:$0xff]
      %v4377 = vld [vmem:[%s4369 + $0x38] sm:$0xff]
      %v4378 = vld [vmem:[%s4369 + $0x40] sm:$0xff]
      %v4379 = vld [vmem:[%s4369 + $0x48] sm:$0xff]
      %v4380 = vld [vmem:[%s4369 + $0x50] sm:$0xff]
      %v4381 = vld [vmem:[%s4369 + $0x58] sm:$0xff]
      %v4382 = vld [vmem:[%s4369 + $0x60] sm:$0xff]
      %v4383 = vld [vmem:[%s4369 + $0x68] sm:$0xff]
      %v4384 = vld [vmem:[%s4369 + $0x70] sm:$0xff]
      %v4385 = vld [vmem:[%s4369 + $0x78] sm:$0xff]
      %v4386 = vld [vmem:[%s4369 + $0x80] sm:$0xff]
      %v4387 = vld [vmem:[%s4369 + $0x88] sm:$0xff]
      %v4388 = vld [vmem:[%s4369 + $0x90] sm:$0xff]
      %v4389 = vld [vmem:[%s4369 + $0x98] sm:$0xff]
      %v4390 = vld [vmem:[%s4369 + $0xa0] sm:$0xff]
      %v4391 = vld [vmem:[%s4369 + $0xa8] sm:$0xff]
      %v4392 = vld [vmem:[%s4369 + $0xb0] sm:$0xff]
      %v4393 = vld [vmem:[%s4369 + $0xb8] sm:$0xff]
      %v4394 = vld [vmem:[%s4369 + $0xc0] sm:$0xff]
      %v4395 = vld [vmem:[%s4369 + $0xc8] sm:$0xff]
      %v4396 = vld [vmem:[%s4369 + $0xd0] sm:$0xff]
      %v4397 = vld [vmem:[%s4369 + $0xd8] sm:$0xff]
      %v4398 = vld [vmem:[%s4369 + $0xe0] sm:$0xff]
      %v4399 = vld [vmem:[%s4369 + $0xe8] sm:$0xff]
      %v4400 = vld [vmem:[%s4369 + $0xf0] sm:$0xff]
      %v4401 = vld [vmem:[%s4369 + $0xf8] sm:$0xff]
      %v4402 = vld [vmem:[%s4369 + $0x100] sm:$0xff]
      %v4403 = vld [vmem:[%s4369 + $0x108] sm:$0xff]
      %v4404 = vld [vmem:[%s4369 + $0x110] sm:$0xff]
      %v4405 = vld [vmem:[%s4369 + $0x118] sm:$0xff]
      %v4406 = vld [vmem:[%s4369 + $0x120] sm:$0xff]
      %v4407 = vld [vmem:[%s4369 + $0x128] sm:$0xff]
      %v4408 = vld [vmem:[%s4369 + $0x130] sm:$0xff]
      %v4409 = vld [vmem:[%s4369 + $0x138] sm:$0xff]
      %v4410 = vld [vmem:[%s4369 + $0x140] sm:$0xff]
      %v4411 = vld [vmem:[%s4369 + $0x148] sm:$0xff]
      %v4412 = vld [vmem:[%s4369 + $0x150] sm:$0xff]
      %v4413 = vld [vmem:[%s4369 + $0x158] sm:$0xff]
      %v4414 = vld [vmem:[%s4369 + $0x160] sm:$0xff]
      %v4415 = vld [vmem:[%s4369 + $0x168] sm:$0xff]
      %v4416 = vld [vmem:[%s4369 + $0x170] sm:$0xff]
      %v4417 = vld [vmem:[%s4369 + $0x178] sm:$0xff]
      %v4418 = vld [vmem:[%s4369 + $0x180] sm:$0xff]
      %v4419 = vld [vmem:[%s4369 + $0x188] sm:$0xff]
      %v4420 = vld [vmem:[%s4369 + $0x190] sm:$0xff]
      %v4421 = vld [vmem:[%s4369 + $0x198] sm:$0xff]
      %v4422 = vld [vmem:[%s4369 + $0x1a0] sm:$0xff]
      %v4423 = vld [vmem:[%s4369 + $0x1a8] sm:$0xff]
      %v4424 = vld [vmem:[%s4369 + $0x1b0] sm:$0xff]
      %v4425 = vld [vmem:[%s4369 + $0x1b8] sm:$0xff]
      %v4426 = vld [vmem:[%s4369 + $0x1c0] sm:$0xff]
      %v4427 = vld [vmem:[%s4369 + $0x1c8] sm:$0xff]
      %v4428 = vld [vmem:[%s4369 + $0x1d0] sm:$0xff]
      %v4429 = vld [vmem:[%s4369 + $0x1d8] sm:$0xff]
      %v4430 = vld [vmem:[%s4369 + $0x1e0] sm:$0xff]
      %v4431 = vld [vmem:[%s4369 + $0x1e8] sm:$0xff]
      %v4432 = vld [vmem:[%s4369 + $0x1f0] sm:$0xff]
      %v4433 = vld [vmem:[%s4369 + $0x1f8] sm:$0xff]
      %v4435 = vunpack.c.l.b16 %v4368
      %v4436 = vunpack.c.h.b16 %v4368
      %v4437 = vpack.c.b16 %v3369, %v4435
      %v4438 = vpack.c.b16 %v3370, %v4436
      %v4439 = vrot.slane %v4437, 3
      %v4440 = vrot.slane %v3893, 3
      %v4441 = vsel %vm1798, %v4439, %v4440
      %v4442 = vrot.slane %v4438, 3
      %v4443 = vrot.slane %v3894, 3
      %v4444 = vsel %vm1798, %v4442, %v4443
      %v4513 = vunpack.c.l.b16 %v4370
      %v4514 = vunpack.c.h.b16 %v4370
      %v4515 = vunpack.c.l.b16 %v4371
      %v4516 = vunpack.c.h.b16 %v4371
      %v4517 = vunpack.c.l.b16 %v4372
      %v4518 = vunpack.c.h.b16 %v4372
      %v4519 = vunpack.c.l.b16 %v4373
      %v4520 = vunpack.c.h.b16 %v4373
      %v4521 = vunpack.c.l.b16 %v4374
      %v4522 = vunpack.c.h.b16 %v4374
      %v4523 = vunpack.c.l.b16 %v4375
      %v4524 = vunpack.c.h.b16 %v4375
      %v4525 = vunpack.c.l.b16 %v4376
      %v4526 = vunpack.c.h.b16 %v4376
      %v4527 = vunpack.c.l.b16 %v4377
      %v4528 = vunpack.c.h.b16 %v4377
      %v4529 = vunpack.c.l.b16 %v4378
      %v4530 = vunpack.c.h.b16 %v4378
      %v4531 = vunpack.c.l.b16 %v4379
      %v4532 = vunpack.c.h.b16 %v4379
      %v4533 = vunpack.c.l.b16 %v4380
      %v4534 = vunpack.c.h.b16 %v4380
      %v4535 = vunpack.c.l.b16 %v4381
      %v4536 = vunpack.c.h.b16 %v4381
      %v4537 = vunpack.c.l.b16 %v4382
      %v4538 = vunpack.c.h.b16 %v4382
      %v4539 = vunpack.c.l.b16 %v4383
      %v4540 = vunpack.c.h.b16 %v4383
      %v4541 = vunpack.c.l.b16 %v4384
      %v4542 = vunpack.c.h.b16 %v4384
      %v4543 = vunpack.c.l.b16 %v4385
      %v4544 = vunpack.c.h.b16 %v4385
      %v4545 = vunpack.c.l.b16 %v4386
      %v4546 = vunpack.c.h.b16 %v4386
      %v4547 = vunpack.c.l.b16 %v4387
      %v4548 = vunpack.c.h.b16 %v4387
      %v4549 = vunpack.c.l.b16 %v4388
      %v4550 = vunpack.c.h.b16 %v4388
      %v4551 = vunpack.c.l.b16 %v4389
      %v4552 = vunpack.c.h.b16 %v4389
      %v4553 = vunpack.c.l.b16 %v4390
      %v4554 = vunpack.c.h.b16 %v4390
      %v4555 = vunpack.c.l.b16 %v4391
      %v4556 = vunpack.c.h.b16 %v4391
      %v4557 = vunpack.c.l.b16 %v4392
      %v4558 = vunpack.c.h.b16 %v4392
      %v4559 = vunpack.c.l.b16 %v4393
      %v4560 = vunpack.c.h.b16 %v4393
      %v4561 = vunpack.c.l.b16 %v4394
      %v4562 = vunpack.c.h.b16 %v4394
      %v4563 = vunpack.c.l.b16 %v4395
      %v4564 = vunpack.c.h.b16 %v4395
      %v4565 = vunpack.c.l.b16 %v4396
      %v4566 = vunpack.c.h.b16 %v4396
      %v4567 = vunpack.c.l.b16 %v4397
      %v4568 = vunpack.c.h.b16 %v4397
      %v4569 = vunpack.c.l.b16 %v4398
      %v4570 = vunpack.c.h.b16 %v4398
      %v4571 = vunpack.c.l.b16 %v4399
      %v4572 = vunpack.c.h.b16 %v4399
      %v4573 = vunpack.c.l.b16 %v4400
      %v4574 = vunpack.c.h.b16 %v4400
      %v4575 = vunpack.c.l.b16 %v4401
      %v4576 = vunpack.c.h.b16 %v4401
      %v4577 = vunpack.c.l.b16 %v4402
      %v4578 = vunpack.c.h.b16 %v4402
      %v4579 = vunpack.c.l.b16 %v4403
      %v4580 = vunpack.c.h.b16 %v4403
      %v4581 = vunpack.c.l.b16 %v4404
      %v4582 = vunpack.c.h.b16 %v4404
      %v4583 = vunpack.c.l.b16 %v4405
      %v4584 = vunpack.c.h.b16 %v4405
      %v4585 = vunpack.c.l.b16 %v4406
      %v4586 = vunpack.c.h.b16 %v4406
      %v4587 = vunpack.c.l.b16 %v4407
      %v4588 = vunpack.c.h.b16 %v4407
      %v4589 = vunpack.c.l.b16 %v4408
      %v4590 = vunpack.c.h.b16 %v4408
      %v4591 = vunpack.c.l.b16 %v4409
      %v4592 = vunpack.c.h.b16 %v4409
      %v4593 = vunpack.c.l.b16 %v4410
      %v4594 = vunpack.c.h.b16 %v4410
      %v4595 = vunpack.c.l.b16 %v4411
      %v4596 = vunpack.c.h.b16 %v4411
      %v4597 = vunpack.c.l.b16 %v4412
      %v4598 = vunpack.c.h.b16 %v4412
      %v4599 = vunpack.c.l.b16 %v4413
      %v4600 = vunpack.c.h.b16 %v4413
      %v4601 = vunpack.c.l.b16 %v4414
      %v4602 = vunpack.c.h.b16 %v4414
      %v4603 = vunpack.c.l.b16 %v4415
      %v4604 = vunpack.c.h.b16 %v4415
      %v4605 = vunpack.c.l.b16 %v4416
      %v4606 = vunpack.c.h.b16 %v4416
      %v4607 = vunpack.c.l.b16 %v4417
      %v4608 = vunpack.c.h.b16 %v4417
      %v4609 = vunpack.c.l.b16 %v4418
      %v4610 = vunpack.c.h.b16 %v4418
      %v4611 = vunpack.c.l.b16 %v4419
      %v4612 = vunpack.c.h.b16 %v4419
      %v4613 = vunpack.c.l.b16 %v4420
      %v4614 = vunpack.c.h.b16 %v4420
      %v4615 = vunpack.c.l.b16 %v4421
      %v4616 = vunpack.c.h.b16 %v4421
      %v4617 = vunpack.c.l.b16 %v4422
      %v4618 = vunpack.c.h.b16 %v4422
      %v4619 = vunpack.c.l.b16 %v4423
      %v4620 = vunpack.c.h.b16 %v4423
      %v4621 = vunpack.c.l.b16 %v4424
      %v4622 = vunpack.c.h.b16 %v4424
      %v4623 = vunpack.c.l.b16 %v4425
      %v4624 = vunpack.c.h.b16 %v4425
      %v4625 = vunpack.c.l.b16 %v4426
      %v4626 = vunpack.c.h.b16 %v4426
      %v4627 = vunpack.c.l.b16 %v4427
      %v4628 = vunpack.c.h.b16 %v4427
      %v4629 = vunpack.c.l.b16 %v4428
      %v4630 = vunpack.c.h.b16 %v4428
      %v4631 = vunpack.c.l.b16 %v4429
      %v4632 = vunpack.c.h.b16 %v4429
      %v4633 = vunpack.c.l.b16 %v4430
      %v4634 = vunpack.c.h.b16 %v4430
      %v4635 = vunpack.c.l.b16 %v4431
      %v4636 = vunpack.c.h.b16 %v4431
      %v4637 = vunpack.c.l.b16 %v4432
      %v4638 = vunpack.c.h.b16 %v4432
      %v4639 = vunpack.c.l.b16 %v4433
      %v4640 = vunpack.c.h.b16 %v4433
      %v4641 = vpack.c.b16 %v4517, %v4513
      %v4642 = vpack.c.b16 %v4518, %v4514
      %v4643 = vpack.c.b16 %v4519, %v4515
      %v4644 = vpack.c.b16 %v4520, %v4516
      %v4645 = vpack.c.b16 %v4525, %v4521
      %v4646 = vpack.c.b16 %v4526, %v4522
      %v4647 = vpack.c.b16 %v4527, %v4523
      %v4648 = vpack.c.b16 %v4528, %v4524
      %v4649 = vpack.c.b16 %v4533, %v4529
      %v4650 = vpack.c.b16 %v4534, %v4530
      %v4651 = vpack.c.b16 %v4535, %v4531
      %v4652 = vpack.c.b16 %v4536, %v4532
      %v4653 = vpack.c.b16 %v4541, %v4537
      %v4654 = vpack.c.b16 %v4542, %v4538
      %v4655 = vpack.c.b16 %v4543, %v4539
      %v4656 = vpack.c.b16 %v4544, %v4540
      %v4657 = vpack.c.b16 %v4549, %v4545
      %v4658 = vpack.c.b16 %v4550, %v4546
      %v4659 = vpack.c.b16 %v4551, %v4547
      %v4660 = vpack.c.b16 %v4552, %v4548
      %v4661 = vpack.c.b16 %v4557, %v4553
      %v4662 = vpack.c.b16 %v4558, %v4554
      %v4663 = vpack.c.b16 %v4559, %v4555
      %v4664 = vpack.c.b16 %v4560, %v4556
      %v4665 = vpack.c.b16 %v4565, %v4561
      %v4666 = vpack.c.b16 %v4566, %v4562
      %v4667 = vpack.c.b16 %v4567, %v4563
      %v4668 = vpack.c.b16 %v4568, %v4564
      %v4669 = vpack.c.b16 %v4573, %v4569
      %v4670 = vpack.c.b16 %v4574, %v4570
      %v4671 = vpack.c.b16 %v4575, %v4571
      %v4672 = vpack.c.b16 %v4576, %v4572
      %v4673 = vpack.c.b16 %v4581, %v4577
      %v4674 = vpack.c.b16 %v4582, %v4578
      %v4675 = vpack.c.b16 %v4583, %v4579
      %v4676 = vpack.c.b16 %v4584, %v4580
      %v4677 = vpack.c.b16 %v4589, %v4585
      %v4678 = vpack.c.b16 %v4590, %v4586
      %v4679 = vpack.c.b16 %v4591, %v4587
      %v4680 = vpack.c.b16 %v4592, %v4588
      %v4681 = vpack.c.b16 %v4597, %v4593
      %v4682 = vpack.c.b16 %v4598, %v4594
      %v4683 = vpack.c.b16 %v4599, %v4595
      %v4684 = vpack.c.b16 %v4600, %v4596
      %v4685 = vpack.c.b16 %v4605, %v4601
      %v4686 = vpack.c.b16 %v4606, %v4602
      %v4687 = vpack.c.b16 %v4607, %v4603
      %v4688 = vpack.c.b16 %v4608, %v4604
      %v4689 = vpack.c.b16 %v4613, %v4609
      %v4690 = vpack.c.b16 %v4614, %v4610
      %v4691 = vpack.c.b16 %v4615, %v4611
      %v4692 = vpack.c.b16 %v4616, %v4612
      %v4693 = vpack.c.b16 %v4621, %v4617
      %v4694 = vpack.c.b16 %v4622, %v4618
      %v4695 = vpack.c.b16 %v4623, %v4619
      %v4696 = vpack.c.b16 %v4624, %v4620
      %v4697 = vpack.c.b16 %v4629, %v4625
      %v4698 = vpack.c.b16 %v4630, %v4626
      %v4699 = vpack.c.b16 %v4631, %v4627
      %v4700 = vpack.c.b16 %v4632, %v4628
      %v4701 = vpack.c.b16 %v4637, %v4633
      %v4702 = vpack.c.b16 %v4638, %v4634
      %v4703 = vpack.c.b16 %v4639, %v4635
      %v4704 = vpack.c.b16 %v4640, %v4636
      %4769 = vmatprep.subr.bf16.mxu0 %v4642
      %4770 = vmatpush1.bf16.msra.mxu0 %v4641
      %4771 = vmatprep.subr.bf16.mxu0 %v4646
      %4772 = vmatpush1.bf16.msra.mxu0 %v4645
      %4773 = vmatprep.subr.bf16.mxu0 %v4650
      %4774 = vmatpush1.bf16.msra.mxu0 %v4649
      %4775 = vmatprep.subr.bf16.mxu0 %v4654
      %4776 = vmatpush1.bf16.msra.mxu0 %v4653
      %4777 = vmatprep.subr.bf16.mxu0 %v4658
      %4778 = vmatpush1.bf16.msra.mxu0 %v4657
      %4779 = vmatprep.subr.bf16.mxu0 %v4662
      %4780 = vmatpush1.bf16.msra.mxu0 %v4661
      %4781 = vmatprep.subr.bf16.mxu0 %v4666
      %4782 = vmatpush1.bf16.msra.mxu0 %v4665
      %4783 = vmatprep.subr.bf16.mxu0 %v4670
      %4784 = vmatpush1.bf16.msra.mxu0 %v4669
      %4785 = vmatprep.subr.bf16.mxu0 %v4674
      %4786 = vmatpush1.bf16.msra.mxu0 %v4673
      %4787 = vmatprep.subr.bf16.mxu0 %v4678
      %4788 = vmatpush1.bf16.msra.mxu0 %v4677
      %4789 = vmatprep.subr.bf16.mxu0 %v4682
      %4790 = vmatpush1.bf16.msra.mxu0 %v4681
      %4791 = vmatprep.subr.bf16.mxu0 %v4686
      %4792 = vmatpush1.bf16.msra.mxu0 %v4685
      %4793 = vmatprep.subr.bf16.mxu0 %v4690
      %4794 = vmatpush1.bf16.msra.mxu0 %v4689
      %4795 = vmatprep.subr.bf16.mxu0 %v4694
      %4796 = vmatpush1.bf16.msra.mxu0 %v4693
      %4797 = vmatprep.subr.bf16.mxu0 %v4698
      %4798 = vmatpush1.bf16.msra.mxu0 %v4697
      %4799 = vmatprep.subr.bf16.mxu0 %v4702
      %4800 = vmatpush1.bf16.msra.mxu0 %v4701
      %4801 = vmatprep.mubr.bf16.mxu0 %v4444
      %4802 = vmatmul.mubr.bf16.gmra.mrb[0].mxu0 %v4441
      %v4803 = vpop.f32.mrb[0].mxu0
      %v4804 = vadd.f32 0.0, %v4803
      %v4805 = vpop.f32.mrb[0].mxu0
      %v4806 = vadd.f32 0.0, %v4805
      %v4807 = vpop.f32.mrb[0].mxu0
      %v4808 = vadd.f32 0.0, %v4807
      %v4809 = vpop.f32.mrb[0].mxu0
      %v4810 = vadd.f32 0.0, %v4809
      %4811 = vmatprep.mubr.bf16.mxu0 %v4443
      %4812 = vmatmul.mubr.bf16.gmra.mrb[0].mxu0 %v4440
      %v4813 = vpop.f32.mrb[0].mxu0
      %v4814 = vadd.f32 0.0, %v4813
      %v4815 = vpop.f32.mrb[0].mxu0
      %v4816 = vadd.f32 0.0, %v4815
      %v4817 = vpop.f32.mrb[0].mxu0
      %v4818 = vpop.f32.mrb[0].mxu0
      %4819 = vdwg.mxu0
      %4820 = vmatprep.subr.bf16.mxu0 %v4644
      %4821 = vmatpush1.bf16.msra.mxu0 %v4643
      %4822 = vmatprep.subr.bf16.mxu0 %v4648
      %4823 = vmatpush1.bf16.msra.mxu0 %v4647
      %4824 = vmatprep.subr.bf16.mxu0 %v4652
      %4825 = vmatpush1.bf16.msra.mxu0 %v4651
      %4826 = vmatprep.subr.bf16.mxu0 %v4656
      %4827 = vmatpush1.bf16.msra.mxu0 %v4655
      %4828 = vmatprep.subr.bf16.mxu0 %v4660
      %4829 = vmatpush1.bf16.msra.mxu0 %v4659
      %4830 = vmatprep.subr.bf16.mxu0 %v4664
      %4831 = vmatpush1.bf16.msra.mxu0 %v4663
      %4832 = vmatprep.subr.bf16.mxu0 %v4668
      %4833 = vmatpush1.bf16.msra.mxu0 %v4667
      %4834 = vmatprep.subr.bf16.mxu0 %v4672
      %4835 = vmatpush1.bf16.msra.mxu0 %v4671
      %4836 = vmatprep.subr.bf16.mxu0 %v4676
      %4837 = vmatpush1.bf16.msra.mxu0 %v4675
      %4838 = vmatprep.subr.bf16.mxu0 %v4680
      %4839 = vmatpush1.bf16.msra.mxu0 %v4679
      %4840 = vmatprep.subr.bf16.mxu0 %v4684
      %4841 = vmatpush1.bf16.msra.mxu0 %v4683
      %4842 = vmatprep.subr.bf16.mxu0 %v4688
      %4843 = vmatpush1.bf16.msra.mxu0 %v4687
      %4844 = vmatprep.subr.bf16.mxu0 %v4692
      %4845 = vmatpush1.bf16.msra.mxu0 %v4691
      %4846 = vmatprep.subr.bf16.mxu0 %v4696
      %4847 = vmatpush1.bf16.msra.mxu0 %v4695
      %4848 = vmatprep.subr.bf16.mxu0 %v4700
      %4849 = vmatpush1.bf16.msra.mxu0 %v4699
      %4850 = vmatprep.subr.bf16.mxu0 %v4704
      %4851 = vmatpush1.bf16.msra.mxu0 %v4703
      %4852 = vmatprep.mubr.bf16.mxu0 %v4444
      %4853 = vmatmul.mubr.bf16.gmra.mrb[0].mxu0 %v4441
      %v4854 = vpop.f32.mrb[0].mxu0
      %v4855 = vadd.f32 0.0, %v4854
      %v4856 = vpop.f32.mrb[0].mxu0
      %v4857 = vadd.f32 0.0, %v4856
      %v4858 = vpop.f32.mrb[0].mxu0
      %v4859 = vadd.f32 0.0, %v4858
      %v4860 = vpop.f32.mrb[0].mxu0
      %v4861 = vadd.f32 0.0, %v4860
      %4862 = vmatprep.mubr.bf16.mxu0 %v4443
      %4863 = vmatmul.mubr.bf16.gmra.mrb[0].mxu0 %v4440
      %v4864 = vpop.f32.mrb[0].mxu0
      %v4865 = vadd.f32 0.0, %v4864
      %v4866 = vpop.f32.mrb[0].mxu0
      %v4867 = vadd.f32 0.0, %v4866
      %v4868 = vpop.f32.mrb[0].mxu0
      %v4869 = vpop.f32.mrb[0].mxu0
      %4870 = vdwg.mxu0
      %v4871 = vadd.f32 %v4356, %v4804
      %v4872 = vadd.f32 %v4357, %v4806
      %v4873 = vadd.f32 %v4358, %v4855
      %v4874 = vadd.f32 %v4359, %v4857
      %v4875 = vadd.f32 %v4360, %v4808
      %v4876 = vadd.f32 %v4361, %v4810
      %v4877 = vadd.f32 %v4362, %v4859
      %v4878 = vadd.f32 %v4363, %v4861
      %v4879 = vadd.f32 %v4364, %v4814
      %v4880 = vadd.f32 %v4365, %v4816
      %v4881 = vadd.f32 %v4366, %v4865
      %v4882 = vadd.f32 %v4367, %v4867
      %v4883 = vmax.f32 %v4871, %v4872
      %v4884 = vmax.f32 %v4875, %v4876
      %v4885 = vmax.f32 %v4879, %v4880
      %v4886 = vmax.f32 %v4873, %v4874
      %v4887 = vmax.f32 %v4877, %v4878
      %v4888 = vmax.f32 %v4881, %v4882
      %v4889 = vmax.f32 %v4883, %v4886
      %v4890 = vmax.f32 %v4884, %v4887
      %v4891 = vmax.f32 %v4885, %v4888
      %v4892 = vld [vmem:[%s2] sm:$0x1]
      %v4894 = vlaneseq
      %v4895 = vshrl.u32 %v4894, 7
      %v4896 = vsub.s32 0, %v4895
      %v4897 = vrot.slane %v4892, %v4896
      %v4899 = vadd.f32 %v4889, %v4897
      %v4900 = vadd.f32 %v4890, %v4897
      %v4901 = vadd.f32 %v4891, %v4897
      %v4902 = vmax.f32 %v4899, 0.0
      %v4903 = vmax.f32 %v4900, 0.0
      %v4904 = vmax.f32 %v4901, 0.0
      %v4905 = vpack.c.bf16 %v4903, %v4902
      %v4906 = vpack.c.bf16 %v4904, %v4904
      %v4909 = vunpack.c.l.b16 %v4905
      %v4910 = vunpack.c.h.b16 %v4905
      %v4911 = vunpack.c.l.b16 %v4906
      %v4912 = vpack.c.b16 %v4909, %v4909
      %v4913 = vpack.c.b16 %v4910, %v4910
      %v4914 = vpack.c.b16 %v4911, %v4911
      %4918 = vst [vmem:[%s170] sm:$0xf] %v4912
      %4919 = vst [vmem:[%s170 + $0x4] sm:$0xf] %v4913
      %4920 = vst [vmem:[%s170 + $0x8] sm:$0xf] %v4914
      %p4921 = scmp.lt.s32.totalorder %s14, 1
      %s4922 = scalar_select %p4921, %s14, 1
      %s4923 = smul.addr %s4922, 3
      %s4924 = smul.addr %s4923, 4
      %s4925 = scalar_lea.vmem %s3, %s4924
      // Predicated region
      $region33: #{example_model_forward.6} parent=31 // pred_check
        %p4926 = pneg %p100
      $region34: #{example_model_forward.6} parent=31 // pred_check_branch
        %4928 = sbr.rel (%p4926) target = $region36
      $region35: #{example_model_forward.6} parent=31 // pred_region
        _
      $region36: #{example_model_forward.6} parent=31 // pred_fallthru
        _
    $region32: #{example_model_forward.6} parent=5 // pred_fallthru
      _
    %p4929 = scmp.le.s32.totalorder 2, %s9
    // Predicated region
    $region37: #{example_model_forward.6} parent=5 // pred_check
      %p4930 = pneg %p4929
    $region38: #{example_model_forward.6} parent=5 // pred_check_branch
      %4932 = sbr.rel (%p4930) target = $region40
    $region39: #{example_model_forward.6} parent=5 // pred_region
      %s4933 = ssub.s32 %s9, 2
      // Predicated region
      $region41: #{example_model_forward.6} parent=39 // pred_check
        %p4934 = pneg %p106
      $region42: #{example_model_forward.6} parent=39 // pred_check_branch
        %4936 = sbr.rel (%p4934) target = $region44
      $region43: #{example_model_forward.6} parent=39 // pred_region
        %p4937 = scmp.lt.s32.totalorder %s15, 1
        %s4938 = scalar_select %p4937, %s15, 1
        %s4939 = smul.addr %s4938, 3
        %s4940 = smul.addr %s4939, 4
        %s4941 = scalar_lea.vmem %s3, %s4940
      $region44: #{example_model_forward.6} parent=39 // pred_fallthru
        _
    $region40: #{example_model_forward.6} parent=5 // pred_fallthru
      _
  $region6: #{example_model_forward.6} parent=0 // loop_footer
    %s13 = sadd.s32 1, %s9
  $region7: #{example_model_forward.6} parent=0 // loop_footer_branch
    %8 = sbr.rel target = $region3
  $region8: #{example_model_forward.6} parent=0 // loop_exit
    _

</llo_original>
